<compile_context>
chip_gen: v6e
topology: v6e:2x2x1
jax: 0.10.0
libtpu: 0.0.40
codegen_flags: <defaults>
</compile_context>

<pallas_src>
import jax
import jax.numpy as jnp
from jax import lax
from jax.experimental import pallas as pl
from jax.experimental.pallas import tpu as pltpu

# ---- module hyper-parameters (matches SatGNNRecursive defaults) ----
EMB = 32            # emb_dim
VAR_FEATS = 6       # var_feats
U_FEATS = 4         # u_feats
CLAUSE_FEATS = 2    # fixed in module
E_FEATS = 2         # fixed in module
SEQ_LEN = 5         # seq_length
HIDDEN_DIM = 128    # hidden_dim (hidden = 2 -> 4 linear layers in Q head)
NEG_SLOPE = 0.1     # LeakyReLU(0.1)

# ---- Q-head weight slab layout (128-lane wide, 8-row aligned blocks) ----
Q_SPECS = (
    ("wq0", EMB), ("bq0", 1), ("wq1", HIDDEN_DIM), ("bq1", 1),
    ("wq2", HIDDEN_DIM), ("bq2", 1), ("wq3t", 1), ("bq3", 1),
)


def _layout(specs, align=8):
    off, r = {}, 0
    for name, rows in specs:
        off[name] = r
        r += ((rows + align - 1) // align) * align
    return off, r


Q_OFF, Q_SLAB_ROWS = _layout(Q_SPECS)
Q_ROWS = dict(Q_SPECS)


def _lrelu(x):
    # LeakyReLU(0.1) == max(x, 0.1*x): mul + max instead of cmp + mul + select.
    return jnp.maximum(x, NEG_SLOPE * x)


def _dot(a, b):
    # default matmul precision: single-pass bf16 MXU operands, f32 accumulate.
    return jnp.dot(a, b, preferred_element_type=jnp.float32)


# ------------------------------- kernel --------------------------------------
def satgnn_kernel(vfeat_ref, cfeat_ref, ufeat_ref, adj_ref, adjT_ref,
                  efvc_ref, efcv_ref,
                  wv2_ref, wc2_ref, wu2_ref, wvr_ref, wcr_ref, wur_ref, wua_ref,
                  blkvc_ref, blkcv_ref, rv_ref, rc_ref, svc_ref, scv_ref, qw_ref,
                  q_ref):
    TU, Nc, Nv = adj_ref.shape

    def qw(name):   # static, 8-row aligned slices of the resident Q-head slab
        s = Q_OFF[name]
        return qw_ref[s:s + Q_ROWS[name], :]

    # ---------------- hoisted, loop-invariant work ----------------
    vfeat = vfeat_ref[...].reshape(TU * Nv, vfeat_ref.shape[-1])   # incl. ones col
    cfeat = cfeat_ref[...].reshape(TU * Nc, cfeat_ref.shape[-1])
    ufeat = ufeat_ref[...]

    # init embeddings + static feature projections (biases folded via ones col)
    pv0 = _dot(vfeat, wv2_ref[...])               # [v_emb | v_update feat-part]
    emb_v0, feat_v = pv0[:, :EMB], pv0[:, EMB:]
    pc0 = _dot(cfeat, wc2_ref[...])
    emb_c0, feat_c = pc0[:, :EMB], pc0[:, EMB:]
    pu0 = _dot(ufeat, wu2_ref[...])
    emb_u0, feat_u = pu0[:, :EMB], pu0[:, EMB:]

    # masked-mean masks with 1/deg folded in, replicated over EMB on the MXU
    adj_vc = adj_ref[...].reshape(TU * Nc, Nv)
    adj_cv = adjT_ref[...].reshape(TU * Nv, Nc)
    deg_c = jnp.maximum(jnp.sum(adj_vc, axis=1, keepdims=True), 1.0)
    deg_v = jnp.maximum(jnp.sum(adj_cv, axis=1, keepdims=True), 1.0)
    mask_vc = _dot(adj_vc / deg_c, rv_ref[...]).reshape(TU, Nc, Nv * EMB)
    mask_cv = _dot(adj_cv / deg_v, rc_ref[...]).reshape(TU, Nv, Nc * EMB)

    # edge-feature message terms (incl. message bias via the constant-1 channel),
    # produced directly in the lane-dense layouts via block-diagonal weights
    efvc = efvc_ref[...].reshape(TU * Nc, efvc_ref.shape[-1])
    efcv = efcv_ref[...].reshape(TU * Nv, efcv_ref.shape[-1])
    edge_vc = _dot(efvc, blkvc_ref[...]).reshape(TU, Nc, Nv * EMB)
    edge_cv = _dot(efcv, blkcv_ref[...]).reshape(TU, Nv, Nc * EMB)

    w_v_rnd = wvr_ref[...]      # (EMB, 2*EMB): [wvc_s | wvu_e]
    w_c_rnd = wcr_ref[...]      # (EMB, 2*EMB): [wcv_s | wcu_e]
    w_u_rnd = wur_ref[...]      # (EMB, 3*EMB): [wcu_x | wvu_x | wuu_e]
    w_u_agg = wua_ref[...]      # (2*EMB, EMB): [wuu_c ; wuu_v]
    s_vc = svc_ref[...]         # (Nv*EMB, EMB): tile(wcu_h) -> masked-mean + proj
    s_cv = scv_ref[...]         # (Nc*EMB, EMB): tile(wvu_h)
    inv_nc, inv_nv = 1.0 / Nc, 1.0 / Nv

    def lane_row(x, n):
        # (TU*n, EMB) t-major rows -> (TU, 1, n*EMB) lane-dense row per context
        x3 = x.reshape(TU, n, EMB)
        return jnp.concatenate([x3[:, i:i + 1, :] for i in range(n)], axis=2)

    # ---------------- seq_length rounds of MessageGNN ----------------
    def round_body(_, carry):
        emb_v, emb_c, emb_u = carry

        # merged tiny matmuls: projections reused by messages / node & ctx updates
        pu = _dot(emb_u, w_u_rnd)                                # (TU, 3*EMB)
        u_proj_c, u_proj_v, u_self = (pu[:, :EMB], pu[:, EMB:2 * EMB],
                                      pu[:, 2 * EMB:])
        pv = _dot(emb_v, w_v_rnd)                                # (TU*Nv, 2*EMB)
        sv, v_self = pv[:, :EMB], pv[:, EMB:]
        pc = _dot(emb_c, w_c_rnd)                                # (TU*Nc, 2*EMB)
        sc, c_self = pc[:, :EMB], pc[:, EMB:]

        # variable -> clause ('assigns'): lane-dense messages, masked mean fused
        # with the wcu_h projection on the MXU
        msg_vc = _lrelu(edge_vc + lane_row(sv, Nv))              # (TU, Nc, Nv*EMB)
        hc_proj = _dot((mask_vc * msg_vc).reshape(TU * Nc, Nv * EMB), s_vc)

        # clause -> variable ('contains'): same, fused with wvu_h
        msg_cv = _lrelu(edge_cv + lane_row(sc, Nc))              # (TU, Nv, Nc*EMB)
        hv_proj = _dot((mask_cv * msg_cv).reshape(TU * Nv, Nc * EMB), s_cv)

        # node updates: LeakyReLU(Linear(cat([feats, h, ctx, old_emb])))
        new_c = _lrelu((feat_c + hc_proj + c_self).reshape(TU, Nc, EMB)
                       + u_proj_c[:, None, :]).reshape(TU * Nc, EMB)
        new_v = _lrelu((feat_v + hv_proj + v_self).reshape(TU, Nv, EMB)
                       + u_proj_v[:, None, :]).reshape(TU * Nv, EMB)

        # context update from per-context means of the *updated* node embeddings
        c_agg = jnp.sum(new_c.reshape(TU, Nc, EMB), axis=1) * inv_nc   # (TU, EMB)
        v_agg = jnp.sum(new_v.reshape(TU, Nv, EMB), axis=1) * inv_nv   # (TU, EMB)
        new_u = _lrelu(feat_u + u_self
                       + _dot(jnp.concatenate([c_agg, v_agg], axis=1), w_u_agg))
        return new_v, new_c, new_u

    emb_v, emb_c, emb_u = lax.fori_loop(0, SEQ_LEN, round_body,
                                        (emb_v0, emb_c0, emb_u0))

    # ---- Q head: 3x (Linear+ReLU) + final layer as a row matmul so the result
    #      lands directly in a lane-dense (1, TU*Nv) output tile ----
    h = jnp.maximum(_dot(emb_v, qw("wq0")) + qw("bq0"), 0.0)
    h = jnp.maximum(_dot(h, qw("wq1")) + qw("bq1"), 0.0)
    h = jnp.maximum(_dot(h, qw("wq2")) + qw("bq2"), 0.0)
    q_row = jnp.einsum("oh,vh->ov", qw("wq3t"), h,
                       preferred_element_type=jnp.float32) + qw("bq3")[:, 0:1]
    q_ref[...] = q_row.reshape(1, 1, TU * Nv)


# ------------------------------- wrapper --------------------------------------
def satgnn_forward(vfeat_a, cfeat_a, ufeat_a, adj, adjT, ef_vc, ef_cv, weights,
                   *, tu=16):
    U, Nv, vfa = vfeat_a.shape
    Nc, cfa = cfeat_a.shape[1], cfeat_a.shape[2]
    ufa = ufeat_a.shape[1]
    tu = min(tu, U)
    assert U % tu == 0, "number of contexts must be a multiple of the context tile"
    nblk = U // tu   # keep nblk >= 2 on v7x so both TensorCores get grid steps

    data_specs = [
        pl.BlockSpec((tu, Nv, vfa), lambda u: (u, 0, 0)),
        pl.BlockSpec((tu, Nc, cfa), lambda u: (u, 0, 0)),
        pl.BlockSpec((tu, ufa), lambda u: (u, 0)),
        pl.BlockSpec((tu, Nc, Nv), lambda u: (u, 0, 0)),
        pl.BlockSpec((tu, Nv, Nc), lambda u: (u, 0, 0)),
        pl.BlockSpec((tu, Nc, ef_vc.shape[2]), lambda u: (u, 0, 0)),
        pl.BlockSpec((tu, Nv, ef_cv.shape[2]), lambda u: (u, 0, 0)),
    ]
    # weights: constant block index -> stay resident in VMEM across grid steps
    weight_specs = [pl.BlockSpec(w.shape, lambda u: (0, 0)) for w in weights]

    out = pl.pallas_call(
        satgnn_kernel,
        out_shape=jax.ShapeDtypeStruct((nblk, 1, tu * Nv), jnp.float32),
        grid_spec=pltpu.PrefetchScalarGridSpec(
            num_scalar_prefetch=0,
            grid=(nblk,),
            in_specs=data_specs + weight_specs,
            out_specs=pl.BlockSpec((1, 1, tu * Nv), lambda u: (u, 0, 0)),
        ),
        compiler_params=pltpu.CompilerParams(
            dimension_semantics=("parallel",),
        ),
    )(vfeat_a, cfeat_a, ufeat_a, adj, adjT, ef_vc, ef_cv, *weights)
    return out.reshape(U, Nv)                     # q_values.reshape(-1, num_var)


# --------------------------- host-side packing --------------------------------
def _block_diag(block, n):
    r, c = block.shape
    out = jnp.zeros((n * r, n * c), block.dtype)
    for i in range(n):
        out = out.at[i * r:(i + 1) * r, i * c:(i + 1) * c].set(block)
    return out


def prepare_graph(vfeat, cfeat, ufeat, adj, ef):
    """Augment node/ctx features with a ones column (folds linear biases), build
    the transposed adjacency and the per-direction edge-feature layouts with a
    constant-1 channel per (edge, node)."""
    U, Nv, _ = vfeat.shape
    Nc = cfeat.shape[1]
    f32 = jnp.float32
    vfeat_a = jnp.concatenate([vfeat, jnp.ones((U, Nv, 1), f32)], -1)
    cfeat_a = jnp.concatenate([cfeat, jnp.ones((U, Nc, 1), f32)], -1)
    ufeat_a = jnp.concatenate([ufeat, jnp.ones((U, 1), f32)], -1)
    adjT = jnp.transpose(adj, (0, 2, 1))
    # ef: (U, E_FEATS, Nc, Nv)
    ef_vc = jnp.concatenate(
        [jnp.transpose(ef, (0, 2, 3, 1)), jnp.ones((U, Nc, Nv, 1), f32)],
        -1).reshape(U, Nc, Nv * (E_FEATS + 1))
    ef_cv = jnp.concatenate(
        [jnp.transpose(ef, (0, 3, 2, 1)), jnp.ones((U, Nv, Nc, 1), f32)],
        -1).reshape(U, Nv, Nc * (E_FEATS + 1))
    return vfeat_a, cfeat_a, ufeat_a, adj, adjT, ef_vc, ef_cv


def pack_weights(params, Nv, Nc):
    (wv, bv, wc, bc, wu, bu, wvc, bvc, wcv, bcv,
     wcu, bcu, wvu, bvu, wuu, buu,
     wq0, bq0, wq1, bq1, wq2, bq2, wq3, bq3) = params
    CF, VF, UF, E = CLAUSE_FEATS, VAR_FEATS, U_FEATS, E_FEATS

    wvc_e, wvc_s = wvc[:E], wvc[E:]
    wcv_e, wcv_s = wcv[:E], wcv[E:]
    wcu_f, wcu_h = wcu[:CF], wcu[CF:CF + EMB]
    wcu_x, wcu_e = wcu[CF + EMB:CF + 2 * EMB], wcu[CF + 2 * EMB:]
    wvu_f, wvu_h = wvu[:VF], wvu[VF:VF + EMB]
    wvu_x, wvu_e = wvu[VF + EMB:VF + 2 * EMB], wvu[VF + 2 * EMB:]
    wuu_f, wuu_c = wuu[:UF], wuu[UF:UF + EMB]
    wuu_v, wuu_e = wuu[UF + EMB:UF + 2 * EMB], wuu[UF + 2 * EMB:]

    cat = jnp.concatenate
    # init + static feature projections, biases folded via the ones feature col
    wv2 = cat([cat([wv, bv], 0), cat([wvu_f, bvu], 0)], 1)        # (VF+1, 2*EMB)
    wc2 = cat([cat([wc, bc], 0), cat([wcu_f, bcu], 0)], 1)        # (CF+1, 2*EMB)
    wu2 = cat([cat([wu, bu], 0), cat([wuu_f, buu], 0)], 1)        # (UF+1, 2*EMB)
    # merged per-round projections
    w_v_rnd = cat([wvc_s, wvu_e], 1)                              # (EMB, 2*EMB)
    w_c_rnd = cat([wcv_s, wcu_e], 1)                              # (EMB, 2*EMB)
    w_u_rnd = cat([wcu_x, wvu_x, wuu_e], 1)                       # (EMB, 3*EMB)
    w_u_agg = cat([wuu_c, wuu_v], 0)                              # (2*EMB, EMB)
    # block-diagonal edge-term weights (message bias via constant-1 channel)
    wblk_vc = _block_diag(cat([wvc_e, bvc], 0), Nv)               # (Nv*(E+1), Nv*EMB)
    wblk_cv = _block_diag(cat([wcv_e, bcv], 0), Nc)               # (Nc*(E+1), Nc*EMB)
    # EMB-replication matrices for the masked-mean masks
    r_v = _block_diag(jnp.ones((1, EMB), jnp.float32), Nv)        # (Nv, Nv*EMB)
    r_c = _block_diag(jnp.ones((1, EMB), jnp.float32), Nc)        # (Nc, Nc*EMB)
    # masked-mean + update-projection matrices
    s_vc = jnp.tile(wcu_h, (Nv, 1))                               # (Nv*EMB, EMB)
    s_cv = jnp.tile(wvu_h, (Nc, 1))                               # (Nc*EMB, EMB)

    q_blocks = {
        "wq0": wq0, "bq0": bq0, "wq1": wq1, "bq1": bq1, "wq2": wq2, "bq2": bq2,
        "wq3t": wq3.T, "bq3": jnp.broadcast_to(bq3, (1, HIDDEN_DIM)),
    }
    q_slab = jnp.zeros((Q_SLAB_ROWS, HIDDEN_DIM), jnp.float32)
    for name, rows in Q_SPECS:
        s = Q_OFF[name]
        q_slab = q_slab.at[s:s + rows, :].set(q_blocks[name])

    return (wv2, wc2, wu2, w_v_rnd, w_c_rnd, w_u_rnd, w_u_agg,
            wblk_vc, wblk_cv, r_v, r_c, s_vc, s_cv, q_slab)


# --------------------------- pure-JAX reference -------------------------------
def reference_forward(vfeat, cfeat, ufeat, adj, ef, params):
    (wv, bv, wc, bc, wu, bu, wvc, bvc, wcv, bcv,
     wcu, bcu, wvu, bvu, wuu, buu,
     wq0, bq0, wq1, bq1, wq2, bq2, wq3, bq3) = params

    def one(vf, cf, uf, a, e):
        lrelu = lambda x: jnp.where(x > 0, x, NEG_SLOPE * x)
        Nc, Nv = a.shape
        uf = uf.reshape(1, U_FEATS)
        emb_v = vf @ wv + bv
        emb_c = cf @ wc + bc
        emb_u = uf @ wu + bu
        deg_c = jnp.maximum(a.sum(1, keepdims=True), 1.0)
        deg_v = jnp.maximum(a.sum(0, keepdims=True).T, 1.0)
        for _ in range(SEQ_LEN):
            ctx_v = jnp.broadcast_to(emb_u, (Nv, EMB))
            ctx_c = jnp.broadcast_to(emb_u, (Nc, EMB))
            src_v = jnp.broadcast_to(emb_v[None, :, :], (Nc, Nv, EMB))
            src_c = jnp.broadcast_to(emb_c[:, None, :], (Nc, Nv, EMB))
            msg_vc = lrelu(jnp.concatenate([e, src_v], -1) @ wvc + bvc)
            h_c = (a[:, :, None] * msg_vc).sum(1) / deg_c
            msg_cv = lrelu(jnp.concatenate([e, src_c], -1) @ wcv + bcv)
            h_v = (a[:, :, None] * msg_cv).sum(0) / deg_v
            new_c = lrelu(jnp.concatenate([cf, h_c, ctx_c, emb_c], 1) @ wcu + bcu)
            new_v = lrelu(jnp.concatenate([vf, h_v, ctx_v, emb_v], 1) @ wvu + bvu)
            emb_c, emb_v = new_c, new_v
            c_agg = emb_c.mean(0, keepdims=True)
            v_agg = emb_v.mean(0, keepdims=True)
            emb_u = lrelu(jnp.concatenate([uf, c_agg, v_agg, emb_u], 1) @ wuu + buu)
        h = jax.nn.relu(emb_v @ wq0 + bq0)
        h = jax.nn.relu(h @ wq1 + bq1)
        h = jax.nn.relu(h @ wq2 + bq2)
        return (h @ wq3 + bq3)[:, 0]

    return jax.vmap(one)(vfeat, cfeat, ufeat, adj, ef)


# --------------------------- deterministic init --------------------------------
def init_linear(key, fan_in, fan_out):
    k1, k2 = jax.random.split(key)
    bound = 1.0 / float(fan_in) ** 0.5
    w = jax.random.uniform(k1, (fan_in, fan_out), jnp.float32, -bound, bound)
    b = jax.random.uniform(k2, (1, fan_out), jnp.float32, -bound, bound)
    return w, b


def make_params(key):
    specs = [
        (VAR_FEATS, EMB),                  # v_emb
        (CLAUSE_FEATS, EMB),               # c_emb
        (U_FEATS, EMB),                    # u_emb
        (E_FEATS + EMB, EMB),              # message_vc_layer
        (E_FEATS + EMB, EMB),              # message_cv_layer
        (CLAUSE_FEATS + 3 * EMB, EMB),     # c_update_layer
        (VAR_FEATS + 3 * EMB, EMB),        # v_update_layer
        (U_FEATS + 3 * EMB, EMB),          # u_update_layer
        (EMB, HIDDEN_DIM),                 # Q layer 0
        (HIDDEN_DIM, HIDDEN_DIM),          # Q layer 1
        (HIDDEN_DIM, HIDDEN_DIM),          # Q layer 2
        (HIDDEN_DIM, 1),                   # Q layer 3
    ]
    params = []
    for i, (fi, fo) in enumerate(specs):
        w, b = init_linear(jax.random.fold_in(key, i), fi, fo)
        params += [w, b]
    return tuple(params)


if __name__ == "__main__":
    key = jax.random.PRNGKey(0)
    # U contexts (independent SAT graphs), Nv vars / Nc clauses per context,
    # TU contexts batched per grid step (TU*Nv = 128 rows, TU*Nc = 256 rows).
    # On v6e raise TU to 32 when U >= 64; on v7x keep nblk = U/TU >= 2.
    U, Nv, Nc, TU = 32, 8, 16, 16

    kf = jax.random.split(key, 5)
    vfeat = jax.random.normal(kf[0], (U, Nv, VAR_FEATS), jnp.float32)
    cfeat = jax.random.normal(kf[1], (U, Nc, CLAUSE_FEATS), jnp.float32)
    ufeat = jax.random.normal(kf[2], (U, U_FEATS), jnp.float32)

    # dense clause-variable adjacency (each clause touches <=3 vars; every var covered)
    u_idx = jnp.arange(U)[:, None, None]
    c_idx = jnp.arange(Nc)[None, :, None]
    v_idx = jnp.arange(Nv)[None, None, :]
    adj = ((v_idx == (c_idx % Nv))
           | (v_idx == ((c_idx + 1) % Nv))
           | (v_idx == ((c_idx + 2 + u_idx) % Nv))).astype(jnp.float32)   # (U, Nc, Nv)

    # edge features in (U, E_FEATS, Nc, Nv) for the kernel-side preprocessing,
    # (U, Nc, Nv, E_FEATS) for the reference
    ef_k = jax.random.normal(kf[3], (U, E_FEATS, Nc, Nv), jnp.float32) * adj[:, None, :, :]
    ef_r = jnp.transpose(ef_k, (0, 2, 3, 1))

    params = make_params(kf[4])
    data = prepare_graph(vfeat, cfeat, ufeat, adj, ef_k)
    weights = pack_weights(params, Nv, Nc)

    q = jax.block_until_ready(satgnn_forward(*data, weights, tu=TU))
    q_ref = jax.block_until_ready(
        reference_forward(vfeat, cfeat, ufeat, adj, ef_r, params))

    assert q.shape == (U, Nv), q.shape
    assert bool(jnp.all(jnp.isfinite(q)))
    max_err = float(jnp.max(jnp.abs(q - q_ref)))
    # Loose tolerance: kernel and reference use default (bf16-pass) MXU matmuls
    # with different summation orders / operand groupings.
    if not bool(jnp.allclose(q, q_ref, atol=1e-1, rtol=1e-1)):
        raise SystemExit(f"mismatch vs reference, max_abs_err={max_err}")

    print("KERNEL_OK")
</pallas_src>

<mosaic_0001>
module attributes {stable_mosaic.version = 11 : i64} {
  func.func @satgnn_kernel(%arg0: i32, %arg1: memref<16x8x7xf32, #tpu.memory_space<vmem>>, %arg2: memref<16x16x3xf32, #tpu.memory_space<vmem>>, %arg3: memref<16x5xf32, #tpu.memory_space<vmem>>, %arg4: memref<16x16x8xf32, #tpu.memory_space<vmem>>, %arg5: memref<16x8x16xf32, #tpu.memory_space<vmem>>, %arg6: memref<16x16x24xf32, #tpu.memory_space<vmem>>, %arg7: memref<16x8x48xf32, #tpu.memory_space<vmem>>, %arg8: memref<7x64xf32, #tpu.memory_space<vmem>>, %arg9: memref<3x64xf32, #tpu.memory_space<vmem>>, %arg10: memref<5x64xf32, #tpu.memory_space<vmem>>, %arg11: memref<32x64xf32, #tpu.memory_space<vmem>>, %arg12: memref<32x64xf32, #tpu.memory_space<vmem>>, %arg13: memref<32x96xf32, #tpu.memory_space<vmem>>, %arg14: memref<64x32xf32, #tpu.memory_space<vmem>>, %arg15: memref<24x256xf32, #tpu.memory_space<vmem>>, %arg16: memref<48x512xf32, #tpu.memory_space<vmem>>, %arg17: memref<8x256xf32, #tpu.memory_space<vmem>>, %arg18: memref<16x512xf32, #tpu.memory_space<vmem>>, %arg19: memref<256x32xf32, #tpu.memory_space<vmem>>, %arg20: memref<512x32xf32, #tpu.memory_space<vmem>>, %arg21: memref<328x128xf32, #tpu.memory_space<vmem>>, %arg22: memref<1x1x128xf32, #tpu.memory_space<vmem>>) attributes {dimension_semantics = [#tpu.dimension_semantics<parallel>], iteration_bounds = array<i64: 2>, scalar_prefetch = 0 : i64, scratch_operands = 0 : i64, tpu.core_type = #tpu.core_type<tc>, window_params = [{transform_indices = @transform_0, window_bounds = array<i64: 16, 8, 7>}, {transform_indices = @transform_1, window_bounds = array<i64: 16, 16, 3>}, {transform_indices = @transform_2, window_bounds = array<i64: 16, 5>}, {transform_indices = @transform_3, window_bounds = array<i64: 16, 16, 8>}, {transform_indices = @transform_4, window_bounds = array<i64: 16, 8, 16>}, {transform_indices = @transform_5, window_bounds = array<i64: 16, 16, 24>}, {transform_indices = @transform_6, window_bounds = array<i64: 16, 8, 48>}, {pipeline_mode = #tpu.pipeline_mode<synchronous>, transform_indices = @transform_7, window_bounds = array<i64: 7, 64>}, {pipeline_mode = #tpu.pipeline_mode<synchronous>, transform_indices = @transform_8, window_bounds = array<i64: 3, 64>}, {pipeline_mode = #tpu.pipeline_mode<synchronous>, transform_indices = @transform_9, window_bounds = array<i64: 5, 64>}, {pipeline_mode = #tpu.pipeline_mode<synchronous>, transform_indices = @transform_10, window_bounds = array<i64: 32, 64>}, {pipeline_mode = #tpu.pipeline_mode<synchronous>, transform_indices = @transform_11, window_bounds = array<i64: 32, 64>}, {pipeline_mode = #tpu.pipeline_mode<synchronous>, transform_indices = @transform_12, window_bounds = array<i64: 32, 96>}, {pipeline_mode = #tpu.pipeline_mode<synchronous>, transform_indices = @transform_13, window_bounds = array<i64: 64, 32>}, {pipeline_mode = #tpu.pipeline_mode<synchronous>, transform_indices = @transform_14, window_bounds = array<i64: 24, 256>}, {pipeline_mode = #tpu.pipeline_mode<synchronous>, transform_indices = @transform_15, window_bounds = array<i64: 48, 512>}, {pipeline_mode = #tpu.pipeline_mode<synchronous>, transform_indices = @transform_16, window_bounds = array<i64: 8, 256>}, {pipeline_mode = #tpu.pipeline_mode<synchronous>, transform_indices = @transform_17, window_bounds = array<i64: 16, 512>}, {pipeline_mode = #tpu.pipeline_mode<synchronous>, transform_indices = @transform_18, window_bounds = array<i64: 256, 32>}, {pipeline_mode = #tpu.pipeline_mode<synchronous>, transform_indices = @transform_19, window_bounds = array<i64: 512, 32>}, {pipeline_mode = #tpu.pipeline_mode<synchronous>, transform_indices = @transform_20, window_bounds = array<i64: 328, 128>}, {transform_indices = @transform_21, window_bounds = array<i64: 1, 1, 128>}]} {
    %c0 = arith.constant 0 : index
    %c0_0 = arith.constant 0 : index
    %c0_1 = arith.constant 0 : index
    %0 = vector.load %arg1[%c0, %c0_0, %c0_1] : memref<16x8x7xf32, #tpu.memory_space<vmem>>, vector<16x8x7xf32>
    %1 = vector.shape_cast %0 : vector<16x8x7xf32> to vector<128x7xf32>
    %c0_2 = arith.constant 0 : index
    %c0_3 = arith.constant 0 : index
    %c0_4 = arith.constant 0 : index
    %2 = vector.load %arg2[%c0_2, %c0_3, %c0_4] : memref<16x16x3xf32, #tpu.memory_space<vmem>>, vector<16x16x3xf32>
    %3 = vector.shape_cast %2 : vector<16x16x3xf32> to vector<256x3xf32>
    %c0_5 = arith.constant 0 : index
    %c0_6 = arith.constant 0 : index
    %4 = vector.load %arg3[%c0_5, %c0_6] : memref<16x5xf32, #tpu.memory_space<vmem>>, vector<16x5xf32>
    %c0_7 = arith.constant 0 : index
    %c0_8 = arith.constant 0 : index
    %5 = vector.load %arg8[%c0_7, %c0_8] : memref<7x64xf32, #tpu.memory_space<vmem>>, vector<7x64xf32>
    %cst = arith.constant dense<0.000000e+00> : vector<128x64xf32>
    %6 = tpu.matmul %1, %5, %cst {dimension_numbers = #tpu.dot_dimension_numbers<[1], [0], [0], [1], [0, 0, 1, 1], [], []>} : vector<128x7xf32>, vector<7x64xf32>, vector<128x64xf32> -> vector<128x64xf32>
    %7 = vector.extract_strided_slice %6 {offsets = [0, 0], sizes = [128, 32], strides = [1, 1]} : vector<128x64xf32> to vector<128x32xf32>
    %8 = vector.extract_strided_slice %6 {offsets = [0, 32], sizes = [128, 32], strides = [1, 1]} : vector<128x64xf32> to vector<128x32xf32>
    %c0_9 = arith.constant 0 : index
    %c0_10 = arith.constant 0 : index
    %9 = vector.load %arg9[%c0_9, %c0_10] : memref<3x64xf32, #tpu.memory_space<vmem>>, vector<3x64xf32>
    %cst_11 = arith.constant dense<0.000000e+00> : vector<256x64xf32>
    %10 = tpu.matmul %3, %9, %cst_11 {dimension_numbers = #tpu.dot_dimension_numbers<[1], [0], [0], [1], [0, 0, 1, 1], [], []>} : vector<256x3xf32>, vector<3x64xf32>, vector<256x64xf32> -> vector<256x64xf32>
    %11 = vector.extract_strided_slice %10 {offsets = [0, 0], sizes = [256, 32], strides = [1, 1]} : vector<256x64xf32> to vector<256x32xf32>
    %12 = vector.extract_strided_slice %10 {offsets = [0, 32], sizes = [256, 32], strides = [1, 1]} : vector<256x64xf32> to vector<256x32xf32>
    %c0_12 = arith.constant 0 : index
    %c0_13 = arith.constant 0 : index
    %13 = vector.load %arg10[%c0_12, %c0_13] : memref<5x64xf32, #tpu.memory_space<vmem>>, vector<5x64xf32>
    %cst_14 = arith.constant dense<0.000000e+00> : vector<16x64xf32>
    %14 = tpu.matmul %4, %13, %cst_14 {dimension_numbers = #tpu.dot_dimension_numbers<[1], [0], [0], [1], [0, 0, 1, 1], [], []>} : vector<16x5xf32>, vector<5x64xf32>, vector<16x64xf32> -> vector<16x64xf32>
    %15 = vector.extract_strided_slice %14 {offsets = [0, 0], sizes = [16, 32], strides = [1, 1]} : vector<16x64xf32> to vector<16x32xf32>
    %16 = vector.extract_strided_slice %14 {offsets = [0, 32], sizes = [16, 32], strides = [1, 1]} : vector<16x64xf32> to vector<16x32xf32>
    %c0_15 = arith.constant 0 : index
    %c0_16 = arith.constant 0 : index
    %c0_17 = arith.constant 0 : index
    %17 = vector.load %arg4[%c0_15, %c0_16, %c0_17] : memref<16x16x8xf32, #tpu.memory_space<vmem>>, vector<16x16x8xf32>
    %18 = vector.shape_cast %17 : vector<16x16x8xf32> to vector<256x8xf32>
    %c0_18 = arith.constant 0 : index
    %c0_19 = arith.constant 0 : index
    %c0_20 = arith.constant 0 : index
    %19 = vector.load %arg5[%c0_18, %c0_19, %c0_20] : memref<16x8x16xf32, #tpu.memory_space<vmem>>, vector<16x8x16xf32>
    %20 = vector.shape_cast %19 : vector<16x8x16xf32> to vector<128x16xf32>
    %cst_21 = arith.constant dense<0.000000e+00> : vector<256xf32>
    %21 = vector.multi_reduction <add>, %18, %cst_21 [1] : vector<256x8xf32> to vector<256xf32>
    %22 = vector.shape_cast %21 : vector<256xf32> to vector<256x1xf32>
    %cst_22 = arith.constant 1.000000e+00 : f32
    %23 = vector.broadcast %cst_22 : f32 to vector<256x1xf32>
    %24 = arith.maximumf %22, %23 : vector<256x1xf32>
    %cst_23 = arith.constant dense<0.000000e+00> : vector<128xf32>
    %25 = vector.multi_reduction <add>, %20, %cst_23 [1] : vector<128x16xf32> to vector<128xf32>
    %26 = vector.shape_cast %25 : vector<128xf32> to vector<128x1xf32>
    %cst_24 = arith.constant 1.000000e+00 : f32
    %27 = vector.broadcast %cst_24 : f32 to vector<128x1xf32>
    %28 = arith.maximumf %26, %27 : vector<128x1xf32>
    %29 = vector.broadcast %24 : vector<256x1xf32> to vector<256x8xf32>
    %30 = arith.divf %18, %29 : vector<256x8xf32>
    %c0_25 = arith.constant 0 : index
    %c0_26 = arith.constant 0 : index
    %31 = vector.load %arg17[%c0_25, %c0_26] : memref<8x256xf32, #tpu.memory_space<vmem>>, vector<8x256xf32>
    %cst_27 = arith.constant dense<0.000000e+00> : vector<256x256xf32>
    %32 = tpu.matmul %30, %31, %cst_27 {dimension_numbers = #tpu.dot_dimension_numbers<[1], [0], [0], [1], [0, 0, 1, 1], [], []>} : vector<256x8xf32>, vector<8x256xf32>, vector<256x256xf32> -> vector<256x256xf32>
    %33 = vector.shape_cast %32 : vector<256x256xf32> to vector<16x16x256xf32>
    %34 = vector.broadcast %28 : vector<128x1xf32> to vector<128x16xf32>
    %35 = arith.divf %20, %34 : vector<128x16xf32>
    %c0_28 = arith.constant 0 : index
    %c0_29 = arith.constant 0 : index
    %36 = vector.load %arg18[%c0_28, %c0_29] : memref<16x512xf32, #tpu.memory_space<vmem>>, vector<16x512xf32>
    %cst_30 = arith.constant dense<0.000000e+00> : vector<128x512xf32>
    %37 = tpu.matmul %35, %36, %cst_30 {dimension_numbers = #tpu.dot_dimension_numbers<[1], [0], [0], [1], [0, 0, 1, 1], [], []>} : vector<128x16xf32>, vector<16x512xf32>, vector<128x512xf32> -> vector<128x512xf32>
    %38 = vector.shape_cast %37 : vector<128x512xf32> to vector<16x8x512xf32>
    %c0_31 = arith.constant 0 : index
    %c0_32 = arith.constant 0 : index
    %c0_33 = arith.constant 0 : index
    %39 = vector.load %arg6[%c0_31, %c0_32, %c0_33] : memref<16x16x24xf32, #tpu.memory_space<vmem>>, vector<16x16x24xf32>
    %40 = vector.shape_cast %39 : vector<16x16x24xf32> to vector<256x24xf32>
    %c0_34 = arith.constant 0 : index
    %c0_35 = arith.constant 0 : index
    %c0_36 = arith.constant 0 : index
    %41 = vector.load %arg7[%c0_34, %c0_35, %c0_36] : memref<16x8x48xf32, #tpu.memory_space<vmem>>, vector<16x8x48xf32>
    %42 = vector.shape_cast %41 : vector<16x8x48xf32> to vector<128x48xf32>
    %c0_37 = arith.constant 0 : index
    %c0_38 = arith.constant 0 : index
    %43 = vector.load %arg15[%c0_37, %c0_38] : memref<24x256xf32, #tpu.memory_space<vmem>>, vector<24x256xf32>
    %cst_39 = arith.constant dense<0.000000e+00> : vector<256x256xf32>
    %44 = tpu.matmul %40, %43, %cst_39 {dimension_numbers = #tpu.dot_dimension_numbers<[1], [0], [0], [1], [0, 0, 1, 1], [], []>} : vector<256x24xf32>, vector<24x256xf32>, vector<256x256xf32> -> vector<256x256xf32>
    %45 = vector.shape_cast %44 : vector<256x256xf32> to vector<16x16x256xf32>
    %c0_40 = arith.constant 0 : index
    %c0_41 = arith.constant 0 : index
    %46 = vector.load %arg16[%c0_40, %c0_41] : memref<48x512xf32, #tpu.memory_space<vmem>>, vector<48x512xf32>
    %cst_42 = arith.constant dense<0.000000e+00> : vector<128x512xf32>
    %47 = tpu.matmul %42, %46, %cst_42 {dimension_numbers = #tpu.dot_dimension_numbers<[1], [0], [0], [1], [0, 0, 1, 1], [], []>} : vector<128x48xf32>, vector<48x512xf32>, vector<128x512xf32> -> vector<128x512xf32>
    %48 = vector.shape_cast %47 : vector<128x512xf32> to vector<16x8x512xf32>
    %c0_43 = arith.constant 0 : index
    %c0_44 = arith.constant 0 : index
    %49 = vector.load %arg11[%c0_43, %c0_44] : memref<32x64xf32, #tpu.memory_space<vmem>>, vector<32x64xf32>
    %c0_45 = arith.constant 0 : index
    %c0_46 = arith.constant 0 : index
    %50 = vector.load %arg12[%c0_45, %c0_46] : memref<32x64xf32, #tpu.memory_space<vmem>>, vector<32x64xf32>
    %c0_47 = arith.constant 0 : index
    %c0_48 = arith.constant 0 : index
    %51 = vector.load %arg13[%c0_47, %c0_48] : memref<32x96xf32, #tpu.memory_space<vmem>>, vector<32x96xf32>
    %c0_49 = arith.constant 0 : index
    %c0_50 = arith.constant 0 : index
    %52 = vector.load %arg14[%c0_49, %c0_50] : memref<64x32xf32, #tpu.memory_space<vmem>>, vector<64x32xf32>
    %c0_51 = arith.constant 0 : index
    %c0_52 = arith.constant 0 : index
    %53 = vector.load %arg19[%c0_51, %c0_52] : memref<256x32xf32, #tpu.memory_space<vmem>>, vector<256x32xf32>
    %c0_53 = arith.constant 0 : index
    %c0_54 = arith.constant 0 : index
    %54 = vector.load %arg20[%c0_53, %c0_54] : memref<512x32xf32, #tpu.memory_space<vmem>>, vector<512x32xf32>
    %c0_i32 = arith.constant 0 : i32
    %c5_i32 = arith.constant 5 : i32
    %55 = arith.addi %c0_i32, %c5_i32 : i32
    %c1_i32 = arith.constant 1 : i32
    %56:3 = scf.for %arg23 = %c0_i32 to %55 step %c1_i32 iter_args(%arg24 = %7, %arg25 = %11, %arg26 = %15) -> (vector<128x32xf32>, vector<256x32xf32>, vector<16x32xf32>)  : i32 {
      %cst_74 = arith.constant dense<0.000000e+00> : vector<16x96xf32>
      %86 = tpu.matmul %arg26, %51, %cst_74 {dimension_numbers = #tpu.dot_dimension_numbers<[1], [0], [0], [1], [0, 0, 1, 1], [], []>} : vector<16x32xf32>, vector<32x96xf32>, vector<16x96xf32> -> vector<16x96xf32>
      %87 = vector.extract_strided_slice %86 {offsets = [0, 0], sizes = [16, 32], strides = [1, 1]} : vector<16x96xf32> to vector<16x32xf32>
      %88 = vector.extract_strided_slice %86 {offsets = [0, 32], sizes = [16, 32], strides = [1, 1]} : vector<16x96xf32> to vector<16x32xf32>
      %89 = vector.extract_strided_slice %86 {offsets = [0, 64], sizes = [16, 32], strides = [1, 1]} : vector<16x96xf32> to vector<16x32xf32>
      %cst_75 = arith.constant dense<0.000000e+00> : vector<128x64xf32>
      %90 = tpu.matmul %arg24, %49, %cst_75 {dimension_numbers = #tpu.dot_dimension_numbers<[1], [0], [0], [1], [0, 0, 1, 1], [], []>} : vector<128x32xf32>, vector<32x64xf32>, vector<128x64xf32> -> vector<128x64xf32>
      %91 = vector.extract_strided_slice %90 {offsets = [0, 0], sizes = [128, 32], strides = [1, 1]} : vector<128x64xf32> to vector<128x32xf32>
      %92 = vector.extract_strided_slice %90 {offsets = [0, 32], sizes = [128, 32], strides = [1, 1]} : vector<128x64xf32> to vector<128x32xf32>
      %cst_76 = arith.constant dense<0.000000e+00> : vector<256x64xf32>
      %93 = tpu.matmul %arg25, %50, %cst_76 {dimension_numbers = #tpu.dot_dimension_numbers<[1], [0], [0], [1], [0, 0, 1, 1], [], []>} : vector<256x32xf32>, vector<32x64xf32>, vector<256x64xf32> -> vector<256x64xf32>
      %94 = vector.extract_strided_slice %93 {offsets = [0, 0], sizes = [256, 32], strides = [1, 1]} : vector<256x64xf32> to vector<256x32xf32>
      %95 = vector.extract_strided_slice %93 {offsets = [0, 32], sizes = [256, 32], strides = [1, 1]} : vector<256x64xf32> to vector<256x32xf32>
      %96 = vector.shape_cast %91 : vector<128x32xf32> to vector<16x8x32xf32>
      %97 = vector.extract_strided_slice %96 {offsets = [0, 0, 0], sizes = [16, 1, 32], strides = [1, 1, 1]} : vector<16x8x32xf32> to vector<16x1x32xf32>
      %98 = vector.extract_strided_slice %96 {offsets = [0, 1, 0], sizes = [16, 1, 32], strides = [1, 1, 1]} : vector<16x8x32xf32> to vector<16x1x32xf32>
      %99 = vector.extract_strided_slice %96 {offsets = [0, 2, 0], sizes = [16, 1, 32], strides = [1, 1, 1]} : vector<16x8x32xf32> to vector<16x1x32xf32>
      %100 = vector.extract_strided_slice %96 {offsets = [0, 3, 0], sizes = [16, 1, 32], strides = [1, 1, 1]} : vector<16x8x32xf32> to vector<16x1x32xf32>
      %101 = vector.extract_strided_slice %96 {offsets = [0, 4, 0], sizes = [16, 1, 32], strides = [1, 1, 1]} : vector<16x8x32xf32> to vector<16x1x32xf32>
      %102 = vector.extract_strided_slice %96 {offsets = [0, 5, 0], sizes = [16, 1, 32], strides = [1, 1, 1]} : vector<16x8x32xf32> to vector<16x1x32xf32>
      %103 = vector.extract_strided_slice %96 {offsets = [0, 6, 0], sizes = [16, 1, 32], strides = [1, 1, 1]} : vector<16x8x32xf32> to vector<16x1x32xf32>
      %104 = vector.extract_strided_slice %96 {offsets = [0, 7, 0], sizes = [16, 1, 32], strides = [1, 1, 1]} : vector<16x8x32xf32> to vector<16x1x32xf32>
      %105 = tpu.concatenate %97, %98, %99, %100, %101, %102, %103, %104 in 2 : vector<16x1x32xf32>, vector<16x1x32xf32>, vector<16x1x32xf32>, vector<16x1x32xf32>, vector<16x1x32xf32>, vector<16x1x32xf32>, vector<16x1x32xf32>, vector<16x1x32xf32> -> vector<16x1x256xf32>
      %106 = vector.broadcast %105 : vector<16x1x256xf32> to vector<16x16x256xf32>
      %107 = arith.addf %45, %106 : vector<16x16x256xf32>
      %cst_77 = arith.constant 1.000000e-01 : f32
      %108 = vector.broadcast %cst_77 : f32 to vector<16x16x256xf32>
      %109 = arith.mulf %108, %107 : vector<16x16x256xf32>
      %110 = arith.maximumf %107, %109 : vector<16x16x256xf32>
      %111 = arith.mulf %33, %110 : vector<16x16x256xf32>
      %112 = vector.shape_cast %111 : vector<16x16x256xf32> to vector<256x256xf32>
      %cst_78 = arith.constant dense<0.000000e+00> : vector<256x32xf32>
      %113 = tpu.matmul %112, %53, %cst_78 {dimension_numbers = #tpu.dot_dimension_numbers<[1], [0], [0], [1], [0, 0, 1, 1], [], []>} : vector<256x256xf32>, vector<256x32xf32>, vector<256x32xf32> -> vector<256x32xf32>
      %114 = vector.shape_cast %94 : vector<256x32xf32> to vector<16x16x32xf32>
      %115 = vector.extract_strided_slice %114 {offsets = [0, 0, 0], sizes = [16, 1, 32], strides = [1, 1, 1]} : vector<16x16x32xf32> to vector<16x1x32xf32>
      %116 = vector.extract_strided_slice %114 {offsets = [0, 1, 0], sizes = [16, 1, 32], strides = [1, 1, 1]} : vector<16x16x32xf32> to vector<16x1x32xf32>
      %117 = vector.extract_strided_slice %114 {offsets = [0, 2, 0], sizes = [16, 1, 32], strides = [1, 1, 1]} : vector<16x16x32xf32> to vector<16x1x32xf32>
      %118 = vector.extract_strided_slice %114 {offsets = [0, 3, 0], sizes = [16, 1, 32], strides = [1, 1, 1]} : vector<16x16x32xf32> to vector<16x1x32xf32>
      %119 = vector.extract_strided_slice %114 {offsets = [0, 4, 0], sizes = [16, 1, 32], strides = [1, 1, 1]} : vector<16x16x32xf32> to vector<16x1x32xf32>
      %120 = vector.extract_strided_slice %114 {offsets = [0, 5, 0], sizes = [16, 1, 32], strides = [1, 1, 1]} : vector<16x16x32xf32> to vector<16x1x32xf32>
      %121 = vector.extract_strided_slice %114 {offsets = [0, 6, 0], sizes = [16, 1, 32], strides = [1, 1, 1]} : vector<16x16x32xf32> to vector<16x1x32xf32>
      %122 = vector.extract_strided_slice %114 {offsets = [0, 7, 0], sizes = [16, 1, 32], strides = [1, 1, 1]} : vector<16x16x32xf32> to vector<16x1x32xf32>
      %123 = vector.extract_strided_slice %114 {offsets = [0, 8, 0], sizes = [16, 1, 32], strides = [1, 1, 1]} : vector<16x16x32xf32> to vector<16x1x32xf32>
      %124 = vector.extract_strided_slice %114 {offsets = [0, 9, 0], sizes = [16, 1, 32], strides = [1, 1, 1]} : vector<16x16x32xf32> to vector<16x1x32xf32>
      %125 = vector.extract_strided_slice %114 {offsets = [0, 10, 0], sizes = [16, 1, 32], strides = [1, 1, 1]} : vector<16x16x32xf32> to vector<16x1x32xf32>
      %126 = vector.extract_strided_slice %114 {offsets = [0, 11, 0], sizes = [16, 1, 32], strides = [1, 1, 1]} : vector<16x16x32xf32> to vector<16x1x32xf32>
      %127 = vector.extract_strided_slice %114 {offsets = [0, 12, 0], sizes = [16, 1, 32], strides = [1, 1, 1]} : vector<16x16x32xf32> to vector<16x1x32xf32>
      %128 = vector.extract_strided_slice %114 {offsets = [0, 13, 0], sizes = [16, 1, 32], strides = [1, 1, 1]} : vector<16x16x32xf32> to vector<16x1x32xf32>
      %129 = vector.extract_strided_slice %114 {offsets = [0, 14, 0], sizes = [16, 1, 32], strides = [1, 1, 1]} : vector<16x16x32xf32> to vector<16x1x32xf32>
      %130 = vector.extract_strided_slice %114 {offsets = [0, 15, 0], sizes = [16, 1, 32], strides = [1, 1, 1]} : vector<16x16x32xf32> to vector<16x1x32xf32>
      %131 = tpu.concatenate %115, %116, %117, %118, %119, %120, %121, %122, %123, %124, %125, %126, %127, %128, %129, %130 in 2 : vector<16x1x32xf32>, vector<16x1x32xf32>, vector<16x1x32xf32>, vector<16x1x32xf32>, vector<16x1x32xf32>, vector<16x1x32xf32>, vector<16x1x32xf32>, vector<16x1x32xf32>, vector<16x1x32xf32>, vector<16x1x32xf32>, vector<16x1x32xf32>, vector<16x1x32xf32>, vector<16x1x32xf32>, vector<16x1x32xf32>, vector<16x1x32xf32>, vector<16x1x32xf32> -> vector<16x1x512xf32>
      %132 = vector.broadcast %131 : vector<16x1x512xf32> to vector<16x8x512xf32>
      %133 = arith.addf %48, %132 : vector<16x8x512xf32>
      %cst_79 = arith.constant 1.000000e-01 : f32
      %134 = vector.broadcast %cst_79 : f32 to vector<16x8x512xf32>
      %135 = arith.mulf %134, %133 : vector<16x8x512xf32>
      %136 = arith.maximumf %133, %135 : vector<16x8x512xf32>
      %137 = arith.mulf %38, %136 : vector<16x8x512xf32>
      %138 = vector.shape_cast %137 : vector<16x8x512xf32> to vector<128x512xf32>
      %cst_80 = arith.constant dense<0.000000e+00> : vector<128x32xf32>
      %139 = tpu.matmul %138, %54, %cst_80 {dimension_numbers = #tpu.dot_dimension_numbers<[1], [0], [0], [1], [0, 0, 1, 1], [], []>} : vector<128x512xf32>, vector<512x32xf32>, vector<128x32xf32> -> vector<128x32xf32>
      %140 = arith.addf %12, %113 : vector<256x32xf32>
      %141 = arith.addf %140, %95 : vector<256x32xf32>
      %142 = vector.shape_cast %141 : vector<256x32xf32> to vector<16x16x32xf32>
      %143 = vector.shape_cast %87 : vector<16x32xf32> to vector<16x1x32xf32>
      %144 = vector.broadcast %143 : vector<16x1x32xf32> to vector<16x16x32xf32>
      %145 = arith.addf %142, %144 : vector<16x16x32xf32>
      %cst_81 = arith.constant 1.000000e-01 : f32
      %146 = vector.broadcast %cst_81 : f32 to vector<16x16x32xf32>
      %147 = arith.mulf %146, %145 : vector<16x16x32xf32>
      %148 = arith.maximumf %145, %147 : vector<16x16x32xf32>
      %149 = vector.shape_cast %148 : vector<16x16x32xf32> to vector<256x32xf32>
      %150 = arith.addf %8, %139 : vector<128x32xf32>
      %151 = arith.addf %150, %92 : vector<128x32xf32>
      %152 = vector.shape_cast %151 : vector<128x32xf32> to vector<16x8x32xf32>
      %153 = vector.shape_cast %88 : vector<16x32xf32> to vector<16x1x32xf32>
      %154 = vector.broadcast %153 : vector<16x1x32xf32> to vector<16x8x32xf32>
      %155 = arith.addf %152, %154 : vector<16x8x32xf32>
      %cst_82 = arith.constant 1.000000e-01 : f32
      %156 = vector.broadcast %cst_82 : f32 to vector<16x8x32xf32>
      %157 = arith.mulf %156, %155 : vector<16x8x32xf32>
      %158 = arith.maximumf %155, %157 : vector<16x8x32xf32>
      %159 = vector.shape_cast %158 : vector<16x8x32xf32> to vector<128x32xf32>
      %160 = vector.shape_cast %149 : vector<256x32xf32> to vector<16x16x32xf32>
      %cst_83 = arith.constant dense<0.000000e+00> : vector<16x32xf32>
      %161 = vector.multi_reduction <add>, %160, %cst_83 [1] : vector<16x16x32xf32> to vector<16x32xf32>
      %cst_84 = arith.constant 6.250000e-02 : f32
      %162 = vector.broadcast %cst_84 : f32 to vector<16x32xf32>
      %163 = arith.mulf %161, %162 : vector<16x32xf32>
      %164 = vector.shape_cast %159 : vector<128x32xf32> to vector<16x8x32xf32>
      %cst_85 = arith.constant dense<0.000000e+00> : vector<16x32xf32>
      %165 = vector.multi_reduction <add>, %164, %cst_85 [1] : vector<16x8x32xf32> to vector<16x32xf32>
      %cst_86 = arith.constant 1.250000e-01 : f32
      %166 = vector.broadcast %cst_86 : f32 to vector<16x32xf32>
      %167 = arith.mulf %165, %166 : vector<16x32xf32>
      %168 = arith.addf %16, %89 : vector<16x32xf32>
      %169 = tpu.concatenate %163, %167 in 1 : vector<16x32xf32>, vector<16x32xf32> -> vector<16x64xf32>
      %cst_87 = arith.constant dense<0.000000e+00> : vector<16x32xf32>
      %170 = tpu.matmul %169, %52, %cst_87 {dimension_numbers = #tpu.dot_dimension_numbers<[1], [0], [0], [1], [0, 0, 1, 1], [], []>} : vector<16x64xf32>, vector<64x32xf32>, vector<16x32xf32> -> vector<16x32xf32>
      %171 = arith.addf %168, %170 : vector<16x32xf32>
      %cst_88 = arith.constant 1.000000e-01 : f32
      %172 = vector.broadcast %cst_88 : f32 to vector<16x32xf32>
      %173 = arith.mulf %172, %171 : vector<16x32xf32>
      %174 = arith.maximumf %171, %173 : vector<16x32xf32>
      scf.yield %159, %149, %174 : vector<128x32xf32>, vector<256x32xf32>, vector<16x32xf32>
    }
    %c0_55 = arith.constant 0 : index
    %c0_56 = arith.constant 0 : index
    %57 = vector.load %arg21[%c0_55, %c0_56] : memref<328x128xf32, #tpu.memory_space<vmem>>, vector<32x128xf32>
    %cst_57 = arith.constant dense<0.000000e+00> : vector<128x128xf32>
    %58 = tpu.matmul %56#0, %57, %cst_57 {dimension_numbers = #tpu.dot_dimension_numbers<[1], [0], [0], [1], [0, 0, 1, 1], [], []>} : vector<128x32xf32>, vector<32x128xf32>, vector<128x128xf32> -> vector<128x128xf32>
    %c32 = arith.constant 32 : index
    %c0_58 = arith.constant 0 : index
    %59 = vector.load %arg21[%c32, %c0_58] : memref<328x128xf32, #tpu.memory_space<vmem>>, vector<1x128xf32>
    %60 = vector.broadcast %59 : vector<1x128xf32> to vector<128x128xf32>
    %61 = arith.addf %58, %60 : vector<128x128xf32>
    %cst_59 = arith.constant 0.000000e+00 : f32
    %62 = vector.broadcast %cst_59 : f32 to vector<128x128xf32>
    %63 = arith.maximumf %61, %62 : vector<128x128xf32>
    %c40 = arith.constant 40 : index
    %c0_60 = arith.constant 0 : index
    %64 = vector.load %arg21[%c40, %c0_60] : memref<328x128xf32, #tpu.memory_space<vmem>>, vector<128x128xf32>
    %cst_61 = arith.constant dense<0.000000e+00> : vector<128x128xf32>
    %65 = tpu.matmul %63, %64, %cst_61 {dimension_numbers = #tpu.dot_dimension_numbers<[1], [0], [0], [1], [0, 0, 1, 1], [], []>} : vector<128x128xf32>, vector<128x128xf32>, vector<128x128xf32> -> vector<128x128xf32>
    %c168 = arith.constant 168 : index
    %c0_62 = arith.constant 0 : index
    %66 = vector.load %arg21[%c168, %c0_62] : memref<328x128xf32, #tpu.memory_space<vmem>>, vector<1x128xf32>
    %67 = vector.broadcast %66 : vector<1x128xf32> to vector<128x128xf32>
    %68 = arith.addf %65, %67 : vector<128x128xf32>
    %cst_63 = arith.constant 0.000000e+00 : f32
    %69 = vector.broadcast %cst_63 : f32 to vector<128x128xf32>
    %70 = arith.maximumf %68, %69 : vector<128x128xf32>
    %c176 = arith.constant 176 : index
    %c0_64 = arith.constant 0 : index
    %71 = vector.load %arg21[%c176, %c0_64] : memref<328x128xf32, #tpu.memory_space<vmem>>, vector<128x128xf32>
    %cst_65 = arith.constant dense<0.000000e+00> : vector<128x128xf32>
    %72 = tpu.matmul %70, %71, %cst_65 {dimension_numbers = #tpu.dot_dimension_numbers<[1], [0], [0], [1], [0, 0, 1, 1], [], []>} : vector<128x128xf32>, vector<128x128xf32>, vector<128x128xf32> -> vector<128x128xf32>
    %c304 = arith.constant 304 : index
    %c0_66 = arith.constant 0 : index
    %73 = vector.load %arg21[%c304, %c0_66] : memref<328x128xf32, #tpu.memory_space<vmem>>, vector<1x128xf32>
    %74 = vector.broadcast %73 : vector<1x128xf32> to vector<128x128xf32>
    %75 = arith.addf %72, %74 : vector<128x128xf32>
    %cst_67 = arith.constant 0.000000e+00 : f32
    %76 = vector.broadcast %cst_67 : f32 to vector<128x128xf32>
    %77 = arith.maximumf %75, %76 : vector<128x128xf32>
    %c312 = arith.constant 312 : index
    %c0_68 = arith.constant 0 : index
    %78 = vector.load %arg21[%c312, %c0_68] : memref<328x128xf32, #tpu.memory_space<vmem>>, vector<1x128xf32>
    "tpu.trace_start"() <{level = 10 : i32, message = "oh,vh->ov"}> : () -> ()
    %cst_69 = arith.constant dense<0.000000e+00> : vector<1x128xf32>
    %79 = tpu.matmul %78, %77, %cst_69 {dimension_numbers = #tpu.dot_dimension_numbers<[1], [1], [0], [0], [0, 0, 1, 0], [], []>} : vector<1x128xf32>, vector<128x128xf32>, vector<1x128xf32> -> vector<1x128xf32>
    "tpu.trace_stop"() : () -> ()
    %c320 = arith.constant 320 : index
    %c0_70 = arith.constant 0 : index
    %80 = vector.load %arg21[%c320, %c0_70] : memref<328x128xf32, #tpu.memory_space<vmem>>, vector<1x128xf32>
    %81 = vector.extract_strided_slice %80 {offsets = [0, 0], sizes = [1, 1], strides = [1, 1]} : vector<1x128xf32> to vector<1x1xf32>
    %82 = vector.broadcast %81 : vector<1x1xf32> to vector<1x128xf32>
    %83 = arith.addf %79, %82 : vector<1x128xf32>
    %84 = vector.shape_cast %83 : vector<1x128xf32> to vector<1x1x128xf32>
    %c0_71 = arith.constant 0 : index
    %c0_72 = arith.constant 0 : index
    %c0_73 = arith.constant 0 : index
    %85 = vector.load %arg22[%c0_71, %c0_72, %c0_73] : memref<1x1x128xf32, #tpu.memory_space<vmem>>, vector<1x1x128xf32>
    tpu.vector_store %arg22[%c0_71, %c0_72, %c0_73], %84 {strides = array<i32>} : memref<1x1x128xf32, #tpu.memory_space<vmem>>, vector<1x1x128xf32>,
    return
  }
  func.func @transform_0(%arg0: i32) -> (i32, i32, i32) {
    %c0_i32 = arith.constant 0 : i32
    %c0_i32_0 = arith.constant 0 : i32
    %c0_i32_1 = arith.constant 0 : i32
    return %arg0, %c0_i32, %c0_i32_0 : i32, i32, i32
  }
  func.func @transform_1(%arg0: i32) -> (i32, i32, i32) {
    %c0_i32 = arith.constant 0 : i32
    %c0_i32_0 = arith.constant 0 : i32
    %c0_i32_1 = arith.constant 0 : i32
    return %arg0, %c0_i32, %c0_i32_0 : i32, i32, i32
  }
  func.func @transform_2(%arg0: i32) -> (i32, i32) {
    %c0_i32 = arith.constant 0 : i32
    %c0_i32_0 = arith.constant 0 : i32
    return %arg0, %c0_i32 : i32, i32
  }
  func.func @transform_3(%arg0: i32) -> (i32, i32, i32) {
    %c0_i32 = arith.constant 0 : i32
    %c0_i32_0 = arith.constant 0 : i32
    %c0_i32_1 = arith.constant 0 : i32
    return %arg0, %c0_i32, %c0_i32_0 : i32, i32, i32
  }
  func.func @transform_4(%arg0: i32) -> (i32, i32, i32) {
    %c0_i32 = arith.constant 0 : i32
    %c0_i32_0 = arith.constant 0 : i32
    %c0_i32_1 = arith.constant 0 : i32
    return %arg0, %c0_i32, %c0_i32_0 : i32, i32, i32
  }
  func.func @transform_5(%arg0: i32) -> (i32, i32, i32) {
    %c0_i32 = arith.constant 0 : i32
    %c0_i32_0 = arith.constant 0 : i32
    %c0_i32_1 = arith.constant 0 : i32
    return %arg0, %c0_i32, %c0_i32_0 : i32, i32, i32
  }
  func.func @transform_6(%arg0: i32) -> (i32, i32, i32) {
    %c0_i32 = arith.constant 0 : i32
    %c0_i32_0 = arith.constant 0 : i32
    %c0_i32_1 = arith.constant 0 : i32
    return %arg0, %c0_i32, %c0_i32_0 : i32, i32, i32
  }
  func.func @transform_7(%arg0: i32) -> (i32, i32) {
    %c0_i32 = arith.constant 0 : i32
    %c0_i32_0 = arith.constant 0 : i32
    %c0_i32_1 = arith.constant 0 : i32
    return %c0_i32, %c0_i32_0 : i32, i32
  }
  func.func @transform_8(%arg0: i32) -> (i32, i32) {
    %c0_i32 = arith.constant 0 : i32
    %c0_i32_0 = arith.constant 0 : i32
    %c0_i32_1 = arith.constant 0 : i32
    return %c0_i32, %c0_i32_0 : i32, i32
  }
  func.func @transform_9(%arg0: i32) -> (i32, i32) {
    %c0_i32 = arith.constant 0 : i32
    %c0_i32_0 = arith.constant 0 : i32
    %c0_i32_1 = arith.constant 0 : i32
    return %c0_i32, %c0_i32_0 : i32, i32
  }
  func.func @transform_10(%arg0: i32) -> (i32, i32) {
    %c0_i32 = arith.constant 0 : i32
    %c0_i32_0 = arith.constant 0 : i32
    %c0_i32_1 = arith.constant 0 : i32
    return %c0_i32, %c0_i32_0 : i32, i32
  }
  func.func @transform_11(%arg0: i32) -> (i32, i32) {
    %c0_i32 = arith.constant 0 : i32
    %c0_i32_0 = arith.constant 0 : i32
    %c0_i32_1 = arith.constant 0 : i32
    return %c0_i32, %c0_i32_0 : i32, i32
  }
  func.func @transform_12(%arg0: i32) -> (i32, i32) {
    %c0_i32 = arith.constant 0 : i32
    %c0_i32_0 = arith.constant 0 : i32
    %c0_i32_1 = arith.constant 0 : i32
    return %c0_i32, %c0_i32_0 : i32, i32
  }
  func.func @transform_13(%arg0: i32) -> (i32, i32) {
    %c0_i32 = arith.constant 0 : i32
    %c0_i32_0 = arith.constant 0 : i32
    %c0_i32_1 = arith.constant 0 : i32
    return %c0_i32, %c0_i32_0 : i32, i32
  }
  func.func @transform_14(%arg0: i32) -> (i32, i32) {
    %c0_i32 = arith.constant 0 : i32
    %c0_i32_0 = arith.constant 0 : i32
    %c0_i32_1 = arith.constant 0 : i32
    return %c0_i32, %c0_i32_0 : i32, i32
  }
  func.func @transform_15(%arg0: i32) -> (i32, i32) {
    %c0_i32 = arith.constant 0 : i32
    %c0_i32_0 = arith.constant 0 : i32
    %c0_i32_1 = arith.constant 0 : i32
    return %c0_i32, %c0_i32_0 : i32, i32
  }
  func.func @transform_16(%arg0: i32) -> (i32, i32) {
    %c0_i32 = arith.constant 0 : i32
    %c0_i32_0 = arith.constant 0 : i32
    %c0_i32_1 = arith.constant 0 : i32
    return %c0_i32, %c0_i32_0 : i32, i32
  }
  func.func @transform_17(%arg0: i32) -> (i32, i32) {
    %c0_i32 = arith.constant 0 : i32
    %c0_i32_0 = arith.constant 0 : i32
    %c0_i32_1 = arith.constant 0 : i32
    return %c0_i32, %c0_i32_0 : i32, i32
  }
  func.func @transform_18(%arg0: i32) -> (i32, i32) {
    %c0_i32 = arith.constant 0 : i32
    %c0_i32_0 = arith.constant 0 : i32
    %c0_i32_1 = arith.constant 0 : i32
    return %c0_i32, %c0_i32_0 : i32, i32
  }
  func.func @transform_19(%arg0: i32) -> (i32, i32) {
    %c0_i32 = arith.constant 0 : i32
    %c0_i32_0 = arith.constant 0 : i32
    %c0_i32_1 = arith.constant 0 : i32
    return %c0_i32, %c0_i32_0 : i32, i32
  }
  func.func @transform_20(%arg0: i32) -> (i32, i32) {
    %c0_i32 = arith.constant 0 : i32
    %c0_i32_0 = arith.constant 0 : i32
    %c0_i32_1 = arith.constant 0 : i32
    return %c0_i32, %c0_i32_0 : i32, i32
  }
  func.func @transform_21(%arg0: i32) -> (i32, i32, i32) {
    %c0_i32 = arith.constant 0 : i32
    %c0_i32_0 = arith.constant 0 : i32
    %c0_i32_1 = arith.constant 0 : i32
    return %arg0, %c0_i32, %c0_i32_0 : i32, i32, i32
  }
}

</mosaic_0001>

<llo_original>
// kernel: tpu_custom_call.1
$region0: #{tpu_custom_call.1}
  #allocation0 [shape = 'u32[]', space=smem, size = 0x4, offset = 0x4, fixed_abs, tag = 'smem constant byte address 0x4 - core index']
  #allocation1 [shape = 'u32[144,128]{1,0:T(1,128)}', space=vmem, size = 0x12000, scoped, tag = 'internal scratch']
  %s0 = inlined_call_operand.vmem [shape: f32[32,8,7], index: 0, kind: input, shape index: {}]
  %s1 = inlined_call_operand.vmem [shape: f32[32,16,3], index: 1, kind: input, shape index: {}]
  %s2 = inlined_call_operand.vmem [shape: f32[32,5], index: 2, kind: input, shape index: {}]
  %s3 = inlined_call_operand.vmem [shape: f32[32,16,8], index: 3, kind: input, shape index: {}]
  %s4 = inlined_call_operand.vmem [shape: f32[32,8,16], index: 4, kind: input, shape index: {}]
  %s5 = inlined_call_operand.vmem [shape: f32[32,16,24], index: 5, kind: input, shape index: {}]
  %s6 = inlined_call_operand.vmem [shape: f32[32,8,48], index: 6, kind: input, shape index: {}]
  %s7 = inlined_call_operand.vmem [shape: f32[7,64], index: 7, kind: input, shape index: {}]
  %s8 = inlined_call_operand.vmem [shape: f32[3,64], index: 8, kind: input, shape index: {}]
  %s9 = inlined_call_operand.vmem [shape: f32[5,64], index: 9, kind: input, shape index: {}]
  %s10 = inlined_call_operand.vmem [shape: f32[32,64], index: 10, kind: input, shape index: {}]
  %s11 = inlined_call_operand.vmem [shape: f32[32,64], index: 11, kind: input, shape index: {}]
  %s12 = inlined_call_operand.vmem [shape: f32[32,96], index: 12, kind: input, shape index: {}]
  %s13 = inlined_call_operand.vmem [shape: f32[64,32], index: 13, kind: input, shape index: {}]
  %s14 = inlined_call_operand.vmem [shape: f32[24,256], index: 14, kind: input, shape index: {}]
  %s15 = inlined_call_operand.vmem [shape: f32[48,512], index: 15, kind: input, shape index: {}]
  %s16 = inlined_call_operand.vmem [shape: f32[8,256], index: 16, kind: input, shape index: {}]
  %s17 = inlined_call_operand.vmem [shape: f32[16,512], index: 17, kind: input, shape index: {}]
  %s18 = inlined_call_operand.vmem [shape: f32[256,32], index: 18, kind: input, shape index: {}]
  %s19 = inlined_call_operand.vmem [shape: f32[512,32], index: 19, kind: input, shape index: {}]
  %s20 = inlined_call_operand.vmem [shape: f32[328,128], index: 20, kind: input, shape index: {}]
  %s21 = inlined_call_operand.hbm [shape: f32[2,1,128], index: 21, kind: output, shape index: {}]
  %s22 = sld [smem:[#allocation0]]
  $region124: #{tpu_custom_call.1} parent=0
    _
  %s24 = ssub.s32 1, %s22
  %s25 = scalar_select 0, %s24, %s22
  $region1: #{tpu_custom_call.1} parent=0
    #allocation2 [shape = 'u8[1024]{0}', space=vmem, size = 0x400, scoped, tag = 'output window, operand 0']
    #allocation3 [shape = 's32[2]{0}', space=sflag, size = 0x8, scoped, tag = 'scoped memory for tpu_custom_call.1']
    %26 = vsyncpa [#allocation3], 0
    %s27 = scalar_lea.sflag [#allocation3], 1
    %28 = vsyncpa %s27, 0
    loop: start=0, step=1, limit=4
    $region2: #{tpu_custom_call.1} parent=1 // loop_pre_header
      _
    $region3: #{tpu_custom_call.1} parent=1 // loop_header
      %s30 = sphi 0, %s34
      %p31 = scmp.ge.s32.totalorder %s30, 4
      %s40 = sphi 0, %s42
      %s43 = sphi 0, %s40
      %s44 = sphi 0, %s43
      %s60 = sphi 0, %s44
      %s66 = sphi 0, %s68
      %s69 = sphi 0, %s66
      %s70 = sphi 0, %s69
      %s86 = sphi 0, %s70
      %s92 = sphi 0, %s94
      %s95 = sphi 0, %s92
      %s96 = sphi 0, %s95
      %s112 = sphi 0, %s96
      %s118 = sphi 0, %s120
      %s121 = sphi 0, %s118
      %s122 = sphi 0, %s121
      %s138 = sphi 0, %s122
      %s144 = sphi 0, %s146
      %s147 = sphi 0, %s144
      %s148 = sphi 0, %s147
      %s164 = sphi 0, %s148
      %s170 = sphi 0, %s172
      %s173 = sphi 0, %s170
      %s174 = sphi 0, %s173
      %s190 = sphi 0, %s174
      %s196 = sphi 0, %s198
      %s199 = sphi 0, %s196
      %s200 = sphi 0, %s199
      %s216 = sphi 0, %s200
      %s220 = sphi 0, %s220
      %s222 = sphi 0, %s220
      %s223 = sphi 0, %s222
      %s237 = sphi 0, %s223
      %s241 = sphi 0, %s241
      %s243 = sphi 0, %s241
      %s244 = sphi 0, %s243
      %s258 = sphi 0, %s244
      %s262 = sphi 0, %s262
      %s264 = sphi 0, %s262
      %s265 = sphi 0, %s264
      %s279 = sphi 0, %s265
      %s283 = sphi 0, %s283
      %s285 = sphi 0, %s283
      %s286 = sphi 0, %s285
      %s300 = sphi 0, %s286
      %s304 = sphi 0, %s304
      %s306 = sphi 0, %s304
      %s307 = sphi 0, %s306
      %s321 = sphi 0, %s307
      %s325 = sphi 0, %s325
      %s327 = sphi 0, %s325
      %s328 = sphi 0, %s327
      %s342 = sphi 0, %s328
      %s346 = sphi 0, %s346
      %s348 = sphi 0, %s346
      %s349 = sphi 0, %s348
      %s363 = sphi 0, %s349
      %s367 = sphi 0, %s367
      %s369 = sphi 0, %s367
      %s370 = sphi 0, %s369
      %s384 = sphi 0, %s370
      %s388 = sphi 0, %s388
      %s390 = sphi 0, %s388
      %s391 = sphi 0, %s390
      %s405 = sphi 0, %s391
      %s409 = sphi 0, %s409
      %s411 = sphi 0, %s409
      %s412 = sphi 0, %s411
      %s426 = sphi 0, %s412
      %s430 = sphi 0, %s430
      %s432 = sphi 0, %s430
      %s433 = sphi 0, %s432
      %s447 = sphi 0, %s433
      %s451 = sphi 0, %s451
      %s453 = sphi 0, %s451
      %s454 = sphi 0, %s453
      %s468 = sphi 0, %s454
      %s472 = sphi 0, %s472
      %s474 = sphi 0, %s472
      %s475 = sphi 0, %s474
      %s489 = sphi 0, %s475
      %s493 = sphi 0, %s493
      %s495 = sphi 0, %s493
      %s496 = sphi 0, %s495
      %s510 = sphi 0, %s496
      %s516 = sphi 0, %s518
      %s519 = sphi 0, %s516
      %s520 = sphi 0, %s519
      %s536 = sphi 0, %s520
    $region4: #{tpu_custom_call.1} parent=1 // loop_header_branch
      %33 = sbr.rel (%p31) target = $region8
    $region5: #{tpu_custom_call.1} parent=1 // loop_body
      %s35 = ssub.s32 %s30, 1
      %s36 = ssub.s32 %s30, 2
      %s37 = sadd.s32 %s30, 1
      %s38 = ssub.s32 %s30, %s37
      %p39 = scmp.eq.s32.totalorder %s38, 0
      %s41 = sadd.s32 %s40, 1
      %s42 = scalar_select %p39, %s40, %s41
      %p45 = pneg %p39
      %p46 = scmp.eq.s32.totalorder %s30, 1
      %p47 = por %p45, %p46
      %p48 = scmp.ne.s32.totalorder %s40, %s43
      %p49 = scmp.eq.s32.totalorder %s30, 0
      %p50 = por %p48, %p49
      %p51 = scmp.ne.s32.totalorder %s40, %s43
      %p52 = scmp.eq.s32.totalorder %s35, 1
      %p53 = por %p51, %p52
      %p54 = scmp.ne.s32.totalorder %s43, %s44
      %p55 = scmp.eq.s32.totalorder %s35, 0
      %p56 = por %p54, %p55
      %p57 = scmp.ne.s32.totalorder %s43, %s44
      %p58 = scmp.eq.s32.totalorder %s36, 1
      %p59 = por %p57, %p58
      %p61 = scmp.ne.s32.totalorder %s44, %s60
      %p62 = scmp.eq.s32.totalorder %s36, 0
      %p63 = por %p61, %p62
      %s64 = ssub.s32 %s30, %s37
      %p65 = scmp.eq.s32.totalorder %s64, 0
      %s67 = sadd.s32 %s66, 1
      %s68 = scalar_select %p65, %s66, %s67
      %p71 = pneg %p65
      %p72 = scmp.eq.s32.totalorder %s30, 1
      %p73 = por %p71, %p72
      %p74 = scmp.ne.s32.totalorder %s66, %s69
      %p75 = scmp.eq.s32.totalorder %s30, 0
      %p76 = por %p74, %p75
      %p77 = scmp.ne.s32.totalorder %s66, %s69
      %p78 = scmp.eq.s32.totalorder %s35, 1
      %p79 = por %p77, %p78
      %p80 = scmp.ne.s32.totalorder %s69, %s70
      %p81 = scmp.eq.s32.totalorder %s35, 0
      %p82 = por %p80, %p81
      %p83 = scmp.ne.s32.totalorder %s69, %s70
      %p84 = scmp.eq.s32.totalorder %s36, 1
      %p85 = por %p83, %p84
      %p87 = scmp.ne.s32.totalorder %s70, %s86
      %p88 = scmp.eq.s32.totalorder %s36, 0
      %p89 = por %p87, %p88
      %s90 = ssub.s32 %s30, %s37
      %p91 = scmp.eq.s32.totalorder %s90, 0
      %s93 = sadd.s32 %s92, 1
      %s94 = scalar_select %p91, %s92, %s93
      %p97 = pneg %p91
      %p98 = scmp.eq.s32.totalorder %s30, 1
      %p99 = por %p97, %p98
      %p100 = scmp.ne.s32.totalorder %s92, %s95
      %p101 = scmp.eq.s32.totalorder %s30, 0
      %p102 = por %p100, %p101
      %p103 = scmp.ne.s32.totalorder %s92, %s95
      %p104 = scmp.eq.s32.totalorder %s35, 1
      %p105 = por %p103, %p104
      %p106 = scmp.ne.s32.totalorder %s95, %s96
      %p107 = scmp.eq.s32.totalorder %s35, 0
      %p108 = por %p106, %p107
      %p109 = scmp.ne.s32.totalorder %s95, %s96
      %p110 = scmp.eq.s32.totalorder %s36, 1
      %p111 = por %p109, %p110
      %p113 = scmp.ne.s32.totalorder %s96, %s112
      %p114 = scmp.eq.s32.totalorder %s36, 0
      %p115 = por %p113, %p114
      %s116 = ssub.s32 %s30, %s37
      %p117 = scmp.eq.s32.totalorder %s116, 0
      %s119 = sadd.s32 %s118, 1
      %s120 = scalar_select %p117, %s118, %s119
      %p123 = pneg %p117
      %p124 = scmp.eq.s32.totalorder %s30, 1
      %p125 = por %p123, %p124
      %p126 = scmp.ne.s32.totalorder %s118, %s121
      %p127 = scmp.eq.s32.totalorder %s30, 0
      %p128 = por %p126, %p127
      %p129 = scmp.ne.s32.totalorder %s118, %s121
      %p130 = scmp.eq.s32.totalorder %s35, 1
      %p131 = por %p129, %p130
      %p132 = scmp.ne.s32.totalorder %s121, %s122
      %p133 = scmp.eq.s32.totalorder %s35, 0
      %p134 = por %p132, %p133
      %p135 = scmp.ne.s32.totalorder %s121, %s122
      %p136 = scmp.eq.s32.totalorder %s36, 1
      %p137 = por %p135, %p136
      %p139 = scmp.ne.s32.totalorder %s122, %s138
      %p140 = scmp.eq.s32.totalorder %s36, 0
      %p141 = por %p139, %p140
      %s142 = ssub.s32 %s30, %s37
      %p143 = scmp.eq.s32.totalorder %s142, 0
      %s145 = sadd.s32 %s144, 1
      %s146 = scalar_select %p143, %s144, %s145
      %p149 = pneg %p143
      %p150 = scmp.eq.s32.totalorder %s30, 1
      %p151 = por %p149, %p150
      %p152 = scmp.ne.s32.totalorder %s144, %s147
      %p153 = scmp.eq.s32.totalorder %s30, 0
      %p154 = por %p152, %p153
      %p155 = scmp.ne.s32.totalorder %s144, %s147
      %p156 = scmp.eq.s32.totalorder %s35, 1
      %p157 = por %p155, %p156
      %p158 = scmp.ne.s32.totalorder %s147, %s148
      %p159 = scmp.eq.s32.totalorder %s35, 0
      %p160 = por %p158, %p159
      %p161 = scmp.ne.s32.totalorder %s147, %s148
      %p162 = scmp.eq.s32.totalorder %s36, 1
      %p163 = por %p161, %p162
      %p165 = scmp.ne.s32.totalorder %s148, %s164
      %p166 = scmp.eq.s32.totalorder %s36, 0
      %p167 = por %p165, %p166
      %s168 = ssub.s32 %s30, %s37
      %p169 = scmp.eq.s32.totalorder %s168, 0
      %s171 = sadd.s32 %s170, 1
      %s172 = scalar_select %p169, %s170, %s171
      %p175 = pneg %p169
      %p176 = scmp.eq.s32.totalorder %s30, 1
      %p177 = por %p175, %p176
      %p178 = scmp.ne.s32.totalorder %s170, %s173
      %p179 = scmp.eq.s32.totalorder %s30, 0
      %p180 = por %p178, %p179
      %p181 = scmp.ne.s32.totalorder %s170, %s173
      %p182 = scmp.eq.s32.totalorder %s35, 1
      %p183 = por %p181, %p182
      %p184 = scmp.ne.s32.totalorder %s173, %s174
      %p185 = scmp.eq.s32.totalorder %s35, 0
      %p186 = por %p184, %p185
      %p187 = scmp.ne.s32.totalorder %s173, %s174
      %p188 = scmp.eq.s32.totalorder %s36, 1
      %p189 = por %p187, %p188
      %p191 = scmp.ne.s32.totalorder %s174, %s190
      %p192 = scmp.eq.s32.totalorder %s36, 0
      %p193 = por %p191, %p192
      %s194 = ssub.s32 %s30, %s37
      %p195 = scmp.eq.s32.totalorder %s194, 0
      %s197 = sadd.s32 %s196, 1
      %s198 = scalar_select %p195, %s196, %s197
      %p201 = pneg %p195
      %p202 = scmp.eq.s32.totalorder %s30, 1
      %p203 = por %p201, %p202
      %p204 = scmp.ne.s32.totalorder %s196, %s199
      %p205 = scmp.eq.s32.totalorder %s30, 0
      %p206 = por %p204, %p205
      %p207 = scmp.ne.s32.totalorder %s196, %s199
      %p208 = scmp.eq.s32.totalorder %s35, 1
      %p209 = por %p207, %p208
      %p210 = scmp.ne.s32.totalorder %s199, %s200
      %p211 = scmp.eq.s32.totalorder %s35, 0
      %p212 = por %p210, %p211
      %p213 = scmp.ne.s32.totalorder %s199, %s200
      %p214 = scmp.eq.s32.totalorder %s36, 1
      %p215 = por %p213, %p214
      %p217 = scmp.ne.s32.totalorder %s200, %s216
      %p218 = scmp.eq.s32.totalorder %s36, 0
      %p219 = por %p217, %p218
      %s221 = sadd.s32 %s220, 1
      %p224 = scmp.eq.s32.totalorder %s30, 1
      %p225 = scmp.ne.s32.totalorder %s220, %s222
      %p226 = scmp.eq.s32.totalorder %s30, 0
      %p227 = por %p225, %p226
      %p228 = scmp.ne.s32.totalorder %s220, %s222
      %p229 = scmp.eq.s32.totalorder %s35, 1
      %p230 = por %p228, %p229
      %p231 = scmp.ne.s32.totalorder %s222, %s223
      %p232 = scmp.eq.s32.totalorder %s35, 0
      %p233 = por %p231, %p232
      %p234 = scmp.ne.s32.totalorder %s222, %s223
      %p235 = scmp.eq.s32.totalorder %s36, 1
      %p236 = por %p234, %p235
      %p238 = scmp.ne.s32.totalorder %s223, %s237
      %p239 = scmp.eq.s32.totalorder %s36, 0
      %p240 = por %p238, %p239
      %s242 = sadd.s32 %s241, 1
      %p245 = scmp.eq.s32.totalorder %s30, 1
      %p246 = scmp.ne.s32.totalorder %s241, %s243
      %p247 = scmp.eq.s32.totalorder %s30, 0
      %p248 = por %p246, %p247
      %p249 = scmp.ne.s32.totalorder %s241, %s243
      %p250 = scmp.eq.s32.totalorder %s35, 1
      %p251 = por %p249, %p250
      %p252 = scmp.ne.s32.totalorder %s243, %s244
      %p253 = scmp.eq.s32.totalorder %s35, 0
      %p254 = por %p252, %p253
      %p255 = scmp.ne.s32.totalorder %s243, %s244
      %p256 = scmp.eq.s32.totalorder %s36, 1
      %p257 = por %p255, %p256
      %p259 = scmp.ne.s32.totalorder %s244, %s258
      %p260 = scmp.eq.s32.totalorder %s36, 0
      %p261 = por %p259, %p260
      %s263 = sadd.s32 %s262, 1
      %p266 = scmp.eq.s32.totalorder %s30, 1
      %p267 = scmp.ne.s32.totalorder %s262, %s264
      %p268 = scmp.eq.s32.totalorder %s30, 0
      %p269 = por %p267, %p268
      %p270 = scmp.ne.s32.totalorder %s262, %s264
      %p271 = scmp.eq.s32.totalorder %s35, 1
      %p272 = por %p270, %p271
      %p273 = scmp.ne.s32.totalorder %s264, %s265
      %p274 = scmp.eq.s32.totalorder %s35, 0
      %p275 = por %p273, %p274
      %p276 = scmp.ne.s32.totalorder %s264, %s265
      %p277 = scmp.eq.s32.totalorder %s36, 1
      %p278 = por %p276, %p277
      %p280 = scmp.ne.s32.totalorder %s265, %s279
      %p281 = scmp.eq.s32.totalorder %s36, 0
      %p282 = por %p280, %p281
      %s284 = sadd.s32 %s283, 1
      %p287 = scmp.eq.s32.totalorder %s30, 1
      %p288 = scmp.ne.s32.totalorder %s283, %s285
      %p289 = scmp.eq.s32.totalorder %s30, 0
      %p290 = por %p288, %p289
      %p291 = scmp.ne.s32.totalorder %s283, %s285
      %p292 = scmp.eq.s32.totalorder %s35, 1
      %p293 = por %p291, %p292
      %p294 = scmp.ne.s32.totalorder %s285, %s286
      %p295 = scmp.eq.s32.totalorder %s35, 0
      %p296 = por %p294, %p295
      %p297 = scmp.ne.s32.totalorder %s285, %s286
      %p298 = scmp.eq.s32.totalorder %s36, 1
      %p299 = por %p297, %p298
      %p301 = scmp.ne.s32.totalorder %s286, %s300
      %p302 = scmp.eq.s32.totalorder %s36, 0
      %p303 = por %p301, %p302
      %s305 = sadd.s32 %s304, 1
      %p308 = scmp.eq.s32.totalorder %s30, 1
      %p309 = scmp.ne.s32.totalorder %s304, %s306
      %p310 = scmp.eq.s32.totalorder %s30, 0
      %p311 = por %p309, %p310
      %p312 = scmp.ne.s32.totalorder %s304, %s306
      %p313 = scmp.eq.s32.totalorder %s35, 1
      %p314 = por %p312, %p313
      %p315 = scmp.ne.s32.totalorder %s306, %s307
      %p316 = scmp.eq.s32.totalorder %s35, 0
      %p317 = por %p315, %p316
      %p318 = scmp.ne.s32.totalorder %s306, %s307
      %p319 = scmp.eq.s32.totalorder %s36, 1
      %p320 = por %p318, %p319
      %p322 = scmp.ne.s32.totalorder %s307, %s321
      %p323 = scmp.eq.s32.totalorder %s36, 0
      %p324 = por %p322, %p323
      %s326 = sadd.s32 %s325, 1
      %p329 = scmp.eq.s32.totalorder %s30, 1
      %p330 = scmp.ne.s32.totalorder %s325, %s327
      %p331 = scmp.eq.s32.totalorder %s30, 0
      %p332 = por %p330, %p331
      %p333 = scmp.ne.s32.totalorder %s325, %s327
      %p334 = scmp.eq.s32.totalorder %s35, 1
      %p335 = por %p333, %p334
      %p336 = scmp.ne.s32.totalorder %s327, %s328
      %p337 = scmp.eq.s32.totalorder %s35, 0
      %p338 = por %p336, %p337
      %p339 = scmp.ne.s32.totalorder %s327, %s328
      %p340 = scmp.eq.s32.totalorder %s36, 1
      %p341 = por %p339, %p340
      %p343 = scmp.ne.s32.totalorder %s328, %s342
      %p344 = scmp.eq.s32.totalorder %s36, 0
      %p345 = por %p343, %p344
      %s347 = sadd.s32 %s346, 1
      %p350 = scmp.eq.s32.totalorder %s30, 1
      %p351 = scmp.ne.s32.totalorder %s346, %s348
      %p352 = scmp.eq.s32.totalorder %s30, 0
      %p353 = por %p351, %p352
      %p354 = scmp.ne.s32.totalorder %s346, %s348
      %p355 = scmp.eq.s32.totalorder %s35, 1
      %p356 = por %p354, %p355
      %p357 = scmp.ne.s32.totalorder %s348, %s349
      %p358 = scmp.eq.s32.totalorder %s35, 0
      %p359 = por %p357, %p358
      %p360 = scmp.ne.s32.totalorder %s348, %s349
      %p361 = scmp.eq.s32.totalorder %s36, 1
      %p362 = por %p360, %p361
      %p364 = scmp.ne.s32.totalorder %s349, %s363
      %p365 = scmp.eq.s32.totalorder %s36, 0
      %p366 = por %p364, %p365
      %s368 = sadd.s32 %s367, 1
      %p371 = scmp.eq.s32.totalorder %s30, 1
      %p372 = scmp.ne.s32.totalorder %s367, %s369
      %p373 = scmp.eq.s32.totalorder %s30, 0
      %p374 = por %p372, %p373
      %p375 = scmp.ne.s32.totalorder %s367, %s369
      %p376 = scmp.eq.s32.totalorder %s35, 1
      %p377 = por %p375, %p376
      %p378 = scmp.ne.s32.totalorder %s369, %s370
      %p379 = scmp.eq.s32.totalorder %s35, 0
      %p380 = por %p378, %p379
      %p381 = scmp.ne.s32.totalorder %s369, %s370
      %p382 = scmp.eq.s32.totalorder %s36, 1
      %p383 = por %p381, %p382
      %p385 = scmp.ne.s32.totalorder %s370, %s384
      %p386 = scmp.eq.s32.totalorder %s36, 0
      %p387 = por %p385, %p386
      %s389 = sadd.s32 %s388, 1
      %p392 = scmp.eq.s32.totalorder %s30, 1
      %p393 = scmp.ne.s32.totalorder %s388, %s390
      %p394 = scmp.eq.s32.totalorder %s30, 0
      %p395 = por %p393, %p394
      %p396 = scmp.ne.s32.totalorder %s388, %s390
      %p397 = scmp.eq.s32.totalorder %s35, 1
      %p398 = por %p396, %p397
      %p399 = scmp.ne.s32.totalorder %s390, %s391
      %p400 = scmp.eq.s32.totalorder %s35, 0
      %p401 = por %p399, %p400
      %p402 = scmp.ne.s32.totalorder %s390, %s391
      %p403 = scmp.eq.s32.totalorder %s36, 1
      %p404 = por %p402, %p403
      %p406 = scmp.ne.s32.totalorder %s391, %s405
      %p407 = scmp.eq.s32.totalorder %s36, 0
      %p408 = por %p406, %p407
      %s410 = sadd.s32 %s409, 1
      %p413 = scmp.eq.s32.totalorder %s30, 1
      %p414 = scmp.ne.s32.totalorder %s409, %s411
      %p415 = scmp.eq.s32.totalorder %s30, 0
      %p416 = por %p414, %p415
      %p417 = scmp.ne.s32.totalorder %s409, %s411
      %p418 = scmp.eq.s32.totalorder %s35, 1
      %p419 = por %p417, %p418
      %p420 = scmp.ne.s32.totalorder %s411, %s412
      %p421 = scmp.eq.s32.totalorder %s35, 0
      %p422 = por %p420, %p421
      %p423 = scmp.ne.s32.totalorder %s411, %s412
      %p424 = scmp.eq.s32.totalorder %s36, 1
      %p425 = por %p423, %p424
      %p427 = scmp.ne.s32.totalorder %s412, %s426
      %p428 = scmp.eq.s32.totalorder %s36, 0
      %p429 = por %p427, %p428
      %s431 = sadd.s32 %s430, 1
      %p434 = scmp.eq.s32.totalorder %s30, 1
      %p435 = scmp.ne.s32.totalorder %s430, %s432
      %p436 = scmp.eq.s32.totalorder %s30, 0
      %p437 = por %p435, %p436
      %p438 = scmp.ne.s32.totalorder %s430, %s432
      %p439 = scmp.eq.s32.totalorder %s35, 1
      %p440 = por %p438, %p439
      %p441 = scmp.ne.s32.totalorder %s432, %s433
      %p442 = scmp.eq.s32.totalorder %s35, 0
      %p443 = por %p441, %p442
      %p444 = scmp.ne.s32.totalorder %s432, %s433
      %p445 = scmp.eq.s32.totalorder %s36, 1
      %p446 = por %p444, %p445
      %p448 = scmp.ne.s32.totalorder %s433, %s447
      %p449 = scmp.eq.s32.totalorder %s36, 0
      %p450 = por %p448, %p449
      %s452 = sadd.s32 %s451, 1
      %p455 = scmp.eq.s32.totalorder %s30, 1
      %p456 = scmp.ne.s32.totalorder %s451, %s453
      %p457 = scmp.eq.s32.totalorder %s30, 0
      %p458 = por %p456, %p457
      %p459 = scmp.ne.s32.totalorder %s451, %s453
      %p460 = scmp.eq.s32.totalorder %s35, 1
      %p461 = por %p459, %p460
      %p462 = scmp.ne.s32.totalorder %s453, %s454
      %p463 = scmp.eq.s32.totalorder %s35, 0
      %p464 = por %p462, %p463
      %p465 = scmp.ne.s32.totalorder %s453, %s454
      %p466 = scmp.eq.s32.totalorder %s36, 1
      %p467 = por %p465, %p466
      %p469 = scmp.ne.s32.totalorder %s454, %s468
      %p470 = scmp.eq.s32.totalorder %s36, 0
      %p471 = por %p469, %p470
      %s473 = sadd.s32 %s472, 1
      %p476 = scmp.eq.s32.totalorder %s30, 1
      %p477 = scmp.ne.s32.totalorder %s472, %s474
      %p478 = scmp.eq.s32.totalorder %s30, 0
      %p479 = por %p477, %p478
      %p480 = scmp.ne.s32.totalorder %s472, %s474
      %p481 = scmp.eq.s32.totalorder %s35, 1
      %p482 = por %p480, %p481
      %p483 = scmp.ne.s32.totalorder %s474, %s475
      %p484 = scmp.eq.s32.totalorder %s35, 0
      %p485 = por %p483, %p484
      %p486 = scmp.ne.s32.totalorder %s474, %s475
      %p487 = scmp.eq.s32.totalorder %s36, 1
      %p488 = por %p486, %p487
      %p490 = scmp.ne.s32.totalorder %s475, %s489
      %p491 = scmp.eq.s32.totalorder %s36, 0
      %p492 = por %p490, %p491
      %s494 = sadd.s32 %s493, 1
      %p497 = scmp.eq.s32.totalorder %s30, 1
      %p498 = scmp.ne.s32.totalorder %s493, %s495
      %p499 = scmp.eq.s32.totalorder %s30, 0
      %p500 = por %p498, %p499
      %p501 = scmp.ne.s32.totalorder %s493, %s495
      %p502 = scmp.eq.s32.totalorder %s35, 1
      %p503 = por %p501, %p502
      %p504 = scmp.ne.s32.totalorder %s495, %s496
      %p505 = scmp.eq.s32.totalorder %s35, 0
      %p506 = por %p504, %p505
      %p507 = scmp.ne.s32.totalorder %s495, %s496
      %p508 = scmp.eq.s32.totalorder %s36, 1
      %p509 = por %p507, %p508
      %p511 = scmp.ne.s32.totalorder %s496, %s510
      %p512 = scmp.eq.s32.totalorder %s36, 0
      %p513 = por %p511, %p512
      %s514 = ssub.s32 %s30, %s37
      %p515 = scmp.eq.s32.totalorder %s514, 0
      %s517 = sadd.s32 %s516, 1
      %s518 = scalar_select %p515, %s516, %s517
      %p521 = pneg %p515
      %p522 = scmp.eq.s32.totalorder %s30, 1
      %p523 = por %p521, %p522
      %p524 = scmp.ne.s32.totalorder %s516, %s519
      %p525 = scmp.eq.s32.totalorder %s30, 0
      %p526 = por %p524, %p525
      %p527 = scmp.ne.s32.totalorder %s516, %s519
      %p528 = scmp.eq.s32.totalorder %s35, 1
      %p529 = por %p527, %p528
      %p530 = scmp.ne.s32.totalorder %s519, %s520
      %p531 = scmp.eq.s32.totalorder %s35, 0
      %p532 = por %p530, %p531
      %p533 = scmp.ne.s32.totalorder %s519, %s520
      %p534 = scmp.eq.s32.totalorder %s36, 1
      %p535 = por %p533, %p534
      %p537 = scmp.ne.s32.totalorder %s520, %s536
      %p538 = scmp.eq.s32.totalorder %s36, 0
      %p539 = por %p537, %p538
      %p540 = scmp.le.s32.totalorder 1, %s30
      %p541 = scmp.lt.s32.totalorder %s30, 3
      %p542 = pnand %p540, %p541
      %p543 = pneg %p542
      // Predicated region
      $region9: #{tpu_custom_call.1} parent=5 // pred_check
        _
      $region10: #{tpu_custom_call.1} parent=5 // pred_check_branch
        %545 = sbr.rel (%p542) target = $region12
      $region11: #{tpu_custom_call.1} parent=5 // pred_region
        %s546 = ssub.s32 %s30, 1
        // Predicated region
        $region13: #{tpu_custom_call.1} parent=11 // pred_check
          %p547 = pneg %p233
        $region14: #{tpu_custom_call.1} parent=11 // pred_check_branch
          %549 = sbr.rel (%p547) target = $region16
        $region15: #{tpu_custom_call.1} parent=11 // pred_region
          _
        $region16: #{tpu_custom_call.1} parent=11 // pred_fallthru
          _
        // Predicated region
        $region17: #{tpu_custom_call.1} parent=11 // pred_check
          %p550 = pneg %p254
        $region18: #{tpu_custom_call.1} parent=11 // pred_check_branch
          %552 = sbr.rel (%p550) target = $region20
        $region19: #{tpu_custom_call.1} parent=11 // pred_region
          _
        $region20: #{tpu_custom_call.1} parent=11 // pred_fallthru
          _
        // Predicated region
        $region21: #{tpu_custom_call.1} parent=11 // pred_check
          %p553 = pneg %p275
        $region22: #{tpu_custom_call.1} parent=11 // pred_check_branch
          %555 = sbr.rel (%p553) target = $region24
        $region23: #{tpu_custom_call.1} parent=11 // pred_region
          _
        $region24: #{tpu_custom_call.1} parent=11 // pred_fallthru
          _
        // Predicated region
        $region25: #{tpu_custom_call.1} parent=11 // pred_check
          %p556 = pneg %p296
        $region26: #{tpu_custom_call.1} parent=11 // pred_check_branch
          %558 = sbr.rel (%p556) target = $region28
        $region27: #{tpu_custom_call.1} parent=11 // pred_region
          _
        $region28: #{tpu_custom_call.1} parent=11 // pred_fallthru
          _
        // Predicated region
        $region29: #{tpu_custom_call.1} parent=11 // pred_check
          %p559 = pneg %p317
        $region30: #{tpu_custom_call.1} parent=11 // pred_check_branch
          %561 = sbr.rel (%p559) target = $region32
        $region31: #{tpu_custom_call.1} parent=11 // pred_region
          _
        $region32: #{tpu_custom_call.1} parent=11 // pred_fallthru
          _
        // Predicated region
        $region33: #{tpu_custom_call.1} parent=11 // pred_check
          %p562 = pneg %p338
        $region34: #{tpu_custom_call.1} parent=11 // pred_check_branch
          %564 = sbr.rel (%p562) target = $region36
        $region35: #{tpu_custom_call.1} parent=11 // pred_region
          _
        $region36: #{tpu_custom_call.1} parent=11 // pred_fallthru
          _
        // Predicated region
        $region37: #{tpu_custom_call.1} parent=11 // pred_check
          %p565 = pneg %p359
        $region38: #{tpu_custom_call.1} parent=11 // pred_check_branch
          %567 = sbr.rel (%p565) target = $region40
        $region39: #{tpu_custom_call.1} parent=11 // pred_region
          _
        $region40: #{tpu_custom_call.1} parent=11 // pred_fallthru
          _
        // Predicated region
        $region41: #{tpu_custom_call.1} parent=11 // pred_check
          %p568 = pneg %p380
        $region42: #{tpu_custom_call.1} parent=11 // pred_check_branch
          %570 = sbr.rel (%p568) target = $region44
        $region43: #{tpu_custom_call.1} parent=11 // pred_region
          _
        $region44: #{tpu_custom_call.1} parent=11 // pred_fallthru
          _
        // Predicated region
        $region45: #{tpu_custom_call.1} parent=11 // pred_check
          %p571 = pneg %p401
        $region46: #{tpu_custom_call.1} parent=11 // pred_check_branch
          %573 = sbr.rel (%p571) target = $region48
        $region47: #{tpu_custom_call.1} parent=11 // pred_region
          _
        $region48: #{tpu_custom_call.1} parent=11 // pred_fallthru
          _
        // Predicated region
        $region49: #{tpu_custom_call.1} parent=11 // pred_check
          %p574 = pneg %p422
        $region50: #{tpu_custom_call.1} parent=11 // pred_check_branch
          %576 = sbr.rel (%p574) target = $region52
        $region51: #{tpu_custom_call.1} parent=11 // pred_region
          _
        $region52: #{tpu_custom_call.1} parent=11 // pred_fallthru
          _
        // Predicated region
        $region53: #{tpu_custom_call.1} parent=11 // pred_check
          %p577 = pneg %p443
        $region54: #{tpu_custom_call.1} parent=11 // pred_check_branch
          %579 = sbr.rel (%p577) target = $region56
        $region55: #{tpu_custom_call.1} parent=11 // pred_region
          _
        $region56: #{tpu_custom_call.1} parent=11 // pred_fallthru
          _
        // Predicated region
        $region57: #{tpu_custom_call.1} parent=11 // pred_check
          %p580 = pneg %p464
        $region58: #{tpu_custom_call.1} parent=11 // pred_check_branch
          %582 = sbr.rel (%p580) target = $region60
        $region59: #{tpu_custom_call.1} parent=11 // pred_region
          _
        $region60: #{tpu_custom_call.1} parent=11 // pred_fallthru
          _
        // Predicated region
        $region61: #{tpu_custom_call.1} parent=11 // pred_check
          %p583 = pneg %p485
        $region62: #{tpu_custom_call.1} parent=11 // pred_check_branch
          %585 = sbr.rel (%p583) target = $region64
        $region63: #{tpu_custom_call.1} parent=11 // pred_region
          _
        $region64: #{tpu_custom_call.1} parent=11 // pred_fallthru
          _
        // Predicated region
        $region65: #{tpu_custom_call.1} parent=11 // pred_check
          %p586 = pneg %p506
        $region66: #{tpu_custom_call.1} parent=11 // pred_check_branch
          %588 = sbr.rel (%p586) target = $region68
        $region67: #{tpu_custom_call.1} parent=11 // pred_region
          _
        $region68: #{tpu_custom_call.1} parent=11 // pred_fallthru
          _
      $region12: #{tpu_custom_call.1} parent=5 // pred_fallthru
        _
      %p589 = scmp.lt.s32.totalorder %s30, 2
      // Predicated region
      $region69: #{tpu_custom_call.1} parent=5 // pred_check
        %p590 = pneg %p589
      $region70: #{tpu_custom_call.1} parent=5 // pred_check_branch
        %592 = sbr.rel (%p590) target = $region72
      $region71: #{tpu_custom_call.1} parent=5 // pred_region
        // Predicated region
        $region73: #{tpu_custom_call.1} parent=71 // pred_check
          %p593 = pneg %p50
        $region74: #{tpu_custom_call.1} parent=71 // pred_check_branch
          %595 = sbr.rel (%p593) target = $region76
        $region75: #{tpu_custom_call.1} parent=71 // pred_region
          %s596 = smul.u32 16, %s30
          %p597 = scmp.lt.s32.totalorder %s596, 31
          %s598 = scalar_select %p597, %s596, 31
          %s599 = smul.addr %s598, 8
          %s600 = scalar_lea.vmem %s0, %s599
          %s601 = smul.u32 16, %s30
        $region76: #{tpu_custom_call.1} parent=71 // pred_fallthru
          _
        // Predicated region
        $region77: #{tpu_custom_call.1} parent=71 // pred_check
          %p602 = pneg %p76
        $region78: #{tpu_custom_call.1} parent=71 // pred_check_branch
          %604 = sbr.rel (%p602) target = $region80
        $region79: #{tpu_custom_call.1} parent=71 // pred_region
          %s605 = smul.u32 16, %s30
          %p606 = scmp.lt.s32.totalorder %s605, 31
          %s607 = scalar_select %p606, %s605, 31
          %s608 = smul.addr %s607, 2
          %s609 = smul.addr %s608, 8
          %s610 = scalar_lea.vmem %s1, %s609
          %s611 = smul.u32 16, %s30
        $region80: #{tpu_custom_call.1} parent=71 // pred_fallthru
          _
        // Predicated region
        $region81: #{tpu_custom_call.1} parent=71 // pred_check
          %p612 = pneg %p102
        $region82: #{tpu_custom_call.1} parent=71 // pred_check_branch
          %614 = sbr.rel (%p612) target = $region84
        $region83: #{tpu_custom_call.1} parent=71 // pred_region
          %s615 = smul.u32 2, %s30
          %p616 = scmp.lt.s32.totalorder %s615, 3
          %s617 = scalar_select %p616, %s615, 3
          %s618 = smul.addr %s617, 8
          %s619 = scalar_lea.vmem %s2, %s618
          %s620 = smul.u32 2, %s30
        $region84: #{tpu_custom_call.1} parent=71 // pred_fallthru
          _
        // Predicated region
        $region85: #{tpu_custom_call.1} parent=71 // pred_check
          %p621 = pneg %p128
        $region86: #{tpu_custom_call.1} parent=71 // pred_check_branch
          %623 = sbr.rel (%p621) target = $region88
        $region87: #{tpu_custom_call.1} parent=71 // pred_region
          %s624 = smul.u32 16, %s30
          %p625 = scmp.lt.s32.totalorder %s624, 31
          %s626 = scalar_select %p625, %s624, 31
          %s627 = smul.addr %s626, 2
          %s628 = smul.addr %s627, 8
          %s629 = scalar_lea.vmem %s3, %s628
          %s630 = smul.u32 16, %s30
        $region88: #{tpu_custom_call.1} parent=71 // pred_fallthru
          _
        // Predicated region
        $region89: #{tpu_custom_call.1} parent=71 // pred_check
          %p631 = pneg %p154
        $region90: #{tpu_custom_call.1} parent=71 // pred_check_branch
          %633 = sbr.rel (%p631) target = $region92
        $region91: #{tpu_custom_call.1} parent=71 // pred_region
          %s634 = smul.u32 16, %s30
          %p635 = scmp.lt.s32.totalorder %s634, 31
          %s636 = scalar_select %p635, %s634, 31
          %s637 = smul.addr %s636, 8
          %s638 = scalar_lea.vmem %s4, %s637
          %s639 = smul.u32 16, %s30
        $region92: #{tpu_custom_call.1} parent=71 // pred_fallthru
          _
        // Predicated region
        $region93: #{tpu_custom_call.1} parent=71 // pred_check
          %p640 = pneg %p180
        $region94: #{tpu_custom_call.1} parent=71 // pred_check_branch
          %642 = sbr.rel (%p640) target = $region96
        $region95: #{tpu_custom_call.1} parent=71 // pred_region
          %s643 = smul.u32 16, %s30
          %p644 = scmp.lt.s32.totalorder %s643, 31
          %s645 = scalar_select %p644, %s643, 31
          %s646 = smul.addr %s645, 2
          %s647 = smul.addr %s646, 8
          %s648 = scalar_lea.vmem %s5, %s647
          %s649 = smul.u32 16, %s30
        $region96: #{tpu_custom_call.1} parent=71 // pred_fallthru
          _
        // Predicated region
        $region97: #{tpu_custom_call.1} parent=71 // pred_check
          %p650 = pneg %p206
        $region98: #{tpu_custom_call.1} parent=71 // pred_check_branch
          %652 = sbr.rel (%p650) target = $region100
        $region99: #{tpu_custom_call.1} parent=71 // pred_region
          %s653 = smul.u32 16, %s30
          %p654 = scmp.lt.s32.totalorder %s653, 31
          %s655 = scalar_select %p654, %s653, 31
          %s656 = smul.addr %s655, 8
          %s657 = scalar_lea.vmem %s6, %s656
          %s658 = smul.u32 16, %s30
        $region100: #{tpu_custom_call.1} parent=71 // pred_fallthru
          _
      $region72: #{tpu_custom_call.1} parent=5 // pred_fallthru
        _
      %p659 = scmp.le.s32.totalorder 1, %s30
      %p660 = scmp.lt.s32.totalorder %s30, 3
      %p661 = pnand %p659, %p660
      %p662 = pneg %p661
      // Predicated region
      $region101: #{tpu_custom_call.1} parent=5 // pred_check
        _
      $region102: #{tpu_custom_call.1} parent=5 // pred_check_branch
        %664 = sbr.rel (%p661) target = $region104
      $region103: #{tpu_custom_call.1} parent=5 // pred_region
        %s665 = ssub.s32 %s30, 1
        %s666 = smul.u32 16, %s35
        %p667 = scmp.lt.s32.totalorder %s666, 31
        %s668 = scalar_select %p667, %s666, 31
        %s669 = smul.addr %s668, 8
        %s670 = scalar_lea.vmem %s0, %s669
        %p671 = pneg %p56
        %p672 = pneg %p53
        %s673 = smul.u32 16, %s35
        %p674 = scmp.lt.s32.totalorder %s673, 31
        %s675 = scalar_select %p674, %s673, 31
        %s676 = smul.addr %s675, 2
        %s677 = smul.addr %s676, 8
        %s678 = scalar_lea.vmem %s1, %s677
        %p679 = pneg %p82
        %p680 = pneg %p79
        %s681 = smul.u32 2, %s35
        %p682 = scmp.lt.s32.totalorder %s681, 3
        %s683 = scalar_select %p682, %s681, 3
        %s684 = smul.addr %s683, 8
        %s685 = scalar_lea.vmem %s2, %s684
        %p686 = pneg %p108
        %p687 = pneg %p105
        %s688 = smul.u32 16, %s35
        %p689 = scmp.lt.s32.totalorder %s688, 31
        %s690 = scalar_select %p689, %s688, 31
        %s691 = smul.addr %s690, 2
        %s692 = smul.addr %s691, 8
        %s693 = scalar_lea.vmem %s3, %s692
        %p694 = pneg %p134
        %p695 = pneg %p131
        %s696 = smul.u32 16, %s35
        %p697 = scmp.lt.s32.totalorder %s696, 31
        %s698 = scalar_select %p697, %s696, 31
        %s699 = smul.addr %s698, 8
        %s700 = scalar_lea.vmem %s4, %s699
        %p701 = pneg %p160
        %p702 = pneg %p157
        %s703 = smul.u32 16, %s35
        %p704 = scmp.lt.s32.totalorder %s703, 31
        %s705 = scalar_select %p704, %s703, 31
        %s706 = smul.addr %s705, 2
        %s707 = smul.addr %s706, 8
        %s708 = scalar_lea.vmem %s5, %s707
        %p709 = pneg %p186
        %p710 = pneg %p183
        %s711 = smul.u32 16, %s35
        %p712 = scmp.lt.s32.totalorder %s711, 31
        %s713 = scalar_select %p712, %s711, 31
        %s714 = smul.addr %s713, 8
        %s715 = scalar_lea.vmem %s6, %s714
        %p716 = pneg %p212
        %p717 = pneg %p209
        %p718 = pneg %p233
        %p719 = pneg %p230
        %p720 = pneg %p254
        %p721 = pneg %p251
        %p722 = pneg %p275
        %p723 = pneg %p272
        %p724 = pneg %p296
        %p725 = pneg %p293
        %p726 = pneg %p317
        %p727 = pneg %p314
        %p728 = pneg %p338
        %p729 = pneg %p335
        %p730 = pneg %p359
        %p731 = pneg %p356
        %p732 = pneg %p380
        %p733 = pneg %p377
        %p734 = pneg %p401
        %p735 = pneg %p398
        %p736 = pneg %p422
        %p737 = pneg %p419
        %p738 = pneg %p443
        %p739 = pneg %p440
        %p740 = pneg %p464
        %p741 = pneg %p461
        %p742 = pneg %p485
        %p743 = pneg %p482
        %p744 = pneg %p506
        %p745 = pneg %p503
        %p746 = pneg %p532
        %p747 = pneg %p529
        %s748 = sand.u32 %s519, 1
        %s749 = scalar_lea.sflag [#allocation3], %s748
        %s750 = sand.u32 %s519, 1
        %s751 = scalar_lea.vmem [#allocation2], %s750
        %s752 = smul.u32 16, %s35
        %p753 = scmp.lt.s32.totalorder %s752, 31
        %s754 = scalar_select %p753, %s752, 31
        %s755 = smul.addr %s754, 8
        %s756 = scalar_lea.vmem %s0, %s755
        %s757 = smul.u32 16, %s35
        %s758 = smul.u32 16, %s35
        %p759 = scmp.lt.s32.totalorder %s758, 31
        %s760 = scalar_select %p759, %s758, 31
        %s761 = smul.addr %s760, 2
        %s762 = smul.addr %s761, 8
        %s763 = scalar_lea.vmem %s1, %s762
        %s764 = smul.u32 16, %s35
        %s765 = smul.u32 2, %s35
        %p766 = scmp.lt.s32.totalorder %s765, 3
        %s767 = scalar_select %p766, %s765, 3
        %s768 = smul.addr %s767, 8
        %s769 = scalar_lea.vmem %s2, %s768
        %s770 = smul.u32 2, %s35
        %s771 = smul.u32 16, %s35
        %p772 = scmp.lt.s32.totalorder %s771, 31
        %s773 = scalar_select %p772, %s771, 31
        %s774 = smul.addr %s773, 2
        %s775 = smul.addr %s774, 8
        %s776 = scalar_lea.vmem %s3, %s775
        %s777 = smul.u32 16, %s35
        %s778 = smul.u32 16, %s35
        %p779 = scmp.lt.s32.totalorder %s778, 31
        %s780 = scalar_select %p779, %s778, 31
        %s781 = smul.addr %s780, 8
        %s782 = scalar_lea.vmem %s4, %s781
        %s783 = smul.u32 16, %s35
        %s784 = smul.u32 16, %s35
        %p785 = scmp.lt.s32.totalorder %s784, 31
        %s786 = scalar_select %p785, %s784, 31
        %s787 = smul.addr %s786, 2
        %s788 = smul.addr %s787, 8
        %s789 = scalar_lea.vmem %s5, %s788
        %s790 = smul.u32 16, %s35
        %s791 = smul.u32 16, %s35
        %p792 = scmp.lt.s32.totalorder %s791, 31
        %s793 = scalar_select %p792, %s791, 31
        %s794 = smul.addr %s793, 8
        %s795 = scalar_lea.vmem %s6, %s794
        %s796 = smul.u32 16, %s35
        %v797 = vld [vmem:[%s756] sm:$0xff]
        %v798 = vld [vmem:[%s756 + $0x8] sm:$0xff]
        %v799 = vld [vmem:[%s756 + $0x10] sm:$0xff]
        %v800 = vld [vmem:[%s756 + $0x18] sm:$0xff]
        %v801 = vld [vmem:[%s756 + $0x20] sm:$0xff]
        %v802 = vld [vmem:[%s756 + $0x28] sm:$0xff]
        %v803 = vld [vmem:[%s756 + $0x30] sm:$0xff]
        %v804 = vld [vmem:[%s756 + $0x38] sm:$0xff]
        %v805 = vld [vmem:[%s756 + $0x40] sm:$0xff]
        %v806 = vld [vmem:[%s756 + $0x48] sm:$0xff]
        %v807 = vld [vmem:[%s756 + $0x50] sm:$0xff]
        %v808 = vld [vmem:[%s756 + $0x58] sm:$0xff]
        %v809 = vld [vmem:[%s756 + $0x60] sm:$0xff]
        %v810 = vld [vmem:[%s756 + $0x68] sm:$0xff]
        %v811 = vld [vmem:[%s756 + $0x70] sm:$0xff]
        %v812 = vld [vmem:[%s756 + $0x78] sm:$0xff]
        %v813 = vld [vmem:[%s763] sm:$0xff]
        %v814 = vld [vmem:[%s763 + $0x8] sm:$0xff]
        %v815 = vld [vmem:[%s763 + $0x10] sm:$0xff]
        %v816 = vld [vmem:[%s763 + $0x18] sm:$0xff]
        %v817 = vld [vmem:[%s763 + $0x20] sm:$0xff]
        %v818 = vld [vmem:[%s763 + $0x28] sm:$0xff]
        %v819 = vld [vmem:[%s763 + $0x30] sm:$0xff]
        %v820 = vld [vmem:[%s763 + $0x38] sm:$0xff]
        %v821 = vld [vmem:[%s763 + $0x40] sm:$0xff]
        %v822 = vld [vmem:[%s763 + $0x48] sm:$0xff]
        %v823 = vld [vmem:[%s763 + $0x50] sm:$0xff]
        %v824 = vld [vmem:[%s763 + $0x58] sm:$0xff]
        %v825 = vld [vmem:[%s763 + $0x60] sm:$0xff]
        %v826 = vld [vmem:[%s763 + $0x68] sm:$0xff]
        %v827 = vld [vmem:[%s763 + $0x70] sm:$0xff]
        %v828 = vld [vmem:[%s763 + $0x78] sm:$0xff]
        %v829 = vld [vmem:[%s763 + $0x80] sm:$0xff]
        %v830 = vld [vmem:[%s763 + $0x88] sm:$0xff]
        %v831 = vld [vmem:[%s763 + $0x90] sm:$0xff]
        %v832 = vld [vmem:[%s763 + $0x98] sm:$0xff]
        %v833 = vld [vmem:[%s763 + $0xa0] sm:$0xff]
        %v834 = vld [vmem:[%s763 + $0xa8] sm:$0xff]
        %v835 = vld [vmem:[%s763 + $0xb0] sm:$0xff]
        %v836 = vld [vmem:[%s763 + $0xb8] sm:$0xff]
        %v837 = vld [vmem:[%s763 + $0xc0] sm:$0xff]
        %v838 = vld [vmem:[%s763 + $0xc8] sm:$0xff]
        %v839 = vld [vmem:[%s763 + $0xd0] sm:$0xff]
        %v840 = vld [vmem:[%s763 + $0xd8] sm:$0xff]
        %v841 = vld [vmem:[%s763 + $0xe0] sm:$0xff]
        %v842 = vld [vmem:[%s763 + $0xe8] sm:$0xff]
        %v843 = vld [vmem:[%s763 + $0xf0] sm:$0xff]
        %v844 = vld [vmem:[%s763 + $0xf8] sm:$0xff]
        %v845 = vld [vmem:[%s769] sm:$0xff]
        %v846 = vld [vmem:[%s769 + $0x8] sm:$0xff]
        %v847 = vld [vmem:[%s7] sm:$0x7f]
        %vm848 = vcmask 56320
        %v850 = vsel %vm848, %v797, 0
        %v853 = vsel %vm848, %v798, 0
        %v856 = vsel %vm848, %v799, 0
        %v859 = vsel %vm848, %v800, 0
        %v862 = vsel %vm848, %v801, 0
        %v865 = vsel %vm848, %v802, 0
        %v868 = vsel %vm848, %v803, 0
        %v871 = vsel %vm848, %v804, 0
        %v874 = vsel %vm848, %v805, 0
        %v877 = vsel %vm848, %v806, 0
        %v880 = vsel %vm848, %v807, 0
        %v883 = vsel %vm848, %v808, 0
        %v886 = vsel %vm848, %v809, 0
        %v889 = vsel %vm848, %v810, 0
        %v892 = vsel %vm848, %v811, 0
        %v895 = vsel %vm848, %v812, 0
        %vm897 = vcmask 1046528
        %v899 = vsel %vm897, %v847, 0
        %901 = vmatprep.subr.mxu0 0.0
        %902 = vmatpush1.msra.mxu0 0.0
        %903 = vmatprep.subr.mxu0 0.0
        %904 = vmatpush1.msra.mxu0 0.0
        %905 = vmatprep.subr.mxu0 0.0
        %906 = vmatpush1.msra.mxu0 0.0
        %907 = vmatprep.subr.mxu0 0.0
        %908 = vmatpush1.msra.mxu0 0.0
        %909 = vmatprep.subr.mxu0 0.0
        %910 = vmatpush1.msra.mxu0 0.0
        %911 = vmatprep.subr.mxu0 0.0
        %912 = vmatpush1.msra.mxu0 0.0
        %913 = vmatprep.subr.mxu0 0.0
        %914 = vmatpush1.msra.mxu0 0.0
        %915 = vmatprep.subr.mxu0 0.0
        %916 = vmatpush1.msra.mxu0 0.0
        %917 = vmatprep.subr.mxu0 0.0
        %918 = vmatpush1.msra.mxu0 0.0
        %919 = vmatprep.subr.mxu0 0.0
        %920 = vmatpush1.msra.mxu0 0.0
        %921 = vmatprep.subr.mxu0 0.0
        %922 = vmatpush1.msra.mxu0 0.0
        %923 = vmatprep.subr.mxu0 0.0
        %924 = vmatpush1.msra.mxu0 0.0
        %925 = vmatprep.subr.mxu0 0.0
        %926 = vmatpush1.msra.mxu0 0.0
        %927 = vmatprep.subr.mxu0 0.0
        %928 = vmatpush1.msra.mxu0 0.0
        %929 = vmatprep.subr.mxu0 0.0
        %930 = vmatpush1.msra.mxu0 0.0
        %931 = vmatprep.subr.mxu0 0.0
        %932 = vmatpush1.msra.mxu0 %v899
        %933 = vmatprep.subr.mxu0 0.0
        %934 = vmatpush2.msra.mxu0 0.0
        %935 = vmatprep.subr.mxu0 0.0
        %936 = vmatpush2.msra.mxu0 0.0
        %937 = vmatprep.subr.mxu0 0.0
        %938 = vmatpush2.msra.mxu0 0.0
        %939 = vmatprep.subr.mxu0 0.0
        %940 = vmatpush2.msra.mxu0 0.0
        %941 = vmatprep.subr.mxu0 0.0
        %942 = vmatpush2.msra.mxu0 0.0
        %943 = vmatprep.subr.mxu0 0.0
        %944 = vmatpush2.msra.mxu0 0.0
        %945 = vmatprep.subr.mxu0 0.0
        %946 = vmatpush2.msra.mxu0 0.0
        %947 = vmatprep.subr.mxu0 0.0
        %948 = vmatpush2.msra.mxu0 0.0
        %949 = vmatprep.subr.mxu0 0.0
        %950 = vmatpush2.msra.mxu0 0.0
        %951 = vmatprep.subr.mxu0 0.0
        %952 = vmatpush2.msra.mxu0 0.0
        %953 = vmatprep.subr.mxu0 0.0
        %954 = vmatpush2.msra.mxu0 0.0
        %955 = vmatprep.subr.mxu0 0.0
        %956 = vmatpush2.msra.mxu0 0.0
        %957 = vmatprep.subr.mxu0 0.0
        %958 = vmatpush2.msra.mxu0 0.0
        %959 = vmatprep.subr.mxu0 0.0
        %960 = vmatpush2.msra.mxu0 0.0
        %961 = vmatprep.subr.mxu0 0.0
        %962 = vmatpush2.msra.mxu0 0.0
        %963 = vmatprep.subr.mxu0 0.0
        %964 = vmatpush2.msra.mxu0 0.0
        %965 = vmatprep.mubr.f32.mxu0 0.0
        %966 = vmatmul.mubr.f32.gmra.mxu0 %v850
        %v967 = vpop.f32.mrf.mxu0
        %v968 = vadd.f32 0.0, %v967
        %v969 = vpop.f32.mrf.mxu0
        %970 = vmatprep.mubr.f32.mxu0 0.0
        %971 = vmatmul.mubr.f32.gmra.mxu0 %v853
        %v972 = vpop.f32.mrf.mxu0
        %v973 = vadd.f32 0.0, %v972
        %v974 = vpop.f32.mrf.mxu0
        %975 = vmatprep.mubr.f32.mxu0 0.0
        %976 = vmatmul.mubr.f32.gmra.mxu0 %v856
        %v977 = vpop.f32.mrf.mxu0
        %v978 = vadd.f32 0.0, %v977
        %v979 = vpop.f32.mrf.mxu0
        %980 = vmatprep.mubr.f32.mxu0 0.0
        %981 = vmatmul.mubr.f32.gmra.mxu0 %v859
        %v982 = vpop.f32.mrf.mxu0
        %v983 = vadd.f32 0.0, %v982
        %v984 = vpop.f32.mrf.mxu0
        %985 = vmatprep.mubr.f32.mxu0 0.0
        %986 = vmatmul.mubr.f32.gmra.mxu0 %v862
        %v987 = vpop.f32.mrf.mxu0
        %v988 = vadd.f32 0.0, %v987
        %v989 = vpop.f32.mrf.mxu0
        %990 = vmatprep.mubr.f32.mxu0 0.0
        %991 = vmatmul.mubr.f32.gmra.mxu0 %v865
        %v992 = vpop.f32.mrf.mxu0
        %v993 = vadd.f32 0.0, %v992
        %v994 = vpop.f32.mrf.mxu0
        %995 = vmatprep.mubr.f32.mxu0 0.0
        %996 = vmatmul.mubr.f32.gmra.mxu0 %v868
        %v997 = vpop.f32.mrf.mxu0
        %v998 = vadd.f32 0.0, %v997
        %v999 = vpop.f32.mrf.mxu0
        %1000 = vmatprep.mubr.f32.mxu0 0.0
        %1001 = vmatmul.mubr.f32.gmra.mxu0 %v871
        %v1002 = vpop.f32.mrf.mxu0
        %v1003 = vadd.f32 0.0, %v1002
        %v1004 = vpop.f32.mrf.mxu0
        %1005 = vmatprep.mubr.f32.mxu0 0.0
        %1006 = vmatmul.mubr.f32.gmra.mxu0 %v874
        %v1007 = vpop.f32.mrf.mxu0
        %v1008 = vadd.f32 0.0, %v1007
        %v1009 = vpop.f32.mrf.mxu0
        %1010 = vmatprep.mubr.f32.mxu0 0.0
        %1011 = vmatmul.mubr.f32.gmra.mxu0 %v877
        %v1012 = vpop.f32.mrf.mxu0
        %v1013 = vadd.f32 0.0, %v1012
        %v1014 = vpop.f32.mrf.mxu0
        %1015 = vmatprep.mubr.f32.mxu0 0.0
        %1016 = vmatmul.mubr.f32.gmra.mxu0 %v880
        %v1017 = vpop.f32.mrf.mxu0
        %v1018 = vadd.f32 0.0, %v1017
        %v1019 = vpop.f32.mrf.mxu0
        %1020 = vmatprep.mubr.f32.mxu0 0.0
        %1021 = vmatmul.mubr.f32.gmra.mxu0 %v883
        %v1022 = vpop.f32.mrf.mxu0
        %v1023 = vadd.f32 0.0, %v1022
        %v1024 = vpop.f32.mrf.mxu0
        %1025 = vmatprep.mubr.f32.mxu0 0.0
        %1026 = vmatmul.mubr.f32.gmra.mxu0 %v886
        %v1027 = vpop.f32.mrf.mxu0
        %v1028 = vadd.f32 0.0, %v1027
        %v1029 = vpop.f32.mrf.mxu0
        %1030 = vmatprep.mubr.f32.mxu0 0.0
        %1031 = vmatmul.mubr.f32.gmra.mxu0 %v889
        %v1032 = vpop.f32.mrf.mxu0
        %v1033 = vadd.f32 0.0, %v1032
        %v1034 = vpop.f32.mrf.mxu0
        %1035 = vmatprep.mubr.f32.mxu0 0.0
        %1036 = vmatmul.mubr.f32.gmra.mxu0 %v892
        %v1037 = vpop.f32.mrf.mxu0
        %v1038 = vadd.f32 0.0, %v1037
        %v1039 = vpop.f32.mrf.mxu0
        %1040 = vmatprep.mubr.f32.mxu0 0.0
        %1041 = vmatmul.mubr.f32.gmra.mxu0 %v895
        %v1042 = vpop.f32.mrf.mxu0
        %v1043 = vadd.f32 0.0, %v1042
        %v1044 = vpop.f32.mrf.mxu0
        %1045 = vdwg.mxu0
        %v1046 = vld [vmem:[%s8] sm:$0x7]
        %vm1047 = vcmask 23552
        %v1049 = vsel %vm1047, %v813, 0
        %v1052 = vsel %vm1047, %v814, 0
        %v1055 = vsel %vm1047, %v815, 0
        %v1058 = vsel %vm1047, %v816, 0
        %v1061 = vsel %vm1047, %v817, 0
        %v1064 = vsel %vm1047, %v818, 0
        %v1067 = vsel %vm1047, %v819, 0
        %v1070 = vsel %vm1047, %v820, 0
        %v1073 = vsel %vm1047, %v821, 0
        %v1076 = vsel %vm1047, %v822, 0
        %v1079 = vsel %vm1047, %v823, 0
        %v1082 = vsel %vm1047, %v824, 0
        %v1085 = vsel %vm1047, %v825, 0
        %v1088 = vsel %vm1047, %v826, 0
        %v1091 = vsel %vm1047, %v827, 0
        %v1094 = vsel %vm1047, %v828, 0
        %v1097 = vsel %vm1047, %v829, 0
        %v1100 = vsel %vm1047, %v830, 0
        %v1103 = vsel %vm1047, %v831, 0
        %v1106 = vsel %vm1047, %v832, 0
        %v1109 = vsel %vm1047, %v833, 0
        %v1112 = vsel %vm1047, %v834, 0
        %v1115 = vsel %vm1047, %v835, 0
        %v1118 = vsel %vm1047, %v836, 0
        %v1121 = vsel %vm1047, %v837, 0
        %v1124 = vsel %vm1047, %v838, 0
        %v1127 = vsel %vm1047, %v839, 0
        %v1130 = vsel %vm1047, %v840, 0
        %v1133 = vsel %vm1047, %v841, 0
        %v1136 = vsel %vm1047, %v842, 0
        %v1139 = vsel %vm1047, %v843, 0
        %v1142 = vsel %vm1047, %v844, 0
        %vm1144 = vcmask 1042432
        %v1146 = vsel %vm1144, %v1046, 0
        %1148 = vmatprep.subr.mxu0 0.0
        %1149 = vmatpush1.msra.mxu0 0.0
        %1150 = vmatprep.subr.mxu0 0.0
        %1151 = vmatpush1.msra.mxu0 0.0
        %1152 = vmatprep.subr.mxu0 0.0
        %1153 = vmatpush1.msra.mxu0 0.0
        %1154 = vmatprep.subr.mxu0 0.0
        %1155 = vmatpush1.msra.mxu0 0.0
        %1156 = vmatprep.subr.mxu0 0.0
        %1157 = vmatpush1.msra.mxu0 0.0
        %1158 = vmatprep.subr.mxu0 0.0
        %1159 = vmatpush1.msra.mxu0 0.0
        %1160 = vmatprep.subr.mxu0 0.0
        %1161 = vmatpush1.msra.mxu0 0.0
        %1162 = vmatprep.subr.mxu0 0.0
        %1163 = vmatpush1.msra.mxu0 0.0
        %1164 = vmatprep.subr.mxu0 0.0
        %1165 = vmatpush1.msra.mxu0 0.0
        %1166 = vmatprep.subr.mxu0 0.0
        %1167 = vmatpush1.msra.mxu0 0.0
        %1168 = vmatprep.subr.mxu0 0.0
        %1169 = vmatpush1.msra.mxu0 0.0
        %1170 = vmatprep.subr.mxu0 0.0
        %1171 = vmatpush1.msra.mxu0 0.0
        %1172 = vmatprep.subr.mxu0 0.0
        %1173 = vmatpush1.msra.mxu0 0.0
        %1174 = vmatprep.subr.mxu0 0.0
        %1175 = vmatpush1.msra.mxu0 0.0
        %1176 = vmatprep.subr.mxu0 0.0
        %1177 = vmatpush1.msra.mxu0 0.0
        %1178 = vmatprep.subr.mxu0 0.0
        %1179 = vmatpush1.msra.mxu0 %v1146
        %1180 = vmatprep.subr.mxu0 0.0
        %1181 = vmatpush2.msra.mxu0 0.0
        %1182 = vmatprep.subr.mxu0 0.0
        %1183 = vmatpush2.msra.mxu0 0.0
        %1184 = vmatprep.subr.mxu0 0.0
        %1185 = vmatpush2.msra.mxu0 0.0
        %1186 = vmatprep.subr.mxu0 0.0
        %1187 = vmatpush2.msra.mxu0 0.0
        %1188 = vmatprep.subr.mxu0 0.0
        %1189 = vmatpush2.msra.mxu0 0.0
        %1190 = vmatprep.subr.mxu0 0.0
        %1191 = vmatpush2.msra.mxu0 0.0
        %1192 = vmatprep.subr.mxu0 0.0
        %1193 = vmatpush2.msra.mxu0 0.0
        %1194 = vmatprep.subr.mxu0 0.0
        %1195 = vmatpush2.msra.mxu0 0.0
        %1196 = vmatprep.subr.mxu0 0.0
        %1197 = vmatpush2.msra.mxu0 0.0
        %1198 = vmatprep.subr.mxu0 0.0
        %1199 = vmatpush2.msra.mxu0 0.0
        %1200 = vmatprep.subr.mxu0 0.0
        %1201 = vmatpush2.msra.mxu0 0.0
        %1202 = vmatprep.subr.mxu0 0.0
        %1203 = vmatpush2.msra.mxu0 0.0
        %1204 = vmatprep.subr.mxu0 0.0
        %1205 = vmatpush2.msra.mxu0 0.0
        %1206 = vmatprep.subr.mxu0 0.0
        %1207 = vmatpush2.msra.mxu0 0.0
        %1208 = vmatprep.subr.mxu0 0.0
        %1209 = vmatpush2.msra.mxu0 0.0
        %1210 = vmatprep.subr.mxu0 0.0
        %1211 = vmatpush2.msra.mxu0 0.0
        %1212 = vmatprep.mubr.f32.mxu0 0.0
        %1213 = vmatmul.mubr.f32.gmra.mxu0 %v1049
        %v1214 = vpop.f32.mrf.mxu0
        %v1215 = vadd.f32 0.0, %v1214
        %v1216 = vpop.f32.mrf.mxu0
        %1217 = vmatprep.mubr.f32.mxu0 0.0
        %1218 = vmatmul.mubr.f32.gmra.mxu0 %v1052
        %v1219 = vpop.f32.mrf.mxu0
        %v1220 = vadd.f32 0.0, %v1219
        %v1221 = vpop.f32.mrf.mxu0
        %1222 = vmatprep.mubr.f32.mxu0 0.0
        %1223 = vmatmul.mubr.f32.gmra.mxu0 %v1055
        %v1224 = vpop.f32.mrf.mxu0
        %v1225 = vadd.f32 0.0, %v1224
        %v1226 = vpop.f32.mrf.mxu0
        %1227 = vmatprep.mubr.f32.mxu0 0.0
        %1228 = vmatmul.mubr.f32.gmra.mxu0 %v1058
        %v1229 = vpop.f32.mrf.mxu0
        %v1230 = vadd.f32 0.0, %v1229
        %v1231 = vpop.f32.mrf.mxu0
        %1232 = vmatprep.mubr.f32.mxu0 0.0
        %1233 = vmatmul.mubr.f32.gmra.mxu0 %v1061
        %v1234 = vpop.f32.mrf.mxu0
        %v1235 = vadd.f32 0.0, %v1234
        %v1236 = vpop.f32.mrf.mxu0
        %1237 = vmatprep.mubr.f32.mxu0 0.0
        %1238 = vmatmul.mubr.f32.gmra.mxu0 %v1064
        %v1239 = vpop.f32.mrf.mxu0
        %v1240 = vadd.f32 0.0, %v1239
        %v1241 = vpop.f32.mrf.mxu0
        %1242 = vmatprep.mubr.f32.mxu0 0.0
        %1243 = vmatmul.mubr.f32.gmra.mxu0 %v1067
        %v1244 = vpop.f32.mrf.mxu0
        %v1245 = vadd.f32 0.0, %v1244
        %v1246 = vpop.f32.mrf.mxu0
        %1247 = vmatprep.mubr.f32.mxu0 0.0
        %1248 = vmatmul.mubr.f32.gmra.mxu0 %v1070
        %v1249 = vpop.f32.mrf.mxu0
        %v1250 = vadd.f32 0.0, %v1249
        %v1251 = vpop.f32.mrf.mxu0
        %1252 = vmatprep.mubr.f32.mxu0 0.0
        %1253 = vmatmul.mubr.f32.gmra.mxu0 %v1073
        %v1254 = vpop.f32.mrf.mxu0
        %v1255 = vadd.f32 0.0, %v1254
        %v1256 = vpop.f32.mrf.mxu0
        %1257 = vmatprep.mubr.f32.mxu0 0.0
        %1258 = vmatmul.mubr.f32.gmra.mxu0 %v1076
        %v1259 = vpop.f32.mrf.mxu0
        %v1260 = vadd.f32 0.0, %v1259
        %v1261 = vpop.f32.mrf.mxu0
        %1262 = vmatprep.mubr.f32.mxu0 0.0
        %1263 = vmatmul.mubr.f32.gmra.mxu0 %v1079
        %v1264 = vpop.f32.mrf.mxu0
        %v1265 = vadd.f32 0.0, %v1264
        %v1266 = vpop.f32.mrf.mxu0
        %1267 = vmatprep.mubr.f32.mxu0 0.0
        %1268 = vmatmul.mubr.f32.gmra.mxu0 %v1082
        %v1269 = vpop.f32.mrf.mxu0
        %v1270 = vadd.f32 0.0, %v1269
        %v1271 = vpop.f32.mrf.mxu0
        %1272 = vmatprep.mubr.f32.mxu0 0.0
        %1273 = vmatmul.mubr.f32.gmra.mxu0 %v1085
        %v1274 = vpop.f32.mrf.mxu0
        %v1275 = vadd.f32 0.0, %v1274
        %v1276 = vpop.f32.mrf.mxu0
        %1277 = vmatprep.mubr.f32.mxu0 0.0
        %1278 = vmatmul.mubr.f32.gmra.mxu0 %v1088
        %v1279 = vpop.f32.mrf.mxu0
        %v1280 = vadd.f32 0.0, %v1279
        %v1281 = vpop.f32.mrf.mxu0
        %1282 = vmatprep.mubr.f32.mxu0 0.0
        %1283 = vmatmul.mubr.f32.gmra.mxu0 %v1091
        %v1284 = vpop.f32.mrf.mxu0
        %v1285 = vadd.f32 0.0, %v1284
        %v1286 = vpop.f32.mrf.mxu0
        %1287 = vmatprep.mubr.f32.mxu0 0.0
        %1288 = vmatmul.mubr.f32.gmra.mxu0 %v1094
        %v1289 = vpop.f32.mrf.mxu0
        %v1290 = vadd.f32 0.0, %v1289
        %v1291 = vpop.f32.mrf.mxu0
        %1292 = vmatprep.mubr.f32.mxu0 0.0
        %1293 = vmatmul.mubr.f32.gmra.mxu0 %v1097
        %v1294 = vpop.f32.mrf.mxu0
        %v1295 = vadd.f32 0.0, %v1294
        %v1296 = vpop.f32.mrf.mxu0
        %1297 = vmatprep.mubr.f32.mxu0 0.0
        %1298 = vmatmul.mubr.f32.gmra.mxu0 %v1100
        %v1299 = vpop.f32.mrf.mxu0
        %v1300 = vadd.f32 0.0, %v1299
        %v1301 = vpop.f32.mrf.mxu0
        %1302 = vmatprep.mubr.f32.mxu0 0.0
        %1303 = vmatmul.mubr.f32.gmra.mxu0 %v1103
        %v1304 = vpop.f32.mrf.mxu0
        %v1305 = vadd.f32 0.0, %v1304
        %v1306 = vpop.f32.mrf.mxu0
        %1307 = vmatprep.mubr.f32.mxu0 0.0
        %1308 = vmatmul.mubr.f32.gmra.mxu0 %v1106
        %v1309 = vpop.f32.mrf.mxu0
        %v1310 = vadd.f32 0.0, %v1309
        %v1311 = vpop.f32.mrf.mxu0
        %1312 = vmatprep.mubr.f32.mxu0 0.0
        %1313 = vmatmul.mubr.f32.gmra.mxu0 %v1109
        %v1314 = vpop.f32.mrf.mxu0
        %v1315 = vadd.f32 0.0, %v1314
        %v1316 = vpop.f32.mrf.mxu0
        %1317 = vmatprep.mubr.f32.mxu0 0.0
        %1318 = vmatmul.mubr.f32.gmra.mxu0 %v1112
        %v1319 = vpop.f32.mrf.mxu0
        %v1320 = vadd.f32 0.0, %v1319
        %v1321 = vpop.f32.mrf.mxu0
        %1322 = vmatprep.mubr.f32.mxu0 0.0
        %1323 = vmatmul.mubr.f32.gmra.mxu0 %v1115
        %v1324 = vpop.f32.mrf.mxu0
        %v1325 = vadd.f32 0.0, %v1324
        %v1326 = vpop.f32.mrf.mxu0
        %1327 = vmatprep.mubr.f32.mxu0 0.0
        %1328 = vmatmul.mubr.f32.gmra.mxu0 %v1118
        %v1329 = vpop.f32.mrf.mxu0
        %v1330 = vadd.f32 0.0, %v1329
        %v1331 = vpop.f32.mrf.mxu0
        %1332 = vmatprep.mubr.f32.mxu0 0.0
        %1333 = vmatmul.mubr.f32.gmra.mxu0 %v1121
        %v1334 = vpop.f32.mrf.mxu0
        %v1335 = vadd.f32 0.0, %v1334
        %v1336 = vpop.f32.mrf.mxu0
        %1337 = vmatprep.mubr.f32.mxu0 0.0
        %1338 = vmatmul.mubr.f32.gmra.mxu0 %v1124
        %v1339 = vpop.f32.mrf.mxu0
        %v1340 = vadd.f32 0.0, %v1339
        %v1341 = vpop.f32.mrf.mxu0
        %1342 = vmatprep.mubr.f32.mxu0 0.0
        %1343 = vmatmul.mubr.f32.gmra.mxu0 %v1127
        %v1344 = vpop.f32.mrf.mxu0
        %v1345 = vadd.f32 0.0, %v1344
        %v1346 = vpop.f32.mrf.mxu0
        %1347 = vmatprep.mubr.f32.mxu0 0.0
        %1348 = vmatmul.mubr.f32.gmra.mxu0 %v1130
        %v1349 = vpop.f32.mrf.mxu0
        %v1350 = vadd.f32 0.0, %v1349
        %v1351 = vpop.f32.mrf.mxu0
        %1352 = vmatprep.mubr.f32.mxu0 0.0
        %1353 = vmatmul.mubr.f32.gmra.mxu0 %v1133
        %v1354 = vpop.f32.mrf.mxu0
        %v1355 = vadd.f32 0.0, %v1354
        %v1356 = vpop.f32.mrf.mxu0
        %1357 = vmatprep.mubr.f32.mxu0 0.0
        %1358 = vmatmul.mubr.f32.gmra.mxu0 %v1136
        %v1359 = vpop.f32.mrf.mxu0
        %v1360 = vadd.f32 0.0, %v1359
        %v1361 = vpop.f32.mrf.mxu0
        %1362 = vmatprep.mubr.f32.mxu0 0.0
        %1363 = vmatmul.mubr.f32.gmra.mxu0 %v1139
        %v1364 = vpop.f32.mrf.mxu0
        %v1365 = vadd.f32 0.0, %v1364
        %v1366 = vpop.f32.mrf.mxu0
        %1367 = vmatprep.mubr.f32.mxu0 0.0
        %1368 = vmatmul.mubr.f32.gmra.mxu0 %v1142
        %v1369 = vpop.f32.mrf.mxu0
        %v1370 = vadd.f32 0.0, %v1369
        %v1371 = vpop.f32.mrf.mxu0
        %1372 = vdwg.mxu0
        %v1373 = vld [vmem:[%s9] sm:$0x1f]
        %vm1374 = vcmask 39936
        %v1376 = vsel %vm1374, %v845, 0
        %v1379 = vsel %vm1374, %v846, 0
        %vm1381 = vcmask 1044480
        %v1383 = vsel %vm1381, %v1373, 0
        %1385 = vmatprep.subr.mxu0 0.0
        %1386 = vmatpush1.msra.mxu0 0.0
        %1387 = vmatprep.subr.mxu0 0.0
        %1388 = vmatpush1.msra.mxu0 0.0
        %1389 = vmatprep.subr.mxu0 0.0
        %1390 = vmatpush1.msra.mxu0 0.0
        %1391 = vmatprep.subr.mxu0 0.0
        %1392 = vmatpush1.msra.mxu0 0.0
        %1393 = vmatprep.subr.mxu0 0.0
        %1394 = vmatpush1.msra.mxu0 0.0
        %1395 = vmatprep.subr.mxu0 0.0
        %1396 = vmatpush1.msra.mxu0 0.0
        %1397 = vmatprep.subr.mxu0 0.0
        %1398 = vmatpush1.msra.mxu0 0.0
        %1399 = vmatprep.subr.mxu0 0.0
        %1400 = vmatpush1.msra.mxu0 0.0
        %1401 = vmatprep.subr.mxu0 0.0
        %1402 = vmatpush1.msra.mxu0 0.0
        %1403 = vmatprep.subr.mxu0 0.0
        %1404 = vmatpush1.msra.mxu0 0.0
        %1405 = vmatprep.subr.mxu0 0.0
        %1406 = vmatpush1.msra.mxu0 0.0
        %1407 = vmatprep.subr.mxu0 0.0
        %1408 = vmatpush1.msra.mxu0 0.0
        %1409 = vmatprep.subr.mxu0 0.0
        %1410 = vmatpush1.msra.mxu0 0.0
        %1411 = vmatprep.subr.mxu0 0.0
        %1412 = vmatpush1.msra.mxu0 0.0
        %1413 = vmatprep.subr.mxu0 0.0
        %1414 = vmatpush1.msra.mxu0 0.0
        %1415 = vmatprep.subr.mxu0 0.0
        %1416 = vmatpush1.msra.mxu0 %v1383
        %1417 = vmatprep.subr.mxu0 0.0
        %1418 = vmatpush2.msra.mxu0 0.0
        %1419 = vmatprep.subr.mxu0 0.0
        %1420 = vmatpush2.msra.mxu0 0.0
        %1421 = vmatprep.subr.mxu0 0.0
        %1422 = vmatpush2.msra.mxu0 0.0
        %1423 = vmatprep.subr.mxu0 0.0
        %1424 = vmatpush2.msra.mxu0 0.0
        %1425 = vmatprep.subr.mxu0 0.0
        %1426 = vmatpush2.msra.mxu0 0.0
        %1427 = vmatprep.subr.mxu0 0.0
        %1428 = vmatpush2.msra.mxu0 0.0
        %1429 = vmatprep.subr.mxu0 0.0
        %1430 = vmatpush2.msra.mxu0 0.0
        %1431 = vmatprep.subr.mxu0 0.0
        %1432 = vmatpush2.msra.mxu0 0.0
        %1433 = vmatprep.subr.mxu0 0.0
        %1434 = vmatpush2.msra.mxu0 0.0
        %1435 = vmatprep.subr.mxu0 0.0
        %1436 = vmatpush2.msra.mxu0 0.0
        %1437 = vmatprep.subr.mxu0 0.0
        %1438 = vmatpush2.msra.mxu0 0.0
        %1439 = vmatprep.subr.mxu0 0.0
        %1440 = vmatpush2.msra.mxu0 0.0
        %1441 = vmatprep.subr.mxu0 0.0
        %1442 = vmatpush2.msra.mxu0 0.0
        %1443 = vmatprep.subr.mxu0 0.0
        %1444 = vmatpush2.msra.mxu0 0.0
        %1445 = vmatprep.subr.mxu0 0.0
        %1446 = vmatpush2.msra.mxu0 0.0
        %1447 = vmatprep.subr.mxu0 0.0
        %1448 = vmatpush2.msra.mxu0 0.0
        %1449 = vmatprep.mubr.f32.mxu0 0.0
        %1450 = vmatmul.mubr.f32.gmra.mxu0 %v1376
        %v1451 = vpop.f32.mrf.mxu0
        %v1452 = vadd.f32 0.0, %v1451
        %v1453 = vpop.f32.mrf.mxu0
        %1454 = vmatprep.mubr.f32.mxu0 0.0
        %1455 = vmatmul.mubr.f32.gmra.mxu0 %v1379
        %v1456 = vpop.f32.mrf.mxu0
        %v1457 = vadd.f32 0.0, %v1456
        %v1458 = vpop.f32.mrf.mxu0
        %1459 = vdwg.mxu0
        %v1460 = vld [vmem:[%s776] sm:$0xff]
        %v1461 = vld [vmem:[%s776 + $0x8] sm:$0xff]
        %v1462 = vld [vmem:[%s776 + $0x10] sm:$0xff]
        %v1463 = vld [vmem:[%s776 + $0x18] sm:$0xff]
        %v1464 = vld [vmem:[%s776 + $0x20] sm:$0xff]
        %v1465 = vld [vmem:[%s776 + $0x28] sm:$0xff]
        %v1466 = vld [vmem:[%s776 + $0x30] sm:$0xff]
        %v1467 = vld [vmem:[%s776 + $0x38] sm:$0xff]
        %v1468 = vld [vmem:[%s776 + $0x40] sm:$0xff]
        %v1469 = vld [vmem:[%s776 + $0x48] sm:$0xff]
        %v1470 = vld [vmem:[%s776 + $0x50] sm:$0xff]
        %v1471 = vld [vmem:[%s776 + $0x58] sm:$0xff]
        %v1472 = vld [vmem:[%s776 + $0x60] sm:$0xff]
        %v1473 = vld [vmem:[%s776 + $0x68] sm:$0xff]
        %v1474 = vld [vmem:[%s776 + $0x70] sm:$0xff]
        %v1475 = vld [vmem:[%s776 + $0x78] sm:$0xff]
        %v1476 = vld [vmem:[%s776 + $0x80] sm:$0xff]
        %v1477 = vld [vmem:[%s776 + $0x88] sm:$0xff]
        %v1478 = vld [vmem:[%s776 + $0x90] sm:$0xff]
        %v1479 = vld [vmem:[%s776 + $0x98] sm:$0xff]
        %v1480 = vld [vmem:[%s776 + $0xa0] sm:$0xff]
        %v1481 = vld [vmem:[%s776 + $0xa8] sm:$0xff]
        %v1482 = vld [vmem:[%s776 + $0xb0] sm:$0xff]
        %v1483 = vld [vmem:[%s776 + $0xb8] sm:$0xff]
        %v1484 = vld [vmem:[%s776 + $0xc0] sm:$0xff]
        %v1485 = vld [vmem:[%s776 + $0xc8] sm:$0xff]
        %v1486 = vld [vmem:[%s776 + $0xd0] sm:$0xff]
        %v1487 = vld [vmem:[%s776 + $0xd8] sm:$0xff]
        %v1488 = vld [vmem:[%s776 + $0xe0] sm:$0xff]
        %v1489 = vld [vmem:[%s776 + $0xe8] sm:$0xff]
        %v1490 = vld [vmem:[%s776 + $0xf0] sm:$0xff]
        %v1491 = vld [vmem:[%s776 + $0xf8] sm:$0xff]
        %v1492 = vld [vmem:[%s782] sm:$0xff]
        %v1493 = vld [vmem:[%s782 + $0x8] sm:$0xff]
        %v1494 = vld [vmem:[%s782 + $0x10] sm:$0xff]
        %v1495 = vld [vmem:[%s782 + $0x18] sm:$0xff]
        %v1496 = vld [vmem:[%s782 + $0x20] sm:$0xff]
        %v1497 = vld [vmem:[%s782 + $0x28] sm:$0xff]
        %v1498 = vld [vmem:[%s782 + $0x30] sm:$0xff]
        %v1499 = vld [vmem:[%s782 + $0x38] sm:$0xff]
        %v1500 = vld [vmem:[%s782 + $0x40] sm:$0xff]
        %v1501 = vld [vmem:[%s782 + $0x48] sm:$0xff]
        %v1502 = vld [vmem:[%s782 + $0x50] sm:$0xff]
        %v1503 = vld [vmem:[%s782 + $0x58] sm:$0xff]
        %v1504 = vld [vmem:[%s782 + $0x60] sm:$0xff]
        %v1505 = vld [vmem:[%s782 + $0x68] sm:$0xff]
        %v1506 = vld [vmem:[%s782 + $0x70] sm:$0xff]
        %v1507 = vld [vmem:[%s782 + $0x78] sm:$0xff]
        %vm1508 = vcmask 64512
        %v1509 = vsel %vm1508, %v1460, 0.0
        %1510 = vadd.xlane.f32.xlu0 %v1509
        %v1511 = vpop.xlane.xlu0 %1510
        %v1512 = vsel %vm1508, %v1461, 0.0
        %1513 = vadd.xlane.f32.xlu0 %v1512
        %v1514 = vpop.xlane.xlu0 %1513
        %v1515 = vsel %vm1508, %v1462, 0.0
        %1516 = vadd.xlane.f32.xlu0 %v1515
        %v1517 = vpop.xlane.xlu0 %1516
        %v1518 = vsel %vm1508, %v1463, 0.0
        %1519 = vadd.xlane.f32.xlu0 %v1518
        %v1520 = vpop.xlane.xlu0 %1519
        %v1521 = vsel %vm1508, %v1464, 0.0
        %1522 = vadd.xlane.f32.xlu0 %v1521
        %v1523 = vpop.xlane.xlu0 %1522
        %v1524 = vsel %vm1508, %v1465, 0.0
        %1525 = vadd.xlane.f32.xlu0 %v1524
        %v1526 = vpop.xlane.xlu0 %1525
        %v1527 = vsel %vm1508, %v1466, 0.0
        %1528 = vadd.xlane.f32.xlu0 %v1527
        %v1529 = vpop.xlane.xlu0 %1528
        %v1530 = vsel %vm1508, %v1467, 0.0
        %1531 = vadd.xlane.f32.xlu0 %v1530
        %v1532 = vpop.xlane.xlu0 %1531
        %v1533 = vsel %vm1508, %v1468, 0.0
        %1534 = vadd.xlane.f32.xlu0 %v1533
        %v1535 = vpop.xlane.xlu0 %1534
        %v1536 = vsel %vm1508, %v1469, 0.0
        %1537 = vadd.xlane.f32.xlu0 %v1536
        %v1538 = vpop.xlane.xlu0 %1537
        %v1539 = vsel %vm1508, %v1470, 0.0
        %1540 = vadd.xlane.f32.xlu0 %v1539
        %v1541 = vpop.xlane.xlu0 %1540
        %v1542 = vsel %vm1508, %v1471, 0.0
        %1543 = vadd.xlane.f32.xlu0 %v1542
        %v1544 = vpop.xlane.xlu0 %1543
        %v1545 = vsel %vm1508, %v1472, 0.0
        %1546 = vadd.xlane.f32.xlu0 %v1545
        %v1547 = vpop.xlane.xlu0 %1546
        %v1548 = vsel %vm1508, %v1473, 0.0
        %1549 = vadd.xlane.f32.xlu0 %v1548
        %v1550 = vpop.xlane.xlu0 %1549
        %v1551 = vsel %vm1508, %v1474, 0.0
        %1552 = vadd.xlane.f32.xlu0 %v1551
        %v1553 = vpop.xlane.xlu0 %1552
        %v1554 = vsel %vm1508, %v1475, 0.0
        %1555 = vadd.xlane.f32.xlu0 %v1554
        %v1556 = vpop.xlane.xlu0 %1555
        %v1557 = vsel %vm1508, %v1476, 0.0
        %1558 = vadd.xlane.f32.xlu0 %v1557
        %v1559 = vpop.xlane.xlu0 %1558
        %v1560 = vsel %vm1508, %v1477, 0.0
        %1561 = vadd.xlane.f32.xlu0 %v1560
        %v1562 = vpop.xlane.xlu0 %1561
        %v1563 = vsel %vm1508, %v1478, 0.0
        %1564 = vadd.xlane.f32.xlu0 %v1563
        %v1565 = vpop.xlane.xlu0 %1564
        %v1566 = vsel %vm1508, %v1479, 0.0
        %1567 = vadd.xlane.f32.xlu0 %v1566
        %v1568 = vpop.xlane.xlu0 %1567
        %v1569 = vsel %vm1508, %v1480, 0.0
        %1570 = vadd.xlane.f32.xlu0 %v1569
        %v1571 = vpop.xlane.xlu0 %1570
        %v1572 = vsel %vm1508, %v1481, 0.0
        %1573 = vadd.xlane.f32.xlu0 %v1572
        %v1574 = vpop.xlane.xlu0 %1573
        %v1575 = vsel %vm1508, %v1482, 0.0
        %1576 = vadd.xlane.f32.xlu0 %v1575
        %v1577 = vpop.xlane.xlu0 %1576
        %v1578 = vsel %vm1508, %v1483, 0.0
        %1579 = vadd.xlane.f32.xlu0 %v1578
        %v1580 = vpop.xlane.xlu0 %1579
        %v1581 = vsel %vm1508, %v1484, 0.0
        %1582 = vadd.xlane.f32.xlu0 %v1581
        %v1583 = vpop.xlane.xlu0 %1582
        %v1584 = vsel %vm1508, %v1485, 0.0
        %1585 = vadd.xlane.f32.xlu0 %v1584
        %v1586 = vpop.xlane.xlu0 %1585
        %v1587 = vsel %vm1508, %v1486, 0.0
        %1588 = vadd.xlane.f32.xlu0 %v1587
        %v1589 = vpop.xlane.xlu0 %1588
        %v1590 = vsel %vm1508, %v1487, 0.0
        %1591 = vadd.xlane.f32.xlu0 %v1590
        %v1592 = vpop.xlane.xlu0 %1591
        %v1593 = vsel %vm1508, %v1488, 0.0
        %1594 = vadd.xlane.f32.xlu0 %v1593
        %v1595 = vpop.xlane.xlu0 %1594
        %v1596 = vsel %vm1508, %v1489, 0.0
        %1597 = vadd.xlane.f32.xlu0 %v1596
        %v1598 = vpop.xlane.xlu0 %1597
        %v1599 = vsel %vm1508, %v1490, 0.0
        %1600 = vadd.xlane.f32.xlu0 %v1599
        %v1601 = vpop.xlane.xlu0 %1600
        %v1602 = vsel %vm1508, %v1491, 0.0
        %1603 = vadd.xlane.f32.xlu0 %v1602
        %v1604 = vpop.xlane.xlu0 %1603
        %v1605 = vmax.f32 %v1511, 1.0
        %v1606 = vmax.f32 %v1514, 1.0
        %v1607 = vmax.f32 %v1517, 1.0
        %v1608 = vmax.f32 %v1520, 1.0
        %v1609 = vmax.f32 %v1523, 1.0
        %v1610 = vmax.f32 %v1526, 1.0
        %v1611 = vmax.f32 %v1529, 1.0
        %v1612 = vmax.f32 %v1532, 1.0
        %v1613 = vmax.f32 %v1535, 1.0
        %v1614 = vmax.f32 %v1538, 1.0
        %v1615 = vmax.f32 %v1541, 1.0
        %v1616 = vmax.f32 %v1544, 1.0
        %v1617 = vmax.f32 %v1547, 1.0
        %v1618 = vmax.f32 %v1550, 1.0
        %v1619 = vmax.f32 %v1553, 1.0
        %v1620 = vmax.f32 %v1556, 1.0
        %v1621 = vmax.f32 %v1559, 1.0
        %v1622 = vmax.f32 %v1562, 1.0
        %v1623 = vmax.f32 %v1565, 1.0
        %v1624 = vmax.f32 %v1568, 1.0
        %v1625 = vmax.f32 %v1571, 1.0
        %v1626 = vmax.f32 %v1574, 1.0
        %v1627 = vmax.f32 %v1577, 1.0
        %v1628 = vmax.f32 %v1580, 1.0
        %v1629 = vmax.f32 %v1583, 1.0
        %v1630 = vmax.f32 %v1586, 1.0
        %v1631 = vmax.f32 %v1589, 1.0
        %v1632 = vmax.f32 %v1592, 1.0
        %v1633 = vmax.f32 %v1595, 1.0
        %v1634 = vmax.f32 %v1598, 1.0
        %v1635 = vmax.f32 %v1601, 1.0
        %v1636 = vmax.f32 %v1604, 1.0
        %vm1637 = vcmask 130048
        %v1638 = vsel %vm1637, %v1492, 0.0
        %1639 = vadd.xlane.f32.xlu0 %v1638
        %v1640 = vpop.xlane.xlu0 %1639
        %v1641 = vsel %vm1637, %v1493, 0.0
        %1642 = vadd.xlane.f32.xlu0 %v1641
        %v1643 = vpop.xlane.xlu0 %1642
        %v1644 = vsel %vm1637, %v1494, 0.0
        %1645 = vadd.xlane.f32.xlu0 %v1644
        %v1646 = vpop.xlane.xlu0 %1645
        %v1647 = vsel %vm1637, %v1495, 0.0
        %1648 = vadd.xlane.f32.xlu0 %v1647
        %v1649 = vpop.xlane.xlu0 %1648
        %v1650 = vsel %vm1637, %v1496, 0.0
        %1651 = vadd.xlane.f32.xlu0 %v1650
        %v1652 = vpop.xlane.xlu0 %1651
        %v1653 = vsel %vm1637, %v1497, 0.0
        %1654 = vadd.xlane.f32.xlu0 %v1653
        %v1655 = vpop.xlane.xlu0 %1654
        %v1656 = vsel %vm1637, %v1498, 0.0
        %1657 = vadd.xlane.f32.xlu0 %v1656
        %v1658 = vpop.xlane.xlu0 %1657
        %v1659 = vsel %vm1637, %v1499, 0.0
        %1660 = vadd.xlane.f32.xlu0 %v1659
        %v1661 = vpop.xlane.xlu0 %1660
        %v1662 = vsel %vm1637, %v1500, 0.0
        %1663 = vadd.xlane.f32.xlu0 %v1662
        %v1664 = vpop.xlane.xlu0 %1663
        %v1665 = vsel %vm1637, %v1501, 0.0
        %1666 = vadd.xlane.f32.xlu0 %v1665
        %v1667 = vpop.xlane.xlu0 %1666
        %v1668 = vsel %vm1637, %v1502, 0.0
        %1669 = vadd.xlane.f32.xlu0 %v1668
        %v1670 = vpop.xlane.xlu0 %1669
        %v1671 = vsel %vm1637, %v1503, 0.0
        %1672 = vadd.xlane.f32.xlu0 %v1671
        %v1673 = vpop.xlane.xlu0 %1672
        %v1674 = vsel %vm1637, %v1504, 0.0
        %1675 = vadd.xlane.f32.xlu0 %v1674
        %v1676 = vpop.xlane.xlu0 %1675
        %v1677 = vsel %vm1637, %v1505, 0.0
        %1678 = vadd.xlane.f32.xlu0 %v1677
        %v1679 = vpop.xlane.xlu0 %1678
        %v1680 = vsel %vm1637, %v1506, 0.0
        %1681 = vadd.xlane.f32.xlu0 %v1680
        %v1682 = vpop.xlane.xlu0 %1681
        %v1683 = vsel %vm1637, %v1507, 0.0
        %1684 = vadd.xlane.f32.xlu0 %v1683
        %v1685 = vpop.xlane.xlu0 %1684
        %v1686 = vmax.f32 %v1640, 1.0
        %v1687 = vmax.f32 %v1643, 1.0
        %v1688 = vmax.f32 %v1646, 1.0
        %v1689 = vmax.f32 %v1649, 1.0
        %v1690 = vmax.f32 %v1652, 1.0
        %v1691 = vmax.f32 %v1655, 1.0
        %v1692 = vmax.f32 %v1658, 1.0
        %v1693 = vmax.f32 %v1661, 1.0
        %v1694 = vmax.f32 %v1664, 1.0
        %v1695 = vmax.f32 %v1667, 1.0
        %v1696 = vmax.f32 %v1670, 1.0
        %v1697 = vmax.f32 %v1673, 1.0
        %v1698 = vmax.f32 %v1676, 1.0
        %v1699 = vmax.f32 %v1679, 1.0
        %v1700 = vmax.f32 %v1682, 1.0
        %v1701 = vmax.f32 %v1685, 1.0
        %v1702 = vrcp.pop %v1605
        %v1703 = vmul.f32 %v1460, %v1702
        %v1704 = vrcp.pop %v1606
        %v1705 = vmul.f32 %v1461, %v1704
        %v1706 = vrcp.pop %v1607
        %v1707 = vmul.f32 %v1462, %v1706
        %v1708 = vrcp.pop %v1608
        %v1709 = vmul.f32 %v1463, %v1708
        %v1710 = vrcp.pop %v1609
        %v1711 = vmul.f32 %v1464, %v1710
        %v1712 = vrcp.pop %v1610
        %v1713 = vmul.f32 %v1465, %v1712
        %v1714 = vrcp.pop %v1611
        %v1715 = vmul.f32 %v1466, %v1714
        %v1716 = vrcp.pop %v1612
        %v1717 = vmul.f32 %v1467, %v1716
        %v1718 = vrcp.pop %v1613
        %v1719 = vmul.f32 %v1468, %v1718
        %v1720 = vrcp.pop %v1614
        %v1721 = vmul.f32 %v1469, %v1720
        %v1722 = vrcp.pop %v1615
        %v1723 = vmul.f32 %v1470, %v1722
        %v1724 = vrcp.pop %v1616
        %v1725 = vmul.f32 %v1471, %v1724
        %v1726 = vrcp.pop %v1617
        %v1727 = vmul.f32 %v1472, %v1726
        %v1728 = vrcp.pop %v1618
        %v1729 = vmul.f32 %v1473, %v1728
        %v1730 = vrcp.pop %v1619
        %v1731 = vmul.f32 %v1474, %v1730
        %v1732 = vrcp.pop %v1620
        %v1733 = vmul.f32 %v1475, %v1732
        %v1734 = vrcp.pop %v1621
        %v1735 = vmul.f32 %v1476, %v1734
        %v1736 = vrcp.pop %v1622
        %v1737 = vmul.f32 %v1477, %v1736
        %v1738 = vrcp.pop %v1623
        %v1739 = vmul.f32 %v1478, %v1738
        %v1740 = vrcp.pop %v1624
        %v1741 = vmul.f32 %v1479, %v1740
        %v1742 = vrcp.pop %v1625
        %v1743 = vmul.f32 %v1480, %v1742
        %v1744 = vrcp.pop %v1626
        %v1745 = vmul.f32 %v1481, %v1744
        %v1746 = vrcp.pop %v1627
        %v1747 = vmul.f32 %v1482, %v1746
        %v1748 = vrcp.pop %v1628
        %v1749 = vmul.f32 %v1483, %v1748
        %v1750 = vrcp.pop %v1629
        %v1751 = vmul.f32 %v1484, %v1750
        %v1752 = vrcp.pop %v1630
        %v1753 = vmul.f32 %v1485, %v1752
        %v1754 = vrcp.pop %v1631
        %v1755 = vmul.f32 %v1486, %v1754
        %v1756 = vrcp.pop %v1632
        %v1757 = vmul.f32 %v1487, %v1756
        %v1758 = vrcp.pop %v1633
        %v1759 = vmul.f32 %v1488, %v1758
        %v1760 = vrcp.pop %v1634
        %v1761 = vmul.f32 %v1489, %v1760
        %v1762 = vrcp.pop %v1635
        %v1763 = vmul.f32 %v1490, %v1762
        %v1764 = vrcp.pop %v1636
        %v1765 = vmul.f32 %v1491, %v1764
        %v1766 = vld [vmem:[%s16] sm:$0xff]
        %v1767 = vld [vmem:[%s16 + $0x8] sm:$0xff]
        %v1769 = vsel %vm1508, %v1703, 0
        %v1772 = vsel %vm1508, %v1705, 0
        %v1775 = vsel %vm1508, %v1707, 0
        %v1778 = vsel %vm1508, %v1709, 0
        %v1781 = vsel %vm1508, %v1711, 0
        %v1784 = vsel %vm1508, %v1713, 0
        %v1787 = vsel %vm1508, %v1715, 0
        %v1790 = vsel %vm1508, %v1717, 0
        %v1793 = vsel %vm1508, %v1719, 0
        %v1796 = vsel %vm1508, %v1721, 0
        %v1799 = vsel %vm1508, %v1723, 0
        %v1802 = vsel %vm1508, %v1725, 0
        %v1805 = vsel %vm1508, %v1727, 0
        %v1808 = vsel %vm1508, %v1729, 0
        %v1811 = vsel %vm1508, %v1731, 0
        %v1814 = vsel %vm1508, %v1733, 0
        %v1817 = vsel %vm1508, %v1735, 0
        %v1820 = vsel %vm1508, %v1737, 0
        %v1823 = vsel %vm1508, %v1739, 0
        %v1826 = vsel %vm1508, %v1741, 0
        %v1829 = vsel %vm1508, %v1743, 0
        %v1832 = vsel %vm1508, %v1745, 0
        %v1835 = vsel %vm1508, %v1747, 0
        %v1838 = vsel %vm1508, %v1749, 0
        %v1841 = vsel %vm1508, %v1751, 0
        %v1844 = vsel %vm1508, %v1753, 0
        %v1847 = vsel %vm1508, %v1755, 0
        %v1850 = vsel %vm1508, %v1757, 0
        %v1853 = vsel %vm1508, %v1759, 0
        %v1856 = vsel %vm1508, %v1761, 0
        %v1859 = vsel %vm1508, %v1763, 0
        %v1862 = vsel %vm1508, %v1765, 0
        %1864 = vmatprep.subr.mxu0 0.0
        %1865 = vmatpush1.msra.mxu0 0.0
        %1866 = vmatprep.subr.mxu0 0.0
        %1867 = vmatpush1.msra.mxu0 0.0
        %1868 = vmatprep.subr.mxu0 0.0
        %1869 = vmatpush1.msra.mxu0 0.0
        %1870 = vmatprep.subr.mxu0 0.0
        %1871 = vmatpush1.msra.mxu0 0.0
        %1872 = vmatprep.subr.mxu0 0.0
        %1873 = vmatpush1.msra.mxu0 0.0
        %1874 = vmatprep.subr.mxu0 0.0
        %1875 = vmatpush1.msra.mxu0 0.0
        %1876 = vmatprep.subr.mxu0 0.0
        %1877 = vmatpush1.msra.mxu0 0.0
        %1878 = vmatprep.subr.mxu0 0.0
        %1879 = vmatpush1.msra.mxu0 0.0
        %1880 = vmatprep.subr.mxu0 0.0
        %1881 = vmatpush1.msra.mxu0 0.0
        %1882 = vmatprep.subr.mxu0 0.0
        %1883 = vmatpush1.msra.mxu0 0.0
        %1884 = vmatprep.subr.mxu0 0.0
        %1885 = vmatpush1.msra.mxu0 0.0
        %1886 = vmatprep.subr.mxu0 0.0
        %1887 = vmatpush1.msra.mxu0 0.0
        %1888 = vmatprep.subr.mxu0 0.0
        %1889 = vmatpush1.msra.mxu0 0.0
        %1890 = vmatprep.subr.mxu0 0.0
        %1891 = vmatpush1.msra.mxu0 0.0
        %1892 = vmatprep.subr.mxu0 0.0
        %1893 = vmatpush1.msra.mxu0 0.0
        %1894 = vmatprep.subr.mxu0 %v1767
        %1895 = vmatpush1.msra.mxu0 %v1766
        %1896 = vmatprep.subr.mxu0 0.0
        %1897 = vmatpush2.msra.mxu0 0.0
        %1898 = vmatprep.subr.mxu0 0.0
        %1899 = vmatpush2.msra.mxu0 0.0
        %1900 = vmatprep.subr.mxu0 0.0
        %1901 = vmatpush2.msra.mxu0 0.0
        %1902 = vmatprep.subr.mxu0 0.0
        %1903 = vmatpush2.msra.mxu0 0.0
        %1904 = vmatprep.subr.mxu0 0.0
        %1905 = vmatpush2.msra.mxu0 0.0
        %1906 = vmatprep.subr.mxu0 0.0
        %1907 = vmatpush2.msra.mxu0 0.0
        %1908 = vmatprep.subr.mxu0 0.0
        %1909 = vmatpush2.msra.mxu0 0.0
        %1910 = vmatprep.subr.mxu0 0.0
        %1911 = vmatpush2.msra.mxu0 0.0
        %1912 = vmatprep.subr.mxu0 0.0
        %1913 = vmatpush2.msra.mxu0 0.0
        %1914 = vmatprep.subr.mxu0 0.0
        %1915 = vmatpush2.msra.mxu0 0.0
        %1916 = vmatprep.subr.mxu0 0.0
        %1917 = vmatpush2.msra.mxu0 0.0
        %1918 = vmatprep.subr.mxu0 0.0
        %1919 = vmatpush2.msra.mxu0 0.0
        %1920 = vmatprep.subr.mxu0 0.0
        %1921 = vmatpush2.msra.mxu0 0.0
        %1922 = vmatprep.subr.mxu0 0.0
        %1923 = vmatpush2.msra.mxu0 0.0
        %1924 = vmatprep.subr.mxu0 0.0
        %1925 = vmatpush2.msra.mxu0 0.0
        %1926 = vmatprep.subr.mxu0 0.0
        %1927 = vmatpush2.msra.mxu0 0.0
        %1928 = vmatprep.mubr.f32.mxu0 0.0
        %1929 = vmatmul.mubr.f32.gmra.mxu0 %v1769
        %v1930 = vpop.f32.mrf.mxu0
        %v1931 = vadd.f32 0.0, %v1930
        %v1932 = vpop.f32.mrf.mxu0
        %v1933 = vadd.f32 0.0, %v1932
        %1934 = vmatprep.mubr.f32.mxu0 0.0
        %1935 = vmatmul.mubr.f32.gmra.mxu0 %v1772
        %v1936 = vpop.f32.mrf.mxu0
        %v1937 = vadd.f32 0.0, %v1936
        %v1938 = vpop.f32.mrf.mxu0
        %v1939 = vadd.f32 0.0, %v1938
        %1940 = vmatprep.mubr.f32.mxu0 0.0
        %1941 = vmatmul.mubr.f32.gmra.mxu0 %v1775
        %v1942 = vpop.f32.mrf.mxu0
        %v1943 = vadd.f32 0.0, %v1942
        %v1944 = vpop.f32.mrf.mxu0
        %v1945 = vadd.f32 0.0, %v1944
        %1946 = vmatprep.mubr.f32.mxu0 0.0
        %1947 = vmatmul.mubr.f32.gmra.mxu0 %v1778
        %v1948 = vpop.f32.mrf.mxu0
        %v1949 = vadd.f32 0.0, %v1948
        %v1950 = vpop.f32.mrf.mxu0
        %v1951 = vadd.f32 0.0, %v1950
        %1952 = vmatprep.mubr.f32.mxu0 0.0
        %1953 = vmatmul.mubr.f32.gmra.mxu0 %v1781
        %v1954 = vpop.f32.mrf.mxu0
        %v1955 = vadd.f32 0.0, %v1954
        %v1956 = vpop.f32.mrf.mxu0
        %v1957 = vadd.f32 0.0, %v1956
        %1958 = vmatprep.mubr.f32.mxu0 0.0
        %1959 = vmatmul.mubr.f32.gmra.mxu0 %v1784
        %v1960 = vpop.f32.mrf.mxu0
        %v1961 = vadd.f32 0.0, %v1960
        %v1962 = vpop.f32.mrf.mxu0
        %v1963 = vadd.f32 0.0, %v1962
        %1964 = vmatprep.mubr.f32.mxu0 0.0
        %1965 = vmatmul.mubr.f32.gmra.mxu0 %v1787
        %v1966 = vpop.f32.mrf.mxu0
        %v1967 = vadd.f32 0.0, %v1966
        %v1968 = vpop.f32.mrf.mxu0
        %v1969 = vadd.f32 0.0, %v1968
        %1970 = vmatprep.mubr.f32.mxu0 0.0
        %1971 = vmatmul.mubr.f32.gmra.mxu0 %v1790
        %v1972 = vpop.f32.mrf.mxu0
        %v1973 = vadd.f32 0.0, %v1972
        %v1974 = vpop.f32.mrf.mxu0
        %v1975 = vadd.f32 0.0, %v1974
        %1976 = vmatprep.mubr.f32.mxu0 0.0
        %1977 = vmatmul.mubr.f32.gmra.mxu0 %v1793
        %v1978 = vpop.f32.mrf.mxu0
        %v1979 = vadd.f32 0.0, %v1978
        %v1980 = vpop.f32.mrf.mxu0
        %v1981 = vadd.f32 0.0, %v1980
        %1982 = vmatprep.mubr.f32.mxu0 0.0
        %1983 = vmatmul.mubr.f32.gmra.mxu0 %v1796
        %v1984 = vpop.f32.mrf.mxu0
        %v1985 = vadd.f32 0.0, %v1984
        %v1986 = vpop.f32.mrf.mxu0
        %v1987 = vadd.f32 0.0, %v1986
        %1988 = vmatprep.mubr.f32.mxu0 0.0
        %1989 = vmatmul.mubr.f32.gmra.mxu0 %v1799
        %v1990 = vpop.f32.mrf.mxu0
        %v1991 = vadd.f32 0.0, %v1990
        %v1992 = vpop.f32.mrf.mxu0
        %v1993 = vadd.f32 0.0, %v1992
        %1994 = vmatprep.mubr.f32.mxu0 0.0
        %1995 = vmatmul.mubr.f32.gmra.mxu0 %v1802
        %v1996 = vpop.f32.mrf.mxu0
        %v1997 = vadd.f32 0.0, %v1996
        %v1998 = vpop.f32.mrf.mxu0
        %v1999 = vadd.f32 0.0, %v1998
        %2000 = vmatprep.mubr.f32.mxu0 0.0
        %2001 = vmatmul.mubr.f32.gmra.mxu0 %v1805
        %v2002 = vpop.f32.mrf.mxu0
        %v2003 = vadd.f32 0.0, %v2002
        %v2004 = vpop.f32.mrf.mxu0
        %v2005 = vadd.f32 0.0, %v2004
        %2006 = vmatprep.mubr.f32.mxu0 0.0
        %2007 = vmatmul.mubr.f32.gmra.mxu0 %v1808
        %v2008 = vpop.f32.mrf.mxu0
        %v2009 = vadd.f32 0.0, %v2008
        %v2010 = vpop.f32.mrf.mxu0
        %v2011 = vadd.f32 0.0, %v2010
        %2012 = vmatprep.mubr.f32.mxu0 0.0
        %2013 = vmatmul.mubr.f32.gmra.mxu0 %v1811
        %v2014 = vpop.f32.mrf.mxu0
        %v2015 = vadd.f32 0.0, %v2014
        %v2016 = vpop.f32.mrf.mxu0
        %v2017 = vadd.f32 0.0, %v2016
        %2018 = vmatprep.mubr.f32.mxu0 0.0
        %2019 = vmatmul.mubr.f32.gmra.mxu0 %v1814
        %v2020 = vpop.f32.mrf.mxu0
        %v2021 = vadd.f32 0.0, %v2020
        %v2022 = vpop.f32.mrf.mxu0
        %v2023 = vadd.f32 0.0, %v2022
        %2024 = vmatprep.mubr.f32.mxu0 0.0
        %2025 = vmatmul.mubr.f32.gmra.mxu0 %v1817
        %v2026 = vpop.f32.mrf.mxu0
        %v2027 = vadd.f32 0.0, %v2026
        %v2028 = vpop.f32.mrf.mxu0
        %v2029 = vadd.f32 0.0, %v2028
        %2030 = vmatprep.mubr.f32.mxu0 0.0
        %2031 = vmatmul.mubr.f32.gmra.mxu0 %v1820
        %v2032 = vpop.f32.mrf.mxu0
        %v2033 = vadd.f32 0.0, %v2032
        %v2034 = vpop.f32.mrf.mxu0
        %v2035 = vadd.f32 0.0, %v2034
        %2036 = vmatprep.mubr.f32.mxu0 0.0
        %2037 = vmatmul.mubr.f32.gmra.mxu0 %v1823
        %v2038 = vpop.f32.mrf.mxu0
        %v2039 = vadd.f32 0.0, %v2038
        %v2040 = vpop.f32.mrf.mxu0
        %v2041 = vadd.f32 0.0, %v2040
        %2042 = vmatprep.mubr.f32.mxu0 0.0
        %2043 = vmatmul.mubr.f32.gmra.mxu0 %v1826
        %v2044 = vpop.f32.mrf.mxu0
        %v2045 = vadd.f32 0.0, %v2044
        %v2046 = vpop.f32.mrf.mxu0
        %v2047 = vadd.f32 0.0, %v2046
        %2048 = vmatprep.mubr.f32.mxu0 0.0
        %2049 = vmatmul.mubr.f32.gmra.mxu0 %v1829
        %v2050 = vpop.f32.mrf.mxu0
        %v2051 = vadd.f32 0.0, %v2050
        %v2052 = vpop.f32.mrf.mxu0
        %v2053 = vadd.f32 0.0, %v2052
        %2054 = vmatprep.mubr.f32.mxu0 0.0
        %2055 = vmatmul.mubr.f32.gmra.mxu0 %v1832
        %v2056 = vpop.f32.mrf.mxu0
        %v2057 = vadd.f32 0.0, %v2056
        %v2058 = vpop.f32.mrf.mxu0
        %v2059 = vadd.f32 0.0, %v2058
        %2060 = vmatprep.mubr.f32.mxu0 0.0
        %2061 = vmatmul.mubr.f32.gmra.mxu0 %v1835
        %v2062 = vpop.f32.mrf.mxu0
        %v2063 = vadd.f32 0.0, %v2062
        %v2064 = vpop.f32.mrf.mxu0
        %v2065 = vadd.f32 0.0, %v2064
        %2066 = vmatprep.mubr.f32.mxu0 0.0
        %2067 = vmatmul.mubr.f32.gmra.mxu0 %v1838
        %v2068 = vpop.f32.mrf.mxu0
        %v2069 = vadd.f32 0.0, %v2068
        %v2070 = vpop.f32.mrf.mxu0
        %v2071 = vadd.f32 0.0, %v2070
        %2072 = vmatprep.mubr.f32.mxu0 0.0
        %2073 = vmatmul.mubr.f32.gmra.mxu0 %v1841
        %v2074 = vpop.f32.mrf.mxu0
        %v2075 = vadd.f32 0.0, %v2074
        %v2076 = vpop.f32.mrf.mxu0
        %v2077 = vadd.f32 0.0, %v2076
        %2078 = vmatprep.mubr.f32.mxu0 0.0
        %2079 = vmatmul.mubr.f32.gmra.mxu0 %v1844
        %v2080 = vpop.f32.mrf.mxu0
        %v2081 = vadd.f32 0.0, %v2080
        %v2082 = vpop.f32.mrf.mxu0
        %v2083 = vadd.f32 0.0, %v2082
        %2084 = vmatprep.mubr.f32.mxu0 0.0
        %2085 = vmatmul.mubr.f32.gmra.mxu0 %v1847
        %v2086 = vpop.f32.mrf.mxu0
        %v2087 = vadd.f32 0.0, %v2086
        %v2088 = vpop.f32.mrf.mxu0
        %v2089 = vadd.f32 0.0, %v2088
        %2090 = vmatprep.mubr.f32.mxu0 0.0
        %2091 = vmatmul.mubr.f32.gmra.mxu0 %v1850
        %v2092 = vpop.f32.mrf.mxu0
        %v2093 = vadd.f32 0.0, %v2092
        %v2094 = vpop.f32.mrf.mxu0
        %v2095 = vadd.f32 0.0, %v2094
        %2096 = vmatprep.mubr.f32.mxu0 0.0
        %2097 = vmatmul.mubr.f32.gmra.mxu0 %v1853
        %v2098 = vpop.f32.mrf.mxu0
        %v2099 = vadd.f32 0.0, %v2098
        %v2100 = vpop.f32.mrf.mxu0
        %v2101 = vadd.f32 0.0, %v2100
        %2102 = vmatprep.mubr.f32.mxu0 0.0
        %2103 = vmatmul.mubr.f32.gmra.mxu0 %v1856
        %v2104 = vpop.f32.mrf.mxu0
        %v2105 = vadd.f32 0.0, %v2104
        %v2106 = vpop.f32.mrf.mxu0
        %v2107 = vadd.f32 0.0, %v2106
        %2108 = vmatprep.mubr.f32.mxu0 0.0
        %2109 = vmatmul.mubr.f32.gmra.mxu0 %v1859
        %v2110 = vpop.f32.mrf.mxu0
        %v2111 = vadd.f32 0.0, %v2110
        %v2112 = vpop.f32.mrf.mxu0
        %v2113 = vadd.f32 0.0, %v2112
        %2114 = vmatprep.mubr.f32.mxu0 0.0
        %2115 = vmatmul.mubr.f32.gmra.mxu0 %v1862
        %v2116 = vpop.f32.mrf.mxu0
        %v2117 = vadd.f32 0.0, %v2116
        %v2118 = vpop.f32.mrf.mxu0
        %v2119 = vadd.f32 0.0, %v2118
        %2120 = vdwg.mxu0
        %v2121 = vrcp.pop %v1686
        %v2122 = vmul.f32 %v1492, %v2121
        %v2123 = vrcp.pop %v1687
        %v2124 = vmul.f32 %v1493, %v2123
        %v2125 = vrcp.pop %v1688
        %v2126 = vmul.f32 %v1494, %v2125
        %v2127 = vrcp.pop %v1689
        %v2128 = vmul.f32 %v1495, %v2127
        %v2129 = vrcp.pop %v1690
        %v2130 = vmul.f32 %v1496, %v2129
        %v2131 = vrcp.pop %v1691
        %v2132 = vmul.f32 %v1497, %v2131
        %v2133 = vrcp.pop %v1692
        %v2134 = vmul.f32 %v1498, %v2133
        %v2135 = vrcp.pop %v1693
        %v2136 = vmul.f32 %v1499, %v2135
        %v2137 = vrcp.pop %v1694
        %v2138 = vmul.f32 %v1500, %v2137
        %v2139 = vrcp.pop %v1695
        %v2140 = vmul.f32 %v1501, %v2139
        %v2141 = vrcp.pop %v1696
        %v2142 = vmul.f32 %v1502, %v2141
        %v2143 = vrcp.pop %v1697
        %v2144 = vmul.f32 %v1503, %v2143
        %v2145 = vrcp.pop %v1698
        %v2146 = vmul.f32 %v1504, %v2145
        %v2147 = vrcp.pop %v1699
        %v2148 = vmul.f32 %v1505, %v2147
        %v2149 = vrcp.pop %v1700
        %v2150 = vmul.f32 %v1506, %v2149
        %v2151 = vrcp.pop %v1701
        %v2152 = vmul.f32 %v1507, %v2151
        %v2153 = vld [vmem:[%s17] sm:$0xff]
        %v2154 = vld [vmem:[%s17 + $0x8] sm:$0xff]
        %v2155 = vld [vmem:[%s17 + $0x10] sm:$0xff]
        %v2156 = vld [vmem:[%s17 + $0x18] sm:$0xff]
        %v2157 = vld [vmem:[%s17 + $0x20] sm:$0xff]
        %v2158 = vld [vmem:[%s17 + $0x28] sm:$0xff]
        %v2159 = vld [vmem:[%s17 + $0x30] sm:$0xff]
        %v2160 = vld [vmem:[%s17 + $0x38] sm:$0xff]
        %v2162 = vsel %vm1637, %v2122, 0
        %v2165 = vsel %vm1637, %v2124, 0
        %v2168 = vsel %vm1637, %v2126, 0
        %v2171 = vsel %vm1637, %v2128, 0
        %v2174 = vsel %vm1637, %v2130, 0
        %v2177 = vsel %vm1637, %v2132, 0
        %v2180 = vsel %vm1637, %v2134, 0
        %v2183 = vsel %vm1637, %v2136, 0
        %v2186 = vsel %vm1637, %v2138, 0
        %v2189 = vsel %vm1637, %v2140, 0
        %v2192 = vsel %vm1637, %v2142, 0
        %v2195 = vsel %vm1637, %v2144, 0
        %v2198 = vsel %vm1637, %v2146, 0
        %v2201 = vsel %vm1637, %v2148, 0
        %v2204 = vsel %vm1637, %v2150, 0
        %v2207 = vsel %vm1637, %v2152, 0
        %2209 = vmatprep.subr.mxu0 0.0
        %2210 = vmatpush1.msra.mxu0 0.0
        %2211 = vmatprep.subr.mxu0 0.0
        %2212 = vmatpush1.msra.mxu0 0.0
        %2213 = vmatprep.subr.mxu0 0.0
        %2214 = vmatpush1.msra.mxu0 0.0
        %2215 = vmatprep.subr.mxu0 0.0
        %2216 = vmatpush1.msra.mxu0 0.0
        %2217 = vmatprep.subr.mxu0 0.0
        %2218 = vmatpush1.msra.mxu0 0.0
        %2219 = vmatprep.subr.mxu0 0.0
        %2220 = vmatpush1.msra.mxu0 0.0
        %2221 = vmatprep.subr.mxu0 0.0
        %2222 = vmatpush1.msra.mxu0 0.0
        %2223 = vmatprep.subr.mxu0 0.0
        %2224 = vmatpush1.msra.mxu0 0.0
        %2225 = vmatprep.subr.mxu0 0.0
        %2226 = vmatpush1.msra.mxu0 0.0
        %2227 = vmatprep.subr.mxu0 0.0
        %2228 = vmatpush1.msra.mxu0 0.0
        %2229 = vmatprep.subr.mxu0 0.0
        %2230 = vmatpush1.msra.mxu0 0.0
        %2231 = vmatprep.subr.mxu0 0.0
        %2232 = vmatpush1.msra.mxu0 0.0
        %2233 = vmatprep.subr.mxu0 0.0
        %2234 = vmatpush1.msra.mxu0 0.0
        %2235 = vmatprep.subr.mxu0 0.0
        %2236 = vmatpush1.msra.mxu0 0.0
        %2237 = vmatprep.subr.mxu0 %v2158
        %2238 = vmatpush1.msra.mxu0 %v2157
        %2239 = vmatprep.subr.mxu0 %v2154
        %2240 = vmatpush1.msra.mxu0 %v2153
        %2241 = vmatprep.subr.mxu0 0.0
        %2242 = vmatpush2.msra.mxu0 0.0
        %2243 = vmatprep.subr.mxu0 0.0
        %2244 = vmatpush2.msra.mxu0 0.0
        %2245 = vmatprep.subr.mxu0 0.0
        %2246 = vmatpush2.msra.mxu0 0.0
        %2247 = vmatprep.subr.mxu0 0.0
        %2248 = vmatpush2.msra.mxu0 0.0
        %2249 = vmatprep.subr.mxu0 0.0
        %2250 = vmatpush2.msra.mxu0 0.0
        %2251 = vmatprep.subr.mxu0 0.0
        %2252 = vmatpush2.msra.mxu0 0.0
        %2253 = vmatprep.subr.mxu0 0.0
        %2254 = vmatpush2.msra.mxu0 0.0
        %2255 = vmatprep.subr.mxu0 0.0
        %2256 = vmatpush2.msra.mxu0 0.0
        %2257 = vmatprep.subr.mxu0 0.0
        %2258 = vmatpush2.msra.mxu0 0.0
        %2259 = vmatprep.subr.mxu0 0.0
        %2260 = vmatpush2.msra.mxu0 0.0
        %2261 = vmatprep.subr.mxu0 0.0
        %2262 = vmatpush2.msra.mxu0 0.0
        %2263 = vmatprep.subr.mxu0 0.0
        %2264 = vmatpush2.msra.mxu0 0.0
        %2265 = vmatprep.subr.mxu0 0.0
        %2266 = vmatpush2.msra.mxu0 0.0
        %2267 = vmatprep.subr.mxu0 0.0
        %2268 = vmatpush2.msra.mxu0 0.0
        %2269 = vmatprep.subr.mxu0 0.0
        %2270 = vmatpush2.msra.mxu0 0.0
        %2271 = vmatprep.subr.mxu0 0.0
        %2272 = vmatpush2.msra.mxu0 0.0
        %2273 = vmatprep.mubr.f32.mxu0 0.0
        %2274 = vmatmul.mubr.f32.gmra.mxu0 %v2162
        %v2275 = vpop.f32.mrf.mxu0
        %v2276 = vadd.f32 0.0, %v2275
        %v2277 = vpop.f32.mrf.mxu0
        %v2278 = vadd.f32 0.0, %v2277
        %2279 = vmatprep.mubr.f32.mxu0 0.0
        %2280 = vmatmul.mubr.f32.gmra.mxu0 %v2165
        %v2281 = vpop.f32.mrf.mxu0
        %v2282 = vadd.f32 0.0, %v2281
        %v2283 = vpop.f32.mrf.mxu0
        %v2284 = vadd.f32 0.0, %v2283
        %2285 = vmatprep.mubr.f32.mxu0 0.0
        %2286 = vmatmul.mubr.f32.gmra.mxu0 %v2168
        %v2287 = vpop.f32.mrf.mxu0
        %v2288 = vadd.f32 0.0, %v2287
        %v2289 = vpop.f32.mrf.mxu0
        %v2290 = vadd.f32 0.0, %v2289
        %2291 = vmatprep.mubr.f32.mxu0 0.0
        %2292 = vmatmul.mubr.f32.gmra.mxu0 %v2171
        %v2293 = vpop.f32.mrf.mxu0
        %v2294 = vadd.f32 0.0, %v2293
        %v2295 = vpop.f32.mrf.mxu0
        %v2296 = vadd.f32 0.0, %v2295
        %2297 = vmatprep.mubr.f32.mxu0 0.0
        %2298 = vmatmul.mubr.f32.gmra.mxu0 %v2174
        %v2299 = vpop.f32.mrf.mxu0
        %v2300 = vadd.f32 0.0, %v2299
        %v2301 = vpop.f32.mrf.mxu0
        %v2302 = vadd.f32 0.0, %v2301
        %2303 = vmatprep.mubr.f32.mxu0 0.0
        %2304 = vmatmul.mubr.f32.gmra.mxu0 %v2177
        %v2305 = vpop.f32.mrf.mxu0
        %v2306 = vadd.f32 0.0, %v2305
        %v2307 = vpop.f32.mrf.mxu0
        %v2308 = vadd.f32 0.0, %v2307
        %2309 = vmatprep.mubr.f32.mxu0 0.0
        %2310 = vmatmul.mubr.f32.gmra.mxu0 %v2180
        %v2311 = vpop.f32.mrf.mxu0
        %v2312 = vadd.f32 0.0, %v2311
        %v2313 = vpop.f32.mrf.mxu0
        %v2314 = vadd.f32 0.0, %v2313
        %2315 = vmatprep.mubr.f32.mxu0 0.0
        %2316 = vmatmul.mubr.f32.gmra.mxu0 %v2183
        %v2317 = vpop.f32.mrf.mxu0
        %v2318 = vadd.f32 0.0, %v2317
        %v2319 = vpop.f32.mrf.mxu0
        %v2320 = vadd.f32 0.0, %v2319
        %2321 = vmatprep.mubr.f32.mxu0 0.0
        %2322 = vmatmul.mubr.f32.gmra.mxu0 %v2186
        %v2323 = vpop.f32.mrf.mxu0
        %v2324 = vadd.f32 0.0, %v2323
        %v2325 = vpop.f32.mrf.mxu0
        %v2326 = vadd.f32 0.0, %v2325
        %2327 = vmatprep.mubr.f32.mxu0 0.0
        %2328 = vmatmul.mubr.f32.gmra.mxu0 %v2189
        %v2329 = vpop.f32.mrf.mxu0
        %v2330 = vadd.f32 0.0, %v2329
        %v2331 = vpop.f32.mrf.mxu0
        %v2332 = vadd.f32 0.0, %v2331
        %2333 = vmatprep.mubr.f32.mxu0 0.0
        %2334 = vmatmul.mubr.f32.gmra.mxu0 %v2192
        %v2335 = vpop.f32.mrf.mxu0
        %v2336 = vadd.f32 0.0, %v2335
        %v2337 = vpop.f32.mrf.mxu0
        %v2338 = vadd.f32 0.0, %v2337
        %2339 = vmatprep.mubr.f32.mxu0 0.0
        %2340 = vmatmul.mubr.f32.gmra.mxu0 %v2195
        %v2341 = vpop.f32.mrf.mxu0
        %v2342 = vadd.f32 0.0, %v2341
        %v2343 = vpop.f32.mrf.mxu0
        %v2344 = vadd.f32 0.0, %v2343
        %2345 = vmatprep.mubr.f32.mxu0 0.0
        %2346 = vmatmul.mubr.f32.gmra.mxu0 %v2198
        %v2347 = vpop.f32.mrf.mxu0
        %v2348 = vadd.f32 0.0, %v2347
        %v2349 = vpop.f32.mrf.mxu0
        %v2350 = vadd.f32 0.0, %v2349
        %2351 = vmatprep.mubr.f32.mxu0 0.0
        %2352 = vmatmul.mubr.f32.gmra.mxu0 %v2201
        %v2353 = vpop.f32.mrf.mxu0
        %v2354 = vadd.f32 0.0, %v2353
        %v2355 = vpop.f32.mrf.mxu0
        %v2356 = vadd.f32 0.0, %v2355
        %2357 = vmatprep.mubr.f32.mxu0 0.0
        %2358 = vmatmul.mubr.f32.gmra.mxu0 %v2204
        %v2359 = vpop.f32.mrf.mxu0
        %v2360 = vadd.f32 0.0, %v2359
        %v2361 = vpop.f32.mrf.mxu0
        %v2362 = vadd.f32 0.0, %v2361
        %2363 = vmatprep.mubr.f32.mxu0 0.0
        %2364 = vmatmul.mubr.f32.gmra.mxu0 %v2207
        %v2365 = vpop.f32.mrf.mxu0
        %v2366 = vadd.f32 0.0, %v2365
        %v2367 = vpop.f32.mrf.mxu0
        %v2368 = vadd.f32 0.0, %v2367
        %2369 = vdwg.mxu0
        %2370 = vmatprep.subr.mxu0 0.0
        %2371 = vmatpush1.msra.mxu0 0.0
        %2372 = vmatprep.subr.mxu0 0.0
        %2373 = vmatpush1.msra.mxu0 0.0
        %2374 = vmatprep.subr.mxu0 0.0
        %2375 = vmatpush1.msra.mxu0 0.0
        %2376 = vmatprep.subr.mxu0 0.0
        %2377 = vmatpush1.msra.mxu0 0.0
        %2378 = vmatprep.subr.mxu0 0.0
        %2379 = vmatpush1.msra.mxu0 0.0
        %2380 = vmatprep.subr.mxu0 0.0
        %2381 = vmatpush1.msra.mxu0 0.0
        %2382 = vmatprep.subr.mxu0 0.0
        %2383 = vmatpush1.msra.mxu0 0.0
        %2384 = vmatprep.subr.mxu0 0.0
        %2385 = vmatpush1.msra.mxu0 0.0
        %2386 = vmatprep.subr.mxu0 0.0
        %2387 = vmatpush1.msra.mxu0 0.0
        %2388 = vmatprep.subr.mxu0 0.0
        %2389 = vmatpush1.msra.mxu0 0.0
        %2390 = vmatprep.subr.mxu0 0.0
        %2391 = vmatpush1.msra.mxu0 0.0
        %2392 = vmatprep.subr.mxu0 0.0
        %2393 = vmatpush1.msra.mxu0 0.0
        %2394 = vmatprep.subr.mxu0 0.0
        %2395 = vmatpush1.msra.mxu0 0.0
        %2396 = vmatprep.subr.mxu0 0.0
        %2397 = vmatpush1.msra.mxu0 0.0
        %2398 = vmatprep.subr.mxu0 %v2160
        %2399 = vmatpush1.msra.mxu0 %v2159
        %2400 = vmatprep.subr.mxu0 %v2156
        %2401 = vmatpush1.msra.mxu0 %v2155
        %2402 = vmatprep.subr.mxu0 0.0
        %2403 = vmatpush2.msra.mxu0 0.0
        %2404 = vmatprep.subr.mxu0 0.0
        %2405 = vmatpush2.msra.mxu0 0.0
        %2406 = vmatprep.subr.mxu0 0.0
        %2407 = vmatpush2.msra.mxu0 0.0
        %2408 = vmatprep.subr.mxu0 0.0
        %2409 = vmatpush2.msra.mxu0 0.0
        %2410 = vmatprep.subr.mxu0 0.0
        %2411 = vmatpush2.msra.mxu0 0.0
        %2412 = vmatprep.subr.mxu0 0.0
        %2413 = vmatpush2.msra.mxu0 0.0
        %2414 = vmatprep.subr.mxu0 0.0
        %2415 = vmatpush2.msra.mxu0 0.0
        %2416 = vmatprep.subr.mxu0 0.0
        %2417 = vmatpush2.msra.mxu0 0.0
        %2418 = vmatprep.subr.mxu0 0.0
        %2419 = vmatpush2.msra.mxu0 0.0
        %2420 = vmatprep.subr.mxu0 0.0
        %2421 = vmatpush2.msra.mxu0 0.0
        %2422 = vmatprep.subr.mxu0 0.0
        %2423 = vmatpush2.msra.mxu0 0.0
        %2424 = vmatprep.subr.mxu0 0.0
        %2425 = vmatpush2.msra.mxu0 0.0
        %2426 = vmatprep.subr.mxu0 0.0
        %2427 = vmatpush2.msra.mxu0 0.0
        %2428 = vmatprep.subr.mxu0 0.0
        %2429 = vmatpush2.msra.mxu0 0.0
        %2430 = vmatprep.subr.mxu0 0.0
        %2431 = vmatpush2.msra.mxu0 0.0
        %2432 = vmatprep.subr.mxu0 0.0
        %2433 = vmatpush2.msra.mxu0 0.0
        %2434 = vmatprep.mubr.f32.mxu0 0.0
        %2435 = vmatmul.mubr.f32.gmra.mxu0 %v2162
        %v2436 = vpop.f32.mrf.mxu0
        %v2437 = vadd.f32 0.0, %v2436
        %v2438 = vpop.f32.mrf.mxu0
        %v2439 = vadd.f32 0.0, %v2438
        %2440 = vmatprep.mubr.f32.mxu0 0.0
        %2441 = vmatmul.mubr.f32.gmra.mxu0 %v2165
        %v2442 = vpop.f32.mrf.mxu0
        %v2443 = vadd.f32 0.0, %v2442
        %v2444 = vpop.f32.mrf.mxu0
        %v2445 = vadd.f32 0.0, %v2444
        %2446 = vmatprep.mubr.f32.mxu0 0.0
        %2447 = vmatmul.mubr.f32.gmra.mxu0 %v2168
        %v2448 = vpop.f32.mrf.mxu0
        %v2449 = vadd.f32 0.0, %v2448
        %v2450 = vpop.f32.mrf.mxu0
        %v2451 = vadd.f32 0.0, %v2450
        %2452 = vmatprep.mubr.f32.mxu0 0.0
        %2453 = vmatmul.mubr.f32.gmra.mxu0 %v2171
        %v2454 = vpop.f32.mrf.mxu0
        %v2455 = vadd.f32 0.0, %v2454
        %v2456 = vpop.f32.mrf.mxu0
        %v2457 = vadd.f32 0.0, %v2456
        %2458 = vmatprep.mubr.f32.mxu0 0.0
        %2459 = vmatmul.mubr.f32.gmra.mxu0 %v2174
        %v2460 = vpop.f32.mrf.mxu0
        %v2461 = vadd.f32 0.0, %v2460
        %v2462 = vpop.f32.mrf.mxu0
        %v2463 = vadd.f32 0.0, %v2462
        %2464 = vmatprep.mubr.f32.mxu0 0.0
        %2465 = vmatmul.mubr.f32.gmra.mxu0 %v2177
        %v2466 = vpop.f32.mrf.mxu0
        %v2467 = vadd.f32 0.0, %v2466
        %v2468 = vpop.f32.mrf.mxu0
        %v2469 = vadd.f32 0.0, %v2468
        %2470 = vmatprep.mubr.f32.mxu0 0.0
        %2471 = vmatmul.mubr.f32.gmra.mxu0 %v2180
        %v2472 = vpop.f32.mrf.mxu0
        %v2473 = vadd.f32 0.0, %v2472
        %v2474 = vpop.f32.mrf.mxu0
        %v2475 = vadd.f32 0.0, %v2474
        %2476 = vmatprep.mubr.f32.mxu0 0.0
        %2477 = vmatmul.mubr.f32.gmra.mxu0 %v2183
        %v2478 = vpop.f32.mrf.mxu0
        %v2479 = vadd.f32 0.0, %v2478
        %v2480 = vpop.f32.mrf.mxu0
        %v2481 = vadd.f32 0.0, %v2480
        %2482 = vmatprep.mubr.f32.mxu0 0.0
        %2483 = vmatmul.mubr.f32.gmra.mxu0 %v2186
        %v2484 = vpop.f32.mrf.mxu0
        %v2485 = vadd.f32 0.0, %v2484
        %v2486 = vpop.f32.mrf.mxu0
        %v2487 = vadd.f32 0.0, %v2486
        %2488 = vmatprep.mubr.f32.mxu0 0.0
        %2489 = vmatmul.mubr.f32.gmra.mxu0 %v2189
        %v2490 = vpop.f32.mrf.mxu0
        %v2491 = vadd.f32 0.0, %v2490
        %v2492 = vpop.f32.mrf.mxu0
        %v2493 = vadd.f32 0.0, %v2492
        %2494 = vmatprep.mubr.f32.mxu0 0.0
        %2495 = vmatmul.mubr.f32.gmra.mxu0 %v2192
        %v2496 = vpop.f32.mrf.mxu0
        %v2497 = vadd.f32 0.0, %v2496
        %v2498 = vpop.f32.mrf.mxu0
        %v2499 = vadd.f32 0.0, %v2498
        %2500 = vmatprep.mubr.f32.mxu0 0.0
        %2501 = vmatmul.mubr.f32.gmra.mxu0 %v2195
        %v2502 = vpop.f32.mrf.mxu0
        %v2503 = vadd.f32 0.0, %v2502
        %v2504 = vpop.f32.mrf.mxu0
        %v2505 = vadd.f32 0.0, %v2504
        %2506 = vmatprep.mubr.f32.mxu0 0.0
        %2507 = vmatmul.mubr.f32.gmra.mxu0 %v2198
        %v2508 = vpop.f32.mrf.mxu0
        %v2509 = vadd.f32 0.0, %v2508
        %v2510 = vpop.f32.mrf.mxu0
        %v2511 = vadd.f32 0.0, %v2510
        %2512 = vmatprep.mubr.f32.mxu0 0.0
        %2513 = vmatmul.mubr.f32.gmra.mxu0 %v2201
        %v2514 = vpop.f32.mrf.mxu0
        %v2515 = vadd.f32 0.0, %v2514
        %v2516 = vpop.f32.mrf.mxu0
        %v2517 = vadd.f32 0.0, %v2516
        %2518 = vmatprep.mubr.f32.mxu0 0.0
        %2519 = vmatmul.mubr.f32.gmra.mxu0 %v2204
        %v2520 = vpop.f32.mrf.mxu0
        %v2521 = vadd.f32 0.0, %v2520
        %v2522 = vpop.f32.mrf.mxu0
        %v2523 = vadd.f32 0.0, %v2522
        %2524 = vmatprep.mubr.f32.mxu0 0.0
        %2525 = vmatmul.mubr.f32.gmra.mxu0 %v2207
        %v2526 = vpop.f32.mrf.mxu0
        %v2527 = vadd.f32 0.0, %v2526
        %v2528 = vpop.f32.mrf.mxu0
        %v2529 = vadd.f32 0.0, %v2528
        %2530 = vdwg.mxu0
        %v2531 = vld [vmem:[%s789] sm:$0xff]
        %v2532 = vld [vmem:[%s789 + $0x8] sm:$0xff]
        %v2533 = vld [vmem:[%s789 + $0x10] sm:$0xff]
        %v2534 = vld [vmem:[%s789 + $0x18] sm:$0xff]
        %v2535 = vld [vmem:[%s789 + $0x20] sm:$0xff]
        %v2536 = vld [vmem:[%s789 + $0x28] sm:$0xff]
        %v2537 = vld [vmem:[%s789 + $0x30] sm:$0xff]
        %v2538 = vld [vmem:[%s789 + $0x38] sm:$0xff]
        %v2539 = vld [vmem:[%s789 + $0x40] sm:$0xff]
        %v2540 = vld [vmem:[%s789 + $0x48] sm:$0xff]
        %v2541 = vld [vmem:[%s789 + $0x50] sm:$0xff]
        %v2542 = vld [vmem:[%s789 + $0x58] sm:$0xff]
        %v2543 = vld [vmem:[%s789 + $0x60] sm:$0xff]
        %v2544 = vld [vmem:[%s789 + $0x68] sm:$0xff]
        %v2545 = vld [vmem:[%s789 + $0x70] sm:$0xff]
        %v2546 = vld [vmem:[%s789 + $0x78] sm:$0xff]
        %v2547 = vld [vmem:[%s789 + $0x80] sm:$0xff]
        %v2548 = vld [vmem:[%s789 + $0x88] sm:$0xff]
        %v2549 = vld [vmem:[%s789 + $0x90] sm:$0xff]
        %v2550 = vld [vmem:[%s789 + $0x98] sm:$0xff]
        %v2551 = vld [vmem:[%s789 + $0xa0] sm:$0xff]
        %v2552 = vld [vmem:[%s789 + $0xa8] sm:$0xff]
        %v2553 = vld [vmem:[%s789 + $0xb0] sm:$0xff]
        %v2554 = vld [vmem:[%s789 + $0xb8] sm:$0xff]
        %v2555 = vld [vmem:[%s789 + $0xc0] sm:$0xff]
        %v2556 = vld [vmem:[%s789 + $0xc8] sm:$0xff]
        %v2557 = vld [vmem:[%s789 + $0xd0] sm:$0xff]
        %v2558 = vld [vmem:[%s789 + $0xd8] sm:$0xff]
        %v2559 = vld [vmem:[%s789 + $0xe0] sm:$0xff]
        %v2560 = vld [vmem:[%s789 + $0xe8] sm:$0xff]
        %v2561 = vld [vmem:[%s789 + $0xf0] sm:$0xff]
        %v2562 = vld [vmem:[%s789 + $0xf8] sm:$0xff]
        %v2563 = vld [vmem:[%s795] sm:$0xff]
        %v2564 = vld [vmem:[%s795 + $0x8] sm:$0xff]
        %v2565 = vld [vmem:[%s795 + $0x10] sm:$0xff]
        %v2566 = vld [vmem:[%s795 + $0x18] sm:$0xff]
        %v2567 = vld [vmem:[%s795 + $0x20] sm:$0xff]
        %v2568 = vld [vmem:[%s795 + $0x28] sm:$0xff]
        %v2569 = vld [vmem:[%s795 + $0x30] sm:$0xff]
        %v2570 = vld [vmem:[%s795 + $0x38] sm:$0xff]
        %v2571 = vld [vmem:[%s795 + $0x40] sm:$0xff]
        %v2572 = vld [vmem:[%s795 + $0x48] sm:$0xff]
        %v2573 = vld [vmem:[%s795 + $0x50] sm:$0xff]
        %v2574 = vld [vmem:[%s795 + $0x58] sm:$0xff]
        %v2575 = vld [vmem:[%s795 + $0x60] sm:$0xff]
        %v2576 = vld [vmem:[%s795 + $0x68] sm:$0xff]
        %v2577 = vld [vmem:[%s795 + $0x70] sm:$0xff]
        %v2578 = vld [vmem:[%s795 + $0x78] sm:$0xff]
        %v2579 = vld [vmem:[%s14] sm:$0xff]
        %v2580 = vld [vmem:[%s14 + $0x8] sm:$0xff]
        %v2581 = vld [vmem:[%s14 + $0x10] sm:$0xff]
        %v2582 = vld [vmem:[%s14 + $0x18] sm:$0xff]
        %v2583 = vld [vmem:[%s14 + $0x20] sm:$0xff]
        %v2584 = vld [vmem:[%s14 + $0x28] sm:$0xff]
        %vm2585 = vcmask 195584
        %v2587 = vsel %vm2585, %v2531, 0
        %v2590 = vsel %vm2585, %v2532, 0
        %v2593 = vsel %vm2585, %v2533, 0
        %v2596 = vsel %vm2585, %v2534, 0
        %v2599 = vsel %vm2585, %v2535, 0
        %v2602 = vsel %vm2585, %v2536, 0
        %v2605 = vsel %vm2585, %v2537, 0
        %v2608 = vsel %vm2585, %v2538, 0
        %v2611 = vsel %vm2585, %v2539, 0
        %v2614 = vsel %vm2585, %v2540, 0
        %v2617 = vsel %vm2585, %v2541, 0
        %v2620 = vsel %vm2585, %v2542, 0
        %v2623 = vsel %vm2585, %v2543, 0
        %v2626 = vsel %vm2585, %v2544, 0
        %v2629 = vsel %vm2585, %v2545, 0
        %v2632 = vsel %vm2585, %v2546, 0
        %v2635 = vsel %vm2585, %v2547, 0
        %v2638 = vsel %vm2585, %v2548, 0
        %v2641 = vsel %vm2585, %v2549, 0
        %v2644 = vsel %vm2585, %v2550, 0
        %v2647 = vsel %vm2585, %v2551, 0
        %v2650 = vsel %vm2585, %v2552, 0
        %v2653 = vsel %vm2585, %v2553, 0
        %v2656 = vsel %vm2585, %v2554, 0
        %v2659 = vsel %vm2585, %v2555, 0
        %v2662 = vsel %vm2585, %v2556, 0
        %v2665 = vsel %vm2585, %v2557, 0
        %v2668 = vsel %vm2585, %v2558, 0
        %v2671 = vsel %vm2585, %v2559, 0
        %v2674 = vsel %vm2585, %v2560, 0
        %v2677 = vsel %vm2585, %v2561, 0
        %v2680 = vsel %vm2585, %v2562, 0
        %2682 = vmatprep.subr.mxu0 0.0
        %2683 = vmatpush1.msra.mxu0 0.0
        %2684 = vmatprep.subr.mxu0 0.0
        %2685 = vmatpush1.msra.mxu0 0.0
        %2686 = vmatprep.subr.mxu0 0.0
        %2687 = vmatpush1.msra.mxu0 0.0
        %2688 = vmatprep.subr.mxu0 0.0
        %2689 = vmatpush1.msra.mxu0 0.0
        %2690 = vmatprep.subr.mxu0 0.0
        %2691 = vmatpush1.msra.mxu0 0.0
        %2692 = vmatprep.subr.mxu0 0.0
        %2693 = vmatpush1.msra.mxu0 0.0
        %2694 = vmatprep.subr.mxu0 0.0
        %2695 = vmatpush1.msra.mxu0 0.0
        %2696 = vmatprep.subr.mxu0 0.0
        %2697 = vmatpush1.msra.mxu0 0.0
        %2698 = vmatprep.subr.mxu0 0.0
        %2699 = vmatpush1.msra.mxu0 0.0
        %2700 = vmatprep.subr.mxu0 0.0
        %2701 = vmatpush1.msra.mxu0 0.0
        %2702 = vmatprep.subr.mxu0 0.0
        %2703 = vmatpush1.msra.mxu0 0.0
        %2704 = vmatprep.subr.mxu0 0.0
        %2705 = vmatpush1.msra.mxu0 0.0
        %2706 = vmatprep.subr.mxu0 0.0
        %2707 = vmatpush1.msra.mxu0 0.0
        %2708 = vmatprep.subr.mxu0 %v2584
        %2709 = vmatpush1.msra.mxu0 %v2583
        %2710 = vmatprep.subr.mxu0 %v2582
        %2711 = vmatpush1.msra.mxu0 %v2581
        %2712 = vmatprep.subr.mxu0 %v2580
        %2713 = vmatpush1.msra.mxu0 %v2579
        %2714 = vmatprep.subr.mxu0 0.0
        %2715 = vmatpush2.msra.mxu0 0.0
        %2716 = vmatprep.subr.mxu0 0.0
        %2717 = vmatpush2.msra.mxu0 0.0
        %2718 = vmatprep.subr.mxu0 0.0
        %2719 = vmatpush2.msra.mxu0 0.0
        %2720 = vmatprep.subr.mxu0 0.0
        %2721 = vmatpush2.msra.mxu0 0.0
        %2722 = vmatprep.subr.mxu0 0.0
        %2723 = vmatpush2.msra.mxu0 0.0
        %2724 = vmatprep.subr.mxu0 0.0
        %2725 = vmatpush2.msra.mxu0 0.0
        %2726 = vmatprep.subr.mxu0 0.0
        %2727 = vmatpush2.msra.mxu0 0.0
        %2728 = vmatprep.subr.mxu0 0.0
        %2729 = vmatpush2.msra.mxu0 0.0
        %2730 = vmatprep.subr.mxu0 0.0
        %2731 = vmatpush2.msra.mxu0 0.0
        %2732 = vmatprep.subr.mxu0 0.0
        %2733 = vmatpush2.msra.mxu0 0.0
        %2734 = vmatprep.subr.mxu0 0.0
        %2735 = vmatpush2.msra.mxu0 0.0
        %2736 = vmatprep.subr.mxu0 0.0
        %2737 = vmatpush2.msra.mxu0 0.0
        %2738 = vmatprep.subr.mxu0 0.0
        %2739 = vmatpush2.msra.mxu0 0.0
        %2740 = vmatprep.subr.mxu0 0.0
        %2741 = vmatpush2.msra.mxu0 0.0
        %2742 = vmatprep.subr.mxu0 0.0
        %2743 = vmatpush2.msra.mxu0 0.0
        %2744 = vmatprep.subr.mxu0 0.0
        %2745 = vmatpush2.msra.mxu0 0.0
        %2746 = vmatprep.mubr.f32.mxu0 0.0
        %2747 = vmatmul.mubr.f32.gmra.mxu0 %v2587
        %v2748 = vpop.f32.mrf.mxu0
        %v2749 = vadd.f32 0.0, %v2748
        %v2750 = vpop.f32.mrf.mxu0
        %v2751 = vadd.f32 0.0, %v2750
        %2752 = vmatprep.mubr.f32.mxu0 0.0
        %2753 = vmatmul.mubr.f32.gmra.mxu0 %v2590
        %v2754 = vpop.f32.mrf.mxu0
        %v2755 = vadd.f32 0.0, %v2754
        %v2756 = vpop.f32.mrf.mxu0
        %v2757 = vadd.f32 0.0, %v2756
        %2758 = vmatprep.mubr.f32.mxu0 0.0
        %2759 = vmatmul.mubr.f32.gmra.mxu0 %v2593
        %v2760 = vpop.f32.mrf.mxu0
        %v2761 = vadd.f32 0.0, %v2760
        %v2762 = vpop.f32.mrf.mxu0
        %v2763 = vadd.f32 0.0, %v2762
        %2764 = vmatprep.mubr.f32.mxu0 0.0
        %2765 = vmatmul.mubr.f32.gmra.mxu0 %v2596
        %v2766 = vpop.f32.mrf.mxu0
        %v2767 = vadd.f32 0.0, %v2766
        %v2768 = vpop.f32.mrf.mxu0
        %v2769 = vadd.f32 0.0, %v2768
        %2770 = vmatprep.mubr.f32.mxu0 0.0
        %2771 = vmatmul.mubr.f32.gmra.mxu0 %v2599
        %v2772 = vpop.f32.mrf.mxu0
        %v2773 = vadd.f32 0.0, %v2772
        %v2774 = vpop.f32.mrf.mxu0
        %v2775 = vadd.f32 0.0, %v2774
        %2776 = vmatprep.mubr.f32.mxu0 0.0
        %2777 = vmatmul.mubr.f32.gmra.mxu0 %v2602
        %v2778 = vpop.f32.mrf.mxu0
        %v2779 = vadd.f32 0.0, %v2778
        %v2780 = vpop.f32.mrf.mxu0
        %v2781 = vadd.f32 0.0, %v2780
        %2782 = vmatprep.mubr.f32.mxu0 0.0
        %2783 = vmatmul.mubr.f32.gmra.mxu0 %v2605
        %v2784 = vpop.f32.mrf.mxu0
        %v2785 = vadd.f32 0.0, %v2784
        %v2786 = vpop.f32.mrf.mxu0
        %v2787 = vadd.f32 0.0, %v2786
        %2788 = vmatprep.mubr.f32.mxu0 0.0
        %2789 = vmatmul.mubr.f32.gmra.mxu0 %v2608
        %v2790 = vpop.f32.mrf.mxu0
        %v2791 = vadd.f32 0.0, %v2790
        %v2792 = vpop.f32.mrf.mxu0
        %v2793 = vadd.f32 0.0, %v2792
        %2794 = vmatprep.mubr.f32.mxu0 0.0
        %2795 = vmatmul.mubr.f32.gmra.mxu0 %v2611
        %v2796 = vpop.f32.mrf.mxu0
        %v2797 = vadd.f32 0.0, %v2796
        %v2798 = vpop.f32.mrf.mxu0
        %v2799 = vadd.f32 0.0, %v2798
        %2800 = vmatprep.mubr.f32.mxu0 0.0
        %2801 = vmatmul.mubr.f32.gmra.mxu0 %v2614
        %v2802 = vpop.f32.mrf.mxu0
        %v2803 = vadd.f32 0.0, %v2802
        %v2804 = vpop.f32.mrf.mxu0
        %v2805 = vadd.f32 0.0, %v2804
        %2806 = vmatprep.mubr.f32.mxu0 0.0
        %2807 = vmatmul.mubr.f32.gmra.mxu0 %v2617
        %v2808 = vpop.f32.mrf.mxu0
        %v2809 = vadd.f32 0.0, %v2808
        %v2810 = vpop.f32.mrf.mxu0
        %v2811 = vadd.f32 0.0, %v2810
        %2812 = vmatprep.mubr.f32.mxu0 0.0
        %2813 = vmatmul.mubr.f32.gmra.mxu0 %v2620
        %v2814 = vpop.f32.mrf.mxu0
        %v2815 = vadd.f32 0.0, %v2814
        %v2816 = vpop.f32.mrf.mxu0
        %v2817 = vadd.f32 0.0, %v2816
        %2818 = vmatprep.mubr.f32.mxu0 0.0
        %2819 = vmatmul.mubr.f32.gmra.mxu0 %v2623
        %v2820 = vpop.f32.mrf.mxu0
        %v2821 = vadd.f32 0.0, %v2820
        %v2822 = vpop.f32.mrf.mxu0
        %v2823 = vadd.f32 0.0, %v2822
        %2824 = vmatprep.mubr.f32.mxu0 0.0
        %2825 = vmatmul.mubr.f32.gmra.mxu0 %v2626
        %v2826 = vpop.f32.mrf.mxu0
        %v2827 = vadd.f32 0.0, %v2826
        %v2828 = vpop.f32.mrf.mxu0
        %v2829 = vadd.f32 0.0, %v2828
        %2830 = vmatprep.mubr.f32.mxu0 0.0
        %2831 = vmatmul.mubr.f32.gmra.mxu0 %v2629
        %v2832 = vpop.f32.mrf.mxu0
        %v2833 = vadd.f32 0.0, %v2832
        %v2834 = vpop.f32.mrf.mxu0
        %v2835 = vadd.f32 0.0, %v2834
        %2836 = vmatprep.mubr.f32.mxu0 0.0
        %2837 = vmatmul.mubr.f32.gmra.mxu0 %v2632
        %v2838 = vpop.f32.mrf.mxu0
        %v2839 = vadd.f32 0.0, %v2838
        %v2840 = vpop.f32.mrf.mxu0
        %v2841 = vadd.f32 0.0, %v2840
        %2842 = vmatprep.mubr.f32.mxu0 0.0
        %2843 = vmatmul.mubr.f32.gmra.mxu0 %v2635
        %v2844 = vpop.f32.mrf.mxu0
        %v2845 = vadd.f32 0.0, %v2844
        %v2846 = vpop.f32.mrf.mxu0
        %v2847 = vadd.f32 0.0, %v2846
        %2848 = vmatprep.mubr.f32.mxu0 0.0
        %2849 = vmatmul.mubr.f32.gmra.mxu0 %v2638
        %v2850 = vpop.f32.mrf.mxu0
        %v2851 = vadd.f32 0.0, %v2850
        %v2852 = vpop.f32.mrf.mxu0
        %v2853 = vadd.f32 0.0, %v2852
        %2854 = vmatprep.mubr.f32.mxu0 0.0
        %2855 = vmatmul.mubr.f32.gmra.mxu0 %v2641
        %v2856 = vpop.f32.mrf.mxu0
        %v2857 = vadd.f32 0.0, %v2856
        %v2858 = vpop.f32.mrf.mxu0
        %v2859 = vadd.f32 0.0, %v2858
        %2860 = vmatprep.mubr.f32.mxu0 0.0
        %2861 = vmatmul.mubr.f32.gmra.mxu0 %v2644
        %v2862 = vpop.f32.mrf.mxu0
        %v2863 = vadd.f32 0.0, %v2862
        %v2864 = vpop.f32.mrf.mxu0
        %v2865 = vadd.f32 0.0, %v2864
        %2866 = vmatprep.mubr.f32.mxu0 0.0
        %2867 = vmatmul.mubr.f32.gmra.mxu0 %v2647
        %v2868 = vpop.f32.mrf.mxu0
        %v2869 = vadd.f32 0.0, %v2868
        %v2870 = vpop.f32.mrf.mxu0
        %v2871 = vadd.f32 0.0, %v2870
        %2872 = vmatprep.mubr.f32.mxu0 0.0
        %2873 = vmatmul.mubr.f32.gmra.mxu0 %v2650
        %v2874 = vpop.f32.mrf.mxu0
        %v2875 = vadd.f32 0.0, %v2874
        %v2876 = vpop.f32.mrf.mxu0
        %v2877 = vadd.f32 0.0, %v2876
        %2878 = vmatprep.mubr.f32.mxu0 0.0
        %2879 = vmatmul.mubr.f32.gmra.mxu0 %v2653
        %v2880 = vpop.f32.mrf.mxu0
        %v2881 = vadd.f32 0.0, %v2880
        %v2882 = vpop.f32.mrf.mxu0
        %v2883 = vadd.f32 0.0, %v2882
        %2884 = vmatprep.mubr.f32.mxu0 0.0
        %2885 = vmatmul.mubr.f32.gmra.mxu0 %v2656
        %v2886 = vpop.f32.mrf.mxu0
        %v2887 = vadd.f32 0.0, %v2886
        %v2888 = vpop.f32.mrf.mxu0
        %v2889 = vadd.f32 0.0, %v2888
        %2890 = vmatprep.mubr.f32.mxu0 0.0
        %2891 = vmatmul.mubr.f32.gmra.mxu0 %v2659
        %v2892 = vpop.f32.mrf.mxu0
        %v2893 = vadd.f32 0.0, %v2892
        %v2894 = vpop.f32.mrf.mxu0
        %v2895 = vadd.f32 0.0, %v2894
        %2896 = vmatprep.mubr.f32.mxu0 0.0
        %2897 = vmatmul.mubr.f32.gmra.mxu0 %v2662
        %v2898 = vpop.f32.mrf.mxu0
        %v2899 = vadd.f32 0.0, %v2898
        %v2900 = vpop.f32.mrf.mxu0
        %v2901 = vadd.f32 0.0, %v2900
        %2902 = vmatprep.mubr.f32.mxu0 0.0
        %2903 = vmatmul.mubr.f32.gmra.mxu0 %v2665
        %v2904 = vpop.f32.mrf.mxu0
        %v2905 = vadd.f32 0.0, %v2904
        %v2906 = vpop.f32.mrf.mxu0
        %v2907 = vadd.f32 0.0, %v2906
        %2908 = vmatprep.mubr.f32.mxu0 0.0
        %2909 = vmatmul.mubr.f32.gmra.mxu0 %v2668
        %v2910 = vpop.f32.mrf.mxu0
        %v2911 = vadd.f32 0.0, %v2910
        %v2912 = vpop.f32.mrf.mxu0
        %v2913 = vadd.f32 0.0, %v2912
        %2914 = vmatprep.mubr.f32.mxu0 0.0
        %2915 = vmatmul.mubr.f32.gmra.mxu0 %v2671
        %v2916 = vpop.f32.mrf.mxu0
        %v2917 = vadd.f32 0.0, %v2916
        %v2918 = vpop.f32.mrf.mxu0
        %v2919 = vadd.f32 0.0, %v2918
        %2920 = vmatprep.mubr.f32.mxu0 0.0
        %2921 = vmatmul.mubr.f32.gmra.mxu0 %v2674
        %v2922 = vpop.f32.mrf.mxu0
        %v2923 = vadd.f32 0.0, %v2922
        %v2924 = vpop.f32.mrf.mxu0
        %v2925 = vadd.f32 0.0, %v2924
        %2926 = vmatprep.mubr.f32.mxu0 0.0
        %2927 = vmatmul.mubr.f32.gmra.mxu0 %v2677
        %v2928 = vpop.f32.mrf.mxu0
        %v2929 = vadd.f32 0.0, %v2928
        %v2930 = vpop.f32.mrf.mxu0
        %v2931 = vadd.f32 0.0, %v2930
        %2932 = vmatprep.mubr.f32.mxu0 0.0
        %2933 = vmatmul.mubr.f32.gmra.mxu0 %v2680
        %v2934 = vpop.f32.mrf.mxu0
        %v2935 = vadd.f32 0.0, %v2934
        %v2936 = vpop.f32.mrf.mxu0
        %v2937 = vadd.f32 0.0, %v2936
        %2938 = vdwg.mxu0
        %v2939 = vld [vmem:[%s15] sm:$0xff]
        %v2940 = vld [vmem:[%s15 + $0x8] sm:$0xff]
        %v2941 = vld [vmem:[%s15 + $0x10] sm:$0xff]
        %v2942 = vld [vmem:[%s15 + $0x18] sm:$0xff]
        %v2943 = vld [vmem:[%s15 + $0x20] sm:$0xff]
        %v2944 = vld [vmem:[%s15 + $0x28] sm:$0xff]
        %v2945 = vld [vmem:[%s15 + $0x30] sm:$0xff]
        %v2946 = vld [vmem:[%s15 + $0x38] sm:$0xff]
        %v2947 = vld [vmem:[%s15 + $0x40] sm:$0xff]
        %v2948 = vld [vmem:[%s15 + $0x48] sm:$0xff]
        %v2949 = vld [vmem:[%s15 + $0x50] sm:$0xff]
        %v2950 = vld [vmem:[%s15 + $0x58] sm:$0xff]
        %v2951 = vld [vmem:[%s15 + $0x60] sm:$0xff]
        %v2952 = vld [vmem:[%s15 + $0x68] sm:$0xff]
        %v2953 = vld [vmem:[%s15 + $0x70] sm:$0xff]
        %v2954 = vld [vmem:[%s15 + $0x78] sm:$0xff]
        %v2955 = vld [vmem:[%s15 + $0x80] sm:$0xff]
        %v2956 = vld [vmem:[%s15 + $0x88] sm:$0xff]
        %v2957 = vld [vmem:[%s15 + $0x90] sm:$0xff]
        %v2958 = vld [vmem:[%s15 + $0x98] sm:$0xff]
        %v2959 = vld [vmem:[%s15 + $0xa0] sm:$0xff]
        %v2960 = vld [vmem:[%s15 + $0xa8] sm:$0xff]
        %v2961 = vld [vmem:[%s15 + $0xb0] sm:$0xff]
        %v2962 = vld [vmem:[%s15 + $0xb8] sm:$0xff]
        %vm2963 = vcmask 392192
        %v2965 = vsel %vm2963, %v2563, 0
        %v2968 = vsel %vm2963, %v2564, 0
        %v2971 = vsel %vm2963, %v2565, 0
        %v2974 = vsel %vm2963, %v2566, 0
        %v2977 = vsel %vm2963, %v2567, 0
        %v2980 = vsel %vm2963, %v2568, 0
        %v2983 = vsel %vm2963, %v2569, 0
        %v2986 = vsel %vm2963, %v2570, 0
        %v2989 = vsel %vm2963, %v2571, 0
        %v2992 = vsel %vm2963, %v2572, 0
        %v2995 = vsel %vm2963, %v2573, 0
        %v2998 = vsel %vm2963, %v2574, 0
        %v3001 = vsel %vm2963, %v2575, 0
        %v3004 = vsel %vm2963, %v2576, 0
        %v3007 = vsel %vm2963, %v2577, 0
        %v3010 = vsel %vm2963, %v2578, 0
        %3012 = vmatprep.subr.mxu0 0.0
        %3013 = vmatpush1.msra.mxu0 0.0
        %3014 = vmatprep.subr.mxu0 0.0
        %3015 = vmatpush1.msra.mxu0 0.0
        %3016 = vmatprep.subr.mxu0 0.0
        %3017 = vmatpush1.msra.mxu0 0.0
        %3018 = vmatprep.subr.mxu0 0.0
        %3019 = vmatpush1.msra.mxu0 0.0
        %3020 = vmatprep.subr.mxu0 0.0
        %3021 = vmatpush1.msra.mxu0 0.0
        %3022 = vmatprep.subr.mxu0 0.0
        %3023 = vmatpush1.msra.mxu0 0.0
        %3024 = vmatprep.subr.mxu0 0.0
        %3025 = vmatpush1.msra.mxu0 0.0
        %3026 = vmatprep.subr.mxu0 0.0
        %3027 = vmatpush1.msra.mxu0 0.0
        %3028 = vmatprep.subr.mxu0 0.0
        %3029 = vmatpush1.msra.mxu0 0.0
        %3030 = vmatprep.subr.mxu0 0.0
        %3031 = vmatpush1.msra.mxu0 0.0
        %3032 = vmatprep.subr.mxu0 %v2960
        %3033 = vmatpush1.msra.mxu0 %v2959
        %3034 = vmatprep.subr.mxu0 %v2956
        %3035 = vmatpush1.msra.mxu0 %v2955
        %3036 = vmatprep.subr.mxu0 %v2952
        %3037 = vmatpush1.msra.mxu0 %v2951
        %3038 = vmatprep.subr.mxu0 %v2948
        %3039 = vmatpush1.msra.mxu0 %v2947
        %3040 = vmatprep.subr.mxu0 %v2944
        %3041 = vmatpush1.msra.mxu0 %v2943
        %3042 = vmatprep.subr.mxu0 %v2940
        %3043 = vmatpush1.msra.mxu0 %v2939
        %3044 = vmatprep.subr.mxu0 0.0
        %3045 = vmatpush2.msra.mxu0 0.0
        %3046 = vmatprep.subr.mxu0 0.0
        %3047 = vmatpush2.msra.mxu0 0.0
        %3048 = vmatprep.subr.mxu0 0.0
        %3049 = vmatpush2.msra.mxu0 0.0
        %3050 = vmatprep.subr.mxu0 0.0
        %3051 = vmatpush2.msra.mxu0 0.0
        %3052 = vmatprep.subr.mxu0 0.0
        %3053 = vmatpush2.msra.mxu0 0.0
        %3054 = vmatprep.subr.mxu0 0.0
        %3055 = vmatpush2.msra.mxu0 0.0
        %3056 = vmatprep.subr.mxu0 0.0
        %3057 = vmatpush2.msra.mxu0 0.0
        %3058 = vmatprep.subr.mxu0 0.0
        %3059 = vmatpush2.msra.mxu0 0.0
        %3060 = vmatprep.subr.mxu0 0.0
        %3061 = vmatpush2.msra.mxu0 0.0
        %3062 = vmatprep.subr.mxu0 0.0
        %3063 = vmatpush2.msra.mxu0 0.0
        %3064 = vmatprep.subr.mxu0 0.0
        %3065 = vmatpush2.msra.mxu0 0.0
        %3066 = vmatprep.subr.mxu0 0.0
        %3067 = vmatpush2.msra.mxu0 0.0
        %3068 = vmatprep.subr.mxu0 0.0
        %3069 = vmatpush2.msra.mxu0 0.0
        %3070 = vmatprep.subr.mxu0 0.0
        %3071 = vmatpush2.msra.mxu0 0.0
        %3072 = vmatprep.subr.mxu0 0.0
        %3073 = vmatpush2.msra.mxu0 0.0
        %3074 = vmatprep.subr.mxu0 0.0
        %3075 = vmatpush2.msra.mxu0 0.0
        %3076 = vmatprep.mubr.f32.mxu0 0.0
        %3077 = vmatmul.mubr.f32.gmra.mxu0 %v2965
        %v3078 = vpop.f32.mrf.mxu0
        %v3079 = vadd.f32 0.0, %v3078
        %v3080 = vpop.f32.mrf.mxu0
        %v3081 = vadd.f32 0.0, %v3080
        %3082 = vmatprep.mubr.f32.mxu0 0.0
        %3083 = vmatmul.mubr.f32.gmra.mxu0 %v2968
        %v3084 = vpop.f32.mrf.mxu0
        %v3085 = vadd.f32 0.0, %v3084
        %v3086 = vpop.f32.mrf.mxu0
        %v3087 = vadd.f32 0.0, %v3086
        %3088 = vmatprep.mubr.f32.mxu0 0.0
        %3089 = vmatmul.mubr.f32.gmra.mxu0 %v2971
        %v3090 = vpop.f32.mrf.mxu0
        %v3091 = vadd.f32 0.0, %v3090
        %v3092 = vpop.f32.mrf.mxu0
        %v3093 = vadd.f32 0.0, %v3092
        %3094 = vmatprep.mubr.f32.mxu0 0.0
        %3095 = vmatmul.mubr.f32.gmra.mxu0 %v2974
        %v3096 = vpop.f32.mrf.mxu0
        %v3097 = vadd.f32 0.0, %v3096
        %v3098 = vpop.f32.mrf.mxu0
        %v3099 = vadd.f32 0.0, %v3098
        %3100 = vmatprep.mubr.f32.mxu0 0.0
        %3101 = vmatmul.mubr.f32.gmra.mxu0 %v2977
        %v3102 = vpop.f32.mrf.mxu0
        %v3103 = vadd.f32 0.0, %v3102
        %v3104 = vpop.f32.mrf.mxu0
        %v3105 = vadd.f32 0.0, %v3104
        %3106 = vmatprep.mubr.f32.mxu0 0.0
        %3107 = vmatmul.mubr.f32.gmra.mxu0 %v2980
        %v3108 = vpop.f32.mrf.mxu0
        %v3109 = vadd.f32 0.0, %v3108
        %v3110 = vpop.f32.mrf.mxu0
        %v3111 = vadd.f32 0.0, %v3110
        %3112 = vmatprep.mubr.f32.mxu0 0.0
        %3113 = vmatmul.mubr.f32.gmra.mxu0 %v2983
        %v3114 = vpop.f32.mrf.mxu0
        %v3115 = vadd.f32 0.0, %v3114
        %v3116 = vpop.f32.mrf.mxu0
        %v3117 = vadd.f32 0.0, %v3116
        %3118 = vmatprep.mubr.f32.mxu0 0.0
        %3119 = vmatmul.mubr.f32.gmra.mxu0 %v2986
        %v3120 = vpop.f32.mrf.mxu0
        %v3121 = vadd.f32 0.0, %v3120
        %v3122 = vpop.f32.mrf.mxu0
        %v3123 = vadd.f32 0.0, %v3122
        %3124 = vmatprep.mubr.f32.mxu0 0.0
        %3125 = vmatmul.mubr.f32.gmra.mxu0 %v2989
        %v3126 = vpop.f32.mrf.mxu0
        %v3127 = vadd.f32 0.0, %v3126
        %v3128 = vpop.f32.mrf.mxu0
        %v3129 = vadd.f32 0.0, %v3128
        %3130 = vmatprep.mubr.f32.mxu0 0.0
        %3131 = vmatmul.mubr.f32.gmra.mxu0 %v2992
        %v3132 = vpop.f32.mrf.mxu0
        %v3133 = vadd.f32 0.0, %v3132
        %v3134 = vpop.f32.mrf.mxu0
        %v3135 = vadd.f32 0.0, %v3134
        %3136 = vmatprep.mubr.f32.mxu0 0.0
        %3137 = vmatmul.mubr.f32.gmra.mxu0 %v2995
        %v3138 = vpop.f32.mrf.mxu0
        %v3139 = vadd.f32 0.0, %v3138
        %v3140 = vpop.f32.mrf.mxu0
        %v3141 = vadd.f32 0.0, %v3140
        %3142 = vmatprep.mubr.f32.mxu0 0.0
        %3143 = vmatmul.mubr.f32.gmra.mxu0 %v2998
        %v3144 = vpop.f32.mrf.mxu0
        %v3145 = vadd.f32 0.0, %v3144
        %v3146 = vpop.f32.mrf.mxu0
        %v3147 = vadd.f32 0.0, %v3146
        %3148 = vmatprep.mubr.f32.mxu0 0.0
        %3149 = vmatmul.mubr.f32.gmra.mxu0 %v3001
        %v3150 = vpop.f32.mrf.mxu0
        %v3151 = vadd.f32 0.0, %v3150
        %v3152 = vpop.f32.mrf.mxu0
        %v3153 = vadd.f32 0.0, %v3152
        %3154 = vmatprep.mubr.f32.mxu0 0.0
        %3155 = vmatmul.mubr.f32.gmra.mxu0 %v3004
        %v3156 = vpop.f32.mrf.mxu0
        %v3157 = vadd.f32 0.0, %v3156
        %v3158 = vpop.f32.mrf.mxu0
        %v3159 = vadd.f32 0.0, %v3158
        %3160 = vmatprep.mubr.f32.mxu0 0.0
        %3161 = vmatmul.mubr.f32.gmra.mxu0 %v3007
        %v3162 = vpop.f32.mrf.mxu0
        %v3163 = vadd.f32 0.0, %v3162
        %v3164 = vpop.f32.mrf.mxu0
        %v3165 = vadd.f32 0.0, %v3164
        %3166 = vmatprep.mubr.f32.mxu0 0.0
        %3167 = vmatmul.mubr.f32.gmra.mxu0 %v3010
        %v3168 = vpop.f32.mrf.mxu0
        %v3169 = vadd.f32 0.0, %v3168
        %v3170 = vpop.f32.mrf.mxu0
        %v3171 = vadd.f32 0.0, %v3170
        %3172 = vdwg.mxu0
        %3173 = vmatprep.subr.mxu0 0.0
        %3174 = vmatpush1.msra.mxu0 0.0
        %3175 = vmatprep.subr.mxu0 0.0
        %3176 = vmatpush1.msra.mxu0 0.0
        %3177 = vmatprep.subr.mxu0 0.0
        %3178 = vmatpush1.msra.mxu0 0.0
        %3179 = vmatprep.subr.mxu0 0.0
        %3180 = vmatpush1.msra.mxu0 0.0
        %3181 = vmatprep.subr.mxu0 0.0
        %3182 = vmatpush1.msra.mxu0 0.0
        %3183 = vmatprep.subr.mxu0 0.0
        %3184 = vmatpush1.msra.mxu0 0.0
        %3185 = vmatprep.subr.mxu0 0.0
        %3186 = vmatpush1.msra.mxu0 0.0
        %3187 = vmatprep.subr.mxu0 0.0
        %3188 = vmatpush1.msra.mxu0 0.0
        %3189 = vmatprep.subr.mxu0 0.0
        %3190 = vmatpush1.msra.mxu0 0.0
        %3191 = vmatprep.subr.mxu0 0.0
        %3192 = vmatpush1.msra.mxu0 0.0
        %3193 = vmatprep.subr.mxu0 %v2962
        %3194 = vmatpush1.msra.mxu0 %v2961
        %3195 = vmatprep.subr.mxu0 %v2958
        %3196 = vmatpush1.msra.mxu0 %v2957
        %3197 = vmatprep.subr.mxu0 %v2954
        %3198 = vmatpush1.msra.mxu0 %v2953
        %3199 = vmatprep.subr.mxu0 %v2950
        %3200 = vmatpush1.msra.mxu0 %v2949
        %3201 = vmatprep.subr.mxu0 %v2946
        %3202 = vmatpush1.msra.mxu0 %v2945
        %3203 = vmatprep.subr.mxu0 %v2942
        %3204 = vmatpush1.msra.mxu0 %v2941
        %3205 = vmatprep.subr.mxu0 0.0
        %3206 = vmatpush2.msra.mxu0 0.0
        %3207 = vmatprep.subr.mxu0 0.0
        %3208 = vmatpush2.msra.mxu0 0.0
        %3209 = vmatprep.subr.mxu0 0.0
        %3210 = vmatpush2.msra.mxu0 0.0
        %3211 = vmatprep.subr.mxu0 0.0
        %3212 = vmatpush2.msra.mxu0 0.0
        %3213 = vmatprep.subr.mxu0 0.0
        %3214 = vmatpush2.msra.mxu0 0.0
        %3215 = vmatprep.subr.mxu0 0.0
        %3216 = vmatpush2.msra.mxu0 0.0
        %3217 = vmatprep.subr.mxu0 0.0
        %3218 = vmatpush2.msra.mxu0 0.0
        %3219 = vmatprep.subr.mxu0 0.0
        %3220 = vmatpush2.msra.mxu0 0.0
        %3221 = vmatprep.subr.mxu0 0.0
        %3222 = vmatpush2.msra.mxu0 0.0
        %3223 = vmatprep.subr.mxu0 0.0
        %3224 = vmatpush2.msra.mxu0 0.0
        %3225 = vmatprep.subr.mxu0 0.0
        %3226 = vmatpush2.msra.mxu0 0.0
        %3227 = vmatprep.subr.mxu0 0.0
        %3228 = vmatpush2.msra.mxu0 0.0
        %3229 = vmatprep.subr.mxu0 0.0
        %3230 = vmatpush2.msra.mxu0 0.0
        %3231 = vmatprep.subr.mxu0 0.0
        %3232 = vmatpush2.msra.mxu0 0.0
        %3233 = vmatprep.subr.mxu0 0.0
        %3234 = vmatpush2.msra.mxu0 0.0
        %3235 = vmatprep.subr.mxu0 0.0
        %3236 = vmatpush2.msra.mxu0 0.0
        %3237 = vmatprep.mubr.f32.mxu0 0.0
        %3238 = vmatmul.mubr.f32.gmra.mxu0 %v2965
        %v3239 = vpop.f32.mrf.mxu0
        %v3240 = vadd.f32 0.0, %v3239
        %v3241 = vpop.f32.mrf.mxu0
        %v3242 = vadd.f32 0.0, %v3241
        %3243 = vmatprep.mubr.f32.mxu0 0.0
        %3244 = vmatmul.mubr.f32.gmra.mxu0 %v2968
        %v3245 = vpop.f32.mrf.mxu0
        %v3246 = vadd.f32 0.0, %v3245
        %v3247 = vpop.f32.mrf.mxu0
        %v3248 = vadd.f32 0.0, %v3247
        %3249 = vmatprep.mubr.f32.mxu0 0.0
        %3250 = vmatmul.mubr.f32.gmra.mxu0 %v2971
        %v3251 = vpop.f32.mrf.mxu0
        %v3252 = vadd.f32 0.0, %v3251
        %v3253 = vpop.f32.mrf.mxu0
        %v3254 = vadd.f32 0.0, %v3253
        %3255 = vmatprep.mubr.f32.mxu0 0.0
        %3256 = vmatmul.mubr.f32.gmra.mxu0 %v2974
        %v3257 = vpop.f32.mrf.mxu0
        %v3258 = vadd.f32 0.0, %v3257
        %v3259 = vpop.f32.mrf.mxu0
        %v3260 = vadd.f32 0.0, %v3259
        %3261 = vmatprep.mubr.f32.mxu0 0.0
        %3262 = vmatmul.mubr.f32.gmra.mxu0 %v2977
        %v3263 = vpop.f32.mrf.mxu0
        %v3264 = vadd.f32 0.0, %v3263
        %v3265 = vpop.f32.mrf.mxu0
        %v3266 = vadd.f32 0.0, %v3265
        %3267 = vmatprep.mubr.f32.mxu0 0.0
        %3268 = vmatmul.mubr.f32.gmra.mxu0 %v2980
        %v3269 = vpop.f32.mrf.mxu0
        %v3270 = vadd.f32 0.0, %v3269
        %v3271 = vpop.f32.mrf.mxu0
        %v3272 = vadd.f32 0.0, %v3271
        %3273 = vmatprep.mubr.f32.mxu0 0.0
        %3274 = vmatmul.mubr.f32.gmra.mxu0 %v2983
        %v3275 = vpop.f32.mrf.mxu0
        %v3276 = vadd.f32 0.0, %v3275
        %v3277 = vpop.f32.mrf.mxu0
        %v3278 = vadd.f32 0.0, %v3277
        %3279 = vmatprep.mubr.f32.mxu0 0.0
        %3280 = vmatmul.mubr.f32.gmra.mxu0 %v2986
        %v3281 = vpop.f32.mrf.mxu0
        %v3282 = vadd.f32 0.0, %v3281
        %v3283 = vpop.f32.mrf.mxu0
        %v3284 = vadd.f32 0.0, %v3283
        %3285 = vmatprep.mubr.f32.mxu0 0.0
        %3286 = vmatmul.mubr.f32.gmra.mxu0 %v2989
        %v3287 = vpop.f32.mrf.mxu0
        %v3288 = vadd.f32 0.0, %v3287
        %v3289 = vpop.f32.mrf.mxu0
        %v3290 = vadd.f32 0.0, %v3289
        %3291 = vmatprep.mubr.f32.mxu0 0.0
        %3292 = vmatmul.mubr.f32.gmra.mxu0 %v2992
        %v3293 = vpop.f32.mrf.mxu0
        %v3294 = vadd.f32 0.0, %v3293
        %v3295 = vpop.f32.mrf.mxu0
        %v3296 = vadd.f32 0.0, %v3295
        %3297 = vmatprep.mubr.f32.mxu0 0.0
        %3298 = vmatmul.mubr.f32.gmra.mxu0 %v2995
        %v3299 = vpop.f32.mrf.mxu0
        %v3300 = vadd.f32 0.0, %v3299
        %v3301 = vpop.f32.mrf.mxu0
        %v3302 = vadd.f32 0.0, %v3301
        %3303 = vmatprep.mubr.f32.mxu0 0.0
        %3304 = vmatmul.mubr.f32.gmra.mxu0 %v2998
        %v3305 = vpop.f32.mrf.mxu0
        %v3306 = vadd.f32 0.0, %v3305
        %v3307 = vpop.f32.mrf.mxu0
        %v3308 = vadd.f32 0.0, %v3307
        %3309 = vmatprep.mubr.f32.mxu0 0.0
        %3310 = vmatmul.mubr.f32.gmra.mxu0 %v3001
        %v3311 = vpop.f32.mrf.mxu0
        %v3312 = vadd.f32 0.0, %v3311
        %v3313 = vpop.f32.mrf.mxu0
        %v3314 = vadd.f32 0.0, %v3313
        %3315 = vmatprep.mubr.f32.mxu0 0.0
        %3316 = vmatmul.mubr.f32.gmra.mxu0 %v3004
        %v3317 = vpop.f32.mrf.mxu0
        %v3318 = vadd.f32 0.0, %v3317
        %v3319 = vpop.f32.mrf.mxu0
        %v3320 = vadd.f32 0.0, %v3319
        %3321 = vmatprep.mubr.f32.mxu0 0.0
        %3322 = vmatmul.mubr.f32.gmra.mxu0 %v3007
        %v3323 = vpop.f32.mrf.mxu0
        %v3324 = vadd.f32 0.0, %v3323
        %v3325 = vpop.f32.mrf.mxu0
        %v3326 = vadd.f32 0.0, %v3325
        %3327 = vmatprep.mubr.f32.mxu0 0.0
        %3328 = vmatmul.mubr.f32.gmra.mxu0 %v3010
        %v3329 = vpop.f32.mrf.mxu0
        %v3330 = vadd.f32 0.0, %v3329
        %v3331 = vpop.f32.mrf.mxu0
        %v3332 = vadd.f32 0.0, %v3331
        %3333 = vdwg.mxu0
        %v3334 = vld [vmem:[%s10] sm:$0xff]
        %v3335 = vld [vmem:[%s10 + $0x8] sm:$0xff]
        %v3336 = vld [vmem:[%s10 + $0x10] sm:$0xff]
        %v3337 = vld [vmem:[%s10 + $0x18] sm:$0xff]
        %v3338 = vld [vmem:[%s11] sm:$0xff]
        %v3339 = vld [vmem:[%s11 + $0x8] sm:$0xff]
        %v3340 = vld [vmem:[%s11 + $0x10] sm:$0xff]
        %v3341 = vld [vmem:[%s11 + $0x18] sm:$0xff]
        %v3342 = vld [vmem:[%s12] sm:$0xff]
        %v3343 = vld [vmem:[%s12 + $0x8] sm:$0xff]
        %v3344 = vld [vmem:[%s12 + $0x10] sm:$0xff]
        %v3345 = vld [vmem:[%s12 + $0x18] sm:$0xff]
        %v3346 = vld [vmem:[%s13] sm:$0xff]
        %v3347 = vld [vmem:[%s13 + $0x8] sm:$0xff]
        %v3348 = vld [vmem:[%s13 + $0x10] sm:$0xff]
        %v3349 = vld [vmem:[%s13 + $0x18] sm:$0xff]
        %v3350 = vld [vmem:[%s13 + $0x20] sm:$0xff]
        %v3351 = vld [vmem:[%s13 + $0x28] sm:$0xff]
        %v3352 = vld [vmem:[%s13 + $0x30] sm:$0xff]
        %v3353 = vld [vmem:[%s13 + $0x38] sm:$0xff]
        %v3354 = vld [vmem:[%s18] sm:$0xff]
        %v3355 = vld [vmem:[%s18 + $0x8] sm:$0xff]
        %v3356 = vld [vmem:[%s18 + $0x10] sm:$0xff]
        %v3357 = vld [vmem:[%s18 + $0x18] sm:$0xff]
        %v3358 = vld [vmem:[%s18 + $0x20] sm:$0xff]
        %v3359 = vld [vmem:[%s18 + $0x28] sm:$0xff]
        %v3360 = vld [vmem:[%s18 + $0x30] sm:$0xff]
        %v3361 = vld [vmem:[%s18 + $0x38] sm:$0xff]
        %v3362 = vld [vmem:[%s18 + $0x40] sm:$0xff]
        %v3363 = vld [vmem:[%s18 + $0x48] sm:$0xff]
        %v3364 = vld [vmem:[%s18 + $0x50] sm:$0xff]
        %v3365 = vld [vmem:[%s18 + $0x58] sm:$0xff]
        %v3366 = vld [vmem:[%s18 + $0x60] sm:$0xff]
        %v3367 = vld [vmem:[%s18 + $0x68] sm:$0xff]
        %v3368 = vld [vmem:[%s18 + $0x70] sm:$0xff]
        %v3369 = vld [vmem:[%s18 + $0x78] sm:$0xff]
        %v3370 = vld [vmem:[%s18 + $0x80] sm:$0xff]
        %v3371 = vld [vmem:[%s18 + $0x88] sm:$0xff]
        %v3372 = vld [vmem:[%s18 + $0x90] sm:$0xff]
        %v3373 = vld [vmem:[%s18 + $0x98] sm:$0xff]
        %v3374 = vld [vmem:[%s18 + $0xa0] sm:$0xff]
        %v3375 = vld [vmem:[%s18 + $0xa8] sm:$0xff]
        %v3376 = vld [vmem:[%s18 + $0xb0] sm:$0xff]
        %v3377 = vld [vmem:[%s18 + $0xb8] sm:$0xff]
        %v3378 = vld [vmem:[%s18 + $0xc0] sm:$0xff]
        %v3379 = vld [vmem:[%s18 + $0xc8] sm:$0xff]
        %v3380 = vld [vmem:[%s18 + $0xd0] sm:$0xff]
        %v3381 = vld [vmem:[%s18 + $0xd8] sm:$0xff]
        %v3382 = vld [vmem:[%s18 + $0xe0] sm:$0xff]
        %v3383 = vld [vmem:[%s18 + $0xe8] sm:$0xff]
        %v3384 = vld [vmem:[%s18 + $0xf0] sm:$0xff]
        %v3385 = vld [vmem:[%s18 + $0xf8] sm:$0xff]
        %v3386 = vld [vmem:[%s19] sm:$0xff]
        %v3387 = vld [vmem:[%s19 + $0x8] sm:$0xff]
        %v3388 = vld [vmem:[%s19 + $0x10] sm:$0xff]
        %v3389 = vld [vmem:[%s19 + $0x18] sm:$0xff]
        %v3390 = vld [vmem:[%s19 + $0x20] sm:$0xff]
        %v3391 = vld [vmem:[%s19 + $0x28] sm:$0xff]
        %v3392 = vld [vmem:[%s19 + $0x30] sm:$0xff]
        %v3393 = vld [vmem:[%s19 + $0x38] sm:$0xff]
        %v3394 = vld [vmem:[%s19 + $0x40] sm:$0xff]
        %v3395 = vld [vmem:[%s19 + $0x48] sm:$0xff]
        %v3396 = vld [vmem:[%s19 + $0x50] sm:$0xff]
        %v3397 = vld [vmem:[%s19 + $0x58] sm:$0xff]
        %v3398 = vld [vmem:[%s19 + $0x60] sm:$0xff]
        %v3399 = vld [vmem:[%s19 + $0x68] sm:$0xff]
        %v3400 = vld [vmem:[%s19 + $0x70] sm:$0xff]
        %v3401 = vld [vmem:[%s19 + $0x78] sm:$0xff]
        %v3402 = vld [vmem:[%s19 + $0x80] sm:$0xff]
        %v3403 = vld [vmem:[%s19 + $0x88] sm:$0xff]
        %v3404 = vld [vmem:[%s19 + $0x90] sm:$0xff]
        %v3405 = vld [vmem:[%s19 + $0x98] sm:$0xff]
        %v3406 = vld [vmem:[%s19 + $0xa0] sm:$0xff]
        %v3407 = vld [vmem:[%s19 + $0xa8] sm:$0xff]
        %v3408 = vld [vmem:[%s19 + $0xb0] sm:$0xff]
        %v3409 = vld [vmem:[%s19 + $0xb8] sm:$0xff]
        %v3410 = vld [vmem:[%s19 + $0xc0] sm:$0xff]
        %v3411 = vld [vmem:[%s19 + $0xc8] sm:$0xff]
        %v3412 = vld [vmem:[%s19 + $0xd0] sm:$0xff]
        %v3413 = vld [vmem:[%s19 + $0xd8] sm:$0xff]
        %v3414 = vld [vmem:[%s19 + $0xe0] sm:$0xff]
        %v3415 = vld [vmem:[%s19 + $0xe8] sm:$0xff]
        %v3416 = vld [vmem:[%s19 + $0xf0] sm:$0xff]
        %v3417 = vld [vmem:[%s19 + $0xf8] sm:$0xff]
        %v3418 = vld [vmem:[%s19 + $0x100] sm:$0xff]
        %v3419 = vld [vmem:[%s19 + $0x108] sm:$0xff]
        %v3420 = vld [vmem:[%s19 + $0x110] sm:$0xff]
        %v3421 = vld [vmem:[%s19 + $0x118] sm:$0xff]
        %v3422 = vld [vmem:[%s19 + $0x120] sm:$0xff]
        %v3423 = vld [vmem:[%s19 + $0x128] sm:$0xff]
        %v3424 = vld [vmem:[%s19 + $0x130] sm:$0xff]
        %v3425 = vld [vmem:[%s19 + $0x138] sm:$0xff]
        %v3426 = vld [vmem:[%s19 + $0x140] sm:$0xff]
        %v3427 = vld [vmem:[%s19 + $0x148] sm:$0xff]
        %v3428 = vld [vmem:[%s19 + $0x150] sm:$0xff]
        %v3429 = vld [vmem:[%s19 + $0x158] sm:$0xff]
        %v3430 = vld [vmem:[%s19 + $0x160] sm:$0xff]
        %v3431 = vld [vmem:[%s19 + $0x168] sm:$0xff]
        %v3432 = vld [vmem:[%s19 + $0x170] sm:$0xff]
        %v3433 = vld [vmem:[%s19 + $0x178] sm:$0xff]
        %v3434 = vld [vmem:[%s19 + $0x180] sm:$0xff]
        %v3435 = vld [vmem:[%s19 + $0x188] sm:$0xff]
        %v3436 = vld [vmem:[%s19 + $0x190] sm:$0xff]
        %v3437 = vld [vmem:[%s19 + $0x198] sm:$0xff]
        %v3438 = vld [vmem:[%s19 + $0x1a0] sm:$0xff]
        %v3439 = vld [vmem:[%s19 + $0x1a8] sm:$0xff]
        %v3440 = vld [vmem:[%s19 + $0x1b0] sm:$0xff]
        %v3441 = vld [vmem:[%s19 + $0x1b8] sm:$0xff]
        %v3442 = vld [vmem:[%s19 + $0x1c0] sm:$0xff]
        %v3443 = vld [vmem:[%s19 + $0x1c8] sm:$0xff]
        %v3444 = vld [vmem:[%s19 + $0x1d0] sm:$0xff]
        %v3445 = vld [vmem:[%s19 + $0x1d8] sm:$0xff]
        %v3446 = vld [vmem:[%s19 + $0x1e0] sm:$0xff]
        %v3447 = vld [vmem:[%s19 + $0x1e8] sm:$0xff]
        %v3448 = vld [vmem:[%s19 + $0x1f0] sm:$0xff]
        %v3449 = vld [vmem:[%s19 + $0x1f8] sm:$0xff]
        loop: start=0, step=1, limit=5
        $region105: #{tpu_custom_call.1} parent=103 // loop_pre_header
          _
        $region106: #{tpu_custom_call.1} parent=103 // loop_header
          %s3451 = sphi 0, %s3455
          %p3452 = scmp.ge.s32.totalorder %s3451, 5
          %v3456 = vphi %v968, %v8245
          %v3457 = vphi %v973, %v8247
          %v3458 = vphi %v978, %v8249
          %v3459 = vphi %v983, %v8251
          %v3460 = vphi %v988, %v8253
          %v3461 = vphi %v993, %v8255
          %v3462 = vphi %v998, %v8257
          %v3463 = vphi %v1003, %v8259
          %v3464 = vphi %v1008, %v8261
          %v3465 = vphi %v1013, %v8263
          %v3466 = vphi %v1018, %v8265
          %v3467 = vphi %v1023, %v8267
          %v3468 = vphi %v1028, %v8269
          %v3469 = vphi %v1033, %v8271
          %v3470 = vphi %v1038, %v8273
          %v3471 = vphi %v1043, %v8275
          %v3472 = vphi %v1215, %v8325
          %v3473 = vphi %v1220, %v8327
          %v3474 = vphi %v1225, %v8329
          %v3475 = vphi %v1230, %v8331
          %v3476 = vphi %v1235, %v8333
          %v3477 = vphi %v1240, %v8335
          %v3478 = vphi %v1245, %v8337
          %v3479 = vphi %v1250, %v8339
          %v3480 = vphi %v1255, %v8341
          %v3481 = vphi %v1260, %v8343
          %v3482 = vphi %v1265, %v8345
          %v3483 = vphi %v1270, %v8347
          %v3484 = vphi %v1275, %v8349
          %v3485 = vphi %v1280, %v8351
          %v3486 = vphi %v1285, %v8353
          %v3487 = vphi %v1290, %v8355
          %v3488 = vphi %v1295, %v8357
          %v3489 = vphi %v1300, %v8359
          %v3490 = vphi %v1305, %v8361
          %v3491 = vphi %v1310, %v8363
          %v3492 = vphi %v1315, %v8365
          %v3493 = vphi %v1320, %v8367
          %v3494 = vphi %v1325, %v8369
          %v3495 = vphi %v1330, %v8371
          %v3496 = vphi %v1335, %v8373
          %v3497 = vphi %v1340, %v8375
          %v3498 = vphi %v1345, %v8377
          %v3499 = vphi %v1350, %v8379
          %v3500 = vphi %v1355, %v8381
          %v3501 = vphi %v1360, %v8383
          %v3502 = vphi %v1365, %v8385
          %v3503 = vphi %v1370, %v8387
          %v3504 = vphi %v1452, %v8423
          %v3505 = vphi %v1457, %v8425
        $region107: #{tpu_custom_call.1} parent=103 // loop_header_branch
          %3454 = sbr.rel (%p3452) target = $region111
        $region108: #{tpu_custom_call.1} parent=103 // loop_body
          %vm3506 = vcmask 261120
          %v3508 = vsel %vm3506, %v3504, 0
          %v3511 = vsel %vm3506, %v3505, 0
          %3513 = vmatprep.subr.mxu0 0.0
          %3514 = vmatpush1.msra.mxu0 0.0
          %3515 = vmatprep.subr.mxu0 0.0
          %3516 = vmatpush1.msra.mxu0 0.0
          %3517 = vmatprep.subr.mxu0 0.0
          %3518 = vmatpush1.msra.mxu0 0.0
          %3519 = vmatprep.subr.mxu0 0.0
          %3520 = vmatpush1.msra.mxu0 0.0
          %3521 = vmatprep.subr.mxu0 0.0
          %3522 = vmatpush1.msra.mxu0 0.0
          %3523 = vmatprep.subr.mxu0 0.0
          %3524 = vmatpush1.msra.mxu0 0.0
          %3525 = vmatprep.subr.mxu0 0.0
          %3526 = vmatpush1.msra.mxu0 0.0
          %3527 = vmatprep.subr.mxu0 0.0
          %3528 = vmatpush1.msra.mxu0 0.0
          %3529 = vmatprep.subr.mxu0 0.0
          %3530 = vmatpush1.msra.mxu0 0.0
          %3531 = vmatprep.subr.mxu0 0.0
          %3532 = vmatpush1.msra.mxu0 0.0
          %3533 = vmatprep.subr.mxu0 0.0
          %3534 = vmatpush1.msra.mxu0 0.0
          %3535 = vmatprep.subr.mxu0 0.0
          %3536 = vmatpush1.msra.mxu0 0.0
          %3537 = vmatprep.subr.mxu0 0.0
          %3538 = vmatpush1.msra.mxu0 %v3345
          %3539 = vmatprep.subr.mxu0 0.0
          %3540 = vmatpush1.msra.mxu0 %v3344
          %3541 = vmatprep.subr.mxu0 0.0
          %3542 = vmatpush1.msra.mxu0 %v3343
          %3543 = vmatprep.subr.mxu0 0.0
          %3544 = vmatpush1.msra.mxu0 %v3342
          %3545 = vmatprep.subr.mxu0 0.0
          %3546 = vmatpush2.msra.mxu0 0.0
          %3547 = vmatprep.subr.mxu0 0.0
          %3548 = vmatpush2.msra.mxu0 0.0
          %3549 = vmatprep.subr.mxu0 0.0
          %3550 = vmatpush2.msra.mxu0 0.0
          %3551 = vmatprep.subr.mxu0 0.0
          %3552 = vmatpush2.msra.mxu0 0.0
          %3553 = vmatprep.subr.mxu0 0.0
          %3554 = vmatpush2.msra.mxu0 0.0
          %3555 = vmatprep.subr.mxu0 0.0
          %3556 = vmatpush2.msra.mxu0 0.0
          %3557 = vmatprep.subr.mxu0 0.0
          %3558 = vmatpush2.msra.mxu0 0.0
          %3559 = vmatprep.subr.mxu0 0.0
          %3560 = vmatpush2.msra.mxu0 0.0
          %3561 = vmatprep.subr.mxu0 0.0
          %3562 = vmatpush2.msra.mxu0 0.0
          %3563 = vmatprep.subr.mxu0 0.0
          %3564 = vmatpush2.msra.mxu0 0.0
          %3565 = vmatprep.subr.mxu0 0.0
          %3566 = vmatpush2.msra.mxu0 0.0
          %3567 = vmatprep.subr.mxu0 0.0
          %3568 = vmatpush2.msra.mxu0 0.0
          %3569 = vmatprep.subr.mxu0 0.0
          %3570 = vmatpush2.msra.mxu0 0.0
          %3571 = vmatprep.subr.mxu0 0.0
          %3572 = vmatpush2.msra.mxu0 0.0
          %3573 = vmatprep.subr.mxu0 0.0
          %3574 = vmatpush2.msra.mxu0 0.0
          %3575 = vmatprep.subr.mxu0 0.0
          %3576 = vmatpush2.msra.mxu0 0.0
          %3577 = vmatprep.mubr.f32.mxu0 0.0
          %3578 = vmatmul.mubr.f32.gmra.mxu0 %v3508
          %v3579 = vpop.f32.mrf.mxu0
          %v3580 = vadd.f32 0.0, %v3579
          %v3581 = vpop.f32.mrf.mxu0
          %3582 = vmatprep.mubr.f32.mxu0 0.0
          %3583 = vmatmul.mubr.f32.gmra.mxu0 %v3511
          %v3584 = vpop.f32.mrf.mxu0
          %v3585 = vadd.f32 0.0, %v3584
          %v3586 = vpop.f32.mrf.mxu0
          %3587 = vdwg.mxu0
          %v3589 = vsel %vm3506, %v3456, 0
          %v3592 = vsel %vm3506, %v3457, 0
          %v3595 = vsel %vm3506, %v3458, 0
          %v3598 = vsel %vm3506, %v3459, 0
          %v3601 = vsel %vm3506, %v3460, 0
          %v3604 = vsel %vm3506, %v3461, 0
          %v3607 = vsel %vm3506, %v3462, 0
          %v3610 = vsel %vm3506, %v3463, 0
          %v3613 = vsel %vm3506, %v3464, 0
          %v3616 = vsel %vm3506, %v3465, 0
          %v3619 = vsel %vm3506, %v3466, 0
          %v3622 = vsel %vm3506, %v3467, 0
          %v3625 = vsel %vm3506, %v3468, 0
          %v3628 = vsel %vm3506, %v3469, 0
          %v3631 = vsel %vm3506, %v3470, 0
          %v3634 = vsel %vm3506, %v3471, 0
          %3636 = vmatprep.subr.mxu0 0.0
          %3637 = vmatpush1.msra.mxu0 0.0
          %3638 = vmatprep.subr.mxu0 0.0
          %3639 = vmatpush1.msra.mxu0 0.0
          %3640 = vmatprep.subr.mxu0 0.0
          %3641 = vmatpush1.msra.mxu0 0.0
          %3642 = vmatprep.subr.mxu0 0.0
          %3643 = vmatpush1.msra.mxu0 0.0
          %3644 = vmatprep.subr.mxu0 0.0
          %3645 = vmatpush1.msra.mxu0 0.0
          %3646 = vmatprep.subr.mxu0 0.0
          %3647 = vmatpush1.msra.mxu0 0.0
          %3648 = vmatprep.subr.mxu0 0.0
          %3649 = vmatpush1.msra.mxu0 0.0
          %3650 = vmatprep.subr.mxu0 0.0
          %3651 = vmatpush1.msra.mxu0 0.0
          %3652 = vmatprep.subr.mxu0 0.0
          %3653 = vmatpush1.msra.mxu0 0.0
          %3654 = vmatprep.subr.mxu0 0.0
          %3655 = vmatpush1.msra.mxu0 0.0
          %3656 = vmatprep.subr.mxu0 0.0
          %3657 = vmatpush1.msra.mxu0 0.0
          %3658 = vmatprep.subr.mxu0 0.0
          %3659 = vmatpush1.msra.mxu0 0.0
          %3660 = vmatprep.subr.mxu0 0.0
          %3661 = vmatpush1.msra.mxu0 %v3337
          %3662 = vmatprep.subr.mxu0 0.0
          %3663 = vmatpush1.msra.mxu0 %v3336
          %3664 = vmatprep.subr.mxu0 0.0
          %3665 = vmatpush1.msra.mxu0 %v3335
          %3666 = vmatprep.subr.mxu0 0.0
          %3667 = vmatpush1.msra.mxu0 %v3334
          %3668 = vmatprep.subr.mxu0 0.0
          %3669 = vmatpush2.msra.mxu0 0.0
          %3670 = vmatprep.subr.mxu0 0.0
          %3671 = vmatpush2.msra.mxu0 0.0
          %3672 = vmatprep.subr.mxu0 0.0
          %3673 = vmatpush2.msra.mxu0 0.0
          %3674 = vmatprep.subr.mxu0 0.0
          %3675 = vmatpush2.msra.mxu0 0.0
          %3676 = vmatprep.subr.mxu0 0.0
          %3677 = vmatpush2.msra.mxu0 0.0
          %3678 = vmatprep.subr.mxu0 0.0
          %3679 = vmatpush2.msra.mxu0 0.0
          %3680 = vmatprep.subr.mxu0 0.0
          %3681 = vmatpush2.msra.mxu0 0.0
          %3682 = vmatprep.subr.mxu0 0.0
          %3683 = vmatpush2.msra.mxu0 0.0
          %3684 = vmatprep.subr.mxu0 0.0
          %3685 = vmatpush2.msra.mxu0 0.0
          %3686 = vmatprep.subr.mxu0 0.0
          %3687 = vmatpush2.msra.mxu0 0.0
          %3688 = vmatprep.subr.mxu0 0.0
          %3689 = vmatpush2.msra.mxu0 0.0
          %3690 = vmatprep.subr.mxu0 0.0
          %3691 = vmatpush2.msra.mxu0 0.0
          %3692 = vmatprep.subr.mxu0 0.0
          %3693 = vmatpush2.msra.mxu0 0.0
          %3694 = vmatprep.subr.mxu0 0.0
          %3695 = vmatpush2.msra.mxu0 0.0
          %3696 = vmatprep.subr.mxu0 0.0
          %3697 = vmatpush2.msra.mxu0 0.0
          %3698 = vmatprep.subr.mxu0 0.0
          %3699 = vmatpush2.msra.mxu0 0.0
          %3700 = vmatprep.mubr.f32.mxu0 0.0
          %3701 = vmatmul.mubr.f32.gmra.mxu0 %v3589
          %v3702 = vpop.f32.mrf.mxu0
          %v3703 = vadd.f32 0.0, %v3702
          %v3704 = vpop.f32.mrf.mxu0
          %3705 = vmatprep.mubr.f32.mxu0 0.0
          %3706 = vmatmul.mubr.f32.gmra.mxu0 %v3592
          %v3707 = vpop.f32.mrf.mxu0
          %v3708 = vadd.f32 0.0, %v3707
          %v3709 = vpop.f32.mrf.mxu0
          %3710 = vmatprep.mubr.f32.mxu0 0.0
          %3711 = vmatmul.mubr.f32.gmra.mxu0 %v3595
          %v3712 = vpop.f32.mrf.mxu0
          %v3713 = vadd.f32 0.0, %v3712
          %v3714 = vpop.f32.mrf.mxu0
          %3715 = vmatprep.mubr.f32.mxu0 0.0
          %3716 = vmatmul.mubr.f32.gmra.mxu0 %v3598
          %v3717 = vpop.f32.mrf.mxu0
          %v3718 = vadd.f32 0.0, %v3717
          %v3719 = vpop.f32.mrf.mxu0
          %3720 = vmatprep.mubr.f32.mxu0 0.0
          %3721 = vmatmul.mubr.f32.gmra.mxu0 %v3601
          %v3722 = vpop.f32.mrf.mxu0
          %v3723 = vadd.f32 0.0, %v3722
          %v3724 = vpop.f32.mrf.mxu0
          %3725 = vmatprep.mubr.f32.mxu0 0.0
          %3726 = vmatmul.mubr.f32.gmra.mxu0 %v3604
          %v3727 = vpop.f32.mrf.mxu0
          %v3728 = vadd.f32 0.0, %v3727
          %v3729 = vpop.f32.mrf.mxu0
          %3730 = vmatprep.mubr.f32.mxu0 0.0
          %3731 = vmatmul.mubr.f32.gmra.mxu0 %v3607
          %v3732 = vpop.f32.mrf.mxu0
          %v3733 = vadd.f32 0.0, %v3732
          %v3734 = vpop.f32.mrf.mxu0
          %3735 = vmatprep.mubr.f32.mxu0 0.0
          %3736 = vmatmul.mubr.f32.gmra.mxu0 %v3610
          %v3737 = vpop.f32.mrf.mxu0
          %v3738 = vadd.f32 0.0, %v3737
          %v3739 = vpop.f32.mrf.mxu0
          %3740 = vmatprep.mubr.f32.mxu0 0.0
          %3741 = vmatmul.mubr.f32.gmra.mxu0 %v3613
          %v3742 = vpop.f32.mrf.mxu0
          %v3743 = vadd.f32 0.0, %v3742
          %v3744 = vpop.f32.mrf.mxu0
          %3745 = vmatprep.mubr.f32.mxu0 0.0
          %3746 = vmatmul.mubr.f32.gmra.mxu0 %v3616
          %v3747 = vpop.f32.mrf.mxu0
          %v3748 = vadd.f32 0.0, %v3747
          %v3749 = vpop.f32.mrf.mxu0
          %3750 = vmatprep.mubr.f32.mxu0 0.0
          %3751 = vmatmul.mubr.f32.gmra.mxu0 %v3619
          %v3752 = vpop.f32.mrf.mxu0
          %v3753 = vadd.f32 0.0, %v3752
          %v3754 = vpop.f32.mrf.mxu0
          %3755 = vmatprep.mubr.f32.mxu0 0.0
          %3756 = vmatmul.mubr.f32.gmra.mxu0 %v3622
          %v3757 = vpop.f32.mrf.mxu0
          %v3758 = vadd.f32 0.0, %v3757
          %v3759 = vpop.f32.mrf.mxu0
          %3760 = vmatprep.mubr.f32.mxu0 0.0
          %3761 = vmatmul.mubr.f32.gmra.mxu0 %v3625
          %v3762 = vpop.f32.mrf.mxu0
          %v3763 = vadd.f32 0.0, %v3762
          %v3764 = vpop.f32.mrf.mxu0
          %3765 = vmatprep.mubr.f32.mxu0 0.0
          %3766 = vmatmul.mubr.f32.gmra.mxu0 %v3628
          %v3767 = vpop.f32.mrf.mxu0
          %v3768 = vadd.f32 0.0, %v3767
          %v3769 = vpop.f32.mrf.mxu0
          %3770 = vmatprep.mubr.f32.mxu0 0.0
          %3771 = vmatmul.mubr.f32.gmra.mxu0 %v3631
          %v3772 = vpop.f32.mrf.mxu0
          %v3773 = vadd.f32 0.0, %v3772
          %v3774 = vpop.f32.mrf.mxu0
          %3775 = vmatprep.mubr.f32.mxu0 0.0
          %3776 = vmatmul.mubr.f32.gmra.mxu0 %v3634
          %v3777 = vpop.f32.mrf.mxu0
          %v3778 = vadd.f32 0.0, %v3777
          %v3779 = vpop.f32.mrf.mxu0
          %3780 = vdwg.mxu0
          %v3782 = vsel %vm3506, %v3472, 0
          %v3785 = vsel %vm3506, %v3473, 0
          %v3788 = vsel %vm3506, %v3474, 0
          %v3791 = vsel %vm3506, %v3475, 0
          %v3794 = vsel %vm3506, %v3476, 0
          %v3797 = vsel %vm3506, %v3477, 0
          %v3800 = vsel %vm3506, %v3478, 0
          %v3803 = vsel %vm3506, %v3479, 0
          %v3806 = vsel %vm3506, %v3480, 0
          %v3809 = vsel %vm3506, %v3481, 0
          %v3812 = vsel %vm3506, %v3482, 0
          %v3815 = vsel %vm3506, %v3483, 0
          %v3818 = vsel %vm3506, %v3484, 0
          %v3821 = vsel %vm3506, %v3485, 0
          %v3824 = vsel %vm3506, %v3486, 0
          %v3827 = vsel %vm3506, %v3487, 0
          %v3830 = vsel %vm3506, %v3488, 0
          %v3833 = vsel %vm3506, %v3489, 0
          %v3836 = vsel %vm3506, %v3490, 0
          %v3839 = vsel %vm3506, %v3491, 0
          %v3842 = vsel %vm3506, %v3492, 0
          %v3845 = vsel %vm3506, %v3493, 0
          %v3848 = vsel %vm3506, %v3494, 0
          %v3851 = vsel %vm3506, %v3495, 0
          %v3854 = vsel %vm3506, %v3496, 0
          %v3857 = vsel %vm3506, %v3497, 0
          %v3860 = vsel %vm3506, %v3498, 0
          %v3863 = vsel %vm3506, %v3499, 0
          %v3866 = vsel %vm3506, %v3500, 0
          %v3869 = vsel %vm3506, %v3501, 0
          %v3872 = vsel %vm3506, %v3502, 0
          %v3875 = vsel %vm3506, %v3503, 0
          %3877 = vmatprep.subr.mxu0 0.0
          %3878 = vmatpush1.msra.mxu0 0.0
          %3879 = vmatprep.subr.mxu0 0.0
          %3880 = vmatpush1.msra.mxu0 0.0
          %3881 = vmatprep.subr.mxu0 0.0
          %3882 = vmatpush1.msra.mxu0 0.0
          %3883 = vmatprep.subr.mxu0 0.0
          %3884 = vmatpush1.msra.mxu0 0.0
          %3885 = vmatprep.subr.mxu0 0.0
          %3886 = vmatpush1.msra.mxu0 0.0
          %3887 = vmatprep.subr.mxu0 0.0
          %3888 = vmatpush1.msra.mxu0 0.0
          %3889 = vmatprep.subr.mxu0 0.0
          %3890 = vmatpush1.msra.mxu0 0.0
          %3891 = vmatprep.subr.mxu0 0.0
          %3892 = vmatpush1.msra.mxu0 0.0
          %3893 = vmatprep.subr.mxu0 0.0
          %3894 = vmatpush1.msra.mxu0 0.0
          %3895 = vmatprep.subr.mxu0 0.0
          %3896 = vmatpush1.msra.mxu0 0.0
          %3897 = vmatprep.subr.mxu0 0.0
          %3898 = vmatpush1.msra.mxu0 0.0
          %3899 = vmatprep.subr.mxu0 0.0
          %3900 = vmatpush1.msra.mxu0 0.0
          %3901 = vmatprep.subr.mxu0 0.0
          %3902 = vmatpush1.msra.mxu0 %v3341
          %3903 = vmatprep.subr.mxu0 0.0
          %3904 = vmatpush1.msra.mxu0 %v3340
          %3905 = vmatprep.subr.mxu0 0.0
          %3906 = vmatpush1.msra.mxu0 %v3339
          %3907 = vmatprep.subr.mxu0 0.0
          %3908 = vmatpush1.msra.mxu0 %v3338
          %3909 = vmatprep.subr.mxu0 0.0
          %3910 = vmatpush2.msra.mxu0 0.0
          %3911 = vmatprep.subr.mxu0 0.0
          %3912 = vmatpush2.msra.mxu0 0.0
          %3913 = vmatprep.subr.mxu0 0.0
          %3914 = vmatpush2.msra.mxu0 0.0
          %3915 = vmatprep.subr.mxu0 0.0
          %3916 = vmatpush2.msra.mxu0 0.0
          %3917 = vmatprep.subr.mxu0 0.0
          %3918 = vmatpush2.msra.mxu0 0.0
          %3919 = vmatprep.subr.mxu0 0.0
          %3920 = vmatpush2.msra.mxu0 0.0
          %3921 = vmatprep.subr.mxu0 0.0
          %3922 = vmatpush2.msra.mxu0 0.0
          %3923 = vmatprep.subr.mxu0 0.0
          %3924 = vmatpush2.msra.mxu0 0.0
          %3925 = vmatprep.subr.mxu0 0.0
          %3926 = vmatpush2.msra.mxu0 0.0
          %3927 = vmatprep.subr.mxu0 0.0
          %3928 = vmatpush2.msra.mxu0 0.0
          %3929 = vmatprep.subr.mxu0 0.0
          %3930 = vmatpush2.msra.mxu0 0.0
          %3931 = vmatprep.subr.mxu0 0.0
          %3932 = vmatpush2.msra.mxu0 0.0
          %3933 = vmatprep.subr.mxu0 0.0
          %3934 = vmatpush2.msra.mxu0 0.0
          %3935 = vmatprep.subr.mxu0 0.0
          %3936 = vmatpush2.msra.mxu0 0.0
          %3937 = vmatprep.subr.mxu0 0.0
          %3938 = vmatpush2.msra.mxu0 0.0
          %3939 = vmatprep.subr.mxu0 0.0
          %3940 = vmatpush2.msra.mxu0 0.0
          %3941 = vmatprep.mubr.f32.mxu0 0.0
          %3942 = vmatmul.mubr.f32.gmra.mxu0 %v3782
          %v3943 = vpop.f32.mrf.mxu0
          %v3944 = vadd.f32 0.0, %v3943
          %v3945 = vpop.f32.mrf.mxu0
          %3946 = vmatprep.mubr.f32.mxu0 0.0
          %3947 = vmatmul.mubr.f32.gmra.mxu0 %v3785
          %v3948 = vpop.f32.mrf.mxu0
          %v3949 = vadd.f32 0.0, %v3948
          %v3950 = vpop.f32.mrf.mxu0
          %3951 = vmatprep.mubr.f32.mxu0 0.0
          %3952 = vmatmul.mubr.f32.gmra.mxu0 %v3788
          %v3953 = vpop.f32.mrf.mxu0
          %v3954 = vadd.f32 0.0, %v3953
          %v3955 = vpop.f32.mrf.mxu0
          %3956 = vmatprep.mubr.f32.mxu0 0.0
          %3957 = vmatmul.mubr.f32.gmra.mxu0 %v3791
          %v3958 = vpop.f32.mrf.mxu0
          %v3959 = vadd.f32 0.0, %v3958
          %v3960 = vpop.f32.mrf.mxu0
          %3961 = vmatprep.mubr.f32.mxu0 0.0
          %3962 = vmatmul.mubr.f32.gmra.mxu0 %v3794
          %v3963 = vpop.f32.mrf.mxu0
          %v3964 = vadd.f32 0.0, %v3963
          %v3965 = vpop.f32.mrf.mxu0
          %3966 = vmatprep.mubr.f32.mxu0 0.0
          %3967 = vmatmul.mubr.f32.gmra.mxu0 %v3797
          %v3968 = vpop.f32.mrf.mxu0
          %v3969 = vadd.f32 0.0, %v3968
          %v3970 = vpop.f32.mrf.mxu0
          %3971 = vmatprep.mubr.f32.mxu0 0.0
          %3972 = vmatmul.mubr.f32.gmra.mxu0 %v3800
          %v3973 = vpop.f32.mrf.mxu0
          %v3974 = vadd.f32 0.0, %v3973
          %v3975 = vpop.f32.mrf.mxu0
          %3976 = vmatprep.mubr.f32.mxu0 0.0
          %3977 = vmatmul.mubr.f32.gmra.mxu0 %v3803
          %v3978 = vpop.f32.mrf.mxu0
          %v3979 = vadd.f32 0.0, %v3978
          %v3980 = vpop.f32.mrf.mxu0
          %3981 = vmatprep.mubr.f32.mxu0 0.0
          %3982 = vmatmul.mubr.f32.gmra.mxu0 %v3806
          %v3983 = vpop.f32.mrf.mxu0
          %v3984 = vadd.f32 0.0, %v3983
          %v3985 = vpop.f32.mrf.mxu0
          %3986 = vmatprep.mubr.f32.mxu0 0.0
          %3987 = vmatmul.mubr.f32.gmra.mxu0 %v3809
          %v3988 = vpop.f32.mrf.mxu0
          %v3989 = vadd.f32 0.0, %v3988
          %v3990 = vpop.f32.mrf.mxu0
          %3991 = vmatprep.mubr.f32.mxu0 0.0
          %3992 = vmatmul.mubr.f32.gmra.mxu0 %v3812
          %v3993 = vpop.f32.mrf.mxu0
          %v3994 = vadd.f32 0.0, %v3993
          %v3995 = vpop.f32.mrf.mxu0
          %3996 = vmatprep.mubr.f32.mxu0 0.0
          %3997 = vmatmul.mubr.f32.gmra.mxu0 %v3815
          %v3998 = vpop.f32.mrf.mxu0
          %v3999 = vadd.f32 0.0, %v3998
          %v4000 = vpop.f32.mrf.mxu0
          %4001 = vmatprep.mubr.f32.mxu0 0.0
          %4002 = vmatmul.mubr.f32.gmra.mxu0 %v3818
          %v4003 = vpop.f32.mrf.mxu0
          %v4004 = vadd.f32 0.0, %v4003
          %v4005 = vpop.f32.mrf.mxu0
          %4006 = vmatprep.mubr.f32.mxu0 0.0
          %4007 = vmatmul.mubr.f32.gmra.mxu0 %v3821
          %v4008 = vpop.f32.mrf.mxu0
          %v4009 = vadd.f32 0.0, %v4008
          %v4010 = vpop.f32.mrf.mxu0
          %4011 = vmatprep.mubr.f32.mxu0 0.0
          %4012 = vmatmul.mubr.f32.gmra.mxu0 %v3824
          %v4013 = vpop.f32.mrf.mxu0
          %v4014 = vadd.f32 0.0, %v4013
          %v4015 = vpop.f32.mrf.mxu0
          %4016 = vmatprep.mubr.f32.mxu0 0.0
          %4017 = vmatmul.mubr.f32.gmra.mxu0 %v3827
          %v4018 = vpop.f32.mrf.mxu0
          %v4019 = vadd.f32 0.0, %v4018
          %v4020 = vpop.f32.mrf.mxu0
          %4021 = vmatprep.mubr.f32.mxu0 0.0
          %4022 = vmatmul.mubr.f32.gmra.mxu0 %v3830
          %v4023 = vpop.f32.mrf.mxu0
          %v4024 = vadd.f32 0.0, %v4023
          %v4025 = vpop.f32.mrf.mxu0
          %4026 = vmatprep.mubr.f32.mxu0 0.0
          %4027 = vmatmul.mubr.f32.gmra.mxu0 %v3833
          %v4028 = vpop.f32.mrf.mxu0
          %v4029 = vadd.f32 0.0, %v4028
          %v4030 = vpop.f32.mrf.mxu0
          %4031 = vmatprep.mubr.f32.mxu0 0.0
          %4032 = vmatmul.mubr.f32.gmra.mxu0 %v3836
          %v4033 = vpop.f32.mrf.mxu0
          %v4034 = vadd.f32 0.0, %v4033
          %v4035 = vpop.f32.mrf.mxu0
          %4036 = vmatprep.mubr.f32.mxu0 0.0
          %4037 = vmatmul.mubr.f32.gmra.mxu0 %v3839
          %v4038 = vpop.f32.mrf.mxu0
          %v4039 = vadd.f32 0.0, %v4038
          %v4040 = vpop.f32.mrf.mxu0
          %4041 = vmatprep.mubr.f32.mxu0 0.0
          %4042 = vmatmul.mubr.f32.gmra.mxu0 %v3842
          %v4043 = vpop.f32.mrf.mxu0
          %v4044 = vadd.f32 0.0, %v4043
          %v4045 = vpop.f32.mrf.mxu0
          %4046 = vmatprep.mubr.f32.mxu0 0.0
          %4047 = vmatmul.mubr.f32.gmra.mxu0 %v3845
          %v4048 = vpop.f32.mrf.mxu0
          %v4049 = vadd.f32 0.0, %v4048
          %v4050 = vpop.f32.mrf.mxu0
          %4051 = vmatprep.mubr.f32.mxu0 0.0
          %4052 = vmatmul.mubr.f32.gmra.mxu0 %v3848
          %v4053 = vpop.f32.mrf.mxu0
          %v4054 = vadd.f32 0.0, %v4053
          %v4055 = vpop.f32.mrf.mxu0
          %4056 = vmatprep.mubr.f32.mxu0 0.0
          %4057 = vmatmul.mubr.f32.gmra.mxu0 %v3851
          %v4058 = vpop.f32.mrf.mxu0
          %v4059 = vadd.f32 0.0, %v4058
          %v4060 = vpop.f32.mrf.mxu0
          %4061 = vmatprep.mubr.f32.mxu0 0.0
          %4062 = vmatmul.mubr.f32.gmra.mxu0 %v3854
          %v4063 = vpop.f32.mrf.mxu0
          %v4064 = vadd.f32 0.0, %v4063
          %v4065 = vpop.f32.mrf.mxu0
          %4066 = vmatprep.mubr.f32.mxu0 0.0
          %4067 = vmatmul.mubr.f32.gmra.mxu0 %v3857
          %v4068 = vpop.f32.mrf.mxu0
          %v4069 = vadd.f32 0.0, %v4068
          %v4070 = vpop.f32.mrf.mxu0
          %4071 = vmatprep.mubr.f32.mxu0 0.0
          %4072 = vmatmul.mubr.f32.gmra.mxu0 %v3860
          %v4073 = vpop.f32.mrf.mxu0
          %v4074 = vadd.f32 0.0, %v4073
          %v4075 = vpop.f32.mrf.mxu0
          %4076 = vmatprep.mubr.f32.mxu0 0.0
          %4077 = vmatmul.mubr.f32.gmra.mxu0 %v3863
          %v4078 = vpop.f32.mrf.mxu0
          %v4079 = vadd.f32 0.0, %v4078
          %v4080 = vpop.f32.mrf.mxu0
          %4081 = vmatprep.mubr.f32.mxu0 0.0
          %4082 = vmatmul.mubr.f32.gmra.mxu0 %v3866
          %v4083 = vpop.f32.mrf.mxu0
          %v4084 = vadd.f32 0.0, %v4083
          %v4085 = vpop.f32.mrf.mxu0
          %4086 = vmatprep.mubr.f32.mxu0 0.0
          %4087 = vmatmul.mubr.f32.gmra.mxu0 %v3869
          %v4088 = vpop.f32.mrf.mxu0
          %v4089 = vadd.f32 0.0, %v4088
          %v4090 = vpop.f32.mrf.mxu0
          %4091 = vmatprep.mubr.f32.mxu0 0.0
          %4092 = vmatmul.mubr.f32.gmra.mxu0 %v3872
          %v4093 = vpop.f32.mrf.mxu0
          %v4094 = vadd.f32 0.0, %v4093
          %v4095 = vpop.f32.mrf.mxu0
          %4096 = vmatprep.mubr.f32.mxu0 0.0
          %4097 = vmatmul.mubr.f32.gmra.mxu0 %v3875
          %v4098 = vpop.f32.mrf.mxu0
          %v4099 = vadd.f32 0.0, %v4098
          %v4100 = vpop.f32.mrf.mxu0
          %4101 = vdwg.mxu0
          %v4118 = vrot.slane %v3703, 1
          %v4119 = vrot.slane %v3708, 1
          %v4120 = vrot.slane %v3713, 1
          %v4121 = vrot.slane %v3718, 1
          %v4122 = vrot.slane %v3723, 1
          %v4123 = vrot.slane %v3728, 1
          %v4124 = vrot.slane %v3733, 1
          %v4125 = vrot.slane %v3738, 1
          %v4126 = vrot.slane %v3743, 1
          %v4127 = vrot.slane %v3748, 1
          %v4128 = vrot.slane %v3753, 1
          %v4129 = vrot.slane %v3758, 1
          %v4130 = vrot.slane %v3763, 1
          %v4131 = vrot.slane %v3768, 1
          %v4132 = vrot.slane %v3773, 1
          %v4133 = vrot.slane %v3778, 1
          %4134 = vrot.lane.b32.xlu0 %v4118, 32
          %v4135 = vpop.permute.xlu0 %4134
          %4136 = vrot.lane.b32.xlu0 %v4119, 32
          %v4137 = vpop.permute.xlu0 %4136
          %4138 = vrot.lane.b32.xlu0 %v4120, 32
          %v4139 = vpop.permute.xlu0 %4138
          %4140 = vrot.lane.b32.xlu0 %v4121, 32
          %v4141 = vpop.permute.xlu0 %4140
          %4142 = vrot.lane.b32.xlu0 %v4122, 32
          %v4143 = vpop.permute.xlu0 %4142
          %4144 = vrot.lane.b32.xlu0 %v4123, 32
          %v4145 = vpop.permute.xlu0 %4144
          %4146 = vrot.lane.b32.xlu0 %v4124, 32
          %v4147 = vpop.permute.xlu0 %4146
          %4148 = vrot.lane.b32.xlu0 %v4125, 32
          %v4149 = vpop.permute.xlu0 %4148
          %4150 = vrot.lane.b32.xlu0 %v4126, 32
          %v4151 = vpop.permute.xlu0 %4150
          %4152 = vrot.lane.b32.xlu0 %v4127, 32
          %v4153 = vpop.permute.xlu0 %4152
          %4154 = vrot.lane.b32.xlu0 %v4128, 32
          %v4155 = vpop.permute.xlu0 %4154
          %4156 = vrot.lane.b32.xlu0 %v4129, 32
          %v4157 = vpop.permute.xlu0 %4156
          %4158 = vrot.lane.b32.xlu0 %v4130, 32
          %v4159 = vpop.permute.xlu0 %4158
          %4160 = vrot.lane.b32.xlu0 %v4131, 32
          %v4161 = vpop.permute.xlu0 %4160
          %4162 = vrot.lane.b32.xlu0 %v4132, 32
          %v4163 = vpop.permute.xlu0 %4162
          %4164 = vrot.lane.b32.xlu0 %v4133, 32
          %v4165 = vpop.permute.xlu0 %4164
          %v4182 = vrot.slane %v3703, 2
          %v4183 = vrot.slane %v3708, 2
          %v4184 = vrot.slane %v3713, 2
          %v4185 = vrot.slane %v3718, 2
          %v4186 = vrot.slane %v3723, 2
          %v4187 = vrot.slane %v3728, 2
          %v4188 = vrot.slane %v3733, 2
          %v4189 = vrot.slane %v3738, 2
          %v4190 = vrot.slane %v3743, 2
          %v4191 = vrot.slane %v3748, 2
          %v4192 = vrot.slane %v3753, 2
          %v4193 = vrot.slane %v3758, 2
          %v4194 = vrot.slane %v3763, 2
          %v4195 = vrot.slane %v3768, 2
          %v4196 = vrot.slane %v3773, 2
          %v4197 = vrot.slane %v3778, 2
          %4198 = vrot.lane.b32.xlu0 %v4182, 64
          %v4199 = vpop.permute.xlu0 %4198
          %4200 = vrot.lane.b32.xlu0 %v4183, 64
          %v4201 = vpop.permute.xlu0 %4200
          %4202 = vrot.lane.b32.xlu0 %v4184, 64
          %v4203 = vpop.permute.xlu0 %4202
          %4204 = vrot.lane.b32.xlu0 %v4185, 64
          %v4205 = vpop.permute.xlu0 %4204
          %4206 = vrot.lane.b32.xlu0 %v4186, 64
          %v4207 = vpop.permute.xlu0 %4206
          %4208 = vrot.lane.b32.xlu0 %v4187, 64
          %v4209 = vpop.permute.xlu0 %4208
          %4210 = vrot.lane.b32.xlu0 %v4188, 64
          %v4211 = vpop.permute.xlu0 %4210
          %4212 = vrot.lane.b32.xlu0 %v4189, 64
          %v4213 = vpop.permute.xlu0 %4212
          %4214 = vrot.lane.b32.xlu0 %v4190, 64
          %v4215 = vpop.permute.xlu0 %4214
          %4216 = vrot.lane.b32.xlu0 %v4191, 64
          %v4217 = vpop.permute.xlu0 %4216
          %4218 = vrot.lane.b32.xlu0 %v4192, 64
          %v4219 = vpop.permute.xlu0 %4218
          %4220 = vrot.lane.b32.xlu0 %v4193, 64
          %v4221 = vpop.permute.xlu0 %4220
          %4222 = vrot.lane.b32.xlu0 %v4194, 64
          %v4223 = vpop.permute.xlu0 %4222
          %4224 = vrot.lane.b32.xlu0 %v4195, 64
          %v4225 = vpop.permute.xlu0 %4224
          %4226 = vrot.lane.b32.xlu0 %v4196, 64
          %v4227 = vpop.permute.xlu0 %4226
          %4228 = vrot.lane.b32.xlu0 %v4197, 64
          %v4229 = vpop.permute.xlu0 %4228
          %v4246 = vrot.slane %v3703, 3
          %v4247 = vrot.slane %v3708, 3
          %v4248 = vrot.slane %v3713, 3
          %v4249 = vrot.slane %v3718, 3
          %v4250 = vrot.slane %v3723, 3
          %v4251 = vrot.slane %v3728, 3
          %v4252 = vrot.slane %v3733, 3
          %v4253 = vrot.slane %v3738, 3
          %v4254 = vrot.slane %v3743, 3
          %v4255 = vrot.slane %v3748, 3
          %v4256 = vrot.slane %v3753, 3
          %v4257 = vrot.slane %v3758, 3
          %v4258 = vrot.slane %v3763, 3
          %v4259 = vrot.slane %v3768, 3
          %v4260 = vrot.slane %v3773, 3
          %v4261 = vrot.slane %v3778, 3
          %4262 = vrot.lane.b32.xlu0 %v4246, 96
          %v4263 = vpop.permute.xlu0 %4262
          %4264 = vrot.lane.b32.xlu0 %v4247, 96
          %v4265 = vpop.permute.xlu0 %4264
          %4266 = vrot.lane.b32.xlu0 %v4248, 96
          %v4267 = vpop.permute.xlu0 %4266
          %4268 = vrot.lane.b32.xlu0 %v4249, 96
          %v4269 = vpop.permute.xlu0 %4268
          %4270 = vrot.lane.b32.xlu0 %v4250, 96
          %v4271 = vpop.permute.xlu0 %4270
          %4272 = vrot.lane.b32.xlu0 %v4251, 96
          %v4273 = vpop.permute.xlu0 %4272
          %4274 = vrot.lane.b32.xlu0 %v4252, 96
          %v4275 = vpop.permute.xlu0 %4274
          %4276 = vrot.lane.b32.xlu0 %v4253, 96
          %v4277 = vpop.permute.xlu0 %4276
          %4278 = vrot.lane.b32.xlu0 %v4254, 96
          %v4279 = vpop.permute.xlu0 %4278
          %4280 = vrot.lane.b32.xlu0 %v4255, 96
          %v4281 = vpop.permute.xlu0 %4280
          %4282 = vrot.lane.b32.xlu0 %v4256, 96
          %v4283 = vpop.permute.xlu0 %4282
          %4284 = vrot.lane.b32.xlu0 %v4257, 96
          %v4285 = vpop.permute.xlu0 %4284
          %4286 = vrot.lane.b32.xlu0 %v4258, 96
          %v4287 = vpop.permute.xlu0 %4286
          %4288 = vrot.lane.b32.xlu0 %v4259, 96
          %v4289 = vpop.permute.xlu0 %4288
          %4290 = vrot.lane.b32.xlu0 %v4260, 96
          %v4291 = vpop.permute.xlu0 %4290
          %4292 = vrot.lane.b32.xlu0 %v4261, 96
          %v4293 = vpop.permute.xlu0 %4292
          %v4310 = vrot.slane %v3703, 4
          %v4311 = vrot.slane %v3708, 4
          %v4312 = vrot.slane %v3713, 4
          %v4313 = vrot.slane %v3718, 4
          %v4314 = vrot.slane %v3723, 4
          %v4315 = vrot.slane %v3728, 4
          %v4316 = vrot.slane %v3733, 4
          %v4317 = vrot.slane %v3738, 4
          %v4318 = vrot.slane %v3743, 4
          %v4319 = vrot.slane %v3748, 4
          %v4320 = vrot.slane %v3753, 4
          %v4321 = vrot.slane %v3758, 4
          %v4322 = vrot.slane %v3763, 4
          %v4323 = vrot.slane %v3768, 4
          %v4324 = vrot.slane %v3773, 4
          %v4325 = vrot.slane %v3778, 4
          %v4342 = vrot.slane %v3703, 5
          %v4343 = vrot.slane %v3708, 5
          %v4344 = vrot.slane %v3713, 5
          %v4345 = vrot.slane %v3718, 5
          %v4346 = vrot.slane %v3723, 5
          %v4347 = vrot.slane %v3728, 5
          %v4348 = vrot.slane %v3733, 5
          %v4349 = vrot.slane %v3738, 5
          %v4350 = vrot.slane %v3743, 5
          %v4351 = vrot.slane %v3748, 5
          %v4352 = vrot.slane %v3753, 5
          %v4353 = vrot.slane %v3758, 5
          %v4354 = vrot.slane %v3763, 5
          %v4355 = vrot.slane %v3768, 5
          %v4356 = vrot.slane %v3773, 5
          %v4357 = vrot.slane %v3778, 5
          %4358 = vrot.lane.b32.xlu0 %v4342, 32
          %v4359 = vpop.permute.xlu0 %4358
          %4360 = vrot.lane.b32.xlu0 %v4343, 32
          %v4361 = vpop.permute.xlu0 %4360
          %4362 = vrot.lane.b32.xlu0 %v4344, 32
          %v4363 = vpop.permute.xlu0 %4362
          %4364 = vrot.lane.b32.xlu0 %v4345, 32
          %v4365 = vpop.permute.xlu0 %4364
          %4366 = vrot.lane.b32.xlu0 %v4346, 32
          %v4367 = vpop.permute.xlu0 %4366
          %4368 = vrot.lane.b32.xlu0 %v4347, 32
          %v4369 = vpop.permute.xlu0 %4368
          %4370 = vrot.lane.b32.xlu0 %v4348, 32
          %v4371 = vpop.permute.xlu0 %4370
          %4372 = vrot.lane.b32.xlu0 %v4349, 32
          %v4373 = vpop.permute.xlu0 %4372
          %4374 = vrot.lane.b32.xlu0 %v4350, 32
          %v4375 = vpop.permute.xlu0 %4374
          %4376 = vrot.lane.b32.xlu0 %v4351, 32
          %v4377 = vpop.permute.xlu0 %4376
          %4378 = vrot.lane.b32.xlu0 %v4352, 32
          %v4379 = vpop.permute.xlu0 %4378
          %4380 = vrot.lane.b32.xlu0 %v4353, 32
          %v4381 = vpop.permute.xlu0 %4380
          %4382 = vrot.lane.b32.xlu0 %v4354, 32
          %v4383 = vpop.permute.xlu0 %4382
          %4384 = vrot.lane.b32.xlu0 %v4355, 32
          %v4385 = vpop.permute.xlu0 %4384
          %4386 = vrot.lane.b32.xlu0 %v4356, 32
          %v4387 = vpop.permute.xlu0 %4386
          %4388 = vrot.lane.b32.xlu0 %v4357, 32
          %v4389 = vpop.permute.xlu0 %4388
          %v4406 = vrot.slane %v3703, 6
          %v4407 = vrot.slane %v3708, 6
          %v4408 = vrot.slane %v3713, 6
          %v4409 = vrot.slane %v3718, 6
          %v4410 = vrot.slane %v3723, 6
          %v4411 = vrot.slane %v3728, 6
          %v4412 = vrot.slane %v3733, 6
          %v4413 = vrot.slane %v3738, 6
          %v4414 = vrot.slane %v3743, 6
          %v4415 = vrot.slane %v3748, 6
          %v4416 = vrot.slane %v3753, 6
          %v4417 = vrot.slane %v3758, 6
          %v4418 = vrot.slane %v3763, 6
          %v4419 = vrot.slane %v3768, 6
          %v4420 = vrot.slane %v3773, 6
          %v4421 = vrot.slane %v3778, 6
          %4422 = vrot.lane.b32.xlu0 %v4406, 64
          %v4423 = vpop.permute.xlu0 %4422
          %4424 = vrot.lane.b32.xlu0 %v4407, 64
          %v4425 = vpop.permute.xlu0 %4424
          %4426 = vrot.lane.b32.xlu0 %v4408, 64
          %v4427 = vpop.permute.xlu0 %4426
          %4428 = vrot.lane.b32.xlu0 %v4409, 64
          %v4429 = vpop.permute.xlu0 %4428
          %4430 = vrot.lane.b32.xlu0 %v4410, 64
          %v4431 = vpop.permute.xlu0 %4430
          %4432 = vrot.lane.b32.xlu0 %v4411, 64
          %v4433 = vpop.permute.xlu0 %4432
          %4434 = vrot.lane.b32.xlu0 %v4412, 64
          %v4435 = vpop.permute.xlu0 %4434
          %4436 = vrot.lane.b32.xlu0 %v4413, 64
          %v4437 = vpop.permute.xlu0 %4436
          %4438 = vrot.lane.b32.xlu0 %v4414, 64
          %v4439 = vpop.permute.xlu0 %4438
          %4440 = vrot.lane.b32.xlu0 %v4415, 64
          %v4441 = vpop.permute.xlu0 %4440
          %4442 = vrot.lane.b32.xlu0 %v4416, 64
          %v4443 = vpop.permute.xlu0 %4442
          %4444 = vrot.lane.b32.xlu0 %v4417, 64
          %v4445 = vpop.permute.xlu0 %4444
          %4446 = vrot.lane.b32.xlu0 %v4418, 64
          %v4447 = vpop.permute.xlu0 %4446
          %4448 = vrot.lane.b32.xlu0 %v4419, 64
          %v4449 = vpop.permute.xlu0 %4448
          %4450 = vrot.lane.b32.xlu0 %v4420, 64
          %v4451 = vpop.permute.xlu0 %4450
          %4452 = vrot.lane.b32.xlu0 %v4421, 64
          %v4453 = vpop.permute.xlu0 %4452
          %v4470 = vrot.slane %v3703, 7
          %v4471 = vrot.slane %v3708, 7
          %v4472 = vrot.slane %v3713, 7
          %v4473 = vrot.slane %v3718, 7
          %v4474 = vrot.slane %v3723, 7
          %v4475 = vrot.slane %v3728, 7
          %v4476 = vrot.slane %v3733, 7
          %v4477 = vrot.slane %v3738, 7
          %v4478 = vrot.slane %v3743, 7
          %v4479 = vrot.slane %v3748, 7
          %v4480 = vrot.slane %v3753, 7
          %v4481 = vrot.slane %v3758, 7
          %v4482 = vrot.slane %v3763, 7
          %v4483 = vrot.slane %v3768, 7
          %v4484 = vrot.slane %v3773, 7
          %v4485 = vrot.slane %v3778, 7
          %4486 = vrot.lane.b32.xlu0 %v4470, 96
          %v4487 = vpop.permute.xlu0 %4486
          %4488 = vrot.lane.b32.xlu0 %v4471, 96
          %v4489 = vpop.permute.xlu0 %4488
          %4490 = vrot.lane.b32.xlu0 %v4472, 96
          %v4491 = vpop.permute.xlu0 %4490
          %4492 = vrot.lane.b32.xlu0 %v4473, 96
          %v4493 = vpop.permute.xlu0 %4492
          %4494 = vrot.lane.b32.xlu0 %v4474, 96
          %v4495 = vpop.permute.xlu0 %4494
          %4496 = vrot.lane.b32.xlu0 %v4475, 96
          %v4497 = vpop.permute.xlu0 %4496
          %4498 = vrot.lane.b32.xlu0 %v4476, 96
          %v4499 = vpop.permute.xlu0 %4498
          %4500 = vrot.lane.b32.xlu0 %v4477, 96
          %v4501 = vpop.permute.xlu0 %4500
          %4502 = vrot.lane.b32.xlu0 %v4478, 96
          %v4503 = vpop.permute.xlu0 %4502
          %4504 = vrot.lane.b32.xlu0 %v4479, 96
          %v4505 = vpop.permute.xlu0 %4504
          %4506 = vrot.lane.b32.xlu0 %v4480, 96
          %v4507 = vpop.permute.xlu0 %4506
          %4508 = vrot.lane.b32.xlu0 %v4481, 96
          %v4509 = vpop.permute.xlu0 %4508
          %4510 = vrot.lane.b32.xlu0 %v4482, 96
          %v4511 = vpop.permute.xlu0 %4510
          %4512 = vrot.lane.b32.xlu0 %v4483, 96
          %v4513 = vpop.permute.xlu0 %4512
          %4514 = vrot.lane.b32.xlu0 %v4484, 96
          %v4515 = vpop.permute.xlu0 %4514
          %4516 = vrot.lane.b32.xlu0 %v4485, 96
          %v4517 = vpop.permute.xlu0 %4516
          %v4534 = vsel %vm3506, %v3703, %v4135
          %v4535 = vsel %vm3506, %v3708, %v4137
          %v4536 = vsel %vm3506, %v3713, %v4139
          %v4537 = vsel %vm3506, %v3718, %v4141
          %v4538 = vsel %vm3506, %v3723, %v4143
          %v4539 = vsel %vm3506, %v3728, %v4145
          %v4540 = vsel %vm3506, %v3733, %v4147
          %v4541 = vsel %vm3506, %v3738, %v4149
          %v4542 = vsel %vm3506, %v3743, %v4151
          %v4543 = vsel %vm3506, %v3748, %v4153
          %v4544 = vsel %vm3506, %v3753, %v4155
          %v4545 = vsel %vm3506, %v3758, %v4157
          %v4546 = vsel %vm3506, %v3763, %v4159
          %v4547 = vsel %vm3506, %v3768, %v4161
          %v4548 = vsel %vm3506, %v3773, %v4163
          %v4549 = vsel %vm3506, %v3778, %v4165
          %vm4550 = vcmask 523264
          %v4551 = vsel %vm4550, %v4534, %v4199
          %v4552 = vsel %vm4550, %v4535, %v4201
          %v4553 = vsel %vm4550, %v4536, %v4203
          %v4554 = vsel %vm4550, %v4537, %v4205
          %v4555 = vsel %vm4550, %v4538, %v4207
          %v4556 = vsel %vm4550, %v4539, %v4209
          %v4557 = vsel %vm4550, %v4540, %v4211
          %v4558 = vsel %vm4550, %v4541, %v4213
          %v4559 = vsel %vm4550, %v4542, %v4215
          %v4560 = vsel %vm4550, %v4543, %v4217
          %v4561 = vsel %vm4550, %v4544, %v4219
          %v4562 = vsel %vm4550, %v4545, %v4221
          %v4563 = vsel %vm4550, %v4546, %v4223
          %v4564 = vsel %vm4550, %v4547, %v4225
          %v4565 = vsel %vm4550, %v4548, %v4227
          %v4566 = vsel %vm4550, %v4549, %v4229
          %vm4567 = vcmask 785408
          %v4568 = vsel %vm4567, %v4551, %v4263
          %v4569 = vsel %vm4567, %v4552, %v4265
          %v4570 = vsel %vm4567, %v4553, %v4267
          %v4571 = vsel %vm4567, %v4554, %v4269
          %v4572 = vsel %vm4567, %v4555, %v4271
          %v4573 = vsel %vm4567, %v4556, %v4273
          %v4574 = vsel %vm4567, %v4557, %v4275
          %v4575 = vsel %vm4567, %v4558, %v4277
          %v4576 = vsel %vm4567, %v4559, %v4279
          %v4577 = vsel %vm4567, %v4560, %v4281
          %v4578 = vsel %vm4567, %v4561, %v4283
          %v4579 = vsel %vm4567, %v4562, %v4285
          %v4580 = vsel %vm4567, %v4563, %v4287
          %v4581 = vsel %vm4567, %v4564, %v4289
          %v4582 = vsel %vm4567, %v4565, %v4291
          %v4583 = vsel %vm4567, %v4566, %v4293
          %v4584 = vsel %vm3506, %v4310, %v4359
          %v4585 = vsel %vm3506, %v4311, %v4361
          %v4586 = vsel %vm3506, %v4312, %v4363
          %v4587 = vsel %vm3506, %v4313, %v4365
          %v4588 = vsel %vm3506, %v4314, %v4367
          %v4589 = vsel %vm3506, %v4315, %v4369
          %v4590 = vsel %vm3506, %v4316, %v4371
          %v4591 = vsel %vm3506, %v4317, %v4373
          %v4592 = vsel %vm3506, %v4318, %v4375
          %v4593 = vsel %vm3506, %v4319, %v4377
          %v4594 = vsel %vm3506, %v4320, %v4379
          %v4595 = vsel %vm3506, %v4321, %v4381
          %v4596 = vsel %vm3506, %v4322, %v4383
          %v4597 = vsel %vm3506, %v4323, %v4385
          %v4598 = vsel %vm3506, %v4324, %v4387
          %v4599 = vsel %vm3506, %v4325, %v4389
          %v4600 = vsel %vm4550, %v4584, %v4423
          %v4601 = vsel %vm4550, %v4585, %v4425
          %v4602 = vsel %vm4550, %v4586, %v4427
          %v4603 = vsel %vm4550, %v4587, %v4429
          %v4604 = vsel %vm4550, %v4588, %v4431
          %v4605 = vsel %vm4550, %v4589, %v4433
          %v4606 = vsel %vm4550, %v4590, %v4435
          %v4607 = vsel %vm4550, %v4591, %v4437
          %v4608 = vsel %vm4550, %v4592, %v4439
          %v4609 = vsel %vm4550, %v4593, %v4441
          %v4610 = vsel %vm4550, %v4594, %v4443
          %v4611 = vsel %vm4550, %v4595, %v4445
          %v4612 = vsel %vm4550, %v4596, %v4447
          %v4613 = vsel %vm4550, %v4597, %v4449
          %v4614 = vsel %vm4550, %v4598, %v4451
          %v4615 = vsel %vm4550, %v4599, %v4453
          %v4616 = vsel %vm4567, %v4600, %v4487
          %v4617 = vsel %vm4567, %v4601, %v4489
          %v4618 = vsel %vm4567, %v4602, %v4491
          %v4619 = vsel %vm4567, %v4603, %v4493
          %v4620 = vsel %vm4567, %v4604, %v4495
          %v4621 = vsel %vm4567, %v4605, %v4497
          %v4622 = vsel %vm4567, %v4606, %v4499
          %v4623 = vsel %vm4567, %v4607, %v4501
          %v4624 = vsel %vm4567, %v4608, %v4503
          %v4625 = vsel %vm4567, %v4609, %v4505
          %v4626 = vsel %vm4567, %v4610, %v4507
          %v4627 = vsel %vm4567, %v4611, %v4509
          %v4628 = vsel %vm4567, %v4612, %v4511
          %v4629 = vsel %vm4567, %v4613, %v4513
          %v4630 = vsel %vm4567, %v4614, %v4515
          %v4631 = vsel %vm4567, %v4615, %v4517
          %v4632 = vlaneseq
          %v4633 = vshrl.u32 %v4632, 7
          %v4634 = vsub.s32 0, %v4633
          %v4635 = vrot.slane %v4568, %v4634
          %v4636 = vlaneseq
          %v4637 = vshrl.u32 %v4636, 7
          %v4638 = vsub.s32 0, %v4637
          %v4639 = vrot.slane %v4616, %v4638
          %v4640 = vlaneseq
          %v4641 = vshrl.u32 %v4640, 7
          %v4642 = vsub.s32 0, %v4641
          %v4643 = vrot.slane %v4569, %v4642
          %v4644 = vlaneseq
          %v4645 = vshrl.u32 %v4644, 7
          %v4646 = vsub.s32 0, %v4645
          %v4647 = vrot.slane %v4617, %v4646
          %v4648 = vlaneseq
          %v4649 = vshrl.u32 %v4648, 7
          %v4650 = vsub.s32 0, %v4649
          %v4651 = vrot.slane %v4570, %v4650
          %v4652 = vlaneseq
          %v4653 = vshrl.u32 %v4652, 7
          %v4654 = vsub.s32 0, %v4653
          %v4655 = vrot.slane %v4618, %v4654
          %v4656 = vlaneseq
          %v4657 = vshrl.u32 %v4656, 7
          %v4658 = vsub.s32 0, %v4657
          %v4659 = vrot.slane %v4571, %v4658
          %v4660 = vlaneseq
          %v4661 = vshrl.u32 %v4660, 7
          %v4662 = vsub.s32 0, %v4661
          %v4663 = vrot.slane %v4619, %v4662
          %v4664 = vlaneseq
          %v4665 = vshrl.u32 %v4664, 7
          %v4666 = vsub.s32 0, %v4665
          %v4667 = vrot.slane %v4572, %v4666
          %v4668 = vlaneseq
          %v4669 = vshrl.u32 %v4668, 7
          %v4670 = vsub.s32 0, %v4669
          %v4671 = vrot.slane %v4620, %v4670
          %v4672 = vlaneseq
          %v4673 = vshrl.u32 %v4672, 7
          %v4674 = vsub.s32 0, %v4673
          %v4675 = vrot.slane %v4573, %v4674
          %v4676 = vlaneseq
          %v4677 = vshrl.u32 %v4676, 7
          %v4678 = vsub.s32 0, %v4677
          %v4679 = vrot.slane %v4621, %v4678
          %v4680 = vlaneseq
          %v4681 = vshrl.u32 %v4680, 7
          %v4682 = vsub.s32 0, %v4681
          %v4683 = vrot.slane %v4574, %v4682
          %v4684 = vlaneseq
          %v4685 = vshrl.u32 %v4684, 7
          %v4686 = vsub.s32 0, %v4685
          %v4687 = vrot.slane %v4622, %v4686
          %v4688 = vlaneseq
          %v4689 = vshrl.u32 %v4688, 7
          %v4690 = vsub.s32 0, %v4689
          %v4691 = vrot.slane %v4575, %v4690
          %v4692 = vlaneseq
          %v4693 = vshrl.u32 %v4692, 7
          %v4694 = vsub.s32 0, %v4693
          %v4695 = vrot.slane %v4623, %v4694
          %v4696 = vlaneseq
          %v4697 = vshrl.u32 %v4696, 7
          %v4698 = vsub.s32 0, %v4697
          %v4699 = vrot.slane %v4576, %v4698
          %v4700 = vlaneseq
          %v4701 = vshrl.u32 %v4700, 7
          %v4702 = vsub.s32 0, %v4701
          %v4703 = vrot.slane %v4624, %v4702
          %v4704 = vlaneseq
          %v4705 = vshrl.u32 %v4704, 7
          %v4706 = vsub.s32 0, %v4705
          %v4707 = vrot.slane %v4577, %v4706
          %v4708 = vlaneseq
          %v4709 = vshrl.u32 %v4708, 7
          %v4710 = vsub.s32 0, %v4709
          %v4711 = vrot.slane %v4625, %v4710
          %v4712 = vlaneseq
          %v4713 = vshrl.u32 %v4712, 7
          %v4714 = vsub.s32 0, %v4713
          %v4715 = vrot.slane %v4578, %v4714
          %v4716 = vlaneseq
          %v4717 = vshrl.u32 %v4716, 7
          %v4718 = vsub.s32 0, %v4717
          %v4719 = vrot.slane %v4626, %v4718
          %v4720 = vlaneseq
          %v4721 = vshrl.u32 %v4720, 7
          %v4722 = vsub.s32 0, %v4721
          %v4723 = vrot.slane %v4579, %v4722
          %v4724 = vlaneseq
          %v4725 = vshrl.u32 %v4724, 7
          %v4726 = vsub.s32 0, %v4725
          %v4727 = vrot.slane %v4627, %v4726
          %v4728 = vlaneseq
          %v4729 = vshrl.u32 %v4728, 7
          %v4730 = vsub.s32 0, %v4729
          %v4731 = vrot.slane %v4580, %v4730
          %v4732 = vlaneseq
          %v4733 = vshrl.u32 %v4732, 7
          %v4734 = vsub.s32 0, %v4733
          %v4735 = vrot.slane %v4628, %v4734
          %v4736 = vlaneseq
          %v4737 = vshrl.u32 %v4736, 7
          %v4738 = vsub.s32 0, %v4737
          %v4739 = vrot.slane %v4581, %v4738
          %v4740 = vlaneseq
          %v4741 = vshrl.u32 %v4740, 7
          %v4742 = vsub.s32 0, %v4741
          %v4743 = vrot.slane %v4629, %v4742
          %v4744 = vlaneseq
          %v4745 = vshrl.u32 %v4744, 7
          %v4746 = vsub.s32 0, %v4745
          %v4747 = vrot.slane %v4582, %v4746
          %v4748 = vlaneseq
          %v4749 = vshrl.u32 %v4748, 7
          %v4750 = vsub.s32 0, %v4749
          %v4751 = vrot.slane %v4630, %v4750
          %v4752 = vlaneseq
          %v4753 = vshrl.u32 %v4752, 7
          %v4754 = vsub.s32 0, %v4753
          %v4755 = vrot.slane %v4583, %v4754
          %v4756 = vlaneseq
          %v4757 = vshrl.u32 %v4756, 7
          %v4758 = vsub.s32 0, %v4757
          %v4759 = vrot.slane %v4631, %v4758
          %v4760 = vadd.f32 %v2749, %v4635
          %v4761 = vadd.f32 %v2751, %v4639
          %v4762 = vadd.f32 %v2755, %v4635
          %v4763 = vadd.f32 %v2757, %v4639
          %v4764 = vadd.f32 %v2761, %v4643
          %v4765 = vadd.f32 %v2763, %v4647
          %v4766 = vadd.f32 %v2767, %v4643
          %v4767 = vadd.f32 %v2769, %v4647
          %v4768 = vadd.f32 %v2773, %v4651
          %v4769 = vadd.f32 %v2775, %v4655
          %v4770 = vadd.f32 %v2779, %v4651
          %v4771 = vadd.f32 %v2781, %v4655
          %v4772 = vadd.f32 %v2785, %v4659
          %v4773 = vadd.f32 %v2787, %v4663
          %v4774 = vadd.f32 %v2791, %v4659
          %v4775 = vadd.f32 %v2793, %v4663
          %v4776 = vadd.f32 %v2797, %v4667
          %v4777 = vadd.f32 %v2799, %v4671
          %v4778 = vadd.f32 %v2803, %v4667
          %v4779 = vadd.f32 %v2805, %v4671
          %v4780 = vadd.f32 %v2809, %v4675
          %v4781 = vadd.f32 %v2811, %v4679
          %v4782 = vadd.f32 %v2815, %v4675
          %v4783 = vadd.f32 %v2817, %v4679
          %v4784 = vadd.f32 %v2821, %v4683
          %v4785 = vadd.f32 %v2823, %v4687
          %v4786 = vadd.f32 %v2827, %v4683
          %v4787 = vadd.f32 %v2829, %v4687
          %v4788 = vadd.f32 %v2833, %v4691
          %v4789 = vadd.f32 %v2835, %v4695
          %v4790 = vadd.f32 %v2839, %v4691
          %v4791 = vadd.f32 %v2841, %v4695
          %v4792 = vadd.f32 %v2845, %v4699
          %v4793 = vadd.f32 %v2847, %v4703
          %v4794 = vadd.f32 %v2851, %v4699
          %v4795 = vadd.f32 %v2853, %v4703
          %v4796 = vadd.f32 %v2857, %v4707
          %v4797 = vadd.f32 %v2859, %v4711
          %v4798 = vadd.f32 %v2863, %v4707
          %v4799 = vadd.f32 %v2865, %v4711
          %v4800 = vadd.f32 %v2869, %v4715
          %v4801 = vadd.f32 %v2871, %v4719
          %v4802 = vadd.f32 %v2875, %v4715
          %v4803 = vadd.f32 %v2877, %v4719
          %v4804 = vadd.f32 %v2881, %v4723
          %v4805 = vadd.f32 %v2883, %v4727
          %v4806 = vadd.f32 %v2887, %v4723
          %v4807 = vadd.f32 %v2889, %v4727
          %v4808 = vadd.f32 %v2893, %v4731
          %v4809 = vadd.f32 %v2895, %v4735
          %v4810 = vadd.f32 %v2899, %v4731
          %v4811 = vadd.f32 %v2901, %v4735
          %v4812 = vadd.f32 %v2905, %v4739
          %v4813 = vadd.f32 %v2907, %v4743
          %v4814 = vadd.f32 %v2911, %v4739
          %v4815 = vadd.f32 %v2913, %v4743
          %v4816 = vadd.f32 %v2917, %v4747
          %v4817 = vadd.f32 %v2919, %v4751
          %v4818 = vadd.f32 %v2923, %v4747
          %v4819 = vadd.f32 %v2925, %v4751
          %v4820 = vadd.f32 %v2929, %v4755
          %v4821 = vadd.f32 %v2931, %v4759
          %v4822 = vadd.f32 %v2935, %v4755
          %v4823 = vadd.f32 %v2937, %v4759
          %v4824 = vmul.f32 %v4760, 0.1
          %v4825 = vmul.f32 %v4761, 0.1
          %v4826 = vmul.f32 %v4762, 0.1
          %v4827 = vmul.f32 %v4763, 0.1
          %v4828 = vmul.f32 %v4764, 0.1
          %v4829 = vmul.f32 %v4765, 0.1
          %v4830 = vmul.f32 %v4766, 0.1
          %v4831 = vmul.f32 %v4767, 0.1
          %v4832 = vmul.f32 %v4768, 0.1
          %v4833 = vmul.f32 %v4769, 0.1
          %v4834 = vmul.f32 %v4770, 0.1
          %v4835 = vmul.f32 %v4771, 0.1
          %v4836 = vmul.f32 %v4772, 0.1
          %v4837 = vmul.f32 %v4773, 0.1
          %v4838 = vmul.f32 %v4774, 0.1
          %v4839 = vmul.f32 %v4775, 0.1
          %v4840 = vmul.f32 %v4776, 0.1
          %v4841 = vmul.f32 %v4777, 0.1
          %v4842 = vmul.f32 %v4778, 0.1
          %v4843 = vmul.f32 %v4779, 0.1
          %v4844 = vmul.f32 %v4780, 0.1
          %v4845 = vmul.f32 %v4781, 0.1
          %v4846 = vmul.f32 %v4782, 0.1
          %v4847 = vmul.f32 %v4783, 0.1
          %v4848 = vmul.f32 %v4784, 0.1
          %v4849 = vmul.f32 %v4785, 0.1
          %v4850 = vmul.f32 %v4786, 0.1
          %v4851 = vmul.f32 %v4787, 0.1
          %v4852 = vmul.f32 %v4788, 0.1
          %v4853 = vmul.f32 %v4789, 0.1
          %v4854 = vmul.f32 %v4790, 0.1
          %v4855 = vmul.f32 %v4791, 0.1
          %v4856 = vmul.f32 %v4792, 0.1
          %v4857 = vmul.f32 %v4793, 0.1
          %v4858 = vmul.f32 %v4794, 0.1
          %v4859 = vmul.f32 %v4795, 0.1
          %v4860 = vmul.f32 %v4796, 0.1
          %v4861 = vmul.f32 %v4797, 0.1
          %v4862 = vmul.f32 %v4798, 0.1
          %v4863 = vmul.f32 %v4799, 0.1
          %v4864 = vmul.f32 %v4800, 0.1
          %v4865 = vmul.f32 %v4801, 0.1
          %v4866 = vmul.f32 %v4802, 0.1
          %v4867 = vmul.f32 %v4803, 0.1
          %v4868 = vmul.f32 %v4804, 0.1
          %v4869 = vmul.f32 %v4805, 0.1
          %v4870 = vmul.f32 %v4806, 0.1
          %v4871 = vmul.f32 %v4807, 0.1
          %v4872 = vmul.f32 %v4808, 0.1
          %v4873 = vmul.f32 %v4809, 0.1
          %v4874 = vmul.f32 %v4810, 0.1
          %v4875 = vmul.f32 %v4811, 0.1
          %v4876 = vmul.f32 %v4812, 0.1
          %v4877 = vmul.f32 %v4813, 0.1
          %v4878 = vmul.f32 %v4814, 0.1
          %v4879 = vmul.f32 %v4815, 0.1
          %v4880 = vmul.f32 %v4816, 0.1
          %v4881 = vmul.f32 %v4817, 0.1
          %v4882 = vmul.f32 %v4818, 0.1
          %v4883 = vmul.f32 %v4819, 0.1
          %v4884 = vmul.f32 %v4820, 0.1
          %v4885 = vmul.f32 %v4821, 0.1
          %v4886 = vmul.f32 %v4822, 0.1
          %v4887 = vmul.f32 %v4823, 0.1
          %v4888 = vmax.f32 %v4760, %v4824
          %v4889 = vmax.f32 %v4761, %v4825
          %v4890 = vmax.f32 %v4762, %v4826
          %v4891 = vmax.f32 %v4763, %v4827
          %v4892 = vmax.f32 %v4764, %v4828
          %v4893 = vmax.f32 %v4765, %v4829
          %v4894 = vmax.f32 %v4766, %v4830
          %v4895 = vmax.f32 %v4767, %v4831
          %v4896 = vmax.f32 %v4768, %v4832
          %v4897 = vmax.f32 %v4769, %v4833
          %v4898 = vmax.f32 %v4770, %v4834
          %v4899 = vmax.f32 %v4771, %v4835
          %v4900 = vmax.f32 %v4772, %v4836
          %v4901 = vmax.f32 %v4773, %v4837
          %v4902 = vmax.f32 %v4774, %v4838
          %v4903 = vmax.f32 %v4775, %v4839
          %v4904 = vmax.f32 %v4776, %v4840
          %v4905 = vmax.f32 %v4777, %v4841
          %v4906 = vmax.f32 %v4778, %v4842
          %v4907 = vmax.f32 %v4779, %v4843
          %v4908 = vmax.f32 %v4780, %v4844
          %v4909 = vmax.f32 %v4781, %v4845
          %v4910 = vmax.f32 %v4782, %v4846
          %v4911 = vmax.f32 %v4783, %v4847
          %v4912 = vmax.f32 %v4784, %v4848
          %v4913 = vmax.f32 %v4785, %v4849
          %v4914 = vmax.f32 %v4786, %v4850
          %v4915 = vmax.f32 %v4787, %v4851
          %v4916 = vmax.f32 %v4788, %v4852
          %v4917 = vmax.f32 %v4789, %v4853
          %v4918 = vmax.f32 %v4790, %v4854
          %v4919 = vmax.f32 %v4791, %v4855
          %v4920 = vmax.f32 %v4792, %v4856
          %v4921 = vmax.f32 %v4793, %v4857
          %v4922 = vmax.f32 %v4794, %v4858
          %v4923 = vmax.f32 %v4795, %v4859
          %v4924 = vmax.f32 %v4796, %v4860
          %v4925 = vmax.f32 %v4797, %v4861
          %v4926 = vmax.f32 %v4798, %v4862
          %v4927 = vmax.f32 %v4799, %v4863
          %v4928 = vmax.f32 %v4800, %v4864
          %v4929 = vmax.f32 %v4801, %v4865
          %v4930 = vmax.f32 %v4802, %v4866
          %v4931 = vmax.f32 %v4803, %v4867
          %v4932 = vmax.f32 %v4804, %v4868
          %v4933 = vmax.f32 %v4805, %v4869
          %v4934 = vmax.f32 %v4806, %v4870
          %v4935 = vmax.f32 %v4807, %v4871
          %v4936 = vmax.f32 %v4808, %v4872
          %v4937 = vmax.f32 %v4809, %v4873
          %v4938 = vmax.f32 %v4810, %v4874
          %v4939 = vmax.f32 %v4811, %v4875
          %v4940 = vmax.f32 %v4812, %v4876
          %v4941 = vmax.f32 %v4813, %v4877
          %v4942 = vmax.f32 %v4814, %v4878
          %v4943 = vmax.f32 %v4815, %v4879
          %v4944 = vmax.f32 %v4816, %v4880
          %v4945 = vmax.f32 %v4817, %v4881
          %v4946 = vmax.f32 %v4818, %v4882
          %v4947 = vmax.f32 %v4819, %v4883
          %v4948 = vmax.f32 %v4820, %v4884
          %v4949 = vmax.f32 %v4821, %v4885
          %v4950 = vmax.f32 %v4822, %v4886
          %v4951 = vmax.f32 %v4823, %v4887
          %v4952 = vmul.f32 %v1931, %v4888
          %v4953 = vmul.f32 %v1933, %v4889
          %v4954 = vmul.f32 %v1937, %v4890
          %v4955 = vmul.f32 %v1939, %v4891
          %v4956 = vmul.f32 %v1943, %v4892
          %v4957 = vmul.f32 %v1945, %v4893
          %v4958 = vmul.f32 %v1949, %v4894
          %v4959 = vmul.f32 %v1951, %v4895
          %v4960 = vmul.f32 %v1955, %v4896
          %v4961 = vmul.f32 %v1957, %v4897
          %v4962 = vmul.f32 %v1961, %v4898
          %v4963 = vmul.f32 %v1963, %v4899
          %v4964 = vmul.f32 %v1967, %v4900
          %v4965 = vmul.f32 %v1969, %v4901
          %v4966 = vmul.f32 %v1973, %v4902
          %v4967 = vmul.f32 %v1975, %v4903
          %v4968 = vmul.f32 %v1979, %v4904
          %v4969 = vmul.f32 %v1981, %v4905
          %v4970 = vmul.f32 %v1985, %v4906
          %v4971 = vmul.f32 %v1987, %v4907
          %v4972 = vmul.f32 %v1991, %v4908
          %v4973 = vmul.f32 %v1993, %v4909
          %v4974 = vmul.f32 %v1997, %v4910
          %v4975 = vmul.f32 %v1999, %v4911
          %v4976 = vmul.f32 %v2003, %v4912
          %v4977 = vmul.f32 %v2005, %v4913
          %v4978 = vmul.f32 %v2009, %v4914
          %v4979 = vmul.f32 %v2011, %v4915
          %v4980 = vmul.f32 %v2015, %v4916
          %v4981 = vmul.f32 %v2017, %v4917
          %v4982 = vmul.f32 %v2021, %v4918
          %v4983 = vmul.f32 %v2023, %v4919
          %v4984 = vmul.f32 %v2027, %v4920
          %v4985 = vmul.f32 %v2029, %v4921
          %v4986 = vmul.f32 %v2033, %v4922
          %v4987 = vmul.f32 %v2035, %v4923
          %v4988 = vmul.f32 %v2039, %v4924
          %v4989 = vmul.f32 %v2041, %v4925
          %v4990 = vmul.f32 %v2045, %v4926
          %v4991 = vmul.f32 %v2047, %v4927
          %v4992 = vmul.f32 %v2051, %v4928
          %v4993 = vmul.f32 %v2053, %v4929
          %v4994 = vmul.f32 %v2057, %v4930
          %v4995 = vmul.f32 %v2059, %v4931
          %v4996 = vmul.f32 %v2063, %v4932
          %v4997 = vmul.f32 %v2065, %v4933
          %v4998 = vmul.f32 %v2069, %v4934
          %v4999 = vmul.f32 %v2071, %v4935
          %v5000 = vmul.f32 %v2075, %v4936
          %v5001 = vmul.f32 %v2077, %v4937
          %v5002 = vmul.f32 %v2081, %v4938
          %v5003 = vmul.f32 %v2083, %v4939
          %v5004 = vmul.f32 %v2087, %v4940
          %v5005 = vmul.f32 %v2089, %v4941
          %v5006 = vmul.f32 %v2093, %v4942
          %v5007 = vmul.f32 %v2095, %v4943
          %v5008 = vmul.f32 %v2099, %v4944
          %v5009 = vmul.f32 %v2101, %v4945
          %v5010 = vmul.f32 %v2105, %v4946
          %v5011 = vmul.f32 %v2107, %v4947
          %v5012 = vmul.f32 %v2111, %v4948
          %v5013 = vmul.f32 %v2113, %v4949
          %v5014 = vmul.f32 %v2117, %v4950
          %v5015 = vmul.f32 %v2119, %v4951
          %5016 = vmatprep.subr.mxu0 0.0
          %5017 = vmatpush1.msra.mxu0 %v3369
          %5018 = vmatprep.subr.mxu0 0.0
          %5019 = vmatpush1.msra.mxu0 %v3368
          %5020 = vmatprep.subr.mxu0 0.0
          %5021 = vmatpush1.msra.mxu0 %v3367
          %5022 = vmatprep.subr.mxu0 0.0
          %5023 = vmatpush1.msra.mxu0 %v3366
          %5024 = vmatprep.subr.mxu0 0.0
          %5025 = vmatpush1.msra.mxu0 %v3365
          %5026 = vmatprep.subr.mxu0 0.0
          %5027 = vmatpush1.msra.mxu0 %v3364
          %5028 = vmatprep.subr.mxu0 0.0
          %5029 = vmatpush1.msra.mxu0 %v3363
          %5030 = vmatprep.subr.mxu0 0.0
          %5031 = vmatpush1.msra.mxu0 %v3362
          %5032 = vmatprep.subr.mxu0 0.0
          %5033 = vmatpush1.msra.mxu0 %v3361
          %5034 = vmatprep.subr.mxu0 0.0
          %5035 = vmatpush1.msra.mxu0 %v3360
          %5036 = vmatprep.subr.mxu0 0.0
          %5037 = vmatpush1.msra.mxu0 %v3359
          %5038 = vmatprep.subr.mxu0 0.0
          %5039 = vmatpush1.msra.mxu0 %v3358
          %5040 = vmatprep.subr.mxu0 0.0
          %5041 = vmatpush1.msra.mxu0 %v3357
          %5042 = vmatprep.subr.mxu0 0.0
          %5043 = vmatpush1.msra.mxu0 %v3356
          %5044 = vmatprep.subr.mxu0 0.0
          %5045 = vmatpush1.msra.mxu0 %v3355
          %5046 = vmatprep.subr.mxu0 0.0
          %5047 = vmatpush1.msra.mxu0 %v3354
          %5048 = vmatprep.subr.mxu0 0.0
          %5049 = vmatpush2.msra.mxu0 %v3385
          %5050 = vmatprep.subr.mxu0 0.0
          %5051 = vmatpush2.msra.mxu0 %v3384
          %5052 = vmatprep.subr.mxu0 0.0
          %5053 = vmatpush2.msra.mxu0 %v3383
          %5054 = vmatprep.subr.mxu0 0.0
          %5055 = vmatpush2.msra.mxu0 %v3382
          %5056 = vmatprep.subr.mxu0 0.0
          %5057 = vmatpush2.msra.mxu0 %v3381
          %5058 = vmatprep.subr.mxu0 0.0
          %5059 = vmatpush2.msra.mxu0 %v3380
          %5060 = vmatprep.subr.mxu0 0.0
          %5061 = vmatpush2.msra.mxu0 %v3379
          %5062 = vmatprep.subr.mxu0 0.0
          %5063 = vmatpush2.msra.mxu0 %v3378
          %5064 = vmatprep.subr.mxu0 0.0
          %5065 = vmatpush2.msra.mxu0 %v3377
          %5066 = vmatprep.subr.mxu0 0.0
          %5067 = vmatpush2.msra.mxu0 %v3376
          %5068 = vmatprep.subr.mxu0 0.0
          %5069 = vmatpush2.msra.mxu0 %v3375
          %5070 = vmatprep.subr.mxu0 0.0
          %5071 = vmatpush2.msra.mxu0 %v3374
          %5072 = vmatprep.subr.mxu0 0.0
          %5073 = vmatpush2.msra.mxu0 %v3373
          %5074 = vmatprep.subr.mxu0 0.0
          %5075 = vmatpush2.msra.mxu0 %v3372
          %5076 = vmatprep.subr.mxu0 0.0
          %5077 = vmatpush2.msra.mxu0 %v3371
          %5078 = vmatprep.subr.mxu0 0.0
          %5079 = vmatpush2.msra.mxu0 %v3370
          %5080 = vmatprep.mubr.f32.mxu0 %v4953
          %5081 = vmatmul.mubr.f32.gmra.mxu0 %v4952
          %v5082 = vpop.f32.mrf.mxu0
          %v5083 = vadd.f32 0.0, %v5082
          %v5084 = vpop.f32.mrf.mxu0
          %5085 = vmatprep.mubr.f32.mxu0 %v4955
          %5086 = vmatmul.mubr.f32.gmra.mxu0 %v4954
          %v5087 = vpop.f32.mrf.mxu0
          %v5088 = vadd.f32 0.0, %v5087
          %v5089 = vpop.f32.mrf.mxu0
          %5090 = vmatprep.mubr.f32.mxu0 %v4957
          %5091 = vmatmul.mubr.f32.gmra.mxu0 %v4956
          %v5092 = vpop.f32.mrf.mxu0
          %v5093 = vadd.f32 0.0, %v5092
          %v5094 = vpop.f32.mrf.mxu0
          %5095 = vmatprep.mubr.f32.mxu0 %v4959
          %5096 = vmatmul.mubr.f32.gmra.mxu0 %v4958
          %v5097 = vpop.f32.mrf.mxu0
          %v5098 = vadd.f32 0.0, %v5097
          %v5099 = vpop.f32.mrf.mxu0
          %5100 = vmatprep.mubr.f32.mxu0 %v4961
          %5101 = vmatmul.mubr.f32.gmra.mxu0 %v4960
          %v5102 = vpop.f32.mrf.mxu0
          %v5103 = vadd.f32 0.0, %v5102
          %v5104 = vpop.f32.mrf.mxu0
          %5105 = vmatprep.mubr.f32.mxu0 %v4963
          %5106 = vmatmul.mubr.f32.gmra.mxu0 %v4962
          %v5107 = vpop.f32.mrf.mxu0
          %v5108 = vadd.f32 0.0, %v5107
          %v5109 = vpop.f32.mrf.mxu0
          %5110 = vmatprep.mubr.f32.mxu0 %v4965
          %5111 = vmatmul.mubr.f32.gmra.mxu0 %v4964
          %v5112 = vpop.f32.mrf.mxu0
          %v5113 = vadd.f32 0.0, %v5112
          %v5114 = vpop.f32.mrf.mxu0
          %5115 = vmatprep.mubr.f32.mxu0 %v4967
          %5116 = vmatmul.mubr.f32.gmra.mxu0 %v4966
          %v5117 = vpop.f32.mrf.mxu0
          %v5118 = vadd.f32 0.0, %v5117
          %v5119 = vpop.f32.mrf.mxu0
          %5120 = vmatprep.mubr.f32.mxu0 %v4969
          %5121 = vmatmul.mubr.f32.gmra.mxu0 %v4968
          %v5122 = vpop.f32.mrf.mxu0
          %v5123 = vadd.f32 0.0, %v5122
          %v5124 = vpop.f32.mrf.mxu0
          %5125 = vmatprep.mubr.f32.mxu0 %v4971
          %5126 = vmatmul.mubr.f32.gmra.mxu0 %v4970
          %v5127 = vpop.f32.mrf.mxu0
          %v5128 = vadd.f32 0.0, %v5127
          %v5129 = vpop.f32.mrf.mxu0
          %5130 = vmatprep.mubr.f32.mxu0 %v4973
          %5131 = vmatmul.mubr.f32.gmra.mxu0 %v4972
          %v5132 = vpop.f32.mrf.mxu0
          %v5133 = vadd.f32 0.0, %v5132
          %v5134 = vpop.f32.mrf.mxu0
          %5135 = vmatprep.mubr.f32.mxu0 %v4975
          %5136 = vmatmul.mubr.f32.gmra.mxu0 %v4974
          %v5137 = vpop.f32.mrf.mxu0
          %v5138 = vadd.f32 0.0, %v5137
          %v5139 = vpop.f32.mrf.mxu0
          %5140 = vmatprep.mubr.f32.mxu0 %v4977
          %5141 = vmatmul.mubr.f32.gmra.mxu0 %v4976
          %v5142 = vpop.f32.mrf.mxu0
          %v5143 = vadd.f32 0.0, %v5142
          %v5144 = vpop.f32.mrf.mxu0
          %5145 = vmatprep.mubr.f32.mxu0 %v4979
          %5146 = vmatmul.mubr.f32.gmra.mxu0 %v4978
          %v5147 = vpop.f32.mrf.mxu0
          %v5148 = vadd.f32 0.0, %v5147
          %v5149 = vpop.f32.mrf.mxu0
          %5150 = vmatprep.mubr.f32.mxu0 %v4981
          %5151 = vmatmul.mubr.f32.gmra.mxu0 %v4980
          %v5152 = vpop.f32.mrf.mxu0
          %v5153 = vadd.f32 0.0, %v5152
          %v5154 = vpop.f32.mrf.mxu0
          %5155 = vmatprep.mubr.f32.mxu0 %v4983
          %5156 = vmatmul.mubr.f32.gmra.mxu0 %v4982
          %v5157 = vpop.f32.mrf.mxu0
          %v5158 = vadd.f32 0.0, %v5157
          %v5159 = vpop.f32.mrf.mxu0
          %5160 = vmatprep.mubr.f32.mxu0 %v4985
          %5161 = vmatmul.mubr.f32.gmra.mxu0 %v4984
          %v5162 = vpop.f32.mrf.mxu0
          %v5163 = vadd.f32 0.0, %v5162
          %v5164 = vpop.f32.mrf.mxu0
          %5165 = vmatprep.mubr.f32.mxu0 %v4987
          %5166 = vmatmul.mubr.f32.gmra.mxu0 %v4986
          %v5167 = vpop.f32.mrf.mxu0
          %v5168 = vadd.f32 0.0, %v5167
          %v5169 = vpop.f32.mrf.mxu0
          %5170 = vmatprep.mubr.f32.mxu0 %v4989
          %5171 = vmatmul.mubr.f32.gmra.mxu0 %v4988
          %v5172 = vpop.f32.mrf.mxu0
          %v5173 = vadd.f32 0.0, %v5172
          %v5174 = vpop.f32.mrf.mxu0
          %5175 = vmatprep.mubr.f32.mxu0 %v4991
          %5176 = vmatmul.mubr.f32.gmra.mxu0 %v4990
          %v5177 = vpop.f32.mrf.mxu0
          %v5178 = vadd.f32 0.0, %v5177
          %v5179 = vpop.f32.mrf.mxu0
          %5180 = vmatprep.mubr.f32.mxu0 %v4993
          %5181 = vmatmul.mubr.f32.gmra.mxu0 %v4992
          %v5182 = vpop.f32.mrf.mxu0
          %v5183 = vadd.f32 0.0, %v5182
          %v5184 = vpop.f32.mrf.mxu0
          %5185 = vmatprep.mubr.f32.mxu0 %v4995
          %5186 = vmatmul.mubr.f32.gmra.mxu0 %v4994
          %v5187 = vpop.f32.mrf.mxu0
          %v5188 = vadd.f32 0.0, %v5187
          %v5189 = vpop.f32.mrf.mxu0
          %5190 = vmatprep.mubr.f32.mxu0 %v4997
          %5191 = vmatmul.mubr.f32.gmra.mxu0 %v4996
          %v5192 = vpop.f32.mrf.mxu0
          %v5193 = vadd.f32 0.0, %v5192
          %v5194 = vpop.f32.mrf.mxu0
          %5195 = vmatprep.mubr.f32.mxu0 %v4999
          %5196 = vmatmul.mubr.f32.gmra.mxu0 %v4998
          %v5197 = vpop.f32.mrf.mxu0
          %v5198 = vadd.f32 0.0, %v5197
          %v5199 = vpop.f32.mrf.mxu0
          %5200 = vmatprep.mubr.f32.mxu0 %v5001
          %5201 = vmatmul.mubr.f32.gmra.mxu0 %v5000
          %v5202 = vpop.f32.mrf.mxu0
          %v5203 = vadd.f32 0.0, %v5202
          %v5204 = vpop.f32.mrf.mxu0
          %5205 = vmatprep.mubr.f32.mxu0 %v5003
          %5206 = vmatmul.mubr.f32.gmra.mxu0 %v5002
          %v5207 = vpop.f32.mrf.mxu0
          %v5208 = vadd.f32 0.0, %v5207
          %v5209 = vpop.f32.mrf.mxu0
          %5210 = vmatprep.mubr.f32.mxu0 %v5005
          %5211 = vmatmul.mubr.f32.gmra.mxu0 %v5004
          %v5212 = vpop.f32.mrf.mxu0
          %v5213 = vadd.f32 0.0, %v5212
          %v5214 = vpop.f32.mrf.mxu0
          %5215 = vmatprep.mubr.f32.mxu0 %v5007
          %5216 = vmatmul.mubr.f32.gmra.mxu0 %v5006
          %v5217 = vpop.f32.mrf.mxu0
          %v5218 = vadd.f32 0.0, %v5217
          %v5219 = vpop.f32.mrf.mxu0
          %5220 = vmatprep.mubr.f32.mxu0 %v5009
          %5221 = vmatmul.mubr.f32.gmra.mxu0 %v5008
          %v5222 = vpop.f32.mrf.mxu0
          %v5223 = vadd.f32 0.0, %v5222
          %v5224 = vpop.f32.mrf.mxu0
          %5225 = vmatprep.mubr.f32.mxu0 %v5011
          %5226 = vmatmul.mubr.f32.gmra.mxu0 %v5010
          %v5227 = vpop.f32.mrf.mxu0
          %v5228 = vadd.f32 0.0, %v5227
          %v5229 = vpop.f32.mrf.mxu0
          %5230 = vmatprep.mubr.f32.mxu0 %v5013
          %5231 = vmatmul.mubr.f32.gmra.mxu0 %v5012
          %v5232 = vpop.f32.mrf.mxu0
          %v5233 = vadd.f32 0.0, %v5232
          %v5234 = vpop.f32.mrf.mxu0
          %5235 = vmatprep.mubr.f32.mxu0 %v5015
          %5236 = vmatmul.mubr.f32.gmra.mxu0 %v5014
          %v5237 = vpop.f32.mrf.mxu0
          %v5238 = vadd.f32 0.0, %v5237
          %v5239 = vpop.f32.mrf.mxu0
          %5240 = vdwg.mxu0
          %v5257 = vrot.slane %v3944, 1
          %v5258 = vrot.slane %v3954, 1
          %v5259 = vrot.slane %v3964, 1
          %v5260 = vrot.slane %v3974, 1
          %v5261 = vrot.slane %v3984, 1
          %v5262 = vrot.slane %v3994, 1
          %v5263 = vrot.slane %v4004, 1
          %v5264 = vrot.slane %v4014, 1
          %v5265 = vrot.slane %v4024, 1
          %v5266 = vrot.slane %v4034, 1
          %v5267 = vrot.slane %v4044, 1
          %v5268 = vrot.slane %v4054, 1
          %v5269 = vrot.slane %v4064, 1
          %v5270 = vrot.slane %v4074, 1
          %v5271 = vrot.slane %v4084, 1
          %v5272 = vrot.slane %v4094, 1
          %5273 = vrot.lane.b32.xlu0 %v5257, 32
          %v5274 = vpop.permute.xlu0 %5273
          %5275 = vrot.lane.b32.xlu0 %v5258, 32
          %v5276 = vpop.permute.xlu0 %5275
          %5277 = vrot.lane.b32.xlu0 %v5259, 32
          %v5278 = vpop.permute.xlu0 %5277
          %5279 = vrot.lane.b32.xlu0 %v5260, 32
          %v5280 = vpop.permute.xlu0 %5279
          %5281 = vrot.lane.b32.xlu0 %v5261, 32
          %v5282 = vpop.permute.xlu0 %5281
          %5283 = vrot.lane.b32.xlu0 %v5262, 32
          %v5284 = vpop.permute.xlu0 %5283
          %5285 = vrot.lane.b32.xlu0 %v5263, 32
          %v5286 = vpop.permute.xlu0 %5285
          %5287 = vrot.lane.b32.xlu0 %v5264, 32
          %v5288 = vpop.permute.xlu0 %5287
          %5289 = vrot.lane.b32.xlu0 %v5265, 32
          %v5290 = vpop.permute.xlu0 %5289
          %5291 = vrot.lane.b32.xlu0 %v5266, 32
          %v5292 = vpop.permute.xlu0 %5291
          %5293 = vrot.lane.b32.xlu0 %v5267, 32
          %v5294 = vpop.permute.xlu0 %5293
          %5295 = vrot.lane.b32.xlu0 %v5268, 32
          %v5296 = vpop.permute.xlu0 %5295
          %5297 = vrot.lane.b32.xlu0 %v5269, 32
          %v5298 = vpop.permute.xlu0 %5297
          %5299 = vrot.lane.b32.xlu0 %v5270, 32
          %v5300 = vpop.permute.xlu0 %5299
          %5301 = vrot.lane.b32.xlu0 %v5271, 32
          %v5302 = vpop.permute.xlu0 %5301
          %5303 = vrot.lane.b32.xlu0 %v5272, 32
          %v5304 = vpop.permute.xlu0 %5303
          %v5321 = vrot.slane %v3944, 2
          %v5322 = vrot.slane %v3954, 2
          %v5323 = vrot.slane %v3964, 2
          %v5324 = vrot.slane %v3974, 2
          %v5325 = vrot.slane %v3984, 2
          %v5326 = vrot.slane %v3994, 2
          %v5327 = vrot.slane %v4004, 2
          %v5328 = vrot.slane %v4014, 2
          %v5329 = vrot.slane %v4024, 2
          %v5330 = vrot.slane %v4034, 2
          %v5331 = vrot.slane %v4044, 2
          %v5332 = vrot.slane %v4054, 2
          %v5333 = vrot.slane %v4064, 2
          %v5334 = vrot.slane %v4074, 2
          %v5335 = vrot.slane %v4084, 2
          %v5336 = vrot.slane %v4094, 2
          %5337 = vrot.lane.b32.xlu0 %v5321, 64
          %v5338 = vpop.permute.xlu0 %5337
          %5339 = vrot.lane.b32.xlu0 %v5322, 64
          %v5340 = vpop.permute.xlu0 %5339
          %5341 = vrot.lane.b32.xlu0 %v5323, 64
          %v5342 = vpop.permute.xlu0 %5341
          %5343 = vrot.lane.b32.xlu0 %v5324, 64
          %v5344 = vpop.permute.xlu0 %5343
          %5345 = vrot.lane.b32.xlu0 %v5325, 64
          %v5346 = vpop.permute.xlu0 %5345
          %5347 = vrot.lane.b32.xlu0 %v5326, 64
          %v5348 = vpop.permute.xlu0 %5347
          %5349 = vrot.lane.b32.xlu0 %v5327, 64
          %v5350 = vpop.permute.xlu0 %5349
          %5351 = vrot.lane.b32.xlu0 %v5328, 64
          %v5352 = vpop.permute.xlu0 %5351
          %5353 = vrot.lane.b32.xlu0 %v5329, 64
          %v5354 = vpop.permute.xlu0 %5353
          %5355 = vrot.lane.b32.xlu0 %v5330, 64
          %v5356 = vpop.permute.xlu0 %5355
          %5357 = vrot.lane.b32.xlu0 %v5331, 64
          %v5358 = vpop.permute.xlu0 %5357
          %5359 = vrot.lane.b32.xlu0 %v5332, 64
          %v5360 = vpop.permute.xlu0 %5359
          %5361 = vrot.lane.b32.xlu0 %v5333, 64
          %v5362 = vpop.permute.xlu0 %5361
          %5363 = vrot.lane.b32.xlu0 %v5334, 64
          %v5364 = vpop.permute.xlu0 %5363
          %5365 = vrot.lane.b32.xlu0 %v5335, 64
          %v5366 = vpop.permute.xlu0 %5365
          %5367 = vrot.lane.b32.xlu0 %v5336, 64
          %v5368 = vpop.permute.xlu0 %5367
          %v5385 = vrot.slane %v3944, 3
          %v5386 = vrot.slane %v3954, 3
          %v5387 = vrot.slane %v3964, 3
          %v5388 = vrot.slane %v3974, 3
          %v5389 = vrot.slane %v3984, 3
          %v5390 = vrot.slane %v3994, 3
          %v5391 = vrot.slane %v4004, 3
          %v5392 = vrot.slane %v4014, 3
          %v5393 = vrot.slane %v4024, 3
          %v5394 = vrot.slane %v4034, 3
          %v5395 = vrot.slane %v4044, 3
          %v5396 = vrot.slane %v4054, 3
          %v5397 = vrot.slane %v4064, 3
          %v5398 = vrot.slane %v4074, 3
          %v5399 = vrot.slane %v4084, 3
          %v5400 = vrot.slane %v4094, 3
          %5401 = vrot.lane.b32.xlu0 %v5385, 96
          %v5402 = vpop.permute.xlu0 %5401
          %5403 = vrot.lane.b32.xlu0 %v5386, 96
          %v5404 = vpop.permute.xlu0 %5403
          %5405 = vrot.lane.b32.xlu0 %v5387, 96
          %v5406 = vpop.permute.xlu0 %5405
          %5407 = vrot.lane.b32.xlu0 %v5388, 96
          %v5408 = vpop.permute.xlu0 %5407
          %5409 = vrot.lane.b32.xlu0 %v5389, 96
          %v5410 = vpop.permute.xlu0 %5409
          %5411 = vrot.lane.b32.xlu0 %v5390, 96
          %v5412 = vpop.permute.xlu0 %5411
          %5413 = vrot.lane.b32.xlu0 %v5391, 96
          %v5414 = vpop.permute.xlu0 %5413
          %5415 = vrot.lane.b32.xlu0 %v5392, 96
          %v5416 = vpop.permute.xlu0 %5415
          %5417 = vrot.lane.b32.xlu0 %v5393, 96
          %v5418 = vpop.permute.xlu0 %5417
          %5419 = vrot.lane.b32.xlu0 %v5394, 96
          %v5420 = vpop.permute.xlu0 %5419
          %5421 = vrot.lane.b32.xlu0 %v5395, 96
          %v5422 = vpop.permute.xlu0 %5421
          %5423 = vrot.lane.b32.xlu0 %v5396, 96
          %v5424 = vpop.permute.xlu0 %5423
          %5425 = vrot.lane.b32.xlu0 %v5397, 96
          %v5426 = vpop.permute.xlu0 %5425
          %5427 = vrot.lane.b32.xlu0 %v5398, 96
          %v5428 = vpop.permute.xlu0 %5427
          %5429 = vrot.lane.b32.xlu0 %v5399, 96
          %v5430 = vpop.permute.xlu0 %5429
          %5431 = vrot.lane.b32.xlu0 %v5400, 96
          %v5432 = vpop.permute.xlu0 %5431
          %v5449 = vrot.slane %v3944, 4
          %v5450 = vrot.slane %v3954, 4
          %v5451 = vrot.slane %v3964, 4
          %v5452 = vrot.slane %v3974, 4
          %v5453 = vrot.slane %v3984, 4
          %v5454 = vrot.slane %v3994, 4
          %v5455 = vrot.slane %v4004, 4
          %v5456 = vrot.slane %v4014, 4
          %v5457 = vrot.slane %v4024, 4
          %v5458 = vrot.slane %v4034, 4
          %v5459 = vrot.slane %v4044, 4
          %v5460 = vrot.slane %v4054, 4
          %v5461 = vrot.slane %v4064, 4
          %v5462 = vrot.slane %v4074, 4
          %v5463 = vrot.slane %v4084, 4
          %v5464 = vrot.slane %v4094, 4
          %v5481 = vrot.slane %v3944, 5
          %v5482 = vrot.slane %v3954, 5
          %v5483 = vrot.slane %v3964, 5
          %v5484 = vrot.slane %v3974, 5
          %v5485 = vrot.slane %v3984, 5
          %v5486 = vrot.slane %v3994, 5
          %v5487 = vrot.slane %v4004, 5
          %v5488 = vrot.slane %v4014, 5
          %v5489 = vrot.slane %v4024, 5
          %v5490 = vrot.slane %v4034, 5
          %v5491 = vrot.slane %v4044, 5
          %v5492 = vrot.slane %v4054, 5
          %v5493 = vrot.slane %v4064, 5
          %v5494 = vrot.slane %v4074, 5
          %v5495 = vrot.slane %v4084, 5
          %v5496 = vrot.slane %v4094, 5
          %5497 = vrot.lane.b32.xlu0 %v5481, 32
          %v5498 = vpop.permute.xlu0 %5497
          %5499 = vrot.lane.b32.xlu0 %v5482, 32
          %v5500 = vpop.permute.xlu0 %5499
          %5501 = vrot.lane.b32.xlu0 %v5483, 32
          %v5502 = vpop.permute.xlu0 %5501
          %5503 = vrot.lane.b32.xlu0 %v5484, 32
          %v5504 = vpop.permute.xlu0 %5503
          %5505 = vrot.lane.b32.xlu0 %v5485, 32
          %v5506 = vpop.permute.xlu0 %5505
          %5507 = vrot.lane.b32.xlu0 %v5486, 32
          %v5508 = vpop.permute.xlu0 %5507
          %5509 = vrot.lane.b32.xlu0 %v5487, 32
          %v5510 = vpop.permute.xlu0 %5509
          %5511 = vrot.lane.b32.xlu0 %v5488, 32
          %v5512 = vpop.permute.xlu0 %5511
          %5513 = vrot.lane.b32.xlu0 %v5489, 32
          %v5514 = vpop.permute.xlu0 %5513
          %5515 = vrot.lane.b32.xlu0 %v5490, 32
          %v5516 = vpop.permute.xlu0 %5515
          %5517 = vrot.lane.b32.xlu0 %v5491, 32
          %v5518 = vpop.permute.xlu0 %5517
          %5519 = vrot.lane.b32.xlu0 %v5492, 32
          %v5520 = vpop.permute.xlu0 %5519
          %5521 = vrot.lane.b32.xlu0 %v5493, 32
          %v5522 = vpop.permute.xlu0 %5521
          %5523 = vrot.lane.b32.xlu0 %v5494, 32
          %v5524 = vpop.permute.xlu0 %5523
          %5525 = vrot.lane.b32.xlu0 %v5495, 32
          %v5526 = vpop.permute.xlu0 %5525
          %5527 = vrot.lane.b32.xlu0 %v5496, 32
          %v5528 = vpop.permute.xlu0 %5527
          %v5545 = vrot.slane %v3944, 6
          %v5546 = vrot.slane %v3954, 6
          %v5547 = vrot.slane %v3964, 6
          %v5548 = vrot.slane %v3974, 6
          %v5549 = vrot.slane %v3984, 6
          %v5550 = vrot.slane %v3994, 6
          %v5551 = vrot.slane %v4004, 6
          %v5552 = vrot.slane %v4014, 6
          %v5553 = vrot.slane %v4024, 6
          %v5554 = vrot.slane %v4034, 6
          %v5555 = vrot.slane %v4044, 6
          %v5556 = vrot.slane %v4054, 6
          %v5557 = vrot.slane %v4064, 6
          %v5558 = vrot.slane %v4074, 6
          %v5559 = vrot.slane %v4084, 6
          %v5560 = vrot.slane %v4094, 6
          %5561 = vrot.lane.b32.xlu0 %v5545, 64
          %v5562 = vpop.permute.xlu0 %5561
          %5563 = vrot.lane.b32.xlu0 %v5546, 64
          %v5564 = vpop.permute.xlu0 %5563
          %5565 = vrot.lane.b32.xlu0 %v5547, 64
          %v5566 = vpop.permute.xlu0 %5565
          %5567 = vrot.lane.b32.xlu0 %v5548, 64
          %v5568 = vpop.permute.xlu0 %5567
          %5569 = vrot.lane.b32.xlu0 %v5549, 64
          %v5570 = vpop.permute.xlu0 %5569
          %5571 = vrot.lane.b32.xlu0 %v5550, 64
          %v5572 = vpop.permute.xlu0 %5571
          %5573 = vrot.lane.b32.xlu0 %v5551, 64
          %v5574 = vpop.permute.xlu0 %5573
          %5575 = vrot.lane.b32.xlu0 %v5552, 64
          %v5576 = vpop.permute.xlu0 %5575
          %5577 = vrot.lane.b32.xlu0 %v5553, 64
          %v5578 = vpop.permute.xlu0 %5577
          %5579 = vrot.lane.b32.xlu0 %v5554, 64
          %v5580 = vpop.permute.xlu0 %5579
          %5581 = vrot.lane.b32.xlu0 %v5555, 64
          %v5582 = vpop.permute.xlu0 %5581
          %5583 = vrot.lane.b32.xlu0 %v5556, 64
          %v5584 = vpop.permute.xlu0 %5583
          %5585 = vrot.lane.b32.xlu0 %v5557, 64
          %v5586 = vpop.permute.xlu0 %5585
          %5587 = vrot.lane.b32.xlu0 %v5558, 64
          %v5588 = vpop.permute.xlu0 %5587
          %5589 = vrot.lane.b32.xlu0 %v5559, 64
          %v5590 = vpop.permute.xlu0 %5589
          %5591 = vrot.lane.b32.xlu0 %v5560, 64
          %v5592 = vpop.permute.xlu0 %5591
          %v5609 = vrot.slane %v3944, 7
          %v5610 = vrot.slane %v3954, 7
          %v5611 = vrot.slane %v3964, 7
          %v5612 = vrot.slane %v3974, 7
          %v5613 = vrot.slane %v3984, 7
          %v5614 = vrot.slane %v3994, 7
          %v5615 = vrot.slane %v4004, 7
          %v5616 = vrot.slane %v4014, 7
          %v5617 = vrot.slane %v4024, 7
          %v5618 = vrot.slane %v4034, 7
          %v5619 = vrot.slane %v4044, 7
          %v5620 = vrot.slane %v4054, 7
          %v5621 = vrot.slane %v4064, 7
          %v5622 = vrot.slane %v4074, 7
          %v5623 = vrot.slane %v4084, 7
          %v5624 = vrot.slane %v4094, 7
          %5625 = vrot.lane.b32.xlu0 %v5609, 96
          %v5626 = vpop.permute.xlu0 %5625
          %5627 = vrot.lane.b32.xlu0 %v5610, 96
          %v5628 = vpop.permute.xlu0 %5627
          %5629 = vrot.lane.b32.xlu0 %v5611, 96
          %v5630 = vpop.permute.xlu0 %5629
          %5631 = vrot.lane.b32.xlu0 %v5612, 96
          %v5632 = vpop.permute.xlu0 %5631
          %5633 = vrot.lane.b32.xlu0 %v5613, 96
          %v5634 = vpop.permute.xlu0 %5633
          %5635 = vrot.lane.b32.xlu0 %v5614, 96
          %v5636 = vpop.permute.xlu0 %5635
          %5637 = vrot.lane.b32.xlu0 %v5615, 96
          %v5638 = vpop.permute.xlu0 %5637
          %5639 = vrot.lane.b32.xlu0 %v5616, 96
          %v5640 = vpop.permute.xlu0 %5639
          %5641 = vrot.lane.b32.xlu0 %v5617, 96
          %v5642 = vpop.permute.xlu0 %5641
          %5643 = vrot.lane.b32.xlu0 %v5618, 96
          %v5644 = vpop.permute.xlu0 %5643
          %5645 = vrot.lane.b32.xlu0 %v5619, 96
          %v5646 = vpop.permute.xlu0 %5645
          %5647 = vrot.lane.b32.xlu0 %v5620, 96
          %v5648 = vpop.permute.xlu0 %5647
          %5649 = vrot.lane.b32.xlu0 %v5621, 96
          %v5650 = vpop.permute.xlu0 %5649
          %5651 = vrot.lane.b32.xlu0 %v5622, 96
          %v5652 = vpop.permute.xlu0 %5651
          %5653 = vrot.lane.b32.xlu0 %v5623, 96
          %v5654 = vpop.permute.xlu0 %5653
          %5655 = vrot.lane.b32.xlu0 %v5624, 96
          %v5656 = vpop.permute.xlu0 %5655
          %v5689 = vrot.slane %v3949, 1
          %v5690 = vrot.slane %v3959, 1
          %v5691 = vrot.slane %v3969, 1
          %v5692 = vrot.slane %v3979, 1
          %v5693 = vrot.slane %v3989, 1
          %v5694 = vrot.slane %v3999, 1
          %v5695 = vrot.slane %v4009, 1
          %v5696 = vrot.slane %v4019, 1
          %v5697 = vrot.slane %v4029, 1
          %v5698 = vrot.slane %v4039, 1
          %v5699 = vrot.slane %v4049, 1
          %v5700 = vrot.slane %v4059, 1
          %v5701 = vrot.slane %v4069, 1
          %v5702 = vrot.slane %v4079, 1
          %v5703 = vrot.slane %v4089, 1
          %v5704 = vrot.slane %v4099, 1
          %5705 = vrot.lane.b32.xlu0 %v5689, 32
          %v5706 = vpop.permute.xlu0 %5705
          %5707 = vrot.lane.b32.xlu0 %v5690, 32
          %v5708 = vpop.permute.xlu0 %5707
          %5709 = vrot.lane.b32.xlu0 %v5691, 32
          %v5710 = vpop.permute.xlu0 %5709
          %5711 = vrot.lane.b32.xlu0 %v5692, 32
          %v5712 = vpop.permute.xlu0 %5711
          %5713 = vrot.lane.b32.xlu0 %v5693, 32
          %v5714 = vpop.permute.xlu0 %5713
          %5715 = vrot.lane.b32.xlu0 %v5694, 32
          %v5716 = vpop.permute.xlu0 %5715
          %5717 = vrot.lane.b32.xlu0 %v5695, 32
          %v5718 = vpop.permute.xlu0 %5717
          %5719 = vrot.lane.b32.xlu0 %v5696, 32
          %v5720 = vpop.permute.xlu0 %5719
          %5721 = vrot.lane.b32.xlu0 %v5697, 32
          %v5722 = vpop.permute.xlu0 %5721
          %5723 = vrot.lane.b32.xlu0 %v5698, 32
          %v5724 = vpop.permute.xlu0 %5723
          %5725 = vrot.lane.b32.xlu0 %v5699, 32
          %v5726 = vpop.permute.xlu0 %5725
          %5727 = vrot.lane.b32.xlu0 %v5700, 32
          %v5728 = vpop.permute.xlu0 %5727
          %5729 = vrot.lane.b32.xlu0 %v5701, 32
          %v5730 = vpop.permute.xlu0 %5729
          %5731 = vrot.lane.b32.xlu0 %v5702, 32
          %v5732 = vpop.permute.xlu0 %5731
          %5733 = vrot.lane.b32.xlu0 %v5703, 32
          %v5734 = vpop.permute.xlu0 %5733
          %5735 = vrot.lane.b32.xlu0 %v5704, 32
          %v5736 = vpop.permute.xlu0 %5735
          %v5753 = vrot.slane %v3949, 2
          %v5754 = vrot.slane %v3959, 2
          %v5755 = vrot.slane %v3969, 2
          %v5756 = vrot.slane %v3979, 2
          %v5757 = vrot.slane %v3989, 2
          %v5758 = vrot.slane %v3999, 2
          %v5759 = vrot.slane %v4009, 2
          %v5760 = vrot.slane %v4019, 2
          %v5761 = vrot.slane %v4029, 2
          %v5762 = vrot.slane %v4039, 2
          %v5763 = vrot.slane %v4049, 2
          %v5764 = vrot.slane %v4059, 2
          %v5765 = vrot.slane %v4069, 2
          %v5766 = vrot.slane %v4079, 2
          %v5767 = vrot.slane %v4089, 2
          %v5768 = vrot.slane %v4099, 2
          %5769 = vrot.lane.b32.xlu0 %v5753, 64
          %v5770 = vpop.permute.xlu0 %5769
          %5771 = vrot.lane.b32.xlu0 %v5754, 64
          %v5772 = vpop.permute.xlu0 %5771
          %5773 = vrot.lane.b32.xlu0 %v5755, 64
          %v5774 = vpop.permute.xlu0 %5773
          %5775 = vrot.lane.b32.xlu0 %v5756, 64
          %v5776 = vpop.permute.xlu0 %5775
          %5777 = vrot.lane.b32.xlu0 %v5757, 64
          %v5778 = vpop.permute.xlu0 %5777
          %5779 = vrot.lane.b32.xlu0 %v5758, 64
          %v5780 = vpop.permute.xlu0 %5779
          %5781 = vrot.lane.b32.xlu0 %v5759, 64
          %v5782 = vpop.permute.xlu0 %5781
          %5783 = vrot.lane.b32.xlu0 %v5760, 64
          %v5784 = vpop.permute.xlu0 %5783
          %5785 = vrot.lane.b32.xlu0 %v5761, 64
          %v5786 = vpop.permute.xlu0 %5785
          %5787 = vrot.lane.b32.xlu0 %v5762, 64
          %v5788 = vpop.permute.xlu0 %5787
          %5789 = vrot.lane.b32.xlu0 %v5763, 64
          %v5790 = vpop.permute.xlu0 %5789
          %5791 = vrot.lane.b32.xlu0 %v5764, 64
          %v5792 = vpop.permute.xlu0 %5791
          %5793 = vrot.lane.b32.xlu0 %v5765, 64
          %v5794 = vpop.permute.xlu0 %5793
          %5795 = vrot.lane.b32.xlu0 %v5766, 64
          %v5796 = vpop.permute.xlu0 %5795
          %5797 = vrot.lane.b32.xlu0 %v5767, 64
          %v5798 = vpop.permute.xlu0 %5797
          %5799 = vrot.lane.b32.xlu0 %v5768, 64
          %v5800 = vpop.permute.xlu0 %5799
          %v5817 = vrot.slane %v3949, 3
          %v5818 = vrot.slane %v3959, 3
          %v5819 = vrot.slane %v3969, 3
          %v5820 = vrot.slane %v3979, 3
          %v5821 = vrot.slane %v3989, 3
          %v5822 = vrot.slane %v3999, 3
          %v5823 = vrot.slane %v4009, 3
          %v5824 = vrot.slane %v4019, 3
          %v5825 = vrot.slane %v4029, 3
          %v5826 = vrot.slane %v4039, 3
          %v5827 = vrot.slane %v4049, 3
          %v5828 = vrot.slane %v4059, 3
          %v5829 = vrot.slane %v4069, 3
          %v5830 = vrot.slane %v4079, 3
          %v5831 = vrot.slane %v4089, 3
          %v5832 = vrot.slane %v4099, 3
          %5833 = vrot.lane.b32.xlu0 %v5817, 96
          %v5834 = vpop.permute.xlu0 %5833
          %5835 = vrot.lane.b32.xlu0 %v5818, 96
          %v5836 = vpop.permute.xlu0 %5835
          %5837 = vrot.lane.b32.xlu0 %v5819, 96
          %v5838 = vpop.permute.xlu0 %5837
          %5839 = vrot.lane.b32.xlu0 %v5820, 96
          %v5840 = vpop.permute.xlu0 %5839
          %5841 = vrot.lane.b32.xlu0 %v5821, 96
          %v5842 = vpop.permute.xlu0 %5841
          %5843 = vrot.lane.b32.xlu0 %v5822, 96
          %v5844 = vpop.permute.xlu0 %5843
          %5845 = vrot.lane.b32.xlu0 %v5823, 96
          %v5846 = vpop.permute.xlu0 %5845
          %5847 = vrot.lane.b32.xlu0 %v5824, 96
          %v5848 = vpop.permute.xlu0 %5847
          %5849 = vrot.lane.b32.xlu0 %v5825, 96
          %v5850 = vpop.permute.xlu0 %5849
          %5851 = vrot.lane.b32.xlu0 %v5826, 96
          %v5852 = vpop.permute.xlu0 %5851
          %5853 = vrot.lane.b32.xlu0 %v5827, 96
          %v5854 = vpop.permute.xlu0 %5853
          %5855 = vrot.lane.b32.xlu0 %v5828, 96
          %v5856 = vpop.permute.xlu0 %5855
          %5857 = vrot.lane.b32.xlu0 %v5829, 96
          %v5858 = vpop.permute.xlu0 %5857
          %5859 = vrot.lane.b32.xlu0 %v5830, 96
          %v5860 = vpop.permute.xlu0 %5859
          %5861 = vrot.lane.b32.xlu0 %v5831, 96
          %v5862 = vpop.permute.xlu0 %5861
          %5863 = vrot.lane.b32.xlu0 %v5832, 96
          %v5864 = vpop.permute.xlu0 %5863
          %v5881 = vrot.slane %v3949, 4
          %v5882 = vrot.slane %v3959, 4
          %v5883 = vrot.slane %v3969, 4
          %v5884 = vrot.slane %v3979, 4
          %v5885 = vrot.slane %v3989, 4
          %v5886 = vrot.slane %v3999, 4
          %v5887 = vrot.slane %v4009, 4
          %v5888 = vrot.slane %v4019, 4
          %v5889 = vrot.slane %v4029, 4
          %v5890 = vrot.slane %v4039, 4
          %v5891 = vrot.slane %v4049, 4
          %v5892 = vrot.slane %v4059, 4
          %v5893 = vrot.slane %v4069, 4
          %v5894 = vrot.slane %v4079, 4
          %v5895 = vrot.slane %v4089, 4
          %v5896 = vrot.slane %v4099, 4
          %v5913 = vrot.slane %v3949, 5
          %v5914 = vrot.slane %v3959, 5
          %v5915 = vrot.slane %v3969, 5
          %v5916 = vrot.slane %v3979, 5
          %v5917 = vrot.slane %v3989, 5
          %v5918 = vrot.slane %v3999, 5
          %v5919 = vrot.slane %v4009, 5
          %v5920 = vrot.slane %v4019, 5
          %v5921 = vrot.slane %v4029, 5
          %v5922 = vrot.slane %v4039, 5
          %v5923 = vrot.slane %v4049, 5
          %v5924 = vrot.slane %v4059, 5
          %v5925 = vrot.slane %v4069, 5
          %v5926 = vrot.slane %v4079, 5
          %v5927 = vrot.slane %v4089, 5
          %v5928 = vrot.slane %v4099, 5
          %5929 = vrot.lane.b32.xlu0 %v5913, 32
          %v5930 = vpop.permute.xlu0 %5929
          %5931 = vrot.lane.b32.xlu0 %v5914, 32
          %v5932 = vpop.permute.xlu0 %5931
          %5933 = vrot.lane.b32.xlu0 %v5915, 32
          %v5934 = vpop.permute.xlu0 %5933
          %5935 = vrot.lane.b32.xlu0 %v5916, 32
          %v5936 = vpop.permute.xlu0 %5935
          %5937 = vrot.lane.b32.xlu0 %v5917, 32
          %v5938 = vpop.permute.xlu0 %5937
          %5939 = vrot.lane.b32.xlu0 %v5918, 32
          %v5940 = vpop.permute.xlu0 %5939
          %5941 = vrot.lane.b32.xlu0 %v5919, 32
          %v5942 = vpop.permute.xlu0 %5941
          %5943 = vrot.lane.b32.xlu0 %v5920, 32
          %v5944 = vpop.permute.xlu0 %5943
          %5945 = vrot.lane.b32.xlu0 %v5921, 32
          %v5946 = vpop.permute.xlu0 %5945
          %5947 = vrot.lane.b32.xlu0 %v5922, 32
          %v5948 = vpop.permute.xlu0 %5947
          %5949 = vrot.lane.b32.xlu0 %v5923, 32
          %v5950 = vpop.permute.xlu0 %5949
          %5951 = vrot.lane.b32.xlu0 %v5924, 32
          %v5952 = vpop.permute.xlu0 %5951
          %5953 = vrot.lane.b32.xlu0 %v5925, 32
          %v5954 = vpop.permute.xlu0 %5953
          %5955 = vrot.lane.b32.xlu0 %v5926, 32
          %v5956 = vpop.permute.xlu0 %5955
          %5957 = vrot.lane.b32.xlu0 %v5927, 32
          %v5958 = vpop.permute.xlu0 %5957
          %5959 = vrot.lane.b32.xlu0 %v5928, 32
          %v5960 = vpop.permute.xlu0 %5959
          %v5977 = vrot.slane %v3949, 6
          %v5978 = vrot.slane %v3959, 6
          %v5979 = vrot.slane %v3969, 6
          %v5980 = vrot.slane %v3979, 6
          %v5981 = vrot.slane %v3989, 6
          %v5982 = vrot.slane %v3999, 6
          %v5983 = vrot.slane %v4009, 6
          %v5984 = vrot.slane %v4019, 6
          %v5985 = vrot.slane %v4029, 6
          %v5986 = vrot.slane %v4039, 6
          %v5987 = vrot.slane %v4049, 6
          %v5988 = vrot.slane %v4059, 6
          %v5989 = vrot.slane %v4069, 6
          %v5990 = vrot.slane %v4079, 6
          %v5991 = vrot.slane %v4089, 6
          %v5992 = vrot.slane %v4099, 6
          %5993 = vrot.lane.b32.xlu0 %v5977, 64
          %v5994 = vpop.permute.xlu0 %5993
          %5995 = vrot.lane.b32.xlu0 %v5978, 64
          %v5996 = vpop.permute.xlu0 %5995
          %5997 = vrot.lane.b32.xlu0 %v5979, 64
          %v5998 = vpop.permute.xlu0 %5997
          %5999 = vrot.lane.b32.xlu0 %v5980, 64
          %v6000 = vpop.permute.xlu0 %5999
          %6001 = vrot.lane.b32.xlu0 %v5981, 64
          %v6002 = vpop.permute.xlu0 %6001
          %6003 = vrot.lane.b32.xlu0 %v5982, 64
          %v6004 = vpop.permute.xlu0 %6003
          %6005 = vrot.lane.b32.xlu0 %v5983, 64
          %v6006 = vpop.permute.xlu0 %6005
          %6007 = vrot.lane.b32.xlu0 %v5984, 64
          %v6008 = vpop.permute.xlu0 %6007
          %6009 = vrot.lane.b32.xlu0 %v5985, 64
          %v6010 = vpop.permute.xlu0 %6009
          %6011 = vrot.lane.b32.xlu0 %v5986, 64
          %v6012 = vpop.permute.xlu0 %6011
          %6013 = vrot.lane.b32.xlu0 %v5987, 64
          %v6014 = vpop.permute.xlu0 %6013
          %6015 = vrot.lane.b32.xlu0 %v5988, 64
          %v6016 = vpop.permute.xlu0 %6015
          %6017 = vrot.lane.b32.xlu0 %v5989, 64
          %v6018 = vpop.permute.xlu0 %6017
          %6019 = vrot.lane.b32.xlu0 %v5990, 64
          %v6020 = vpop.permute.xlu0 %6019
          %6021 = vrot.lane.b32.xlu0 %v5991, 64
          %v6022 = vpop.permute.xlu0 %6021
          %6023 = vrot.lane.b32.xlu0 %v5992, 64
          %v6024 = vpop.permute.xlu0 %6023
          %v6041 = vrot.slane %v3949, 7
          %v6042 = vrot.slane %v3959, 7
          %v6043 = vrot.slane %v3969, 7
          %v6044 = vrot.slane %v3979, 7
          %v6045 = vrot.slane %v3989, 7
          %v6046 = vrot.slane %v3999, 7
          %v6047 = vrot.slane %v4009, 7
          %v6048 = vrot.slane %v4019, 7
          %v6049 = vrot.slane %v4029, 7
          %v6050 = vrot.slane %v4039, 7
          %v6051 = vrot.slane %v4049, 7
          %v6052 = vrot.slane %v4059, 7
          %v6053 = vrot.slane %v4069, 7
          %v6054 = vrot.slane %v4079, 7
          %v6055 = vrot.slane %v4089, 7
          %v6056 = vrot.slane %v4099, 7
          %6057 = vrot.lane.b32.xlu0 %v6041, 96
          %v6058 = vpop.permute.xlu0 %6057
          %6059 = vrot.lane.b32.xlu0 %v6042, 96
          %v6060 = vpop.permute.xlu0 %6059
          %6061 = vrot.lane.b32.xlu0 %v6043, 96
          %v6062 = vpop.permute.xlu0 %6061
          %6063 = vrot.lane.b32.xlu0 %v6044, 96
          %v6064 = vpop.permute.xlu0 %6063
          %6065 = vrot.lane.b32.xlu0 %v6045, 96
          %v6066 = vpop.permute.xlu0 %6065
          %6067 = vrot.lane.b32.xlu0 %v6046, 96
          %v6068 = vpop.permute.xlu0 %6067
          %6069 = vrot.lane.b32.xlu0 %v6047, 96
          %v6070 = vpop.permute.xlu0 %6069
          %6071 = vrot.lane.b32.xlu0 %v6048, 96
          %v6072 = vpop.permute.xlu0 %6071
          %6073 = vrot.lane.b32.xlu0 %v6049, 96
          %v6074 = vpop.permute.xlu0 %6073
          %6075 = vrot.lane.b32.xlu0 %v6050, 96
          %v6076 = vpop.permute.xlu0 %6075
          %6077 = vrot.lane.b32.xlu0 %v6051, 96
          %v6078 = vpop.permute.xlu0 %6077
          %6079 = vrot.lane.b32.xlu0 %v6052, 96
          %v6080 = vpop.permute.xlu0 %6079
          %6081 = vrot.lane.b32.xlu0 %v6053, 96
          %v6082 = vpop.permute.xlu0 %6081
          %6083 = vrot.lane.b32.xlu0 %v6054, 96
          %v6084 = vpop.permute.xlu0 %6083
          %6085 = vrot.lane.b32.xlu0 %v6055, 96
          %v6086 = vpop.permute.xlu0 %6085
          %6087 = vrot.lane.b32.xlu0 %v6056, 96
          %v6088 = vpop.permute.xlu0 %6087
          %v6105 = vsel %vm3506, %v3944, %v5274
          %v6106 = vsel %vm3506, %v3954, %v5276
          %v6107 = vsel %vm3506, %v3964, %v5278
          %v6108 = vsel %vm3506, %v3974, %v5280
          %v6109 = vsel %vm3506, %v3984, %v5282
          %v6110 = vsel %vm3506, %v3994, %v5284
          %v6111 = vsel %vm3506, %v4004, %v5286
          %v6112 = vsel %vm3506, %v4014, %v5288
          %v6113 = vsel %vm3506, %v4024, %v5290
          %v6114 = vsel %vm3506, %v4034, %v5292
          %v6115 = vsel %vm3506, %v4044, %v5294
          %v6116 = vsel %vm3506, %v4054, %v5296
          %v6117 = vsel %vm3506, %v4064, %v5298
          %v6118 = vsel %vm3506, %v4074, %v5300
          %v6119 = vsel %vm3506, %v4084, %v5302
          %v6120 = vsel %vm3506, %v4094, %v5304
          %v6121 = vsel %vm4550, %v6105, %v5338
          %v6122 = vsel %vm4550, %v6106, %v5340
          %v6123 = vsel %vm4550, %v6107, %v5342
          %v6124 = vsel %vm4550, %v6108, %v5344
          %v6125 = vsel %vm4550, %v6109, %v5346
          %v6126 = vsel %vm4550, %v6110, %v5348
          %v6127 = vsel %vm4550, %v6111, %v5350
          %v6128 = vsel %vm4550, %v6112, %v5352
          %v6129 = vsel %vm4550, %v6113, %v5354
          %v6130 = vsel %vm4550, %v6114, %v5356
          %v6131 = vsel %vm4550, %v6115, %v5358
          %v6132 = vsel %vm4550, %v6116, %v5360
          %v6133 = vsel %vm4550, %v6117, %v5362
          %v6134 = vsel %vm4550, %v6118, %v5364
          %v6135 = vsel %vm4550, %v6119, %v5366
          %v6136 = vsel %vm4550, %v6120, %v5368
          %v6137 = vsel %vm4567, %v6121, %v5402
          %v6138 = vsel %vm4567, %v6122, %v5404
          %v6139 = vsel %vm4567, %v6123, %v5406
          %v6140 = vsel %vm4567, %v6124, %v5408
          %v6141 = vsel %vm4567, %v6125, %v5410
          %v6142 = vsel %vm4567, %v6126, %v5412
          %v6143 = vsel %vm4567, %v6127, %v5414
          %v6144 = vsel %vm4567, %v6128, %v5416
          %v6145 = vsel %vm4567, %v6129, %v5418
          %v6146 = vsel %vm4567, %v6130, %v5420
          %v6147 = vsel %vm4567, %v6131, %v5422
          %v6148 = vsel %vm4567, %v6132, %v5424
          %v6149 = vsel %vm4567, %v6133, %v5426
          %v6150 = vsel %vm4567, %v6134, %v5428
          %v6151 = vsel %vm4567, %v6135, %v5430
          %v6152 = vsel %vm4567, %v6136, %v5432
          %v6153 = vsel %vm3506, %v5449, %v5498
          %v6154 = vsel %vm3506, %v5450, %v5500
          %v6155 = vsel %vm3506, %v5451, %v5502
          %v6156 = vsel %vm3506, %v5452, %v5504
          %v6157 = vsel %vm3506, %v5453, %v5506
          %v6158 = vsel %vm3506, %v5454, %v5508
          %v6159 = vsel %vm3506, %v5455, %v5510
          %v6160 = vsel %vm3506, %v5456, %v5512
          %v6161 = vsel %vm3506, %v5457, %v5514
          %v6162 = vsel %vm3506, %v5458, %v5516
          %v6163 = vsel %vm3506, %v5459, %v5518
          %v6164 = vsel %vm3506, %v5460, %v5520
          %v6165 = vsel %vm3506, %v5461, %v5522
          %v6166 = vsel %vm3506, %v5462, %v5524
          %v6167 = vsel %vm3506, %v5463, %v5526
          %v6168 = vsel %vm3506, %v5464, %v5528
          %v6169 = vsel %vm4550, %v6153, %v5562
          %v6170 = vsel %vm4550, %v6154, %v5564
          %v6171 = vsel %vm4550, %v6155, %v5566
          %v6172 = vsel %vm4550, %v6156, %v5568
          %v6173 = vsel %vm4550, %v6157, %v5570
          %v6174 = vsel %vm4550, %v6158, %v5572
          %v6175 = vsel %vm4550, %v6159, %v5574
          %v6176 = vsel %vm4550, %v6160, %v5576
          %v6177 = vsel %vm4550, %v6161, %v5578
          %v6178 = vsel %vm4550, %v6162, %v5580
          %v6179 = vsel %vm4550, %v6163, %v5582
          %v6180 = vsel %vm4550, %v6164, %v5584
          %v6181 = vsel %vm4550, %v6165, %v5586
          %v6182 = vsel %vm4550, %v6166, %v5588
          %v6183 = vsel %vm4550, %v6167, %v5590
          %v6184 = vsel %vm4550, %v6168, %v5592
          %v6185 = vsel %vm4567, %v6169, %v5626
          %v6186 = vsel %vm4567, %v6170, %v5628
          %v6187 = vsel %vm4567, %v6171, %v5630
          %v6188 = vsel %vm4567, %v6172, %v5632
          %v6189 = vsel %vm4567, %v6173, %v5634
          %v6190 = vsel %vm4567, %v6174, %v5636
          %v6191 = vsel %vm4567, %v6175, %v5638
          %v6192 = vsel %vm4567, %v6176, %v5640
          %v6193 = vsel %vm4567, %v6177, %v5642
          %v6194 = vsel %vm4567, %v6178, %v5644
          %v6195 = vsel %vm4567, %v6179, %v5646
          %v6196 = vsel %vm4567, %v6180, %v5648
          %v6197 = vsel %vm4567, %v6181, %v5650
          %v6198 = vsel %vm4567, %v6182, %v5652
          %v6199 = vsel %vm4567, %v6183, %v5654
          %v6200 = vsel %vm4567, %v6184, %v5656
          %v6201 = vsel %vm3506, %v3949, %v5706
          %v6202 = vsel %vm3506, %v3959, %v5708
          %v6203 = vsel %vm3506, %v3969, %v5710
          %v6204 = vsel %vm3506, %v3979, %v5712
          %v6205 = vsel %vm3506, %v3989, %v5714
          %v6206 = vsel %vm3506, %v3999, %v5716
          %v6207 = vsel %vm3506, %v4009, %v5718
          %v6208 = vsel %vm3506, %v4019, %v5720
          %v6209 = vsel %vm3506, %v4029, %v5722
          %v6210 = vsel %vm3506, %v4039, %v5724
          %v6211 = vsel %vm3506, %v4049, %v5726
          %v6212 = vsel %vm3506, %v4059, %v5728
          %v6213 = vsel %vm3506, %v4069, %v5730
          %v6214 = vsel %vm3506, %v4079, %v5732
          %v6215 = vsel %vm3506, %v4089, %v5734
          %v6216 = vsel %vm3506, %v4099, %v5736
          %v6217 = vsel %vm4550, %v6201, %v5770
          %v6218 = vsel %vm4550, %v6202, %v5772
          %v6219 = vsel %vm4550, %v6203, %v5774
          %v6220 = vsel %vm4550, %v6204, %v5776
          %v6221 = vsel %vm4550, %v6205, %v5778
          %v6222 = vsel %vm4550, %v6206, %v5780
          %v6223 = vsel %vm4550, %v6207, %v5782
          %v6224 = vsel %vm4550, %v6208, %v5784
          %v6225 = vsel %vm4550, %v6209, %v5786
          %v6226 = vsel %vm4550, %v6210, %v5788
          %v6227 = vsel %vm4550, %v6211, %v5790
          %v6228 = vsel %vm4550, %v6212, %v5792
          %v6229 = vsel %vm4550, %v6213, %v5794
          %v6230 = vsel %vm4550, %v6214, %v5796
          %v6231 = vsel %vm4550, %v6215, %v5798
          %v6232 = vsel %vm4550, %v6216, %v5800
          %v6233 = vsel %vm4567, %v6217, %v5834
          %v6234 = vsel %vm4567, %v6218, %v5836
          %v6235 = vsel %vm4567, %v6219, %v5838
          %v6236 = vsel %vm4567, %v6220, %v5840
          %v6237 = vsel %vm4567, %v6221, %v5842
          %v6238 = vsel %vm4567, %v6222, %v5844
          %v6239 = vsel %vm4567, %v6223, %v5846
          %v6240 = vsel %vm4567, %v6224, %v5848
          %v6241 = vsel %vm4567, %v6225, %v5850
          %v6242 = vsel %vm4567, %v6226, %v5852
          %v6243 = vsel %vm4567, %v6227, %v5854
          %v6244 = vsel %vm4567, %v6228, %v5856
          %v6245 = vsel %vm4567, %v6229, %v5858
          %v6246 = vsel %vm4567, %v6230, %v5860
          %v6247 = vsel %vm4567, %v6231, %v5862
          %v6248 = vsel %vm4567, %v6232, %v5864
          %v6249 = vsel %vm3506, %v5881, %v5930
          %v6250 = vsel %vm3506, %v5882, %v5932
          %v6251 = vsel %vm3506, %v5883, %v5934
          %v6252 = vsel %vm3506, %v5884, %v5936
          %v6253 = vsel %vm3506, %v5885, %v5938
          %v6254 = vsel %vm3506, %v5886, %v5940
          %v6255 = vsel %vm3506, %v5887, %v5942
          %v6256 = vsel %vm3506, %v5888, %v5944
          %v6257 = vsel %vm3506, %v5889, %v5946
          %v6258 = vsel %vm3506, %v5890, %v5948
          %v6259 = vsel %vm3506, %v5891, %v5950
          %v6260 = vsel %vm3506, %v5892, %v5952
          %v6261 = vsel %vm3506, %v5893, %v5954
          %v6262 = vsel %vm3506, %v5894, %v5956
          %v6263 = vsel %vm3506, %v5895, %v5958
          %v6264 = vsel %vm3506, %v5896, %v5960
          %v6265 = vsel %vm4550, %v6249, %v5994
          %v6266 = vsel %vm4550, %v6250, %v5996
          %v6267 = vsel %vm4550, %v6251, %v5998
          %v6268 = vsel %vm4550, %v6252, %v6000
          %v6269 = vsel %vm4550, %v6253, %v6002
          %v6270 = vsel %vm4550, %v6254, %v6004
          %v6271 = vsel %vm4550, %v6255, %v6006
          %v6272 = vsel %vm4550, %v6256, %v6008
          %v6273 = vsel %vm4550, %v6257, %v6010
          %v6274 = vsel %vm4550, %v6258, %v6012
          %v6275 = vsel %vm4550, %v6259, %v6014
          %v6276 = vsel %vm4550, %v6260, %v6016
          %v6277 = vsel %vm4550, %v6261, %v6018
          %v6278 = vsel %vm4550, %v6262, %v6020
          %v6279 = vsel %vm4550, %v6263, %v6022
          %v6280 = vsel %vm4550, %v6264, %v6024
          %v6281 = vsel %vm4567, %v6265, %v6058
          %v6282 = vsel %vm4567, %v6266, %v6060
          %v6283 = vsel %vm4567, %v6267, %v6062
          %v6284 = vsel %vm4567, %v6268, %v6064
          %v6285 = vsel %vm4567, %v6269, %v6066
          %v6286 = vsel %vm4567, %v6270, %v6068
          %v6287 = vsel %vm4567, %v6271, %v6070
          %v6288 = vsel %vm4567, %v6272, %v6072
          %v6289 = vsel %vm4567, %v6273, %v6074
          %v6290 = vsel %vm4567, %v6274, %v6076
          %v6291 = vsel %vm4567, %v6275, %v6078
          %v6292 = vsel %vm4567, %v6276, %v6080
          %v6293 = vsel %vm4567, %v6277, %v6082
          %v6294 = vsel %vm4567, %v6278, %v6084
          %v6295 = vsel %vm4567, %v6279, %v6086
          %v6296 = vsel %vm4567, %v6280, %v6088
          %v6297 = vlaneseq
          %v6298 = vshrl.u32 %v6297, 7
          %v6299 = vsub.s32 0, %v6298
          %v6300 = vrot.slane %v6137, %v6299
          %v6301 = vlaneseq
          %v6302 = vshrl.u32 %v6301, 7
          %v6303 = vsub.s32 0, %v6302
          %v6304 = vrot.slane %v6185, %v6303
          %v6305 = vlaneseq
          %v6306 = vshrl.u32 %v6305, 7
          %v6307 = vsub.s32 0, %v6306
          %v6308 = vrot.slane %v6233, %v6307
          %v6309 = vlaneseq
          %v6310 = vshrl.u32 %v6309, 7
          %v6311 = vsub.s32 0, %v6310
          %v6312 = vrot.slane %v6281, %v6311
          %v6313 = vlaneseq
          %v6314 = vshrl.u32 %v6313, 7
          %v6315 = vsub.s32 0, %v6314
          %v6316 = vrot.slane %v6138, %v6315
          %v6317 = vlaneseq
          %v6318 = vshrl.u32 %v6317, 7
          %v6319 = vsub.s32 0, %v6318
          %v6320 = vrot.slane %v6186, %v6319
          %v6321 = vlaneseq
          %v6322 = vshrl.u32 %v6321, 7
          %v6323 = vsub.s32 0, %v6322
          %v6324 = vrot.slane %v6234, %v6323
          %v6325 = vlaneseq
          %v6326 = vshrl.u32 %v6325, 7
          %v6327 = vsub.s32 0, %v6326
          %v6328 = vrot.slane %v6282, %v6327
          %v6329 = vlaneseq
          %v6330 = vshrl.u32 %v6329, 7
          %v6331 = vsub.s32 0, %v6330
          %v6332 = vrot.slane %v6139, %v6331
          %v6333 = vlaneseq
          %v6334 = vshrl.u32 %v6333, 7
          %v6335 = vsub.s32 0, %v6334
          %v6336 = vrot.slane %v6187, %v6335
          %v6337 = vlaneseq
          %v6338 = vshrl.u32 %v6337, 7
          %v6339 = vsub.s32 0, %v6338
          %v6340 = vrot.slane %v6235, %v6339
          %v6341 = vlaneseq
          %v6342 = vshrl.u32 %v6341, 7
          %v6343 = vsub.s32 0, %v6342
          %v6344 = vrot.slane %v6283, %v6343
          %v6345 = vlaneseq
          %v6346 = vshrl.u32 %v6345, 7
          %v6347 = vsub.s32 0, %v6346
          %v6348 = vrot.slane %v6140, %v6347
          %v6349 = vlaneseq
          %v6350 = vshrl.u32 %v6349, 7
          %v6351 = vsub.s32 0, %v6350
          %v6352 = vrot.slane %v6188, %v6351
          %v6353 = vlaneseq
          %v6354 = vshrl.u32 %v6353, 7
          %v6355 = vsub.s32 0, %v6354
          %v6356 = vrot.slane %v6236, %v6355
          %v6357 = vlaneseq
          %v6358 = vshrl.u32 %v6357, 7
          %v6359 = vsub.s32 0, %v6358
          %v6360 = vrot.slane %v6284, %v6359
          %v6361 = vlaneseq
          %v6362 = vshrl.u32 %v6361, 7
          %v6363 = vsub.s32 0, %v6362
          %v6364 = vrot.slane %v6141, %v6363
          %v6365 = vlaneseq
          %v6366 = vshrl.u32 %v6365, 7
          %v6367 = vsub.s32 0, %v6366
          %v6368 = vrot.slane %v6189, %v6367
          %v6369 = vlaneseq
          %v6370 = vshrl.u32 %v6369, 7
          %v6371 = vsub.s32 0, %v6370
          %v6372 = vrot.slane %v6237, %v6371
          %v6373 = vlaneseq
          %v6374 = vshrl.u32 %v6373, 7
          %v6375 = vsub.s32 0, %v6374
          %v6376 = vrot.slane %v6285, %v6375
          %v6377 = vlaneseq
          %v6378 = vshrl.u32 %v6377, 7
          %v6379 = vsub.s32 0, %v6378
          %v6380 = vrot.slane %v6142, %v6379
          %v6381 = vlaneseq
          %v6382 = vshrl.u32 %v6381, 7
          %v6383 = vsub.s32 0, %v6382
          %v6384 = vrot.slane %v6190, %v6383
          %v6385 = vlaneseq
          %v6386 = vshrl.u32 %v6385, 7
          %v6387 = vsub.s32 0, %v6386
          %v6388 = vrot.slane %v6238, %v6387
          %v6389 = vlaneseq
          %v6390 = vshrl.u32 %v6389, 7
          %v6391 = vsub.s32 0, %v6390
          %v6392 = vrot.slane %v6286, %v6391
          %v6393 = vlaneseq
          %v6394 = vshrl.u32 %v6393, 7
          %v6395 = vsub.s32 0, %v6394
          %v6396 = vrot.slane %v6143, %v6395
          %v6397 = vlaneseq
          %v6398 = vshrl.u32 %v6397, 7
          %v6399 = vsub.s32 0, %v6398
          %v6400 = vrot.slane %v6191, %v6399
          %v6401 = vlaneseq
          %v6402 = vshrl.u32 %v6401, 7
          %v6403 = vsub.s32 0, %v6402
          %v6404 = vrot.slane %v6239, %v6403
          %v6405 = vlaneseq
          %v6406 = vshrl.u32 %v6405, 7
          %v6407 = vsub.s32 0, %v6406
          %v6408 = vrot.slane %v6287, %v6407
          %v6409 = vlaneseq
          %v6410 = vshrl.u32 %v6409, 7
          %v6411 = vsub.s32 0, %v6410
          %v6412 = vrot.slane %v6144, %v6411
          %v6413 = vlaneseq
          %v6414 = vshrl.u32 %v6413, 7
          %v6415 = vsub.s32 0, %v6414
          %v6416 = vrot.slane %v6192, %v6415
          %v6417 = vlaneseq
          %v6418 = vshrl.u32 %v6417, 7
          %v6419 = vsub.s32 0, %v6418
          %v6420 = vrot.slane %v6240, %v6419
          %v6421 = vlaneseq
          %v6422 = vshrl.u32 %v6421, 7
          %v6423 = vsub.s32 0, %v6422
          %v6424 = vrot.slane %v6288, %v6423
          %v6425 = vlaneseq
          %v6426 = vshrl.u32 %v6425, 7
          %v6427 = vsub.s32 0, %v6426
          %v6428 = vrot.slane %v6145, %v6427
          %v6429 = vlaneseq
          %v6430 = vshrl.u32 %v6429, 7
          %v6431 = vsub.s32 0, %v6430
          %v6432 = vrot.slane %v6193, %v6431
          %v6433 = vlaneseq
          %v6434 = vshrl.u32 %v6433, 7
          %v6435 = vsub.s32 0, %v6434
          %v6436 = vrot.slane %v6241, %v6435
          %v6437 = vlaneseq
          %v6438 = vshrl.u32 %v6437, 7
          %v6439 = vsub.s32 0, %v6438
          %v6440 = vrot.slane %v6289, %v6439
          %v6441 = vlaneseq
          %v6442 = vshrl.u32 %v6441, 7
          %v6443 = vsub.s32 0, %v6442
          %v6444 = vrot.slane %v6146, %v6443
          %v6445 = vlaneseq
          %v6446 = vshrl.u32 %v6445, 7
          %v6447 = vsub.s32 0, %v6446
          %v6448 = vrot.slane %v6194, %v6447
          %v6449 = vlaneseq
          %v6450 = vshrl.u32 %v6449, 7
          %v6451 = vsub.s32 0, %v6450
          %v6452 = vrot.slane %v6242, %v6451
          %v6453 = vlaneseq
          %v6454 = vshrl.u32 %v6453, 7
          %v6455 = vsub.s32 0, %v6454
          %v6456 = vrot.slane %v6290, %v6455
          %v6457 = vlaneseq
          %v6458 = vshrl.u32 %v6457, 7
          %v6459 = vsub.s32 0, %v6458
          %v6460 = vrot.slane %v6147, %v6459
          %v6461 = vlaneseq
          %v6462 = vshrl.u32 %v6461, 7
          %v6463 = vsub.s32 0, %v6462
          %v6464 = vrot.slane %v6195, %v6463
          %v6465 = vlaneseq
          %v6466 = vshrl.u32 %v6465, 7
          %v6467 = vsub.s32 0, %v6466
          %v6468 = vrot.slane %v6243, %v6467
          %v6469 = vlaneseq
          %v6470 = vshrl.u32 %v6469, 7
          %v6471 = vsub.s32 0, %v6470
          %v6472 = vrot.slane %v6291, %v6471
          %v6473 = vlaneseq
          %v6474 = vshrl.u32 %v6473, 7
          %v6475 = vsub.s32 0, %v6474
          %v6476 = vrot.slane %v6148, %v6475
          %v6477 = vlaneseq
          %v6478 = vshrl.u32 %v6477, 7
          %v6479 = vsub.s32 0, %v6478
          %v6480 = vrot.slane %v6196, %v6479
          %v6481 = vlaneseq
          %v6482 = vshrl.u32 %v6481, 7
          %v6483 = vsub.s32 0, %v6482
          %v6484 = vrot.slane %v6244, %v6483
          %v6485 = vlaneseq
          %v6486 = vshrl.u32 %v6485, 7
          %v6487 = vsub.s32 0, %v6486
          %v6488 = vrot.slane %v6292, %v6487
          %v6489 = vlaneseq
          %v6490 = vshrl.u32 %v6489, 7
          %v6491 = vsub.s32 0, %v6490
          %v6492 = vrot.slane %v6149, %v6491
          %v6493 = vlaneseq
          %v6494 = vshrl.u32 %v6493, 7
          %v6495 = vsub.s32 0, %v6494
          %v6496 = vrot.slane %v6197, %v6495
          %v6497 = vlaneseq
          %v6498 = vshrl.u32 %v6497, 7
          %v6499 = vsub.s32 0, %v6498
          %v6500 = vrot.slane %v6245, %v6499
          %v6501 = vlaneseq
          %v6502 = vshrl.u32 %v6501, 7
          %v6503 = vsub.s32 0, %v6502
          %v6504 = vrot.slane %v6293, %v6503
          %v6505 = vlaneseq
          %v6506 = vshrl.u32 %v6505, 7
          %v6507 = vsub.s32 0, %v6506
          %v6508 = vrot.slane %v6150, %v6507
          %v6509 = vlaneseq
          %v6510 = vshrl.u32 %v6509, 7
          %v6511 = vsub.s32 0, %v6510
          %v6512 = vrot.slane %v6198, %v6511
          %v6513 = vlaneseq
          %v6514 = vshrl.u32 %v6513, 7
          %v6515 = vsub.s32 0, %v6514
          %v6516 = vrot.slane %v6246, %v6515
          %v6517 = vlaneseq
          %v6518 = vshrl.u32 %v6517, 7
          %v6519 = vsub.s32 0, %v6518
          %v6520 = vrot.slane %v6294, %v6519
          %v6521 = vlaneseq
          %v6522 = vshrl.u32 %v6521, 7
          %v6523 = vsub.s32 0, %v6522
          %v6524 = vrot.slane %v6151, %v6523
          %v6525 = vlaneseq
          %v6526 = vshrl.u32 %v6525, 7
          %v6527 = vsub.s32 0, %v6526
          %v6528 = vrot.slane %v6199, %v6527
          %v6529 = vlaneseq
          %v6530 = vshrl.u32 %v6529, 7
          %v6531 = vsub.s32 0, %v6530
          %v6532 = vrot.slane %v6247, %v6531
          %v6533 = vlaneseq
          %v6534 = vshrl.u32 %v6533, 7
          %v6535 = vsub.s32 0, %v6534
          %v6536 = vrot.slane %v6295, %v6535
          %v6537 = vlaneseq
          %v6538 = vshrl.u32 %v6537, 7
          %v6539 = vsub.s32 0, %v6538
          %v6540 = vrot.slane %v6152, %v6539
          %v6541 = vlaneseq
          %v6542 = vshrl.u32 %v6541, 7
          %v6543 = vsub.s32 0, %v6542
          %v6544 = vrot.slane %v6200, %v6543
          %v6545 = vlaneseq
          %v6546 = vshrl.u32 %v6545, 7
          %v6547 = vsub.s32 0, %v6546
          %v6548 = vrot.slane %v6248, %v6547
          %v6549 = vlaneseq
          %v6550 = vshrl.u32 %v6549, 7
          %v6551 = vsub.s32 0, %v6550
          %v6552 = vrot.slane %v6296, %v6551
          %v6553 = vadd.f32 %v3079, %v6300
          %v6554 = vadd.f32 %v3081, %v6304
          %v6555 = vadd.f32 %v3240, %v6308
          %v6556 = vadd.f32 %v3242, %v6312
          %v6557 = vadd.f32 %v3085, %v6316
          %v6558 = vadd.f32 %v3087, %v6320
          %v6559 = vadd.f32 %v3246, %v6324
          %v6560 = vadd.f32 %v3248, %v6328
          %v6561 = vadd.f32 %v3091, %v6332
          %v6562 = vadd.f32 %v3093, %v6336
          %v6563 = vadd.f32 %v3252, %v6340
          %v6564 = vadd.f32 %v3254, %v6344
          %v6565 = vadd.f32 %v3097, %v6348
          %v6566 = vadd.f32 %v3099, %v6352
          %v6567 = vadd.f32 %v3258, %v6356
          %v6568 = vadd.f32 %v3260, %v6360
          %v6569 = vadd.f32 %v3103, %v6364
          %v6570 = vadd.f32 %v3105, %v6368
          %v6571 = vadd.f32 %v3264, %v6372
          %v6572 = vadd.f32 %v3266, %v6376
          %v6573 = vadd.f32 %v3109, %v6380
          %v6574 = vadd.f32 %v3111, %v6384
          %v6575 = vadd.f32 %v3270, %v6388
          %v6576 = vadd.f32 %v3272, %v6392
          %v6577 = vadd.f32 %v3115, %v6396
          %v6578 = vadd.f32 %v3117, %v6400
          %v6579 = vadd.f32 %v3276, %v6404
          %v6580 = vadd.f32 %v3278, %v6408
          %v6581 = vadd.f32 %v3121, %v6412
          %v6582 = vadd.f32 %v3123, %v6416
          %v6583 = vadd.f32 %v3282, %v6420
          %v6584 = vadd.f32 %v3284, %v6424
          %v6585 = vadd.f32 %v3127, %v6428
          %v6586 = vadd.f32 %v3129, %v6432
          %v6587 = vadd.f32 %v3288, %v6436
          %v6588 = vadd.f32 %v3290, %v6440
          %v6589 = vadd.f32 %v3133, %v6444
          %v6590 = vadd.f32 %v3135, %v6448
          %v6591 = vadd.f32 %v3294, %v6452
          %v6592 = vadd.f32 %v3296, %v6456
          %v6593 = vadd.f32 %v3139, %v6460
          %v6594 = vadd.f32 %v3141, %v6464
          %v6595 = vadd.f32 %v3300, %v6468
          %v6596 = vadd.f32 %v3302, %v6472
          %v6597 = vadd.f32 %v3145, %v6476
          %v6598 = vadd.f32 %v3147, %v6480
          %v6599 = vadd.f32 %v3306, %v6484
          %v6600 = vadd.f32 %v3308, %v6488
          %v6601 = vadd.f32 %v3151, %v6492
          %v6602 = vadd.f32 %v3153, %v6496
          %v6603 = vadd.f32 %v3312, %v6500
          %v6604 = vadd.f32 %v3314, %v6504
          %v6605 = vadd.f32 %v3157, %v6508
          %v6606 = vadd.f32 %v3159, %v6512
          %v6607 = vadd.f32 %v3318, %v6516
          %v6608 = vadd.f32 %v3320, %v6520
          %v6609 = vadd.f32 %v3163, %v6524
          %v6610 = vadd.f32 %v3165, %v6528
          %v6611 = vadd.f32 %v3324, %v6532
          %v6612 = vadd.f32 %v3326, %v6536
          %v6613 = vadd.f32 %v3169, %v6540
          %v6614 = vadd.f32 %v3171, %v6544
          %v6615 = vadd.f32 %v3330, %v6548
          %v6616 = vadd.f32 %v3332, %v6552
          %v6617 = vmul.f32 %v6553, 0.1
          %v6618 = vmul.f32 %v6554, 0.1
          %v6619 = vmul.f32 %v6555, 0.1
          %v6620 = vmul.f32 %v6556, 0.1
          %v6621 = vmul.f32 %v6557, 0.1
          %v6622 = vmul.f32 %v6558, 0.1
          %v6623 = vmul.f32 %v6559, 0.1
          %v6624 = vmul.f32 %v6560, 0.1
          %v6625 = vmul.f32 %v6561, 0.1
          %v6626 = vmul.f32 %v6562, 0.1
          %v6627 = vmul.f32 %v6563, 0.1
          %v6628 = vmul.f32 %v6564, 0.1
          %v6629 = vmul.f32 %v6565, 0.1
          %v6630 = vmul.f32 %v6566, 0.1
          %v6631 = vmul.f32 %v6567, 0.1
          %v6632 = vmul.f32 %v6568, 0.1
          %v6633 = vmul.f32 %v6569, 0.1
          %v6634 = vmul.f32 %v6570, 0.1
          %v6635 = vmul.f32 %v6571, 0.1
          %v6636 = vmul.f32 %v6572, 0.1
          %v6637 = vmul.f32 %v6573, 0.1
          %v6638 = vmul.f32 %v6574, 0.1
          %v6639 = vmul.f32 %v6575, 0.1
          %v6640 = vmul.f32 %v6576, 0.1
          %v6641 = vmul.f32 %v6577, 0.1
          %v6642 = vmul.f32 %v6578, 0.1
          %v6643 = vmul.f32 %v6579, 0.1
          %v6644 = vmul.f32 %v6580, 0.1
          %v6645 = vmul.f32 %v6581, 0.1
          %v6646 = vmul.f32 %v6582, 0.1
          %v6647 = vmul.f32 %v6583, 0.1
          %v6648 = vmul.f32 %v6584, 0.1
          %v6649 = vmul.f32 %v6585, 0.1
          %v6650 = vmul.f32 %v6586, 0.1
          %v6651 = vmul.f32 %v6587, 0.1
          %v6652 = vmul.f32 %v6588, 0.1
          %v6653 = vmul.f32 %v6589, 0.1
          %v6654 = vmul.f32 %v6590, 0.1
          %v6655 = vmul.f32 %v6591, 0.1
          %v6656 = vmul.f32 %v6592, 0.1
          %v6657 = vmul.f32 %v6593, 0.1
          %v6658 = vmul.f32 %v6594, 0.1
          %v6659 = vmul.f32 %v6595, 0.1
          %v6660 = vmul.f32 %v6596, 0.1
          %v6661 = vmul.f32 %v6597, 0.1
          %v6662 = vmul.f32 %v6598, 0.1
          %v6663 = vmul.f32 %v6599, 0.1
          %v6664 = vmul.f32 %v6600, 0.1
          %v6665 = vmul.f32 %v6601, 0.1
          %v6666 = vmul.f32 %v6602, 0.1
          %v6667 = vmul.f32 %v6603, 0.1
          %v6668 = vmul.f32 %v6604, 0.1
          %v6669 = vmul.f32 %v6605, 0.1
          %v6670 = vmul.f32 %v6606, 0.1
          %v6671 = vmul.f32 %v6607, 0.1
          %v6672 = vmul.f32 %v6608, 0.1
          %v6673 = vmul.f32 %v6609, 0.1
          %v6674 = vmul.f32 %v6610, 0.1
          %v6675 = vmul.f32 %v6611, 0.1
          %v6676 = vmul.f32 %v6612, 0.1
          %v6677 = vmul.f32 %v6613, 0.1
          %v6678 = vmul.f32 %v6614, 0.1
          %v6679 = vmul.f32 %v6615, 0.1
          %v6680 = vmul.f32 %v6616, 0.1
          %v6681 = vmax.f32 %v6553, %v6617
          %v6682 = vmax.f32 %v6554, %v6618
          %v6683 = vmax.f32 %v6555, %v6619
          %v6684 = vmax.f32 %v6556, %v6620
          %v6685 = vmax.f32 %v6557, %v6621
          %v6686 = vmax.f32 %v6558, %v6622
          %v6687 = vmax.f32 %v6559, %v6623
          %v6688 = vmax.f32 %v6560, %v6624
          %v6689 = vmax.f32 %v6561, %v6625
          %v6690 = vmax.f32 %v6562, %v6626
          %v6691 = vmax.f32 %v6563, %v6627
          %v6692 = vmax.f32 %v6564, %v6628
          %v6693 = vmax.f32 %v6565, %v6629
          %v6694 = vmax.f32 %v6566, %v6630
          %v6695 = vmax.f32 %v6567, %v6631
          %v6696 = vmax.f32 %v6568, %v6632
          %v6697 = vmax.f32 %v6569, %v6633
          %v6698 = vmax.f32 %v6570, %v6634
          %v6699 = vmax.f32 %v6571, %v6635
          %v6700 = vmax.f32 %v6572, %v6636
          %v6701 = vmax.f32 %v6573, %v6637
          %v6702 = vmax.f32 %v6574, %v6638
          %v6703 = vmax.f32 %v6575, %v6639
          %v6704 = vmax.f32 %v6576, %v6640
          %v6705 = vmax.f32 %v6577, %v6641
          %v6706 = vmax.f32 %v6578, %v6642
          %v6707 = vmax.f32 %v6579, %v6643
          %v6708 = vmax.f32 %v6580, %v6644
          %v6709 = vmax.f32 %v6581, %v6645
          %v6710 = vmax.f32 %v6582, %v6646
          %v6711 = vmax.f32 %v6583, %v6647
          %v6712 = vmax.f32 %v6584, %v6648
          %v6713 = vmax.f32 %v6585, %v6649
          %v6714 = vmax.f32 %v6586, %v6650
          %v6715 = vmax.f32 %v6587, %v6651
          %v6716 = vmax.f32 %v6588, %v6652
          %v6717 = vmax.f32 %v6589, %v6653
          %v6718 = vmax.f32 %v6590, %v6654
          %v6719 = vmax.f32 %v6591, %v6655
          %v6720 = vmax.f32 %v6592, %v6656
          %v6721 = vmax.f32 %v6593, %v6657
          %v6722 = vmax.f32 %v6594, %v6658
          %v6723 = vmax.f32 %v6595, %v6659
          %v6724 = vmax.f32 %v6596, %v6660
          %v6725 = vmax.f32 %v6597, %v6661
          %v6726 = vmax.f32 %v6598, %v6662
          %v6727 = vmax.f32 %v6599, %v6663
          %v6728 = vmax.f32 %v6600, %v6664
          %v6729 = vmax.f32 %v6601, %v6665
          %v6730 = vmax.f32 %v6602, %v6666
          %v6731 = vmax.f32 %v6603, %v6667
          %v6732 = vmax.f32 %v6604, %v6668
          %v6733 = vmax.f32 %v6605, %v6669
          %v6734 = vmax.f32 %v6606, %v6670
          %v6735 = vmax.f32 %v6607, %v6671
          %v6736 = vmax.f32 %v6608, %v6672
          %v6737 = vmax.f32 %v6609, %v6673
          %v6738 = vmax.f32 %v6610, %v6674
          %v6739 = vmax.f32 %v6611, %v6675
          %v6740 = vmax.f32 %v6612, %v6676
          %v6741 = vmax.f32 %v6613, %v6677
          %v6742 = vmax.f32 %v6614, %v6678
          %v6743 = vmax.f32 %v6615, %v6679
          %v6744 = vmax.f32 %v6616, %v6680
          %v6745 = vmul.f32 %v2276, %v6681
          %v6746 = vmul.f32 %v2278, %v6682
          %v6747 = vmul.f32 %v2437, %v6683
          %v6748 = vmul.f32 %v2439, %v6684
          %v6749 = vmul.f32 %v2282, %v6685
          %v6750 = vmul.f32 %v2284, %v6686
          %v6751 = vmul.f32 %v2443, %v6687
          %v6752 = vmul.f32 %v2445, %v6688
          %v6753 = vmul.f32 %v2288, %v6689
          %v6754 = vmul.f32 %v2290, %v6690
          %v6755 = vmul.f32 %v2449, %v6691
          %v6756 = vmul.f32 %v2451, %v6692
          %v6757 = vmul.f32 %v2294, %v6693
          %v6758 = vmul.f32 %v2296, %v6694
          %v6759 = vmul.f32 %v2455, %v6695
          %v6760 = vmul.f32 %v2457, %v6696
          %v6761 = vmul.f32 %v2300, %v6697
          %v6762 = vmul.f32 %v2302, %v6698
          %v6763 = vmul.f32 %v2461, %v6699
          %v6764 = vmul.f32 %v2463, %v6700
          %v6765 = vmul.f32 %v2306, %v6701
          %v6766 = vmul.f32 %v2308, %v6702
          %v6767 = vmul.f32 %v2467, %v6703
          %v6768 = vmul.f32 %v2469, %v6704
          %v6769 = vmul.f32 %v2312, %v6705
          %v6770 = vmul.f32 %v2314, %v6706
          %v6771 = vmul.f32 %v2473, %v6707
          %v6772 = vmul.f32 %v2475, %v6708
          %v6773 = vmul.f32 %v2318, %v6709
          %v6774 = vmul.f32 %v2320, %v6710
          %v6775 = vmul.f32 %v2479, %v6711
          %v6776 = vmul.f32 %v2481, %v6712
          %v6777 = vmul.f32 %v2324, %v6713
          %v6778 = vmul.f32 %v2326, %v6714
          %v6779 = vmul.f32 %v2485, %v6715
          %v6780 = vmul.f32 %v2487, %v6716
          %v6781 = vmul.f32 %v2330, %v6717
          %v6782 = vmul.f32 %v2332, %v6718
          %v6783 = vmul.f32 %v2491, %v6719
          %v6784 = vmul.f32 %v2493, %v6720
          %v6785 = vmul.f32 %v2336, %v6721
          %v6786 = vmul.f32 %v2338, %v6722
          %v6787 = vmul.f32 %v2497, %v6723
          %v6788 = vmul.f32 %v2499, %v6724
          %v6789 = vmul.f32 %v2342, %v6725
          %v6790 = vmul.f32 %v2344, %v6726
          %v6791 = vmul.f32 %v2503, %v6727
          %v6792 = vmul.f32 %v2505, %v6728
          %v6793 = vmul.f32 %v2348, %v6729
          %v6794 = vmul.f32 %v2350, %v6730
          %v6795 = vmul.f32 %v2509, %v6731
          %v6796 = vmul.f32 %v2511, %v6732
          %v6797 = vmul.f32 %v2354, %v6733
          %v6798 = vmul.f32 %v2356, %v6734
          %v6799 = vmul.f32 %v2515, %v6735
          %v6800 = vmul.f32 %v2517, %v6736
          %v6801 = vmul.f32 %v2360, %v6737
          %v6802 = vmul.f32 %v2362, %v6738
          %v6803 = vmul.f32 %v2521, %v6739
          %v6804 = vmul.f32 %v2523, %v6740
          %v6805 = vmul.f32 %v2366, %v6741
          %v6806 = vmul.f32 %v2368, %v6742
          %v6807 = vmul.f32 %v2527, %v6743
          %v6808 = vmul.f32 %v2529, %v6744
          %6809 = vmatprep.subr.mxu0 0.0
          %6810 = vmatpush1.msra.mxu0 %v3401
          %6811 = vmatprep.subr.mxu0 0.0
          %6812 = vmatpush1.msra.mxu0 %v3400
          %6813 = vmatprep.subr.mxu0 0.0
          %6814 = vmatpush1.msra.mxu0 %v3399
          %6815 = vmatprep.subr.mxu0 0.0
          %6816 = vmatpush1.msra.mxu0 %v3398
          %6817 = vmatprep.subr.mxu0 0.0
          %6818 = vmatpush1.msra.mxu0 %v3397
          %6819 = vmatprep.subr.mxu0 0.0
          %6820 = vmatpush1.msra.mxu0 %v3396
          %6821 = vmatprep.subr.mxu0 0.0
          %6822 = vmatpush1.msra.mxu0 %v3395
          %6823 = vmatprep.subr.mxu0 0.0
          %6824 = vmatpush1.msra.mxu0 %v3394
          %6825 = vmatprep.subr.mxu0 0.0
          %6826 = vmatpush1.msra.mxu0 %v3393
          %6827 = vmatprep.subr.mxu0 0.0
          %6828 = vmatpush1.msra.mxu0 %v3392
          %6829 = vmatprep.subr.mxu0 0.0
          %6830 = vmatpush1.msra.mxu0 %v3391
          %6831 = vmatprep.subr.mxu0 0.0
          %6832 = vmatpush1.msra.mxu0 %v3390
          %6833 = vmatprep.subr.mxu0 0.0
          %6834 = vmatpush1.msra.mxu0 %v3389
          %6835 = vmatprep.subr.mxu0 0.0
          %6836 = vmatpush1.msra.mxu0 %v3388
          %6837 = vmatprep.subr.mxu0 0.0
          %6838 = vmatpush1.msra.mxu0 %v3387
          %6839 = vmatprep.subr.mxu0 0.0
          %6840 = vmatpush1.msra.mxu0 %v3386
          %6841 = vmatprep.subr.mxu0 0.0
          %6842 = vmatpush2.msra.mxu0 %v3417
          %6843 = vmatprep.subr.mxu0 0.0
          %6844 = vmatpush2.msra.mxu0 %v3416
          %6845 = vmatprep.subr.mxu0 0.0
          %6846 = vmatpush2.msra.mxu0 %v3415
          %6847 = vmatprep.subr.mxu0 0.0
          %6848 = vmatpush2.msra.mxu0 %v3414
          %6849 = vmatprep.subr.mxu0 0.0
          %6850 = vmatpush2.msra.mxu0 %v3413
          %6851 = vmatprep.subr.mxu0 0.0
          %6852 = vmatpush2.msra.mxu0 %v3412
          %6853 = vmatprep.subr.mxu0 0.0
          %6854 = vmatpush2.msra.mxu0 %v3411
          %6855 = vmatprep.subr.mxu0 0.0
          %6856 = vmatpush2.msra.mxu0 %v3410
          %6857 = vmatprep.subr.mxu0 0.0
          %6858 = vmatpush2.msra.mxu0 %v3409
          %6859 = vmatprep.subr.mxu0 0.0
          %6860 = vmatpush2.msra.mxu0 %v3408
          %6861 = vmatprep.subr.mxu0 0.0
          %6862 = vmatpush2.msra.mxu0 %v3407
          %6863 = vmatprep.subr.mxu0 0.0
          %6864 = vmatpush2.msra.mxu0 %v3406
          %6865 = vmatprep.subr.mxu0 0.0
          %6866 = vmatpush2.msra.mxu0 %v3405
          %6867 = vmatprep.subr.mxu0 0.0
          %6868 = vmatpush2.msra.mxu0 %v3404
          %6869 = vmatprep.subr.mxu0 0.0
          %6870 = vmatpush2.msra.mxu0 %v3403
          %6871 = vmatprep.subr.mxu0 0.0
          %6872 = vmatpush2.msra.mxu0 %v3402
          %6873 = vmatprep.mubr.f32.mxu0 %v6746
          %6874 = vmatmul.mubr.f32.gmra.mxu0 %v6745
          %v6875 = vpop.f32.mrf.mxu0
          %v6876 = vadd.f32 0.0, %v6875
          %v6877 = vpop.f32.mrf.mxu0
          %6878 = vmatprep.mubr.f32.mxu0 %v6750
          %6879 = vmatmul.mubr.f32.gmra.mxu0 %v6749
          %v6880 = vpop.f32.mrf.mxu0
          %v6881 = vadd.f32 0.0, %v6880
          %v6882 = vpop.f32.mrf.mxu0
          %6883 = vmatprep.mubr.f32.mxu0 %v6754
          %6884 = vmatmul.mubr.f32.gmra.mxu0 %v6753
          %v6885 = vpop.f32.mrf.mxu0
          %v6886 = vadd.f32 0.0, %v6885
          %v6887 = vpop.f32.mrf.mxu0
          %6888 = vmatprep.mubr.f32.mxu0 %v6758
          %6889 = vmatmul.mubr.f32.gmra.mxu0 %v6757
          %v6890 = vpop.f32.mrf.mxu0
          %v6891 = vadd.f32 0.0, %v6890
          %v6892 = vpop.f32.mrf.mxu0
          %6893 = vmatprep.mubr.f32.mxu0 %v6762
          %6894 = vmatmul.mubr.f32.gmra.mxu0 %v6761
          %v6895 = vpop.f32.mrf.mxu0
          %v6896 = vadd.f32 0.0, %v6895
          %v6897 = vpop.f32.mrf.mxu0
          %6898 = vmatprep.mubr.f32.mxu0 %v6766
          %6899 = vmatmul.mubr.f32.gmra.mxu0 %v6765
          %v6900 = vpop.f32.mrf.mxu0
          %v6901 = vadd.f32 0.0, %v6900
          %v6902 = vpop.f32.mrf.mxu0
          %6903 = vmatprep.mubr.f32.mxu0 %v6770
          %6904 = vmatmul.mubr.f32.gmra.mxu0 %v6769
          %v6905 = vpop.f32.mrf.mxu0
          %v6906 = vadd.f32 0.0, %v6905
          %v6907 = vpop.f32.mrf.mxu0
          %6908 = vmatprep.mubr.f32.mxu0 %v6774
          %6909 = vmatmul.mubr.f32.gmra.mxu0 %v6773
          %v6910 = vpop.f32.mrf.mxu0
          %v6911 = vadd.f32 0.0, %v6910
          %v6912 = vpop.f32.mrf.mxu0
          %6913 = vmatprep.mubr.f32.mxu0 %v6778
          %6914 = vmatmul.mubr.f32.gmra.mxu0 %v6777
          %v6915 = vpop.f32.mrf.mxu0
          %v6916 = vadd.f32 0.0, %v6915
          %v6917 = vpop.f32.mrf.mxu0
          %6918 = vmatprep.mubr.f32.mxu0 %v6782
          %6919 = vmatmul.mubr.f32.gmra.mxu0 %v6781
          %v6920 = vpop.f32.mrf.mxu0
          %v6921 = vadd.f32 0.0, %v6920
          %v6922 = vpop.f32.mrf.mxu0
          %6923 = vmatprep.mubr.f32.mxu0 %v6786
          %6924 = vmatmul.mubr.f32.gmra.mxu0 %v6785
          %v6925 = vpop.f32.mrf.mxu0
          %v6926 = vadd.f32 0.0, %v6925
          %v6927 = vpop.f32.mrf.mxu0
          %6928 = vmatprep.mubr.f32.mxu0 %v6790
          %6929 = vmatmul.mubr.f32.gmra.mxu0 %v6789
          %v6930 = vpop.f32.mrf.mxu0
          %v6931 = vadd.f32 0.0, %v6930
          %v6932 = vpop.f32.mrf.mxu0
          %6933 = vmatprep.mubr.f32.mxu0 %v6794
          %6934 = vmatmul.mubr.f32.gmra.mxu0 %v6793
          %v6935 = vpop.f32.mrf.mxu0
          %v6936 = vadd.f32 0.0, %v6935
          %v6937 = vpop.f32.mrf.mxu0
          %6938 = vmatprep.mubr.f32.mxu0 %v6798
          %6939 = vmatmul.mubr.f32.gmra.mxu0 %v6797
          %v6940 = vpop.f32.mrf.mxu0
          %v6941 = vadd.f32 0.0, %v6940
          %v6942 = vpop.f32.mrf.mxu0
          %6943 = vmatprep.mubr.f32.mxu0 %v6802
          %6944 = vmatmul.mubr.f32.gmra.mxu0 %v6801
          %v6945 = vpop.f32.mrf.mxu0
          %v6946 = vadd.f32 0.0, %v6945
          %v6947 = vpop.f32.mrf.mxu0
          %6948 = vmatprep.mubr.f32.mxu0 %v6806
          %6949 = vmatmul.mubr.f32.gmra.mxu0 %v6805
          %v6950 = vpop.f32.mrf.mxu0
          %v6951 = vadd.f32 0.0, %v6950
          %v6952 = vpop.f32.mrf.mxu0
          %6953 = vdwg.mxu0
          %6954 = vmatprep.subr.mxu0 0.0
          %6955 = vmatpush1.msra.mxu0 %v3433
          %6956 = vmatprep.subr.mxu0 0.0
          %6957 = vmatpush1.msra.mxu0 %v3432
          %6958 = vmatprep.subr.mxu0 0.0
          %6959 = vmatpush1.msra.mxu0 %v3431
          %6960 = vmatprep.subr.mxu0 0.0
          %6961 = vmatpush1.msra.mxu0 %v3430
          %6962 = vmatprep.subr.mxu0 0.0
          %6963 = vmatpush1.msra.mxu0 %v3429
          %6964 = vmatprep.subr.mxu0 0.0
          %6965 = vmatpush1.msra.mxu0 %v3428
          %6966 = vmatprep.subr.mxu0 0.0
          %6967 = vmatpush1.msra.mxu0 %v3427
          %6968 = vmatprep.subr.mxu0 0.0
          %6969 = vmatpush1.msra.mxu0 %v3426
          %6970 = vmatprep.subr.mxu0 0.0
          %6971 = vmatpush1.msra.mxu0 %v3425
          %6972 = vmatprep.subr.mxu0 0.0
          %6973 = vmatpush1.msra.mxu0 %v3424
          %6974 = vmatprep.subr.mxu0 0.0
          %6975 = vmatpush1.msra.mxu0 %v3423
          %6976 = vmatprep.subr.mxu0 0.0
          %6977 = vmatpush1.msra.mxu0 %v3422
          %6978 = vmatprep.subr.mxu0 0.0
          %6979 = vmatpush1.msra.mxu0 %v3421
          %6980 = vmatprep.subr.mxu0 0.0
          %6981 = vmatpush1.msra.mxu0 %v3420
          %6982 = vmatprep.subr.mxu0 0.0
          %6983 = vmatpush1.msra.mxu0 %v3419
          %6984 = vmatprep.subr.mxu0 0.0
          %6985 = vmatpush1.msra.mxu0 %v3418
          %6986 = vmatprep.subr.mxu0 0.0
          %6987 = vmatpush2.msra.mxu0 %v3449
          %6988 = vmatprep.subr.mxu0 0.0
          %6989 = vmatpush2.msra.mxu0 %v3448
          %6990 = vmatprep.subr.mxu0 0.0
          %6991 = vmatpush2.msra.mxu0 %v3447
          %6992 = vmatprep.subr.mxu0 0.0
          %6993 = vmatpush2.msra.mxu0 %v3446
          %6994 = vmatprep.subr.mxu0 0.0
          %6995 = vmatpush2.msra.mxu0 %v3445
          %6996 = vmatprep.subr.mxu0 0.0
          %6997 = vmatpush2.msra.mxu0 %v3444
          %6998 = vmatprep.subr.mxu0 0.0
          %6999 = vmatpush2.msra.mxu0 %v3443
          %7000 = vmatprep.subr.mxu0 0.0
          %7001 = vmatpush2.msra.mxu0 %v3442
          %7002 = vmatprep.subr.mxu0 0.0
          %7003 = vmatpush2.msra.mxu0 %v3441
          %7004 = vmatprep.subr.mxu0 0.0
          %7005 = vmatpush2.msra.mxu0 %v3440
          %7006 = vmatprep.subr.mxu0 0.0
          %7007 = vmatpush2.msra.mxu0 %v3439
          %7008 = vmatprep.subr.mxu0 0.0
          %7009 = vmatpush2.msra.mxu0 %v3438
          %7010 = vmatprep.subr.mxu0 0.0
          %7011 = vmatpush2.msra.mxu0 %v3437
          %7012 = vmatprep.subr.mxu0 0.0
          %7013 = vmatpush2.msra.mxu0 %v3436
          %7014 = vmatprep.subr.mxu0 0.0
          %7015 = vmatpush2.msra.mxu0 %v3435
          %7016 = vmatprep.subr.mxu0 0.0
          %7017 = vmatpush2.msra.mxu0 %v3434
          %7018 = vmatprep.mubr.f32.mxu0 %v6748
          %7019 = vmatmul.mubr.f32.gmra.mxu0 %v6747
          %v7020 = vpop.f32.mrf.mxu0
          %v7021 = vadd.f32 %v6876, %v7020
          %v7022 = vpop.f32.mrf.mxu0
          %7023 = vmatprep.mubr.f32.mxu0 %v6752
          %7024 = vmatmul.mubr.f32.gmra.mxu0 %v6751
          %v7025 = vpop.f32.mrf.mxu0
          %v7026 = vadd.f32 %v6881, %v7025
          %v7027 = vpop.f32.mrf.mxu0
          %7028 = vmatprep.mubr.f32.mxu0 %v6756
          %7029 = vmatmul.mubr.f32.gmra.mxu0 %v6755
          %v7030 = vpop.f32.mrf.mxu0
          %v7031 = vadd.f32 %v6886, %v7030
          %v7032 = vpop.f32.mrf.mxu0
          %7033 = vmatprep.mubr.f32.mxu0 %v6760
          %7034 = vmatmul.mubr.f32.gmra.mxu0 %v6759
          %v7035 = vpop.f32.mrf.mxu0
          %v7036 = vadd.f32 %v6891, %v7035
          %v7037 = vpop.f32.mrf.mxu0
          %7038 = vmatprep.mubr.f32.mxu0 %v6764
          %7039 = vmatmul.mubr.f32.gmra.mxu0 %v6763
          %v7040 = vpop.f32.mrf.mxu0
          %v7041 = vadd.f32 %v6896, %v7040
          %v7042 = vpop.f32.mrf.mxu0
          %7043 = vmatprep.mubr.f32.mxu0 %v6768
          %7044 = vmatmul.mubr.f32.gmra.mxu0 %v6767
          %v7045 = vpop.f32.mrf.mxu0
          %v7046 = vadd.f32 %v6901, %v7045
          %v7047 = vpop.f32.mrf.mxu0
          %7048 = vmatprep.mubr.f32.mxu0 %v6772
          %7049 = vmatmul.mubr.f32.gmra.mxu0 %v6771
          %v7050 = vpop.f32.mrf.mxu0
          %v7051 = vadd.f32 %v6906, %v7050
          %v7052 = vpop.f32.mrf.mxu0
          %7053 = vmatprep.mubr.f32.mxu0 %v6776
          %7054 = vmatmul.mubr.f32.gmra.mxu0 %v6775
          %v7055 = vpop.f32.mrf.mxu0
          %v7056 = vadd.f32 %v6911, %v7055
          %v7057 = vpop.f32.mrf.mxu0
          %7058 = vmatprep.mubr.f32.mxu0 %v6780
          %7059 = vmatmul.mubr.f32.gmra.mxu0 %v6779
          %v7060 = vpop.f32.mrf.mxu0
          %v7061 = vadd.f32 %v6916, %v7060
          %v7062 = vpop.f32.mrf.mxu0
          %7063 = vmatprep.mubr.f32.mxu0 %v6784
          %7064 = vmatmul.mubr.f32.gmra.mxu0 %v6783
          %v7065 = vpop.f32.mrf.mxu0
          %v7066 = vadd.f32 %v6921, %v7065
          %v7067 = vpop.f32.mrf.mxu0
          %7068 = vmatprep.mubr.f32.mxu0 %v6788
          %7069 = vmatmul.mubr.f32.gmra.mxu0 %v6787
          %v7070 = vpop.f32.mrf.mxu0
          %v7071 = vadd.f32 %v6926, %v7070
          %v7072 = vpop.f32.mrf.mxu0
          %7073 = vmatprep.mubr.f32.mxu0 %v6792
          %7074 = vmatmul.mubr.f32.gmra.mxu0 %v6791
          %v7075 = vpop.f32.mrf.mxu0
          %v7076 = vadd.f32 %v6931, %v7075
          %v7077 = vpop.f32.mrf.mxu0
          %7078 = vmatprep.mubr.f32.mxu0 %v6796
          %7079 = vmatmul.mubr.f32.gmra.mxu0 %v6795
          %v7080 = vpop.f32.mrf.mxu0
          %v7081 = vadd.f32 %v6936, %v7080
          %v7082 = vpop.f32.mrf.mxu0
          %7083 = vmatprep.mubr.f32.mxu0 %v6800
          %7084 = vmatmul.mubr.f32.gmra.mxu0 %v6799
          %v7085 = vpop.f32.mrf.mxu0
          %v7086 = vadd.f32 %v6941, %v7085
          %v7087 = vpop.f32.mrf.mxu0
          %7088 = vmatprep.mubr.f32.mxu0 %v6804
          %7089 = vmatmul.mubr.f32.gmra.mxu0 %v6803
          %v7090 = vpop.f32.mrf.mxu0
          %v7091 = vadd.f32 %v6946, %v7090
          %v7092 = vpop.f32.mrf.mxu0
          %7093 = vmatprep.mubr.f32.mxu0 %v6808
          %7094 = vmatmul.mubr.f32.gmra.mxu0 %v6807
          %v7095 = vpop.f32.mrf.mxu0
          %v7096 = vadd.f32 %v6951, %v7095
          %v7097 = vpop.f32.mrf.mxu0
          %7098 = vdwg.mxu0
          %7131 = vrot.lane.b32.xlu0 %v5083, 32
          %v7132 = vpop.permute.xlu0 %7131
          %7133 = vrot.lane.b32.xlu0 %v5088, 32
          %v7134 = vpop.permute.xlu0 %7133
          %7135 = vrot.lane.b32.xlu0 %v5093, 32
          %v7136 = vpop.permute.xlu0 %7135
          %7137 = vrot.lane.b32.xlu0 %v5098, 32
          %v7138 = vpop.permute.xlu0 %7137
          %7139 = vrot.lane.b32.xlu0 %v5103, 32
          %v7140 = vpop.permute.xlu0 %7139
          %7141 = vrot.lane.b32.xlu0 %v5108, 32
          %v7142 = vpop.permute.xlu0 %7141
          %7143 = vrot.lane.b32.xlu0 %v5113, 32
          %v7144 = vpop.permute.xlu0 %7143
          %7145 = vrot.lane.b32.xlu0 %v5118, 32
          %v7146 = vpop.permute.xlu0 %7145
          %7147 = vrot.lane.b32.xlu0 %v5123, 32
          %v7148 = vpop.permute.xlu0 %7147
          %7149 = vrot.lane.b32.xlu0 %v5128, 32
          %v7150 = vpop.permute.xlu0 %7149
          %7151 = vrot.lane.b32.xlu0 %v5133, 32
          %v7152 = vpop.permute.xlu0 %7151
          %7153 = vrot.lane.b32.xlu0 %v5138, 32
          %v7154 = vpop.permute.xlu0 %7153
          %7155 = vrot.lane.b32.xlu0 %v5143, 32
          %v7156 = vpop.permute.xlu0 %7155
          %7157 = vrot.lane.b32.xlu0 %v5148, 32
          %v7158 = vpop.permute.xlu0 %7157
          %7159 = vrot.lane.b32.xlu0 %v5153, 32
          %v7160 = vpop.permute.xlu0 %7159
          %7161 = vrot.lane.b32.xlu0 %v5158, 32
          %v7162 = vpop.permute.xlu0 %7161
          %7163 = vrot.lane.b32.xlu0 %v5163, 32
          %v7164 = vpop.permute.xlu0 %7163
          %7165 = vrot.lane.b32.xlu0 %v5168, 32
          %v7166 = vpop.permute.xlu0 %7165
          %7167 = vrot.lane.b32.xlu0 %v5173, 32
          %v7168 = vpop.permute.xlu0 %7167
          %7169 = vrot.lane.b32.xlu0 %v5178, 32
          %v7170 = vpop.permute.xlu0 %7169
          %7171 = vrot.lane.b32.xlu0 %v5183, 32
          %v7172 = vpop.permute.xlu0 %7171
          %7173 = vrot.lane.b32.xlu0 %v5188, 32
          %v7174 = vpop.permute.xlu0 %7173
          %7175 = vrot.lane.b32.xlu0 %v5193, 32
          %v7176 = vpop.permute.xlu0 %7175
          %7177 = vrot.lane.b32.xlu0 %v5198, 32
          %v7178 = vpop.permute.xlu0 %7177
          %7179 = vrot.lane.b32.xlu0 %v5203, 32
          %v7180 = vpop.permute.xlu0 %7179
          %7181 = vrot.lane.b32.xlu0 %v5208, 32
          %v7182 = vpop.permute.xlu0 %7181
          %7183 = vrot.lane.b32.xlu0 %v5213, 32
          %v7184 = vpop.permute.xlu0 %7183
          %7185 = vrot.lane.b32.xlu0 %v5218, 32
          %v7186 = vpop.permute.xlu0 %7185
          %7187 = vrot.lane.b32.xlu0 %v5223, 32
          %v7188 = vpop.permute.xlu0 %7187
          %7189 = vrot.lane.b32.xlu0 %v5228, 32
          %v7190 = vpop.permute.xlu0 %7189
          %7191 = vrot.lane.b32.xlu0 %v5233, 32
          %v7192 = vpop.permute.xlu0 %7191
          %7193 = vrot.lane.b32.xlu0 %v5238, 32
          %v7194 = vpop.permute.xlu0 %7193
          %v7227 = vadd.f32 %v1215, %v7132
          %v7228 = vadd.f32 %v1220, %v7134
          %v7229 = vadd.f32 %v1225, %v7136
          %v7230 = vadd.f32 %v1230, %v7138
          %v7231 = vadd.f32 %v1235, %v7140
          %v7232 = vadd.f32 %v1240, %v7142
          %v7233 = vadd.f32 %v1245, %v7144
          %v7234 = vadd.f32 %v1250, %v7146
          %v7235 = vadd.f32 %v1255, %v7148
          %v7236 = vadd.f32 %v1260, %v7150
          %v7237 = vadd.f32 %v1265, %v7152
          %v7238 = vadd.f32 %v1270, %v7154
          %v7239 = vadd.f32 %v1275, %v7156
          %v7240 = vadd.f32 %v1280, %v7158
          %v7241 = vadd.f32 %v1285, %v7160
          %v7242 = vadd.f32 %v1290, %v7162
          %v7243 = vadd.f32 %v1295, %v7164
          %v7244 = vadd.f32 %v1300, %v7166
          %v7245 = vadd.f32 %v1305, %v7168
          %v7246 = vadd.f32 %v1310, %v7170
          %v7247 = vadd.f32 %v1315, %v7172
          %v7248 = vadd.f32 %v1320, %v7174
          %v7249 = vadd.f32 %v1325, %v7176
          %v7250 = vadd.f32 %v1330, %v7178
          %v7251 = vadd.f32 %v1335, %v7180
          %v7252 = vadd.f32 %v1340, %v7182
          %v7253 = vadd.f32 %v1345, %v7184
          %v7254 = vadd.f32 %v1350, %v7186
          %v7255 = vadd.f32 %v1355, %v7188
          %v7256 = vadd.f32 %v1360, %v7190
          %v7257 = vadd.f32 %v1365, %v7192
          %v7258 = vadd.f32 %v1370, %v7194
          %v7259 = vadd.f32 %v7227, %v3944
          %v7260 = vadd.f32 %v7228, %v3949
          %v7261 = vadd.f32 %v7229, %v3954
          %v7262 = vadd.f32 %v7230, %v3959
          %v7263 = vadd.f32 %v7231, %v3964
          %v7264 = vadd.f32 %v7232, %v3969
          %v7265 = vadd.f32 %v7233, %v3974
          %v7266 = vadd.f32 %v7234, %v3979
          %v7267 = vadd.f32 %v7235, %v3984
          %v7268 = vadd.f32 %v7236, %v3989
          %v7269 = vadd.f32 %v7237, %v3994
          %v7270 = vadd.f32 %v7238, %v3999
          %v7271 = vadd.f32 %v7239, %v4004
          %v7272 = vadd.f32 %v7240, %v4009
          %v7273 = vadd.f32 %v7241, %v4014
          %v7274 = vadd.f32 %v7242, %v4019
          %v7275 = vadd.f32 %v7243, %v4024
          %v7276 = vadd.f32 %v7244, %v4029
          %v7277 = vadd.f32 %v7245, %v4034
          %v7278 = vadd.f32 %v7246, %v4039
          %v7279 = vadd.f32 %v7247, %v4044
          %v7280 = vadd.f32 %v7248, %v4049
          %v7281 = vadd.f32 %v7249, %v4054
          %v7282 = vadd.f32 %v7250, %v4059
          %v7283 = vadd.f32 %v7251, %v4064
          %v7284 = vadd.f32 %v7252, %v4069
          %v7285 = vadd.f32 %v7253, %v4074
          %v7286 = vadd.f32 %v7254, %v4079
          %v7287 = vadd.f32 %v7255, %v4084
          %v7288 = vadd.f32 %v7256, %v4089
          %v7289 = vadd.f32 %v7257, %v4094
          %v7290 = vadd.f32 %v7258, %v4099
          %v7293 = vcombine.high %v3580, %v3580
          %v7295 = vunpack.c.l.s4 1966171168
          %v7296 = vunpack.c.0.s8 %v7295
          %v7297 = vlaneseq
          %v7298 = vshrl.u32 %v7297, 7
          %v7299 = vsub.s32 %v7296, %v7298
          %v7300 = vrot.slane %v3580, %v7299
          %v7302 = vunpack.c.l.s4 1966171168
          %v7303 = vunpack.c.0.s8 %v7302
          %v7304 = vlaneseq
          %v7305 = vshrl.u32 %v7304, 7
          %v7306 = vsub.s32 %v7303, %v7305
          %v7307 = vrot.slane %v7293, %v7306
          %v7308 = vcombine.high %v7300, %v7300
          %v7309 = vcombine.high %v7307, %v7307
          %v7311 = vunpack.c.l.s4 1966171168
          %v7312 = vunpack.c.0.s8 %v7311
          %v7313 = vlaneseq
          %v7314 = vshrl.u32 %v7313, 7
          %v7315 = vsub.s32 %v7312, %v7314
          %v7316 = vrot.slane %v7300, %v7315
          %v7318 = vunpack.c.l.s4 1966171168
          %v7319 = vunpack.c.0.s8 %v7318
          %v7320 = vlaneseq
          %v7321 = vshrl.u32 %v7320, 7
          %v7322 = vsub.s32 %v7319, %v7321
          %v7323 = vrot.slane %v7307, %v7322
          %v7325 = vunpack.c.l.s4 1966171168
          %v7326 = vunpack.c.0.s8 %v7325
          %v7327 = vlaneseq
          %v7328 = vshrl.u32 %v7327, 7
          %v7329 = vsub.s32 %v7326, %v7328
          %v7330 = vrot.slane %v7308, %v7329
          %v7332 = vunpack.c.l.s4 1966171168
          %v7333 = vunpack.c.0.s8 %v7332
          %v7334 = vlaneseq
          %v7335 = vshrl.u32 %v7334, 7
          %v7336 = vsub.s32 %v7333, %v7335
          %v7337 = vrot.slane %v7309, %v7336
          %v7338 = vcombine.high %v7316, %v7316
          %v7339 = vcombine.high %v7323, %v7323
          %v7340 = vcombine.high %v7330, %v7330
          %v7341 = vcombine.high %v7337, %v7337
          %v7342 = vcombine.high %v3585, %v3585
          %v7344 = vunpack.c.l.s4 1966171168
          %v7345 = vunpack.c.0.s8 %v7344
          %v7346 = vlaneseq
          %v7347 = vshrl.u32 %v7346, 7
          %v7348 = vsub.s32 %v7345, %v7347
          %v7349 = vrot.slane %v3585, %v7348
          %v7351 = vunpack.c.l.s4 1966171168
          %v7352 = vunpack.c.0.s8 %v7351
          %v7353 = vlaneseq
          %v7354 = vshrl.u32 %v7353, 7
          %v7355 = vsub.s32 %v7352, %v7354
          %v7356 = vrot.slane %v7342, %v7355
          %v7357 = vcombine.high %v7349, %v7349
          %v7358 = vcombine.high %v7356, %v7356
          %v7360 = vunpack.c.l.s4 1966171168
          %v7361 = vunpack.c.0.s8 %v7360
          %v7362 = vlaneseq
          %v7363 = vshrl.u32 %v7362, 7
          %v7364 = vsub.s32 %v7361, %v7363
          %v7365 = vrot.slane %v7349, %v7364
          %v7367 = vunpack.c.l.s4 1966171168
          %v7368 = vunpack.c.0.s8 %v7367
          %v7369 = vlaneseq
          %v7370 = vshrl.u32 %v7369, 7
          %v7371 = vsub.s32 %v7368, %v7370
          %v7372 = vrot.slane %v7356, %v7371
          %v7374 = vunpack.c.l.s4 1966171168
          %v7375 = vunpack.c.0.s8 %v7374
          %v7376 = vlaneseq
          %v7377 = vshrl.u32 %v7376, 7
          %v7378 = vsub.s32 %v7375, %v7377
          %v7379 = vrot.slane %v7357, %v7378
          %v7381 = vunpack.c.l.s4 1966171168
          %v7382 = vunpack.c.0.s8 %v7381
          %v7383 = vlaneseq
          %v7384 = vshrl.u32 %v7383, 7
          %v7385 = vsub.s32 %v7382, %v7384
          %v7386 = vrot.slane %v7358, %v7385
          %v7387 = vcombine.high %v7365, %v7365
          %v7388 = vcombine.high %v7372, %v7372
          %v7389 = vcombine.high %v7379, %v7379
          %v7390 = vcombine.high %v7386, %v7386
          %v7391 = vlaneseq
          %v7392 = vshrl.u32 %v7391, 7
          %v7393 = vsub.s32 0, %v7392
          %v7394 = vrot.slane %v7316, %v7393
          %v7395 = vlaneseq
          %v7396 = vshrl.u32 %v7395, 7
          %v7397 = vsub.s32 0, %v7396
          %v7398 = vrot.slane %v7330, %v7397
          %v7399 = vlaneseq
          %v7400 = vshrl.u32 %v7399, 7
          %v7401 = vsub.s32 0, %v7400
          %v7402 = vrot.slane %v7338, %v7401
          %v7403 = vlaneseq
          %v7404 = vshrl.u32 %v7403, 7
          %v7405 = vsub.s32 0, %v7404
          %v7406 = vrot.slane %v7340, %v7405
          %v7407 = vlaneseq
          %v7408 = vshrl.u32 %v7407, 7
          %v7409 = vsub.s32 0, %v7408
          %v7410 = vrot.slane %v7323, %v7409
          %v7411 = vlaneseq
          %v7412 = vshrl.u32 %v7411, 7
          %v7413 = vsub.s32 0, %v7412
          %v7414 = vrot.slane %v7337, %v7413
          %v7415 = vlaneseq
          %v7416 = vshrl.u32 %v7415, 7
          %v7417 = vsub.s32 0, %v7416
          %v7418 = vrot.slane %v7339, %v7417
          %v7419 = vlaneseq
          %v7420 = vshrl.u32 %v7419, 7
          %v7421 = vsub.s32 0, %v7420
          %v7422 = vrot.slane %v7341, %v7421
          %v7423 = vlaneseq
          %v7424 = vshrl.u32 %v7423, 7
          %v7425 = vsub.s32 0, %v7424
          %v7426 = vrot.slane %v7365, %v7425
          %v7427 = vlaneseq
          %v7428 = vshrl.u32 %v7427, 7
          %v7429 = vsub.s32 0, %v7428
          %v7430 = vrot.slane %v7379, %v7429
          %v7431 = vlaneseq
          %v7432 = vshrl.u32 %v7431, 7
          %v7433 = vsub.s32 0, %v7432
          %v7434 = vrot.slane %v7387, %v7433
          %v7435 = vlaneseq
          %v7436 = vshrl.u32 %v7435, 7
          %v7437 = vsub.s32 0, %v7436
          %v7438 = vrot.slane %v7389, %v7437
          %v7439 = vlaneseq
          %v7440 = vshrl.u32 %v7439, 7
          %v7441 = vsub.s32 0, %v7440
          %v7442 = vrot.slane %v7372, %v7441
          %v7443 = vlaneseq
          %v7444 = vshrl.u32 %v7443, 7
          %v7445 = vsub.s32 0, %v7444
          %v7446 = vrot.slane %v7386, %v7445
          %v7447 = vlaneseq
          %v7448 = vshrl.u32 %v7447, 7
          %v7449 = vsub.s32 0, %v7448
          %v7450 = vrot.slane %v7388, %v7449
          %v7451 = vlaneseq
          %v7452 = vshrl.u32 %v7451, 7
          %v7453 = vsub.s32 0, %v7452
          %v7454 = vrot.slane %v7390, %v7453
          %7455 = vrot.lane.b32.xlu0 %v7394, 32
          %v7456 = vpop.permute.xlu0 %7455
          %7457 = vrot.lane.b32.xlu0 %v7398, 32
          %v7458 = vpop.permute.xlu0 %7457
          %7459 = vrot.lane.b32.xlu0 %v7402, 32
          %v7460 = vpop.permute.xlu0 %7459
          %7461 = vrot.lane.b32.xlu0 %v7406, 32
          %v7462 = vpop.permute.xlu0 %7461
          %7463 = vrot.lane.b32.xlu0 %v7410, 32
          %v7464 = vpop.permute.xlu0 %7463
          %7465 = vrot.lane.b32.xlu0 %v7414, 32
          %v7466 = vpop.permute.xlu0 %7465
          %7467 = vrot.lane.b32.xlu0 %v7418, 32
          %v7468 = vpop.permute.xlu0 %7467
          %7469 = vrot.lane.b32.xlu0 %v7422, 32
          %v7470 = vpop.permute.xlu0 %7469
          %7471 = vrot.lane.b32.xlu0 %v7426, 32
          %v7472 = vpop.permute.xlu0 %7471
          %7473 = vrot.lane.b32.xlu0 %v7430, 32
          %v7474 = vpop.permute.xlu0 %7473
          %7475 = vrot.lane.b32.xlu0 %v7434, 32
          %v7476 = vpop.permute.xlu0 %7475
          %7477 = vrot.lane.b32.xlu0 %v7438, 32
          %v7478 = vpop.permute.xlu0 %7477
          %7479 = vrot.lane.b32.xlu0 %v7442, 32
          %v7480 = vpop.permute.xlu0 %7479
          %7481 = vrot.lane.b32.xlu0 %v7446, 32
          %v7482 = vpop.permute.xlu0 %7481
          %7483 = vrot.lane.b32.xlu0 %v7450, 32
          %v7484 = vpop.permute.xlu0 %7483
          %7485 = vrot.lane.b32.xlu0 %v7454, 32
          %v7486 = vpop.permute.xlu0 %7485
          %v7503 = vadd.f32 %v7259, %v7456
          %v7504 = vadd.f32 %v7260, %v7456
          %v7505 = vadd.f32 %v7261, %v7458
          %v7506 = vadd.f32 %v7262, %v7458
          %v7507 = vadd.f32 %v7263, %v7460
          %v7508 = vadd.f32 %v7264, %v7460
          %v7509 = vadd.f32 %v7265, %v7462
          %v7510 = vadd.f32 %v7266, %v7462
          %v7511 = vadd.f32 %v7267, %v7464
          %v7512 = vadd.f32 %v7268, %v7464
          %v7513 = vadd.f32 %v7269, %v7466
          %v7514 = vadd.f32 %v7270, %v7466
          %v7515 = vadd.f32 %v7271, %v7468
          %v7516 = vadd.f32 %v7272, %v7468
          %v7517 = vadd.f32 %v7273, %v7470
          %v7518 = vadd.f32 %v7274, %v7470
          %v7519 = vadd.f32 %v7275, %v7472
          %v7520 = vadd.f32 %v7276, %v7472
          %v7521 = vadd.f32 %v7277, %v7474
          %v7522 = vadd.f32 %v7278, %v7474
          %v7523 = vadd.f32 %v7279, %v7476
          %v7524 = vadd.f32 %v7280, %v7476
          %v7525 = vadd.f32 %v7281, %v7478
          %v7526 = vadd.f32 %v7282, %v7478
          %v7527 = vadd.f32 %v7283, %v7480
          %v7528 = vadd.f32 %v7284, %v7480
          %v7529 = vadd.f32 %v7285, %v7482
          %v7530 = vadd.f32 %v7286, %v7482
          %v7531 = vadd.f32 %v7287, %v7484
          %v7532 = vadd.f32 %v7288, %v7484
          %v7533 = vadd.f32 %v7289, %v7486
          %v7534 = vadd.f32 %v7290, %v7486
          %v7535 = vmul.f32 %v7503, 0.1
          %v7536 = vmul.f32 %v7504, 0.1
          %v7537 = vmul.f32 %v7505, 0.1
          %v7538 = vmul.f32 %v7506, 0.1
          %v7539 = vmul.f32 %v7507, 0.1
          %v7540 = vmul.f32 %v7508, 0.1
          %v7541 = vmul.f32 %v7509, 0.1
          %v7542 = vmul.f32 %v7510, 0.1
          %v7543 = vmul.f32 %v7511, 0.1
          %v7544 = vmul.f32 %v7512, 0.1
          %v7545 = vmul.f32 %v7513, 0.1
          %v7546 = vmul.f32 %v7514, 0.1
          %v7547 = vmul.f32 %v7515, 0.1
          %v7548 = vmul.f32 %v7516, 0.1
          %v7549 = vmul.f32 %v7517, 0.1
          %v7550 = vmul.f32 %v7518, 0.1
          %v7551 = vmul.f32 %v7519, 0.1
          %v7552 = vmul.f32 %v7520, 0.1
          %v7553 = vmul.f32 %v7521, 0.1
          %v7554 = vmul.f32 %v7522, 0.1
          %v7555 = vmul.f32 %v7523, 0.1
          %v7556 = vmul.f32 %v7524, 0.1
          %v7557 = vmul.f32 %v7525, 0.1
          %v7558 = vmul.f32 %v7526, 0.1
          %v7559 = vmul.f32 %v7527, 0.1
          %v7560 = vmul.f32 %v7528, 0.1
          %v7561 = vmul.f32 %v7529, 0.1
          %v7562 = vmul.f32 %v7530, 0.1
          %v7563 = vmul.f32 %v7531, 0.1
          %v7564 = vmul.f32 %v7532, 0.1
          %v7565 = vmul.f32 %v7533, 0.1
          %v7566 = vmul.f32 %v7534, 0.1
          %v7567 = vmax.f32 %v7503, %v7535
          %v7568 = vmax.f32 %v7504, %v7536
          %v7569 = vmax.f32 %v7505, %v7537
          %v7570 = vmax.f32 %v7506, %v7538
          %v7571 = vmax.f32 %v7507, %v7539
          %v7572 = vmax.f32 %v7508, %v7540
          %v7573 = vmax.f32 %v7509, %v7541
          %v7574 = vmax.f32 %v7510, %v7542
          %v7575 = vmax.f32 %v7511, %v7543
          %v7576 = vmax.f32 %v7512, %v7544
          %v7577 = vmax.f32 %v7513, %v7545
          %v7578 = vmax.f32 %v7514, %v7546
          %v7579 = vmax.f32 %v7515, %v7547
          %v7580 = vmax.f32 %v7516, %v7548
          %v7581 = vmax.f32 %v7517, %v7549
          %v7582 = vmax.f32 %v7518, %v7550
          %v7583 = vmax.f32 %v7519, %v7551
          %v7584 = vmax.f32 %v7520, %v7552
          %v7585 = vmax.f32 %v7521, %v7553
          %v7586 = vmax.f32 %v7522, %v7554
          %v7587 = vmax.f32 %v7523, %v7555
          %v7588 = vmax.f32 %v7524, %v7556
          %v7589 = vmax.f32 %v7525, %v7557
          %v7590 = vmax.f32 %v7526, %v7558
          %v7591 = vmax.f32 %v7527, %v7559
          %v7592 = vmax.f32 %v7528, %v7560
          %v7593 = vmax.f32 %v7529, %v7561
          %v7594 = vmax.f32 %v7530, %v7562
          %v7595 = vmax.f32 %v7531, %v7563
          %v7596 = vmax.f32 %v7532, %v7564
          %v7597 = vmax.f32 %v7533, %v7565
          %v7598 = vmax.f32 %v7534, %v7566
          %7615 = vrot.lane.b32.xlu0 %v7021, 32
          %v7616 = vpop.permute.xlu0 %7615
          %7617 = vrot.lane.b32.xlu0 %v7026, 32
          %v7618 = vpop.permute.xlu0 %7617
          %7619 = vrot.lane.b32.xlu0 %v7031, 32
          %v7620 = vpop.permute.xlu0 %7619
          %7621 = vrot.lane.b32.xlu0 %v7036, 32
          %v7622 = vpop.permute.xlu0 %7621
          %7623 = vrot.lane.b32.xlu0 %v7041, 32
          %v7624 = vpop.permute.xlu0 %7623
          %7625 = vrot.lane.b32.xlu0 %v7046, 32
          %v7626 = vpop.permute.xlu0 %7625
          %7627 = vrot.lane.b32.xlu0 %v7051, 32
          %v7628 = vpop.permute.xlu0 %7627
          %7629 = vrot.lane.b32.xlu0 %v7056, 32
          %v7630 = vpop.permute.xlu0 %7629
          %7631 = vrot.lane.b32.xlu0 %v7061, 32
          %v7632 = vpop.permute.xlu0 %7631
          %7633 = vrot.lane.b32.xlu0 %v7066, 32
          %v7634 = vpop.permute.xlu0 %7633
          %7635 = vrot.lane.b32.xlu0 %v7071, 32
          %v7636 = vpop.permute.xlu0 %7635
          %7637 = vrot.lane.b32.xlu0 %v7076, 32
          %v7638 = vpop.permute.xlu0 %7637
          %7639 = vrot.lane.b32.xlu0 %v7081, 32
          %v7640 = vpop.permute.xlu0 %7639
          %7641 = vrot.lane.b32.xlu0 %v7086, 32
          %v7642 = vpop.permute.xlu0 %7641
          %7643 = vrot.lane.b32.xlu0 %v7091, 32
          %v7644 = vpop.permute.xlu0 %7643
          %7645 = vrot.lane.b32.xlu0 %v7096, 32
          %v7646 = vpop.permute.xlu0 %7645
          %v7663 = vadd.f32 %v968, %v7616
          %v7664 = vadd.f32 %v973, %v7618
          %v7665 = vadd.f32 %v978, %v7620
          %v7666 = vadd.f32 %v983, %v7622
          %v7667 = vadd.f32 %v988, %v7624
          %v7668 = vadd.f32 %v993, %v7626
          %v7669 = vadd.f32 %v998, %v7628
          %v7670 = vadd.f32 %v1003, %v7630
          %v7671 = vadd.f32 %v1008, %v7632
          %v7672 = vadd.f32 %v1013, %v7634
          %v7673 = vadd.f32 %v1018, %v7636
          %v7674 = vadd.f32 %v1023, %v7638
          %v7675 = vadd.f32 %v1028, %v7640
          %v7676 = vadd.f32 %v1033, %v7642
          %v7677 = vadd.f32 %v1038, %v7644
          %v7678 = vadd.f32 %v1043, %v7646
          %v7679 = vadd.f32 %v7663, %v3703
          %v7680 = vadd.f32 %v7664, %v3708
          %v7681 = vadd.f32 %v7665, %v3713
          %v7682 = vadd.f32 %v7666, %v3718
          %v7683 = vadd.f32 %v7667, %v3723
          %v7684 = vadd.f32 %v7668, %v3728
          %v7685 = vadd.f32 %v7669, %v3733
          %v7686 = vadd.f32 %v7670, %v3738
          %v7687 = vadd.f32 %v7671, %v3743
          %v7688 = vadd.f32 %v7672, %v3748
          %v7689 = vadd.f32 %v7673, %v3753
          %v7690 = vadd.f32 %v7674, %v3758
          %v7691 = vadd.f32 %v7675, %v3763
          %v7692 = vadd.f32 %v7676, %v3768
          %v7693 = vadd.f32 %v7677, %v3773
          %v7694 = vadd.f32 %v7678, %v3778
          %v7711 = vadd.f32 %v7679, %v7394
          %v7712 = vadd.f32 %v7680, %v7398
          %v7713 = vadd.f32 %v7681, %v7402
          %v7714 = vadd.f32 %v7682, %v7406
          %v7715 = vadd.f32 %v7683, %v7410
          %v7716 = vadd.f32 %v7684, %v7414
          %v7717 = vadd.f32 %v7685, %v7418
          %v7718 = vadd.f32 %v7686, %v7422
          %v7719 = vadd.f32 %v7687, %v7426
          %v7720 = vadd.f32 %v7688, %v7430
          %v7721 = vadd.f32 %v7689, %v7434
          %v7722 = vadd.f32 %v7690, %v7438
          %v7723 = vadd.f32 %v7691, %v7442
          %v7724 = vadd.f32 %v7692, %v7446
          %v7725 = vadd.f32 %v7693, %v7450
          %v7726 = vadd.f32 %v7694, %v7454
          %v7727 = vmul.f32 %v7711, 0.1
          %v7728 = vmul.f32 %v7712, 0.1
          %v7729 = vmul.f32 %v7713, 0.1
          %v7730 = vmul.f32 %v7714, 0.1
          %v7731 = vmul.f32 %v7715, 0.1
          %v7732 = vmul.f32 %v7716, 0.1
          %v7733 = vmul.f32 %v7717, 0.1
          %v7734 = vmul.f32 %v7718, 0.1
          %v7735 = vmul.f32 %v7719, 0.1
          %v7736 = vmul.f32 %v7720, 0.1
          %v7737 = vmul.f32 %v7721, 0.1
          %v7738 = vmul.f32 %v7722, 0.1
          %v7739 = vmul.f32 %v7723, 0.1
          %v7740 = vmul.f32 %v7724, 0.1
          %v7741 = vmul.f32 %v7725, 0.1
          %v7742 = vmul.f32 %v7726, 0.1
          %v7743 = vmax.f32 %v7711, %v7727
          %v7744 = vmax.f32 %v7712, %v7728
          %v7745 = vmax.f32 %v7713, %v7729
          %v7746 = vmax.f32 %v7714, %v7730
          %v7747 = vmax.f32 %v7715, %v7731
          %v7748 = vmax.f32 %v7716, %v7732
          %v7749 = vmax.f32 %v7717, %v7733
          %v7750 = vmax.f32 %v7718, %v7734
          %v7751 = vmax.f32 %v7719, %v7735
          %v7752 = vmax.f32 %v7720, %v7736
          %v7753 = vmax.f32 %v7721, %v7737
          %v7754 = vmax.f32 %v7722, %v7738
          %v7755 = vmax.f32 %v7723, %v7739
          %v7756 = vmax.f32 %v7724, %v7740
          %v7757 = vmax.f32 %v7725, %v7741
          %v7758 = vmax.f32 %v7726, %v7742
          %vm7759 = vcmask 523520
          %v7760 = vsel %vm7759, %v7567, 0.0
          %v7761 = vsel %vm7759, %v7568, 0.0
          %v7762 = vadd.f32 %v7760, %v7761
          %v7763 = vrot.slane %v7762, 4
          %v7764 = vadd.f32 %v7762, %v7763
          %v7765 = vrot.slane %v7764, 2
          %v7766 = vadd.f32 %v7764, %v7765
          %v7767 = vrot.slane %v7766, 1
          %v7768 = vadd.f32 %v7766, %v7767
          %v7769 = vsel %vm7759, %v7569, 0.0
          %v7770 = vsel %vm7759, %v7570, 0.0
          %v7771 = vadd.f32 %v7769, %v7770
          %v7772 = vrot.slane %v7771, 4
          %v7773 = vadd.f32 %v7771, %v7772
          %v7774 = vrot.slane %v7773, 2
          %v7775 = vadd.f32 %v7773, %v7774
          %v7776 = vrot.slane %v7775, 1
          %v7777 = vadd.f32 %v7775, %v7776
          %v7778 = vsel %vm7759, %v7571, 0.0
          %v7779 = vsel %vm7759, %v7572, 0.0
          %v7780 = vadd.f32 %v7778, %v7779
          %v7781 = vrot.slane %v7780, 4
          %v7782 = vadd.f32 %v7780, %v7781
          %v7783 = vrot.slane %v7782, 2
          %v7784 = vadd.f32 %v7782, %v7783
          %v7785 = vrot.slane %v7784, 1
          %v7786 = vadd.f32 %v7784, %v7785
          %v7787 = vsel %vm7759, %v7573, 0.0
          %v7788 = vsel %vm7759, %v7574, 0.0
          %v7789 = vadd.f32 %v7787, %v7788
          %v7790 = vrot.slane %v7789, 4
          %v7791 = vadd.f32 %v7789, %v7790
          %v7792 = vrot.slane %v7791, 2
          %v7793 = vadd.f32 %v7791, %v7792
          %v7794 = vrot.slane %v7793, 1
          %v7795 = vadd.f32 %v7793, %v7794
          %v7796 = vsel %vm7759, %v7575, 0.0
          %v7797 = vsel %vm7759, %v7576, 0.0
          %v7798 = vadd.f32 %v7796, %v7797
          %v7799 = vrot.slane %v7798, 4
          %v7800 = vadd.f32 %v7798, %v7799
          %v7801 = vrot.slane %v7800, 2
          %v7802 = vadd.f32 %v7800, %v7801
          %v7803 = vrot.slane %v7802, 1
          %v7804 = vadd.f32 %v7802, %v7803
          %v7805 = vsel %vm7759, %v7577, 0.0
          %v7806 = vsel %vm7759, %v7578, 0.0
          %v7807 = vadd.f32 %v7805, %v7806
          %v7808 = vrot.slane %v7807, 4
          %v7809 = vadd.f32 %v7807, %v7808
          %v7810 = vrot.slane %v7809, 2
          %v7811 = vadd.f32 %v7809, %v7810
          %v7812 = vrot.slane %v7811, 1
          %v7813 = vadd.f32 %v7811, %v7812
          %v7814 = vsel %vm7759, %v7579, 0.0
          %v7815 = vsel %vm7759, %v7580, 0.0
          %v7816 = vadd.f32 %v7814, %v7815
          %v7817 = vrot.slane %v7816, 4
          %v7818 = vadd.f32 %v7816, %v7817
          %v7819 = vrot.slane %v7818, 2
          %v7820 = vadd.f32 %v7818, %v7819
          %v7821 = vrot.slane %v7820, 1
          %v7822 = vadd.f32 %v7820, %v7821
          %v7823 = vsel %vm7759, %v7581, 0.0
          %v7824 = vsel %vm7759, %v7582, 0.0
          %v7825 = vadd.f32 %v7823, %v7824
          %v7826 = vrot.slane %v7825, 4
          %v7827 = vadd.f32 %v7825, %v7826
          %v7828 = vrot.slane %v7827, 2
          %v7829 = vadd.f32 %v7827, %v7828
          %v7830 = vrot.slane %v7829, 1
          %v7831 = vadd.f32 %v7829, %v7830
          %v7832 = vsel %vm7759, %v7583, 0.0
          %v7833 = vsel %vm7759, %v7584, 0.0
          %v7834 = vadd.f32 %v7832, %v7833
          %v7835 = vrot.slane %v7834, 4
          %v7836 = vadd.f32 %v7834, %v7835
          %v7837 = vrot.slane %v7836, 2
          %v7838 = vadd.f32 %v7836, %v7837
          %v7839 = vrot.slane %v7838, 1
          %v7840 = vadd.f32 %v7838, %v7839
          %v7841 = vsel %vm7759, %v7585, 0.0
          %v7842 = vsel %vm7759, %v7586, 0.0
          %v7843 = vadd.f32 %v7841, %v7842
          %v7844 = vrot.slane %v7843, 4
          %v7845 = vadd.f32 %v7843, %v7844
          %v7846 = vrot.slane %v7845, 2
          %v7847 = vadd.f32 %v7845, %v7846
          %v7848 = vrot.slane %v7847, 1
          %v7849 = vadd.f32 %v7847, %v7848
          %v7850 = vsel %vm7759, %v7587, 0.0
          %v7851 = vsel %vm7759, %v7588, 0.0
          %v7852 = vadd.f32 %v7850, %v7851
          %v7853 = vrot.slane %v7852, 4
          %v7854 = vadd.f32 %v7852, %v7853
          %v7855 = vrot.slane %v7854, 2
          %v7856 = vadd.f32 %v7854, %v7855
          %v7857 = vrot.slane %v7856, 1
          %v7858 = vadd.f32 %v7856, %v7857
          %v7859 = vsel %vm7759, %v7589, 0.0
          %v7860 = vsel %vm7759, %v7590, 0.0
          %v7861 = vadd.f32 %v7859, %v7860
          %v7862 = vrot.slane %v7861, 4
          %v7863 = vadd.f32 %v7861, %v7862
          %v7864 = vrot.slane %v7863, 2
          %v7865 = vadd.f32 %v7863, %v7864
          %v7866 = vrot.slane %v7865, 1
          %v7867 = vadd.f32 %v7865, %v7866
          %v7868 = vsel %vm7759, %v7591, 0.0
          %v7869 = vsel %vm7759, %v7592, 0.0
          %v7870 = vadd.f32 %v7868, %v7869
          %v7871 = vrot.slane %v7870, 4
          %v7872 = vadd.f32 %v7870, %v7871
          %v7873 = vrot.slane %v7872, 2
          %v7874 = vadd.f32 %v7872, %v7873
          %v7875 = vrot.slane %v7874, 1
          %v7876 = vadd.f32 %v7874, %v7875
          %v7877 = vsel %vm7759, %v7593, 0.0
          %v7878 = vsel %vm7759, %v7594, 0.0
          %v7879 = vadd.f32 %v7877, %v7878
          %v7880 = vrot.slane %v7879, 4
          %v7881 = vadd.f32 %v7879, %v7880
          %v7882 = vrot.slane %v7881, 2
          %v7883 = vadd.f32 %v7881, %v7882
          %v7884 = vrot.slane %v7883, 1
          %v7885 = vadd.f32 %v7883, %v7884
          %v7886 = vsel %vm7759, %v7595, 0.0
          %v7887 = vsel %vm7759, %v7596, 0.0
          %v7888 = vadd.f32 %v7886, %v7887
          %v7889 = vrot.slane %v7888, 4
          %v7890 = vadd.f32 %v7888, %v7889
          %v7891 = vrot.slane %v7890, 2
          %v7892 = vadd.f32 %v7890, %v7891
          %v7893 = vrot.slane %v7892, 1
          %v7894 = vadd.f32 %v7892, %v7893
          %v7895 = vsel %vm7759, %v7597, 0.0
          %v7896 = vsel %vm7759, %v7598, 0.0
          %v7897 = vadd.f32 %v7895, %v7896
          %v7898 = vrot.slane %v7897, 4
          %v7899 = vadd.f32 %v7897, %v7898
          %v7900 = vrot.slane %v7899, 2
          %v7901 = vadd.f32 %v7899, %v7900
          %v7902 = vrot.slane %v7901, 1
          %v7903 = vadd.f32 %v7901, %v7902
          %v7904 = vmul.f32 %v7768, 0.0625
          %v7905 = vmul.f32 %v7777, 0.0625
          %v7906 = vmul.f32 %v7786, 0.0625
          %v7907 = vmul.f32 %v7795, 0.0625
          %v7908 = vmul.f32 %v7804, 0.0625
          %v7909 = vmul.f32 %v7813, 0.0625
          %v7910 = vmul.f32 %v7822, 0.0625
          %v7911 = vmul.f32 %v7831, 0.0625
          %v7912 = vmul.f32 %v7840, 0.0625
          %v7913 = vmul.f32 %v7849, 0.0625
          %v7914 = vmul.f32 %v7858, 0.0625
          %v7915 = vmul.f32 %v7867, 0.0625
          %v7916 = vmul.f32 %v7876, 0.0625
          %v7917 = vmul.f32 %v7885, 0.0625
          %v7918 = vmul.f32 %v7894, 0.0625
          %v7919 = vmul.f32 %v7903, 0.0625
          %v7920 = vsel %vm7759, %v7743, 0.0
          %v7921 = vrot.slane %v7920, 4
          %v7922 = vadd.f32 %v7920, %v7921
          %v7923 = vrot.slane %v7922, 2
          %v7924 = vadd.f32 %v7922, %v7923
          %v7925 = vrot.slane %v7924, 1
          %v7926 = vadd.f32 %v7924, %v7925
          %v7927 = vsel %vm7759, %v7744, 0.0
          %v7928 = vrot.slane %v7927, 4
          %v7929 = vadd.f32 %v7927, %v7928
          %v7930 = vrot.slane %v7929, 2
          %v7931 = vadd.f32 %v7929, %v7930
          %v7932 = vrot.slane %v7931, 1
          %v7933 = vadd.f32 %v7931, %v7932
          %v7934 = vsel %vm7759, %v7745, 0.0
          %v7935 = vrot.slane %v7934, 4
          %v7936 = vadd.f32 %v7934, %v7935
          %v7937 = vrot.slane %v7936, 2
          %v7938 = vadd.f32 %v7936, %v7937
          %v7939 = vrot.slane %v7938, 1
          %v7940 = vadd.f32 %v7938, %v7939
          %v7941 = vsel %vm7759, %v7746, 0.0
          %v7942 = vrot.slane %v7941, 4
          %v7943 = vadd.f32 %v7941, %v7942
          %v7944 = vrot.slane %v7943, 2
          %v7945 = vadd.f32 %v7943, %v7944
          %v7946 = vrot.slane %v7945, 1
          %v7947 = vadd.f32 %v7945, %v7946
          %v7948 = vsel %vm7759, %v7747, 0.0
          %v7949 = vrot.slane %v7948, 4
          %v7950 = vadd.f32 %v7948, %v7949
          %v7951 = vrot.slane %v7950, 2
          %v7952 = vadd.f32 %v7950, %v7951
          %v7953 = vrot.slane %v7952, 1
          %v7954 = vadd.f32 %v7952, %v7953
          %v7955 = vsel %vm7759, %v7748, 0.0
          %v7956 = vrot.slane %v7955, 4
          %v7957 = vadd.f32 %v7955, %v7956
          %v7958 = vrot.slane %v7957, 2
          %v7959 = vadd.f32 %v7957, %v7958
          %v7960 = vrot.slane %v7959, 1
          %v7961 = vadd.f32 %v7959, %v7960
          %v7962 = vsel %vm7759, %v7749, 0.0
          %v7963 = vrot.slane %v7962, 4
          %v7964 = vadd.f32 %v7962, %v7963
          %v7965 = vrot.slane %v7964, 2
          %v7966 = vadd.f32 %v7964, %v7965
          %v7967 = vrot.slane %v7966, 1
          %v7968 = vadd.f32 %v7966, %v7967
          %v7969 = vsel %vm7759, %v7750, 0.0
          %v7970 = vrot.slane %v7969, 4
          %v7971 = vadd.f32 %v7969, %v7970
          %v7972 = vrot.slane %v7971, 2
          %v7973 = vadd.f32 %v7971, %v7972
          %v7974 = vrot.slane %v7973, 1
          %v7975 = vadd.f32 %v7973, %v7974
          %v7976 = vsel %vm7759, %v7751, 0.0
          %v7977 = vrot.slane %v7976, 4
          %v7978 = vadd.f32 %v7976, %v7977
          %v7979 = vrot.slane %v7978, 2
          %v7980 = vadd.f32 %v7978, %v7979
          %v7981 = vrot.slane %v7980, 1
          %v7982 = vadd.f32 %v7980, %v7981
          %v7983 = vsel %vm7759, %v7752, 0.0
          %v7984 = vrot.slane %v7983, 4
          %v7985 = vadd.f32 %v7983, %v7984
          %v7986 = vrot.slane %v7985, 2
          %v7987 = vadd.f32 %v7985, %v7986
          %v7988 = vrot.slane %v7987, 1
          %v7989 = vadd.f32 %v7987, %v7988
          %v7990 = vsel %vm7759, %v7753, 0.0
          %v7991 = vrot.slane %v7990, 4
          %v7992 = vadd.f32 %v7990, %v7991
          %v7993 = vrot.slane %v7992, 2
          %v7994 = vadd.f32 %v7992, %v7993
          %v7995 = vrot.slane %v7994, 1
          %v7996 = vadd.f32 %v7994, %v7995
          %v7997 = vsel %vm7759, %v7754, 0.0
          %v7998 = vrot.slane %v7997, 4
          %v7999 = vadd.f32 %v7997, %v7998
          %v8000 = vrot.slane %v7999, 2
          %v8001 = vadd.f32 %v7999, %v8000
          %v8002 = vrot.slane %v8001, 1
          %v8003 = vadd.f32 %v8001, %v8002
          %v8004 = vsel %vm7759, %v7755, 0.0
          %v8005 = vrot.slane %v8004, 4
          %v8006 = vadd.f32 %v8004, %v8005
          %v8007 = vrot.slane %v8006, 2
          %v8008 = vadd.f32 %v8006, %v8007
          %v8009 = vrot.slane %v8008, 1
          %v8010 = vadd.f32 %v8008, %v8009
          %v8011 = vsel %vm7759, %v7756, 0.0
          %v8012 = vrot.slane %v8011, 4
          %v8013 = vadd.f32 %v8011, %v8012
          %v8014 = vrot.slane %v8013, 2
          %v8015 = vadd.f32 %v8013, %v8014
          %v8016 = vrot.slane %v8015, 1
          %v8017 = vadd.f32 %v8015, %v8016
          %v8018 = vsel %vm7759, %v7757, 0.0
          %v8019 = vrot.slane %v8018, 4
          %v8020 = vadd.f32 %v8018, %v8019
          %v8021 = vrot.slane %v8020, 2
          %v8022 = vadd.f32 %v8020, %v8021
          %v8023 = vrot.slane %v8022, 1
          %v8024 = vadd.f32 %v8022, %v8023
          %v8025 = vsel %vm7759, %v7758, 0.0
          %v8026 = vrot.slane %v8025, 4
          %v8027 = vadd.f32 %v8025, %v8026
          %v8028 = vrot.slane %v8027, 2
          %v8029 = vadd.f32 %v8027, %v8028
          %v8030 = vrot.slane %v8029, 1
          %v8031 = vadd.f32 %v8029, %v8030
          %v8032 = vmul.f32 %v7926, 0.125
          %v8033 = vmul.f32 %v7933, 0.125
          %v8034 = vmul.f32 %v7940, 0.125
          %v8035 = vmul.f32 %v7947, 0.125
          %v8036 = vmul.f32 %v7954, 0.125
          %v8037 = vmul.f32 %v7961, 0.125
          %v8038 = vmul.f32 %v7968, 0.125
          %v8039 = vmul.f32 %v7975, 0.125
          %v8040 = vmul.f32 %v7982, 0.125
          %v8041 = vmul.f32 %v7989, 0.125
          %v8042 = vmul.f32 %v7996, 0.125
          %v8043 = vmul.f32 %v8003, 0.125
          %v8044 = vmul.f32 %v8010, 0.125
          %v8045 = vmul.f32 %v8017, 0.125
          %v8046 = vmul.f32 %v8024, 0.125
          %v8047 = vmul.f32 %v8031, 0.125
          %8048 = vrot.lane.b32.xlu0 %v3580, 96
          %v8049 = vpop.permute.xlu0 %8048
          %8050 = vrot.lane.b32.xlu0 %v3585, 96
          %v8051 = vpop.permute.xlu0 %8050
          %v8054 = vadd.f32 %v1452, %v8049
          %v8055 = vadd.f32 %v1457, %v8051
          %vm8072 = vcmask 1041409
          %v8073 = vsel %vm8072, %v7905, %v7904
          %vm8074 = vcmask 1042434
          %v8075 = vsel %vm8074, %v7906, %v8073
          %vm8076 = vcmask 1043459
          %v8077 = vsel %vm8076, %v7907, %v8075
          %vm8078 = vcmask 1044484
          %v8079 = vsel %vm8078, %v7908, %v8077
          %vm8080 = vcmask 1045509
          %v8081 = vsel %vm8080, %v7909, %v8079
          %vm8082 = vcmask 1046534
          %v8083 = vsel %vm8082, %v7910, %v8081
          %vm8084 = vcmask 1047559
          %v8085 = vsel %vm8084, %v7911, %v8083
          %v8086 = vsel %vm8072, %v7913, %v7912
          %v8087 = vsel %vm8074, %v7914, %v8086
          %v8088 = vsel %vm8076, %v7915, %v8087
          %v8089 = vsel %vm8078, %v7916, %v8088
          %v8090 = vsel %vm8080, %v7917, %v8089
          %v8091 = vsel %vm8082, %v7918, %v8090
          %v8092 = vsel %vm8084, %v7919, %v8091
          %8093 = vrot.lane.b32.xlu0 %v8085, 96
          %v8094 = vpop.permute.xlu0 %8093
          %8095 = vrot.lane.b32.xlu0 %v8092, 96
          %v8096 = vpop.permute.xlu0 %8095
          %v8115 = vsel %vm8072, %v8033, %v8032
          %v8116 = vsel %vm8074, %v8034, %v8115
          %v8117 = vsel %vm8076, %v8035, %v8116
          %v8118 = vsel %vm8078, %v8036, %v8117
          %v8119 = vsel %vm8080, %v8037, %v8118
          %v8120 = vsel %vm8082, %v8038, %v8119
          %v8121 = vsel %vm8084, %v8039, %v8120
          %v8122 = vsel %vm8072, %v8041, %v8040
          %v8123 = vsel %vm8074, %v8042, %v8122
          %v8124 = vsel %vm8076, %v8043, %v8123
          %v8125 = vsel %vm8078, %v8044, %v8124
          %v8126 = vsel %vm8080, %v8045, %v8125
          %v8127 = vsel %vm8082, %v8046, %v8126
          %v8128 = vsel %vm8084, %v8047, %v8127
          %v8131 = vsel %vm3506, %v8094, %v8121
          %v8132 = vsel %vm3506, %v8096, %v8128
          %v8134 = vsel %vm4550, %v8131, 0
          %v8137 = vsel %vm4550, %v8132, 0
          %8139 = vmatprep.subr.mxu0 0.0
          %8140 = vmatpush1.msra.mxu0 0.0
          %8141 = vmatprep.subr.mxu0 0.0
          %8142 = vmatpush1.msra.mxu0 0.0
          %8143 = vmatprep.subr.mxu0 0.0
          %8144 = vmatpush1.msra.mxu0 0.0
          %8145 = vmatprep.subr.mxu0 0.0
          %8146 = vmatpush1.msra.mxu0 0.0
          %8147 = vmatprep.subr.mxu0 0.0
          %8148 = vmatpush1.msra.mxu0 0.0
          %8149 = vmatprep.subr.mxu0 0.0
          %8150 = vmatpush1.msra.mxu0 0.0
          %8151 = vmatprep.subr.mxu0 0.0
          %8152 = vmatpush1.msra.mxu0 0.0
          %8153 = vmatprep.subr.mxu0 0.0
          %8154 = vmatpush1.msra.mxu0 0.0
          %8155 = vmatprep.subr.mxu0 0.0
          %8156 = vmatpush1.msra.mxu0 %v3353
          %8157 = vmatprep.subr.mxu0 0.0
          %8158 = vmatpush1.msra.mxu0 %v3352
          %8159 = vmatprep.subr.mxu0 0.0
          %8160 = vmatpush1.msra.mxu0 %v3351
          %8161 = vmatprep.subr.mxu0 0.0
          %8162 = vmatpush1.msra.mxu0 %v3350
          %8163 = vmatprep.subr.mxu0 0.0
          %8164 = vmatpush1.msra.mxu0 %v3349
          %8165 = vmatprep.subr.mxu0 0.0
          %8166 = vmatpush1.msra.mxu0 %v3348
          %8167 = vmatprep.subr.mxu0 0.0
          %8168 = vmatpush1.msra.mxu0 %v3347
          %8169 = vmatprep.subr.mxu0 0.0
          %8170 = vmatpush1.msra.mxu0 %v3346
          %8171 = vmatprep.subr.mxu0 0.0
          %8172 = vmatpush2.msra.mxu0 0.0
          %8173 = vmatprep.subr.mxu0 0.0
          %8174 = vmatpush2.msra.mxu0 0.0
          %8175 = vmatprep.subr.mxu0 0.0
          %8176 = vmatpush2.msra.mxu0 0.0
          %8177 = vmatprep.subr.mxu0 0.0
          %8178 = vmatpush2.msra.mxu0 0.0
          %8179 = vmatprep.subr.mxu0 0.0
          %8180 = vmatpush2.msra.mxu0 0.0
          %8181 = vmatprep.subr.mxu0 0.0
          %8182 = vmatpush2.msra.mxu0 0.0
          %8183 = vmatprep.subr.mxu0 0.0
          %8184 = vmatpush2.msra.mxu0 0.0
          %8185 = vmatprep.subr.mxu0 0.0
          %8186 = vmatpush2.msra.mxu0 0.0
          %8187 = vmatprep.subr.mxu0 0.0
          %8188 = vmatpush2.msra.mxu0 0.0
          %8189 = vmatprep.subr.mxu0 0.0
          %8190 = vmatpush2.msra.mxu0 0.0
          %8191 = vmatprep.subr.mxu0 0.0
          %8192 = vmatpush2.msra.mxu0 0.0
          %8193 = vmatprep.subr.mxu0 0.0
          %8194 = vmatpush2.msra.mxu0 0.0
          %8195 = vmatprep.subr.mxu0 0.0
          %8196 = vmatpush2.msra.mxu0 0.0
          %8197 = vmatprep.subr.mxu0 0.0
          %8198 = vmatpush2.msra.mxu0 0.0
          %8199 = vmatprep.subr.mxu0 0.0
          %8200 = vmatpush2.msra.mxu0 0.0
          %8201 = vmatprep.subr.mxu0 0.0
          %8202 = vmatpush2.msra.mxu0 0.0
          %8203 = vmatprep.mubr.f32.mxu0 0.0
          %8204 = vmatmul.mubr.f32.gmra.mxu0 %v8134
          %v8205 = vpop.f32.mrf.mxu0
          %v8206 = vadd.f32 0.0, %v8205
          %v8207 = vpop.f32.mrf.mxu0
          %8208 = vmatprep.mubr.f32.mxu0 0.0
          %8209 = vmatmul.mubr.f32.gmra.mxu0 %v8137
          %v8210 = vpop.f32.mrf.mxu0
          %v8211 = vadd.f32 0.0, %v8210
          %v8212 = vpop.f32.mrf.mxu0
          %8213 = vdwg.mxu0
          %8216 = vrot.lane.b32.xlu0 %v8206, 32
          %v8217 = vpop.permute.xlu0 %8216
          %8218 = vrot.lane.b32.xlu0 %v8211, 32
          %v8219 = vpop.permute.xlu0 %8218
          %v8222 = vadd.f32 %v8054, %v8217
          %v8223 = vadd.f32 %v8055, %v8219
          %v8224 = vmul.f32 %v8222, 0.1
          %v8225 = vmul.f32 %v8223, 0.1
          %v8226 = vmax.f32 %v8222, %v8224
          %v8227 = vmax.f32 %v8223, %v8225
          %8244 = vrot.lane.b32.xlu0 %v7743, 96
          %v8245 = vpop.permute.xlu0 %8244
          %8246 = vrot.lane.b32.xlu0 %v7744, 96
          %v8247 = vpop.permute.xlu0 %8246
          %8248 = vrot.lane.b32.xlu0 %v7745, 96
          %v8249 = vpop.permute.xlu0 %8248
          %8250 = vrot.lane.b32.xlu0 %v7746, 96
          %v8251 = vpop.permute.xlu0 %8250
          %8252 = vrot.lane.b32.xlu0 %v7747, 96
          %v8253 = vpop.permute.xlu0 %8252
          %8254 = vrot.lane.b32.xlu0 %v7748, 96
          %v8255 = vpop.permute.xlu0 %8254
          %8256 = vrot.lane.b32.xlu0 %v7749, 96
          %v8257 = vpop.permute.xlu0 %8256
          %8258 = vrot.lane.b32.xlu0 %v7750, 96
          %v8259 = vpop.permute.xlu0 %8258
          %8260 = vrot.lane.b32.xlu0 %v7751, 96
          %v8261 = vpop.permute.xlu0 %8260
          %8262 = vrot.lane.b32.xlu0 %v7752, 96
          %v8263 = vpop.permute.xlu0 %8262
          %8264 = vrot.lane.b32.xlu0 %v7753, 96
          %v8265 = vpop.permute.xlu0 %8264
          %8266 = vrot.lane.b32.xlu0 %v7754, 96
          %v8267 = vpop.permute.xlu0 %8266
          %8268 = vrot.lane.b32.xlu0 %v7755, 96
          %v8269 = vpop.permute.xlu0 %8268
          %8270 = vrot.lane.b32.xlu0 %v7756, 96
          %v8271 = vpop.permute.xlu0 %8270
          %8272 = vrot.lane.b32.xlu0 %v7757, 96
          %v8273 = vpop.permute.xlu0 %8272
          %8274 = vrot.lane.b32.xlu0 %v7758, 96
          %v8275 = vpop.permute.xlu0 %8274
          %8324 = vrot.lane.b32.xlu0 %v7567, 96
          %v8325 = vpop.permute.xlu0 %8324
          %8326 = vrot.lane.b32.xlu0 %v7568, 96
          %v8327 = vpop.permute.xlu0 %8326
          %8328 = vrot.lane.b32.xlu0 %v7569, 96
          %v8329 = vpop.permute.xlu0 %8328
          %8330 = vrot.lane.b32.xlu0 %v7570, 96
          %v8331 = vpop.permute.xlu0 %8330
          %8332 = vrot.lane.b32.xlu0 %v7571, 96
          %v8333 = vpop.permute.xlu0 %8332
          %8334 = vrot.lane.b32.xlu0 %v7572, 96
          %v8335 = vpop.permute.xlu0 %8334
          %8336 = vrot.lane.b32.xlu0 %v7573, 96
          %v8337 = vpop.permute.xlu0 %8336
          %8338 = vrot.lane.b32.xlu0 %v7574, 96
          %v8339 = vpop.permute.xlu0 %8338
          %8340 = vrot.lane.b32.xlu0 %v7575, 96
          %v8341 = vpop.permute.xlu0 %8340
          %8342 = vrot.lane.b32.xlu0 %v7576, 96
          %v8343 = vpop.permute.xlu0 %8342
          %8344 = vrot.lane.b32.xlu0 %v7577, 96
          %v8345 = vpop.permute.xlu0 %8344
          %8346 = vrot.lane.b32.xlu0 %v7578, 96
          %v8347 = vpop.permute.xlu0 %8346
          %8348 = vrot.lane.b32.xlu0 %v7579, 96
          %v8349 = vpop.permute.xlu0 %8348
          %8350 = vrot.lane.b32.xlu0 %v7580, 96
          %v8351 = vpop.permute.xlu0 %8350
          %8352 = vrot.lane.b32.xlu0 %v7581, 96
          %v8353 = vpop.permute.xlu0 %8352
          %8354 = vrot.lane.b32.xlu0 %v7582, 96
          %v8355 = vpop.permute.xlu0 %8354
          %8356 = vrot.lane.b32.xlu0 %v7583, 96
          %v8357 = vpop.permute.xlu0 %8356
          %8358 = vrot.lane.b32.xlu0 %v7584, 96
          %v8359 = vpop.permute.xlu0 %8358
          %8360 = vrot.lane.b32.xlu0 %v7585, 96
          %v8361 = vpop.permute.xlu0 %8360
          %8362 = vrot.lane.b32.xlu0 %v7586, 96
          %v8363 = vpop.permute.xlu0 %8362
          %8364 = vrot.lane.b32.xlu0 %v7587, 96
          %v8365 = vpop.permute.xlu0 %8364
          %8366 = vrot.lane.b32.xlu0 %v7588, 96
          %v8367 = vpop.permute.xlu0 %8366
          %8368 = vrot.lane.b32.xlu0 %v7589, 96
          %v8369 = vpop.permute.xlu0 %8368
          %8370 = vrot.lane.b32.xlu0 %v7590, 96
          %v8371 = vpop.permute.xlu0 %8370
          %8372 = vrot.lane.b32.xlu0 %v7591, 96
          %v8373 = vpop.permute.xlu0 %8372
          %8374 = vrot.lane.b32.xlu0 %v7592, 96
          %v8375 = vpop.permute.xlu0 %8374
          %8376 = vrot.lane.b32.xlu0 %v7593, 96
          %v8377 = vpop.permute.xlu0 %8376
          %8378 = vrot.lane.b32.xlu0 %v7594, 96
          %v8379 = vpop.permute.xlu0 %8378
          %8380 = vrot.lane.b32.xlu0 %v7595, 96
          %v8381 = vpop.permute.xlu0 %8380
          %8382 = vrot.lane.b32.xlu0 %v7596, 96
          %v8383 = vpop.permute.xlu0 %8382
          %8384 = vrot.lane.b32.xlu0 %v7597, 96
          %v8385 = vpop.permute.xlu0 %8384
          %8386 = vrot.lane.b32.xlu0 %v7598, 96
          %v8387 = vpop.permute.xlu0 %8386
          %8422 = vrot.lane.b32.xlu0 %v8226, 96
          %v8423 = vpop.permute.xlu0 %8422
          %8424 = vrot.lane.b32.xlu0 %v8227, 96
          %v8425 = vpop.permute.xlu0 %8424
        $region109: #{tpu_custom_call.1} parent=103 // loop_footer
          %s3455 = sadd.s32 1, %s3451
        $region110: #{tpu_custom_call.1} parent=103 // loop_footer_branch
          %3450 = sbr.rel target = $region106
        $region111: #{tpu_custom_call.1} parent=103 // loop_exit
          _
        %v8428 = vld [vmem:[%s20] sm:$0xff]
        %v8429 = vld [vmem:[%s20 + $0x8] sm:$0xff]
        %v8430 = vld [vmem:[%s20 + $0x10] sm:$0xff]
        %v8431 = vld [vmem:[%s20 + $0x18] sm:$0xff]
        %v8432 = vld [vmem:[%s20 + $0x20] sm:$0x1]
        %v8433 = vlaneseq
        %v8434 = vshrl.u32 %v8433, 7
        %v8435 = vsub.s32 0, %v8434
        %v8436 = vrot.slane %v8432, %v8435
        %vm8437 = vcmask 261120
        %v8439 = vsel %vm8437, %v3456, 0
        %v8442 = vsel %vm8437, %v3457, 0
        %v8445 = vsel %vm8437, %v3458, 0
        %v8448 = vsel %vm8437, %v3459, 0
        %v8451 = vsel %vm8437, %v3460, 0
        %v8454 = vsel %vm8437, %v3461, 0
        %v8457 = vsel %vm8437, %v3462, 0
        %v8460 = vsel %vm8437, %v3463, 0
        %v8463 = vsel %vm8437, %v3464, 0
        %v8466 = vsel %vm8437, %v3465, 0
        %v8469 = vsel %vm8437, %v3466, 0
        %v8472 = vsel %vm8437, %v3467, 0
        %v8475 = vsel %vm8437, %v3468, 0
        %v8478 = vsel %vm8437, %v3469, 0
        %v8481 = vsel %vm8437, %v3470, 0
        %v8484 = vsel %vm8437, %v3471, 0
        %8486 = vmatprep.subr.mxu0 0.0
        %8487 = vmatpush1.msra.mxu0 0.0
        %8488 = vmatprep.subr.mxu0 0.0
        %8489 = vmatpush1.msra.mxu0 0.0
        %8490 = vmatprep.subr.mxu0 0.0
        %8491 = vmatpush1.msra.mxu0 0.0
        %8492 = vmatprep.subr.mxu0 0.0
        %8493 = vmatpush1.msra.mxu0 0.0
        %8494 = vmatprep.subr.mxu0 0.0
        %8495 = vmatpush1.msra.mxu0 0.0
        %8496 = vmatprep.subr.mxu0 0.0
        %8497 = vmatpush1.msra.mxu0 0.0
        %8498 = vmatprep.subr.mxu0 0.0
        %8499 = vmatpush1.msra.mxu0 0.0
        %8500 = vmatprep.subr.mxu0 0.0
        %8501 = vmatpush1.msra.mxu0 0.0
        %8502 = vmatprep.subr.mxu0 0.0
        %8503 = vmatpush1.msra.mxu0 0.0
        %8504 = vmatprep.subr.mxu0 0.0
        %8505 = vmatpush1.msra.mxu0 0.0
        %8506 = vmatprep.subr.mxu0 0.0
        %8507 = vmatpush1.msra.mxu0 0.0
        %8508 = vmatprep.subr.mxu0 0.0
        %8509 = vmatpush1.msra.mxu0 0.0
        %8510 = vmatprep.subr.mxu0 0.0
        %8511 = vmatpush1.msra.mxu0 %v8431
        %8512 = vmatprep.subr.mxu0 0.0
        %8513 = vmatpush1.msra.mxu0 %v8430
        %8514 = vmatprep.subr.mxu0 0.0
        %8515 = vmatpush1.msra.mxu0 %v8429
        %8516 = vmatprep.subr.mxu0 0.0
        %8517 = vmatpush1.msra.mxu0 %v8428
        %8518 = vmatprep.subr.mxu0 0.0
        %8519 = vmatpush2.msra.mxu0 0.0
        %8520 = vmatprep.subr.mxu0 0.0
        %8521 = vmatpush2.msra.mxu0 0.0
        %8522 = vmatprep.subr.mxu0 0.0
        %8523 = vmatpush2.msra.mxu0 0.0
        %8524 = vmatprep.subr.mxu0 0.0
        %8525 = vmatpush2.msra.mxu0 0.0
        %8526 = vmatprep.subr.mxu0 0.0
        %8527 = vmatpush2.msra.mxu0 0.0
        %8528 = vmatprep.subr.mxu0 0.0
        %8529 = vmatpush2.msra.mxu0 0.0
        %8530 = vmatprep.subr.mxu0 0.0
        %8531 = vmatpush2.msra.mxu0 0.0
        %8532 = vmatprep.subr.mxu0 0.0
        %8533 = vmatpush2.msra.mxu0 0.0
        %8534 = vmatprep.subr.mxu0 0.0
        %8535 = vmatpush2.msra.mxu0 0.0
        %8536 = vmatprep.subr.mxu0 0.0
        %8537 = vmatpush2.msra.mxu0 0.0
        %8538 = vmatprep.subr.mxu0 0.0
        %8539 = vmatpush2.msra.mxu0 0.0
        %8540 = vmatprep.subr.mxu0 0.0
        %8541 = vmatpush2.msra.mxu0 0.0
        %8542 = vmatprep.subr.mxu0 0.0
        %8543 = vmatpush2.msra.mxu0 0.0
        %8544 = vmatprep.subr.mxu0 0.0
        %8545 = vmatpush2.msra.mxu0 0.0
        %8546 = vmatprep.subr.mxu0 0.0
        %8547 = vmatpush2.msra.mxu0 0.0
        %8548 = vmatprep.subr.mxu0 0.0
        %8549 = vmatpush2.msra.mxu0 0.0
        %8550 = vmatprep.mubr.f32.mxu0 0.0
        %8551 = vmatmul.mubr.f32.gmra.mxu0 %v8439
        %v8552 = vpop.f32.mrf.mxu0
        %v8553 = vadd.f32 %v8436, %v8552
        %v8554 = vpop.f32.mrf.mxu0
        %8555 = vmatprep.mubr.f32.mxu0 0.0
        %8556 = vmatmul.mubr.f32.gmra.mxu0 %v8442
        %v8557 = vpop.f32.mrf.mxu0
        %v8558 = vadd.f32 %v8436, %v8557
        %v8559 = vpop.f32.mrf.mxu0
        %8560 = vmatprep.mubr.f32.mxu0 0.0
        %8561 = vmatmul.mubr.f32.gmra.mxu0 %v8445
        %v8562 = vpop.f32.mrf.mxu0
        %v8563 = vadd.f32 %v8436, %v8562
        %v8564 = vpop.f32.mrf.mxu0
        %8565 = vmatprep.mubr.f32.mxu0 0.0
        %8566 = vmatmul.mubr.f32.gmra.mxu0 %v8448
        %v8567 = vpop.f32.mrf.mxu0
        %v8568 = vadd.f32 %v8436, %v8567
        %v8569 = vpop.f32.mrf.mxu0
        %8570 = vmatprep.mubr.f32.mxu0 0.0
        %8571 = vmatmul.mubr.f32.gmra.mxu0 %v8451
        %v8572 = vpop.f32.mrf.mxu0
        %v8573 = vadd.f32 %v8436, %v8572
        %v8574 = vpop.f32.mrf.mxu0
        %8575 = vmatprep.mubr.f32.mxu0 0.0
        %8576 = vmatmul.mubr.f32.gmra.mxu0 %v8454
        %v8577 = vpop.f32.mrf.mxu0
        %v8578 = vadd.f32 %v8436, %v8577
        %v8579 = vpop.f32.mrf.mxu0
        %8580 = vmatprep.mubr.f32.mxu0 0.0
        %8581 = vmatmul.mubr.f32.gmra.mxu0 %v8457
        %v8582 = vpop.f32.mrf.mxu0
        %v8583 = vadd.f32 %v8436, %v8582
        %v8584 = vpop.f32.mrf.mxu0
        %8585 = vmatprep.mubr.f32.mxu0 0.0
        %8586 = vmatmul.mubr.f32.gmra.mxu0 %v8460
        %v8587 = vpop.f32.mrf.mxu0
        %v8588 = vadd.f32 %v8436, %v8587
        %v8589 = vpop.f32.mrf.mxu0
        %8590 = vmatprep.mubr.f32.mxu0 0.0
        %8591 = vmatmul.mubr.f32.gmra.mxu0 %v8463
        %v8592 = vpop.f32.mrf.mxu0
        %v8593 = vadd.f32 %v8436, %v8592
        %v8594 = vpop.f32.mrf.mxu0
        %8595 = vmatprep.mubr.f32.mxu0 0.0
        %8596 = vmatmul.mubr.f32.gmra.mxu0 %v8466
        %v8597 = vpop.f32.mrf.mxu0
        %v8598 = vadd.f32 %v8436, %v8597
        %v8599 = vpop.f32.mrf.mxu0
        %8600 = vmatprep.mubr.f32.mxu0 0.0
        %8601 = vmatmul.mubr.f32.gmra.mxu0 %v8469
        %v8602 = vpop.f32.mrf.mxu0
        %v8603 = vadd.f32 %v8436, %v8602
        %v8604 = vpop.f32.mrf.mxu0
        %8605 = vmatprep.mubr.f32.mxu0 0.0
        %8606 = vmatmul.mubr.f32.gmra.mxu0 %v8472
        %v8607 = vpop.f32.mrf.mxu0
        %v8608 = vadd.f32 %v8436, %v8607
        %v8609 = vpop.f32.mrf.mxu0
        %8610 = vmatprep.mubr.f32.mxu0 0.0
        %8611 = vmatmul.mubr.f32.gmra.mxu0 %v8475
        %v8612 = vpop.f32.mrf.mxu0
        %v8613 = vadd.f32 %v8436, %v8612
        %v8614 = vpop.f32.mrf.mxu0
        %8615 = vmatprep.mubr.f32.mxu0 0.0
        %8616 = vmatmul.mubr.f32.gmra.mxu0 %v8478
        %v8617 = vpop.f32.mrf.mxu0
        %v8618 = vadd.f32 %v8436, %v8617
        %v8619 = vpop.f32.mrf.mxu0
        %8620 = vmatprep.mubr.f32.mxu0 0.0
        %8621 = vmatmul.mubr.f32.gmra.mxu0 %v8481
        %v8622 = vpop.f32.mrf.mxu0
        %v8623 = vadd.f32 %v8436, %v8622
        %v8624 = vpop.f32.mrf.mxu0
        %8625 = vmatprep.mubr.f32.mxu0 0.0
        %8626 = vmatmul.mubr.f32.gmra.mxu0 %v8484
        %v8627 = vpop.f32.mrf.mxu0
        %v8628 = vadd.f32 %v8436, %v8627
        %v8629 = vpop.f32.mrf.mxu0
        %8630 = vdwg.mxu0
        %v8631 = vmax.f32 %v8553, 0.0
        %v8632 = vmax.f32 %v8558, 0.0
        %v8633 = vmax.f32 %v8563, 0.0
        %v8634 = vmax.f32 %v8568, 0.0
        %v8635 = vmax.f32 %v8573, 0.0
        %v8636 = vmax.f32 %v8578, 0.0
        %v8637 = vmax.f32 %v8583, 0.0
        %v8638 = vmax.f32 %v8588, 0.0
        %v8639 = vmax.f32 %v8593, 0.0
        %v8640 = vmax.f32 %v8598, 0.0
        %v8641 = vmax.f32 %v8603, 0.0
        %v8642 = vmax.f32 %v8608, 0.0
        %v8643 = vmax.f32 %v8613, 0.0
        %v8644 = vmax.f32 %v8618, 0.0
        %v8645 = vmax.f32 %v8623, 0.0
        %v8646 = vmax.f32 %v8628, 0.0
        %v8647 = vld [vmem:[%s20 + $0x28] sm:$0xff]
        %v8648 = vld [vmem:[%s20 + $0x30] sm:$0xff]
        %v8649 = vld [vmem:[%s20 + $0x38] sm:$0xff]
        %v8650 = vld [vmem:[%s20 + $0x40] sm:$0xff]
        %v8651 = vld [vmem:[%s20 + $0x48] sm:$0xff]
        %v8652 = vld [vmem:[%s20 + $0x50] sm:$0xff]
        %v8653 = vld [vmem:[%s20 + $0x58] sm:$0xff]
        %v8654 = vld [vmem:[%s20 + $0x60] sm:$0xff]
        %v8655 = vld [vmem:[%s20 + $0x68] sm:$0xff]
        %v8656 = vld [vmem:[%s20 + $0x70] sm:$0xff]
        %v8657 = vld [vmem:[%s20 + $0x78] sm:$0xff]
        %v8658 = vld [vmem:[%s20 + $0x80] sm:$0xff]
        %v8659 = vld [vmem:[%s20 + $0x88] sm:$0xff]
        %v8660 = vld [vmem:[%s20 + $0x90] sm:$0xff]
        %v8661 = vld [vmem:[%s20 + $0x98] sm:$0xff]
        %v8662 = vld [vmem:[%s20 + $0xa0] sm:$0xff]
        %v8663 = vld [vmem:[%s20 + $0xa8] sm:$0x1]
        %v8664 = vlaneseq
        %v8665 = vshrl.u32 %v8664, 7
        %v8666 = vsub.s32 0, %v8665
        %v8667 = vrot.slane %v8663, %v8666
        %8668 = vmatprep.subr.mxu0 0.0
        %8669 = vmatpush1.msra.mxu0 %v8662
        %8670 = vmatprep.subr.mxu0 0.0
        %8671 = vmatpush1.msra.mxu0 %v8661
        %8672 = vmatprep.subr.mxu0 0.0
        %8673 = vmatpush1.msra.mxu0 %v8660
        %8674 = vmatprep.subr.mxu0 0.0
        %8675 = vmatpush1.msra.mxu0 %v8659
        %8676 = vmatprep.subr.mxu0 0.0
        %8677 = vmatpush1.msra.mxu0 %v8658
        %8678 = vmatprep.subr.mxu0 0.0
        %8679 = vmatpush1.msra.mxu0 %v8657
        %8680 = vmatprep.subr.mxu0 0.0
        %8681 = vmatpush1.msra.mxu0 %v8656
        %8682 = vmatprep.subr.mxu0 0.0
        %8683 = vmatpush1.msra.mxu0 %v8655
        %8684 = vmatprep.subr.mxu0 0.0
        %8685 = vmatpush1.msra.mxu0 %v8654
        %8686 = vmatprep.subr.mxu0 0.0
        %8687 = vmatpush1.msra.mxu0 %v8653
        %8688 = vmatprep.subr.mxu0 0.0
        %8689 = vmatpush1.msra.mxu0 %v8652
        %8690 = vmatprep.subr.mxu0 0.0
        %8691 = vmatpush1.msra.mxu0 %v8651
        %8692 = vmatprep.subr.mxu0 0.0
        %8693 = vmatpush1.msra.mxu0 %v8650
        %8694 = vmatprep.subr.mxu0 0.0
        %8695 = vmatpush1.msra.mxu0 %v8649
        %8696 = vmatprep.subr.mxu0 0.0
        %8697 = vmatpush1.msra.mxu0 %v8648
        %8698 = vmatprep.subr.mxu0 0.0
        %8699 = vmatpush1.msra.mxu0 %v8647
        %8700 = vmatprep.subr.mxu0 0.0
        %8701 = vmatpush2.msra.mxu0 0.0
        %8702 = vmatprep.subr.mxu0 0.0
        %8703 = vmatpush2.msra.mxu0 0.0
        %8704 = vmatprep.subr.mxu0 0.0
        %8705 = vmatpush2.msra.mxu0 0.0
        %8706 = vmatprep.subr.mxu0 0.0
        %8707 = vmatpush2.msra.mxu0 0.0
        %8708 = vmatprep.subr.mxu0 0.0
        %8709 = vmatpush2.msra.mxu0 0.0
        %8710 = vmatprep.subr.mxu0 0.0
        %8711 = vmatpush2.msra.mxu0 0.0
        %8712 = vmatprep.subr.mxu0 0.0
        %8713 = vmatpush2.msra.mxu0 0.0
        %8714 = vmatprep.subr.mxu0 0.0
        %8715 = vmatpush2.msra.mxu0 0.0
        %8716 = vmatprep.subr.mxu0 0.0
        %8717 = vmatpush2.msra.mxu0 0.0
        %8718 = vmatprep.subr.mxu0 0.0
        %8719 = vmatpush2.msra.mxu0 0.0
        %8720 = vmatprep.subr.mxu0 0.0
        %8721 = vmatpush2.msra.mxu0 0.0
        %8722 = vmatprep.subr.mxu0 0.0
        %8723 = vmatpush2.msra.mxu0 0.0
        %8724 = vmatprep.subr.mxu0 0.0
        %8725 = vmatpush2.msra.mxu0 0.0
        %8726 = vmatprep.subr.mxu0 0.0
        %8727 = vmatpush2.msra.mxu0 0.0
        %8728 = vmatprep.subr.mxu0 0.0
        %8729 = vmatpush2.msra.mxu0 0.0
        %8730 = vmatprep.subr.mxu0 0.0
        %8731 = vmatpush2.msra.mxu0 0.0
        %8732 = vmatprep.mubr.f32.mxu0 0.0
        %8733 = vmatmul.mubr.f32.gmra.mxu0 %v8631
        %v8734 = vpop.f32.mrf.mxu0
        %v8735 = vadd.f32 %v8667, %v8734
        %v8736 = vpop.f32.mrf.mxu0
        %8737 = vmatprep.mubr.f32.mxu0 0.0
        %8738 = vmatmul.mubr.f32.gmra.mxu0 %v8632
        %v8739 = vpop.f32.mrf.mxu0
        %v8740 = vadd.f32 %v8667, %v8739
        %v8741 = vpop.f32.mrf.mxu0
        %8742 = vmatprep.mubr.f32.mxu0 0.0
        %8743 = vmatmul.mubr.f32.gmra.mxu0 %v8633
        %v8744 = vpop.f32.mrf.mxu0
        %v8745 = vadd.f32 %v8667, %v8744
        %v8746 = vpop.f32.mrf.mxu0
        %8747 = vmatprep.mubr.f32.mxu0 0.0
        %8748 = vmatmul.mubr.f32.gmra.mxu0 %v8634
        %v8749 = vpop.f32.mrf.mxu0
        %v8750 = vadd.f32 %v8667, %v8749
        %v8751 = vpop.f32.mrf.mxu0
        %8752 = vmatprep.mubr.f32.mxu0 0.0
        %8753 = vmatmul.mubr.f32.gmra.mxu0 %v8635
        %v8754 = vpop.f32.mrf.mxu0
        %v8755 = vadd.f32 %v8667, %v8754
        %v8756 = vpop.f32.mrf.mxu0
        %8757 = vmatprep.mubr.f32.mxu0 0.0
        %8758 = vmatmul.mubr.f32.gmra.mxu0 %v8636
        %v8759 = vpop.f32.mrf.mxu0
        %v8760 = vadd.f32 %v8667, %v8759
        %v8761 = vpop.f32.mrf.mxu0
        %8762 = vmatprep.mubr.f32.mxu0 0.0
        %8763 = vmatmul.mubr.f32.gmra.mxu0 %v8637
        %v8764 = vpop.f32.mrf.mxu0
        %v8765 = vadd.f32 %v8667, %v8764
        %v8766 = vpop.f32.mrf.mxu0
        %8767 = vmatprep.mubr.f32.mxu0 0.0
        %8768 = vmatmul.mubr.f32.gmra.mxu0 %v8638
        %v8769 = vpop.f32.mrf.mxu0
        %v8770 = vadd.f32 %v8667, %v8769
        %v8771 = vpop.f32.mrf.mxu0
        %8772 = vmatprep.mubr.f32.mxu0 0.0
        %8773 = vmatmul.mubr.f32.gmra.mxu0 %v8639
        %v8774 = vpop.f32.mrf.mxu0
        %v8775 = vadd.f32 %v8667, %v8774
        %v8776 = vpop.f32.mrf.mxu0
        %8777 = vmatprep.mubr.f32.mxu0 0.0
        %8778 = vmatmul.mubr.f32.gmra.mxu0 %v8640
        %v8779 = vpop.f32.mrf.mxu0
        %v8780 = vadd.f32 %v8667, %v8779
        %v8781 = vpop.f32.mrf.mxu0
        %8782 = vmatprep.mubr.f32.mxu0 0.0
        %8783 = vmatmul.mubr.f32.gmra.mxu0 %v8641
        %v8784 = vpop.f32.mrf.mxu0
        %v8785 = vadd.f32 %v8667, %v8784
        %v8786 = vpop.f32.mrf.mxu0
        %8787 = vmatprep.mubr.f32.mxu0 0.0
        %8788 = vmatmul.mubr.f32.gmra.mxu0 %v8642
        %v8789 = vpop.f32.mrf.mxu0
        %v8790 = vadd.f32 %v8667, %v8789
        %v8791 = vpop.f32.mrf.mxu0
        %8792 = vmatprep.mubr.f32.mxu0 0.0
        %8793 = vmatmul.mubr.f32.gmra.mxu0 %v8643
        %v8794 = vpop.f32.mrf.mxu0
        %v8795 = vadd.f32 %v8667, %v8794
        %v8796 = vpop.f32.mrf.mxu0
        %8797 = vmatprep.mubr.f32.mxu0 0.0
        %8798 = vmatmul.mubr.f32.gmra.mxu0 %v8644
        %v8799 = vpop.f32.mrf.mxu0
        %v8800 = vadd.f32 %v8667, %v8799
        %v8801 = vpop.f32.mrf.mxu0
        %8802 = vmatprep.mubr.f32.mxu0 0.0
        %8803 = vmatmul.mubr.f32.gmra.mxu0 %v8645
        %v8804 = vpop.f32.mrf.mxu0
        %v8805 = vadd.f32 %v8667, %v8804
        %v8806 = vpop.f32.mrf.mxu0
        %8807 = vmatprep.mubr.f32.mxu0 0.0
        %8808 = vmatmul.mubr.f32.gmra.mxu0 %v8646
        %v8809 = vpop.f32.mrf.mxu0
        %v8810 = vadd.f32 %v8667, %v8809
        %v8811 = vpop.f32.mrf.mxu0
        %8812 = vdwg.mxu0
        %v8813 = vmax.f32 %v8735, 0.0
        %v8814 = vmax.f32 %v8740, 0.0
        %v8815 = vmax.f32 %v8745, 0.0
        %v8816 = vmax.f32 %v8750, 0.0
        %v8817 = vmax.f32 %v8755, 0.0
        %v8818 = vmax.f32 %v8760, 0.0
        %v8819 = vmax.f32 %v8765, 0.0
        %v8820 = vmax.f32 %v8770, 0.0
        %v8821 = vmax.f32 %v8775, 0.0
        %v8822 = vmax.f32 %v8780, 0.0
        %v8823 = vmax.f32 %v8785, 0.0
        %v8824 = vmax.f32 %v8790, 0.0
        %v8825 = vmax.f32 %v8795, 0.0
        %v8826 = vmax.f32 %v8800, 0.0
        %v8827 = vmax.f32 %v8805, 0.0
        %v8828 = vmax.f32 %v8810, 0.0
        %v8829 = vld [vmem:[%s20 + $0xb0] sm:$0xff]
        %v8830 = vld [vmem:[%s20 + $0xb8] sm:$0xff]
        %v8831 = vld [vmem:[%s20 + $0xc0] sm:$0xff]
        %v8832 = vld [vmem:[%s20 + $0xc8] sm:$0xff]
        %v8833 = vld [vmem:[%s20 + $0xd0] sm:$0xff]
        %v8834 = vld [vmem:[%s20 + $0xd8] sm:$0xff]
        %v8835 = vld [vmem:[%s20 + $0xe0] sm:$0xff]
        %v8836 = vld [vmem:[%s20 + $0xe8] sm:$0xff]
        %v8837 = vld [vmem:[%s20 + $0xf0] sm:$0xff]
        %v8838 = vld [vmem:[%s20 + $0xf8] sm:$0xff]
        %v8839 = vld [vmem:[%s20 + $0x100] sm:$0xff]
        %v8840 = vld [vmem:[%s20 + $0x108] sm:$0xff]
        %v8841 = vld [vmem:[%s20 + $0x110] sm:$0xff]
        %v8842 = vld [vmem:[%s20 + $0x118] sm:$0xff]
        %v8843 = vld [vmem:[%s20 + $0x120] sm:$0xff]
        %v8844 = vld [vmem:[%s20 + $0x128] sm:$0xff]
        %v8845 = vld [vmem:[%s20 + $0x130] sm:$0x1]
        %v8846 = vlaneseq
        %v8847 = vshrl.u32 %v8846, 7
        %v8848 = vsub.s32 0, %v8847
        %v8849 = vrot.slane %v8845, %v8848
        %8850 = vmatprep.subr.mxu0 0.0
        %8851 = vmatpush1.msra.mxu0 %v8844
        %8852 = vmatprep.subr.mxu0 0.0
        %8853 = vmatpush1.msra.mxu0 %v8843
        %8854 = vmatprep.subr.mxu0 0.0
        %8855 = vmatpush1.msra.mxu0 %v8842
        %8856 = vmatprep.subr.mxu0 0.0
        %8857 = vmatpush1.msra.mxu0 %v8841
        %8858 = vmatprep.subr.mxu0 0.0
        %8859 = vmatpush1.msra.mxu0 %v8840
        %8860 = vmatprep.subr.mxu0 0.0
        %8861 = vmatpush1.msra.mxu0 %v8839
        %8862 = vmatprep.subr.mxu0 0.0
        %8863 = vmatpush1.msra.mxu0 %v8838
        %8864 = vmatprep.subr.mxu0 0.0
        %8865 = vmatpush1.msra.mxu0 %v8837
        %8866 = vmatprep.subr.mxu0 0.0
        %8867 = vmatpush1.msra.mxu0 %v8836
        %8868 = vmatprep.subr.mxu0 0.0
        %8869 = vmatpush1.msra.mxu0 %v8835
        %8870 = vmatprep.subr.mxu0 0.0
        %8871 = vmatpush1.msra.mxu0 %v8834
        %8872 = vmatprep.subr.mxu0 0.0
        %8873 = vmatpush1.msra.mxu0 %v8833
        %8874 = vmatprep.subr.mxu0 0.0
        %8875 = vmatpush1.msra.mxu0 %v8832
        %8876 = vmatprep.subr.mxu0 0.0
        %8877 = vmatpush1.msra.mxu0 %v8831
        %8878 = vmatprep.subr.mxu0 0.0
        %8879 = vmatpush1.msra.mxu0 %v8830
        %8880 = vmatprep.subr.mxu0 0.0
        %8881 = vmatpush1.msra.mxu0 %v8829
        %8882 = vmatprep.subr.mxu0 0.0
        %8883 = vmatpush2.msra.mxu0 0.0
        %8884 = vmatprep.subr.mxu0 0.0
        %8885 = vmatpush2.msra.mxu0 0.0
        %8886 = vmatprep.subr.mxu0 0.0
        %8887 = vmatpush2.msra.mxu0 0.0
        %8888 = vmatprep.subr.mxu0 0.0
        %8889 = vmatpush2.msra.mxu0 0.0
        %8890 = vmatprep.subr.mxu0 0.0
        %8891 = vmatpush2.msra.mxu0 0.0
        %8892 = vmatprep.subr.mxu0 0.0
        %8893 = vmatpush2.msra.mxu0 0.0
        %8894 = vmatprep.subr.mxu0 0.0
        %8895 = vmatpush2.msra.mxu0 0.0
        %8896 = vmatprep.subr.mxu0 0.0
        %8897 = vmatpush2.msra.mxu0 0.0
        %8898 = vmatprep.subr.mxu0 0.0
        %8899 = vmatpush2.msra.mxu0 0.0
        %8900 = vmatprep.subr.mxu0 0.0
        %8901 = vmatpush2.msra.mxu0 0.0
        %8902 = vmatprep.subr.mxu0 0.0
        %8903 = vmatpush2.msra.mxu0 0.0
        %8904 = vmatprep.subr.mxu0 0.0
        %8905 = vmatpush2.msra.mxu0 0.0
        %8906 = vmatprep.subr.mxu0 0.0
        %8907 = vmatpush2.msra.mxu0 0.0
        %8908 = vmatprep.subr.mxu0 0.0
        %8909 = vmatpush2.msra.mxu0 0.0
        %8910 = vmatprep.subr.mxu0 0.0
        %8911 = vmatpush2.msra.mxu0 0.0
        %8912 = vmatprep.subr.mxu0 0.0
        %8913 = vmatpush2.msra.mxu0 0.0
        %8914 = vmatprep.mubr.f32.mxu0 0.0
        %8915 = vmatmul.mubr.f32.gmra.mxu0 %v8813
        %v8916 = vpop.f32.mrf.mxu0
        %v8917 = vadd.f32 %v8849, %v8916
        %v8918 = vpop.f32.mrf.mxu0
        %8919 = vmatprep.mubr.f32.mxu0 0.0
        %8920 = vmatmul.mubr.f32.gmra.mxu0 %v8814
        %v8921 = vpop.f32.mrf.mxu0
        %v8922 = vadd.f32 %v8849, %v8921
        %v8923 = vpop.f32.mrf.mxu0
        %8924 = vmatprep.mubr.f32.mxu0 0.0
        %8925 = vmatmul.mubr.f32.gmra.mxu0 %v8815
        %v8926 = vpop.f32.mrf.mxu0
        %v8927 = vadd.f32 %v8849, %v8926
        %v8928 = vpop.f32.mrf.mxu0
        %8929 = vmatprep.mubr.f32.mxu0 0.0
        %8930 = vmatmul.mubr.f32.gmra.mxu0 %v8816
        %v8931 = vpop.f32.mrf.mxu0
        %v8932 = vadd.f32 %v8849, %v8931
        %v8933 = vpop.f32.mrf.mxu0
        %8934 = vmatprep.mubr.f32.mxu0 0.0
        %8935 = vmatmul.mubr.f32.gmra.mxu0 %v8817
        %v8936 = vpop.f32.mrf.mxu0
        %v8937 = vadd.f32 %v8849, %v8936
        %v8938 = vpop.f32.mrf.mxu0
        %8939 = vmatprep.mubr.f32.mxu0 0.0
        %8940 = vmatmul.mubr.f32.gmra.mxu0 %v8818
        %v8941 = vpop.f32.mrf.mxu0
        %v8942 = vadd.f32 %v8849, %v8941
        %v8943 = vpop.f32.mrf.mxu0
        %8944 = vmatprep.mubr.f32.mxu0 0.0
        %8945 = vmatmul.mubr.f32.gmra.mxu0 %v8819
        %v8946 = vpop.f32.mrf.mxu0
        %v8947 = vadd.f32 %v8849, %v8946
        %v8948 = vpop.f32.mrf.mxu0
        %8949 = vmatprep.mubr.f32.mxu0 0.0
        %8950 = vmatmul.mubr.f32.gmra.mxu0 %v8820
        %v8951 = vpop.f32.mrf.mxu0
        %v8952 = vadd.f32 %v8849, %v8951
        %v8953 = vpop.f32.mrf.mxu0
        %8954 = vmatprep.mubr.f32.mxu0 0.0
        %8955 = vmatmul.mubr.f32.gmra.mxu0 %v8821
        %v8956 = vpop.f32.mrf.mxu0
        %v8957 = vadd.f32 %v8849, %v8956
        %v8958 = vpop.f32.mrf.mxu0
        %8959 = vmatprep.mubr.f32.mxu0 0.0
        %8960 = vmatmul.mubr.f32.gmra.mxu0 %v8822
        %v8961 = vpop.f32.mrf.mxu0
        %v8962 = vadd.f32 %v8849, %v8961
        %v8963 = vpop.f32.mrf.mxu0
        %8964 = vmatprep.mubr.f32.mxu0 0.0
        %8965 = vmatmul.mubr.f32.gmra.mxu0 %v8823
        %v8966 = vpop.f32.mrf.mxu0
        %v8967 = vadd.f32 %v8849, %v8966
        %v8968 = vpop.f32.mrf.mxu0
        %8969 = vmatprep.mubr.f32.mxu0 0.0
        %8970 = vmatmul.mubr.f32.gmra.mxu0 %v8824
        %v8971 = vpop.f32.mrf.mxu0
        %v8972 = vadd.f32 %v8849, %v8971
        %v8973 = vpop.f32.mrf.mxu0
        %8974 = vmatprep.mubr.f32.mxu0 0.0
        %8975 = vmatmul.mubr.f32.gmra.mxu0 %v8825
        %v8976 = vpop.f32.mrf.mxu0
        %v8977 = vadd.f32 %v8849, %v8976
        %v8978 = vpop.f32.mrf.mxu0
        %8979 = vmatprep.mubr.f32.mxu0 0.0
        %8980 = vmatmul.mubr.f32.gmra.mxu0 %v8826
        %v8981 = vpop.f32.mrf.mxu0
        %v8982 = vadd.f32 %v8849, %v8981
        %v8983 = vpop.f32.mrf.mxu0
        %8984 = vmatprep.mubr.f32.mxu0 0.0
        %8985 = vmatmul.mubr.f32.gmra.mxu0 %v8827
        %v8986 = vpop.f32.mrf.mxu0
        %v8987 = vadd.f32 %v8849, %v8986
        %v8988 = vpop.f32.mrf.mxu0
        %8989 = vmatprep.mubr.f32.mxu0 0.0
        %8990 = vmatmul.mubr.f32.gmra.mxu0 %v8828
        %v8991 = vpop.f32.mrf.mxu0
        %v8992 = vadd.f32 %v8849, %v8991
        %v8993 = vpop.f32.mrf.mxu0
        %8994 = vdwg.mxu0
        %v8995 = vmax.f32 %v8917, 0.0
        %v8996 = vmax.f32 %v8922, 0.0
        %v8997 = vmax.f32 %v8927, 0.0
        %v8998 = vmax.f32 %v8932, 0.0
        %v8999 = vmax.f32 %v8937, 0.0
        %v9000 = vmax.f32 %v8942, 0.0
        %v9001 = vmax.f32 %v8947, 0.0
        %v9002 = vmax.f32 %v8952, 0.0
        %v9003 = vmax.f32 %v8957, 0.0
        %v9004 = vmax.f32 %v8962, 0.0
        %v9005 = vmax.f32 %v8967, 0.0
        %v9006 = vmax.f32 %v8972, 0.0
        %v9007 = vmax.f32 %v8977, 0.0
        %v9008 = vmax.f32 %v8982, 0.0
        %v9009 = vmax.f32 %v8987, 0.0
        %v9010 = vmax.f32 %v8992, 0.0
        %v9011 = vld [vmem:[%s20 + $0x138] sm:$0x1]
        %v9012 = vld [vmem:[%s20 + $0x140] sm:$0x1]
        %9014 = vset.pattern.permute.xlu0 0
        %9015 = vperm.xlu0 %9014, %v9012
        %v9016 = vpop.permute.xlu0 %9015
        %9018 = vmatprep.subr.mxu0 0.0
        %9019 = vmatpush1.xpose.msra.mxu0 %v9010
        %9020 = vmatprep.subr.mxu0 0.0
        %9021 = vmatpush1.xpose.msra.mxu0 %v9009
        %9022 = vmatprep.subr.mxu0 0.0
        %9023 = vmatpush1.xpose.msra.mxu0 %v9008
        %9024 = vmatprep.subr.mxu0 0.0
        %9025 = vmatpush1.xpose.msra.mxu0 %v9007
        %9026 = vmatprep.subr.mxu0 0.0
        %9027 = vmatpush1.xpose.msra.mxu0 %v9006
        %9028 = vmatprep.subr.mxu0 0.0
        %9029 = vmatpush1.xpose.msra.mxu0 %v9005
        %9030 = vmatprep.subr.mxu0 0.0
        %9031 = vmatpush1.xpose.msra.mxu0 %v9004
        %9032 = vmatprep.subr.mxu0 0.0
        %9033 = vmatpush1.xpose.msra.mxu0 %v9003
        %9034 = vmatprep.subr.mxu0 0.0
        %9035 = vmatpush1.xpose.msra.mxu0 %v9002
        %9036 = vmatprep.subr.mxu0 0.0
        %9037 = vmatpush1.xpose.msra.mxu0 %v9001
        %9038 = vmatprep.subr.mxu0 0.0
        %9039 = vmatpush1.xpose.msra.mxu0 %v9000
        %9040 = vmatprep.subr.mxu0 0.0
        %9041 = vmatpush1.xpose.msra.mxu0 %v8999
        %9042 = vmatprep.subr.mxu0 0.0
        %9043 = vmatpush1.xpose.msra.mxu0 %v8998
        %9044 = vmatprep.subr.mxu0 0.0
        %9045 = vmatpush1.xpose.msra.mxu0 %v8997
        %9046 = vmatprep.subr.mxu0 0.0
        %9047 = vmatpush1.xpose.msra.mxu0 %v8996
        %9048 = vmatprep.subr.mxu0 0.0
        %9049 = vmatpush1.xpose.msra.mxu0 %v8995
        %9050 = vmatprep.subr.mxu0 0.0
        %9051 = vmatpush2.xpose.msra.mxu0 0.0
        %9052 = vmatprep.subr.mxu0 0.0
        %9053 = vmatpush2.xpose.msra.mxu0 0.0
        %9054 = vmatprep.subr.mxu0 0.0
        %9055 = vmatpush2.xpose.msra.mxu0 0.0
        %9056 = vmatprep.subr.mxu0 0.0
        %9057 = vmatpush2.xpose.msra.mxu0 0.0
        %9058 = vmatprep.subr.mxu0 0.0
        %9059 = vmatpush2.xpose.msra.mxu0 0.0
        %9060 = vmatprep.subr.mxu0 0.0
        %9061 = vmatpush2.xpose.msra.mxu0 0.0
        %9062 = vmatprep.subr.mxu0 0.0
        %9063 = vmatpush2.xpose.msra.mxu0 0.0
        %9064 = vmatprep.subr.mxu0 0.0
        %9065 = vmatpush2.xpose.msra.mxu0 0.0
        %9066 = vmatprep.subr.mxu0 0.0
        %9067 = vmatpush2.xpose.msra.mxu0 0.0
        %9068 = vmatprep.subr.mxu0 0.0
        %9069 = vmatpush2.xpose.msra.mxu0 0.0
        %9070 = vmatprep.subr.mxu0 0.0
        %9071 = vmatpush2.xpose.msra.mxu0 0.0
        %9072 = vmatprep.subr.mxu0 0.0
        %9073 = vmatpush2.xpose.msra.mxu0 0.0
        %9074 = vmatprep.subr.mxu0 0.0
        %9075 = vmatpush2.xpose.msra.mxu0 0.0
        %9076 = vmatprep.subr.mxu0 0.0
        %9077 = vmatpush2.xpose.msra.mxu0 0.0
        %9078 = vmatprep.subr.mxu0 0.0
        %9079 = vmatpush2.xpose.msra.mxu0 0.0
        %9080 = vmatprep.subr.mxu0 0.0
        %9081 = vmatpush2.xpose.msra.mxu0 0.0
        %9082 = vmatprep.mubr.f32.mxu0 0.0
        %9083 = vmatmul.mubr.f32.gmra.mxu0 %v9011
        %v9084 = vpop.f32.mrf.mxu0
        %v9085 = vadd.f32 %v9016, %v9084
        %v9086 = vpop.f32.mrf.mxu0
        %9087 = vdwg.mxu0
        %9088 = vst [vmem:[%s751] sm:$0x1] %v9085
        %s9089 = sand.u32 %s519, 1
        %s9090 = scalar_lea.sflag [#allocation3], %s9089
        %s9091 = sand.u32 %s519, 1
        %s9092 = scalar_lea.vmem [#allocation2], %s9091
        // Predicated region
        $region112: #{tpu_custom_call.1} parent=103 // pred_check
          %p9093 = pneg %p529
        $region113: #{tpu_custom_call.1} parent=103 // pred_check_branch
          %9095 = sbr.rel (%p9093) target = $region115
        $region114: #{tpu_custom_call.1} parent=103 // pred_region
          %s9097 = ssub.s32 16, 16
          %9098 = vsyncadd %s9090, %s9097
          %s9099 = smul.addr %s35, 16
          %s9100 = scalar_lea.hbm %s21, %s9099
          %s9102 = sshll.u32 %s9092, 4
          %s9103 = int_to_ptr.vmem [resolvable:$true] %s9102
          %9105 = dma.vmem_to_hbm [thread:$0]  %s9103, 16, %s9100, %s9090
        $region115: #{tpu_custom_call.1} parent=103 // pred_fallthru
          _
      $region104: #{tpu_custom_call.1} parent=5 // pred_fallthru
        _
      %p9106 = scmp.le.s32.totalorder 2, %s30
      // Predicated region
      $region116: #{tpu_custom_call.1} parent=5 // pred_check
        %p9107 = pneg %p9106
      $region117: #{tpu_custom_call.1} parent=5 // pred_check_branch
        %9109 = sbr.rel (%p9107) target = $region119
      $region118: #{tpu_custom_call.1} parent=5 // pred_region
        %s9110 = ssub.s32 %s30, 2
        // Predicated region
        $region120: #{tpu_custom_call.1} parent=118 // pred_check
          %p9111 = pneg %p535
        $region121: #{tpu_custom_call.1} parent=118 // pred_check_branch
          %9113 = sbr.rel (%p9111) target = $region123
        $region122: #{tpu_custom_call.1} parent=118 // pred_region
          %s9114 = sand.u32 %s520, 1
          %s9115 = scalar_lea.sflag [#allocation3], %s9114
          %s9116 = sand.u32 %s520, 1
          %s9117 = scalar_lea.vmem [#allocation2], %s9116
          %9118 = dma.done %s9115, 16
        $region123: #{tpu_custom_call.1} parent=118 // pred_fallthru
          _
      $region119: #{tpu_custom_call.1} parent=5 // pred_fallthru
        _
    $region6: #{tpu_custom_call.1} parent=1 // loop_footer
      %s34 = sadd.s32 1, %s30
    $region7: #{tpu_custom_call.1} parent=1 // loop_footer_branch
      %29 = sbr.rel target = $region3
    $region8: #{tpu_custom_call.1} parent=1 // loop_exit
      _
    %9119 = vsyncpa [#allocation3], 1
    %s9120 = scalar_lea.sflag [#allocation3], 1
    %9121 = vsyncpa %s9120, 1

</llo_original>
